<compile_context>
chip_gen: v6e
topology: v6e:2x2x1
jax: 0.10.0
libtpu: 0.0.40
codegen_flags: <defaults>
</compile_context>

<pallas_src>
import numpy as np
import jax
import jax.numpy as jnp
from jax.experimental import pallas as pl
from jax.experimental.pallas import tpu as pltpu

# ----------------------- small SwinV2 / SatVision config -----------------------
IMG_SIZE = 16
PATCH_SIZE = 4
IN_CHANS = 4
EMBED_DIM = 32
DEPTHS = (2, 2)
NUM_HEADS = (2, 4)
WINDOW_SIZE = 2
MLP_RATIO = 4
NUM_CLASSES = 10
LN_EPS = 1e-5  # PyTorch nn.LayerNorm default


# ----------------------- in-kernel helpers -----------------------
def _ln(x, g, b):
    mu = jnp.mean(x, axis=-1, keepdims=True)
    xc = x - mu
    var = jnp.mean(xc * xc, axis=-1, keepdims=True)
    return xc * jax.lax.rsqrt(var + LN_EPS) * g + b


def _param_spec(a):
    """Full-array block, fetched once (same block index every grid step)."""
    nd = a.ndim
    return pl.BlockSpec(a.shape, lambda b, _nd=nd: (0,) * _nd)


# ----------------------- static (prep-time) geometry helpers -----------------------
def _relative_position_index_np(ws):
    coords = np.stack(np.meshgrid(np.arange(ws), np.arange(ws), indexing='ij'))
    cf = coords.reshape(2, -1)
    rel = (cf[:, :, None] - cf[:, None, :]).transpose(1, 2, 0).astype(np.int64)
    rel[:, :, 0] += ws - 1
    rel[:, :, 1] += ws - 1
    rel[:, :, 0] *= 2 * ws - 1
    return rel.sum(-1)  # (N, N)


def _relative_coords_table_np(ws, pretrained_ws=0):
    h = np.arange(-(ws - 1), ws, dtype=np.float32)
    w = np.arange(-(ws - 1), ws, dtype=np.float32)
    table = np.stack(np.meshgrid(h, w, indexing='ij'), axis=-1)  # (2ws-1, 2ws-1, 2)
    denom = (pretrained_ws - 1) if pretrained_ws > 0 else max(ws - 1, 1)
    table = table / denom
    table = table * 8.0
    table = np.sign(table) * np.log2(np.abs(table) + 1.0) / np.log2(8.0)
    return table.reshape(-1, 2)  # ((2ws-1)^2, 2)


def _full_sequence_bias(rel_bias, H, W, ws, shift):
    """Fold cyclic shift, window partition, shift mask and relative-position bias
    into one (nH, L, L) additive attention bias over the full token sequence.
    Cross-window pairs get -1e9 (exp underflows to 0 after max-subtraction), so the
    result is numerically identical to SwinV2 windowed attention."""
    L = H * W
    rr, cc = np.meshgrid(np.arange(H), np.arange(W), indexing='ij')
    r2 = (rr - shift) % H            # coordinates after torch.roll(-shift)
    c2 = (cc - shift) % W
    win = ((r2 // ws) * (W // ws) + (c2 // ws)).reshape(L)
    pos = ((r2 % ws) * ws + (c2 % ws)).reshape(L)
    same = win[:, None] == win[None, :]
    if shift > 0:
        img = np.zeros((H, W), np.float32)
        cnt = 0
        for hs in (slice(0, -ws), slice(-ws, -shift), slice(-shift, None)):
            for wsl in (slice(0, -ws), slice(-ws, -shift), slice(-shift, None)):
                img[hs, wsl] = cnt
                cnt += 1
        region = img[r2.reshape(L), c2.reshape(L)]
        shift_mask = np.where(region[:, None] == region[None, :], 0.0, -100.0)
    else:
        shift_mask = np.zeros((L, L), np.float32)
    fb = rel_bias[:, pos[:, None], pos[None, :]]          # (nH, L, L)
    fb = fb + jnp.asarray(shift_mask, jnp.float32)[None]
    fb = jnp.where(jnp.asarray(same)[None], fb, -1e9)
    return fb.astype(jnp.float32)


def _merge_select_np(H, W):
    """0/1 selection matrices implementing PatchMerging's 2x2 gather as matmuls.
    Group order matches SwinV2: (0,0), (1,0), (0,1), (1,1)."""
    L = H * W
    L2 = (H // 2) * (W // 2)
    sel = np.zeros((4, L2, L), np.float32)
    for g, (dr, dc) in enumerate(((0, 0), (1, 0), (0, 1), (1, 1))):
        for i in range(H // 2):
            for j in range(W // 2):
                m = i * (W // 2) + j
                src = (2 * i + dr) * W + (2 * j + dc)
                sel[g, m, src] = 1.0
    return sel


# ----------------------- one-time parameter preprocessing -----------------------
def prepare_inference_params(params):
    """Hoist all parameter-only work out of the forward path: CPB-MLP relative bias,
    shift masks, window structure, logit-scale clamp+exp, qkv-bias layout, merge
    selection matrices; stack per-block weights along a depth axis; cast matmul
    weights to bf16.  Returns (flat tuple of arrays, nested index of positions)."""
    bf16 = jnp.bfloat16
    f32 = jnp.float32
    arrays = []

    def add(a):
        arrays.append(a)
        return len(arrays) - 1

    index = {}
    pe = params['patch_embed']
    index['patch_embed'] = dict(
        w=add(pe['proj_w'].astype(bf16)),
        b=add(pe['proj_b'].reshape(1, -1).astype(f32)),
        g=add(pe['norm_g'].reshape(1, -1).astype(f32)),
        beta=add(pe['norm_b'].reshape(1, -1).astype(f32)))

    res = (IMG_SIZE // PATCH_SIZE, IMG_SIZE // PATCH_SIZE)
    index['layers'] = []
    for li, depth in enumerate(DEPTHS):
        lp = params['layers'][li]
        nH = NUM_HEADS[li]
        H, W = res
        L = H * W
        if min(res) <= WINDOW_SIZE:
            eff_ws, base_shift = min(res), 0
        else:
            eff_ws, base_shift = WINDOW_SIZE, WINDOW_SIZE // 2
        N = eff_ws * eff_ws
        rel_index = _relative_position_index_np(eff_ws)
        coords_table = jnp.asarray(_relative_coords_table_np(eff_ws), f32)

        keys = ('qkv_w', 'qkv_b', 'proj_w', 'proj_b', 'scale', 'bias',
                'n1g', 'n1b', 'fc1_w', 'fc1_b', 'fc2_w', 'fc2_b', 'n2g', 'n2b')
        stk = {k: [] for k in keys}
        for bi in range(depth):
            bp = lp['blocks'][bi]
            shift = 0 if bi % 2 == 0 else base_shift
            # continuous relative position bias MLP (parameter-only)
            tbl = jnp.maximum(coords_table @ bp['cpb_w1'] + bp['cpb_b1'], 0.0) @ bp['cpb_w2']
            rb = tbl[rel_index.reshape(-1)].reshape(N, N, nH).transpose(2, 0, 1)
            rb = 16.0 * jax.nn.sigmoid(rb)                        # (nH, N, N)
            bias = _full_sequence_bias(rb, H, W, eff_ws, shift)   # (nH, L, L)
            scale = jnp.exp(jnp.minimum(bp['logit_scale'],
                                        float(np.log(1.0 / 0.01)))).astype(f32)  # (nH,1,1)
            scale = jnp.broadcast_to(scale, (nH, L, 1))           # lane-broadcast in kernel
            qkv_b = jnp.concatenate([bp['q_bias'], jnp.zeros_like(bp['v_bias']),
                                     bp['v_bias']]).reshape(1, -1).astype(f32)
            stk['qkv_w'].append(bp['qkv_w'].astype(bf16))
            stk['qkv_b'].append(qkv_b)
            stk['proj_w'].append(bp['proj_w'].astype(bf16))
            stk['proj_b'].append(bp['proj_b'].reshape(1, -1).astype(f32))
            stk['scale'].append(scale)
            stk['bias'].append(bias)
            stk['n1g'].append(bp['norm1_g'].reshape(1, -1).astype(f32))
            stk['n1b'].append(bp['norm1_b'].reshape(1, -1).astype(f32))
            stk['fc1_w'].append(bp['fc1_w'].astype(bf16))
            stk['fc1_b'].append(bp['fc1_b'].reshape(1, -1).astype(f32))
            stk['fc2_w'].append(bp['fc2_w'].astype(bf16))
            stk['fc2_b'].append(bp['fc2_b'].reshape(1, -1).astype(f32))
            stk['n2g'].append(bp['norm2_g'].reshape(1, -1).astype(f32))
            stk['n2b'].append(bp['norm2_b'].reshape(1, -1).astype(f32))
        layer_entry = dict(blocks={k: add(jnp.stack(v, axis=0)) for k, v in stk.items()})
        if li < len(DEPTHS) - 1:
            dp = lp['downsample']
            layer_entry['downsample'] = dict(
                sel=add(jnp.asarray(_merge_select_np(H, W), bf16)),   # (4, L/4, L)
                w=add(dp['red_w'].astype(bf16)),
                g=add(dp['norm_g'].reshape(1, -1).astype(f32)),
                b=add(dp['norm_b'].reshape(1, -1).astype(f32)))
            res = (H // 2, W // 2)
        index['layers'].append(layer_entry)

    index['norm_g'] = add(params['norm_g'].reshape(1, -1).astype(f32))
    index['norm_b'] = add(params['norm_b'].reshape(1, -1).astype(f32))
    index['head_w'] = add(params['head_w'].astype(bf16))
    index['head_b'] = add(params['head_b'].reshape(1, -1).astype(f32))
    return tuple(arrays), index


# ----------------------- fully fused forward (ONE pallas_call) -----------------------
def make_satvision_forward(index):
    f32 = jnp.float32
    bf16 = jnp.bfloat16
    nh = nw = IMG_SIZE // PATCH_SIZE
    nP = nh * nw
    Cpp = IN_CHANS * PATCH_SIZE * PATCH_SIZE

    def kernel(*refs):
        x_ref = refs[0]
        o_ref = refs[-1]
        pr = refs[1:-1]

        def V(i):
            return pr[i][...]

        # ---- patch embed: Conv2d(k=s=patch) as matmul + LayerNorm (ape=False) ----
        pe = index['patch_embed']
        y = jnp.dot(x_ref[0].astype(bf16), V(pe['w']),
                    preferred_element_type=f32) + V(pe['b'])
        x = _ln(y, V(pe['g']), V(pe['beta']))                       # (nP, EMBED_DIM) f32

        res = (nh, nw)
        for li, depth in enumerate(DEPTHS):
            C = EMBED_DIM * (2 ** li)
            nH = NUM_HEADS[li]
            hd = C // nH
            H, W = res
            L = H * W
            bx = index['layers'][li]['blocks']
            for bi in range(depth):
                # ---------- fused SwinV2 block ----------
                qkv = jnp.dot(x.astype(bf16), pr[bx['qkv_w']][bi],
                              preferred_element_type=f32) + pr[bx['qkv_b']][bi]  # (L, 3C)

                def heads(off, _qkv=qkv, _L=L, _hd=hd, _nH=nH):
                    # head-batched (nH, L, hd) view
                    return jnp.concatenate(
                        [_qkv[:, off + h * _hd: off + (h + 1) * _hd].reshape(1, _L, _hd)
                         for h in range(_nH)], axis=0)

                q = heads(0)
                k = heads(C)
                v = heads(2 * C)
                # F.normalize(dim=-1, eps=1e-12) via rsqrt (EUP)
                qn = q * jax.lax.rsqrt(jnp.maximum(jnp.sum(q * q, -1, keepdims=True), 1e-24))
                kn = k * jax.lax.rsqrt(jnp.maximum(jnp.sum(k * k, -1, keepdims=True), 1e-24))
                # head-batched cosine-attention scores (nH, L, L), f32 accumulation
                s = jax.lax.dot_general(qn.astype(bf16), kn.astype(bf16),
                                        (((2,), (2,)), ((0,), (0,))),
                                        preferred_element_type=f32)
                # scale = exp(clamped logit_scale); bias folds rel-pos bias + shift mask
                # + cross-window exclusion (-1e9)
                s = s * pr[bx['scale']][bi] + pr[bx['bias']][bi]
                s = s - jnp.max(s, axis=-1, keepdims=True)
                e = jnp.exp(s)
                p_attn = e * pl.reciprocal(jnp.sum(e, axis=-1, keepdims=True), approx=True)
                o = jax.lax.dot_general(p_attn.astype(bf16), v.astype(bf16),
                                        (((2,), (1,)), ((0,), (0,))),
                                        preferred_element_type=f32)          # (nH, L, hd)
                o2 = jnp.concatenate([o[h] for h in range(nH)], axis=-1)     # (L, C)
                attn_out = jnp.dot(o2.astype(bf16), pr[bx['proj_w']][bi],
                                   preferred_element_type=f32) + pr[bx['proj_b']][bi]
                # SwinV2 post-norm residuals (drop_path 0 -> identity)
                x1 = x + _ln(attn_out, pr[bx['n1g']][bi], pr[bx['n1b']][bi])
                m1 = jnp.dot(x1.astype(bf16), pr[bx['fc1_w']][bi],
                             preferred_element_type=f32) + pr[bx['fc1_b']][bi]
                # TODO(synk): tanh-approx GELU (PyTorch nn.GELU is exact erf) -- deliberate.
                m1 = jax.nn.gelu(m1, approximate=True)
                m2 = jnp.dot(m1.astype(bf16), pr[bx['fc2_w']][bi],
                             preferred_element_type=f32) + pr[bx['fc2_b']][bi]
                x = x1 + _ln(m2, pr[bx['n2g']][bi], pr[bx['n2b']][bi])

            if li < len(DEPTHS) - 1:
                # ---------- PatchMerging V2: 2x2 gather via selection matmuls ----------
                d = index['layers'][li]['downsample']
                xb = x.astype(bf16)
                parts = [jnp.dot(pr[d['sel']][g], xb, preferred_element_type=f32)
                         for g in range(4)]
                xc = jnp.concatenate(parts, axis=-1)                  # (L/4, 4C)
                y = jnp.dot(xc.astype(bf16), V(d['w']), preferred_element_type=f32)
                x = _ln(y, V(d['g']), V(d['b']))                      # V2: norm AFTER reduction
                res = (H // 2, W // 2)

        # ---- final LayerNorm + token mean-pool (AdaptiveAvgPool1d(1)) + head ----
        y = _ln(x, V(index['norm_g']), V(index['norm_b']))
        pooled = jnp.mean(y, axis=0, keepdims=True)                   # (1, num_features)
        o_ref[0] = jnp.dot(pooled.astype(bf16), V(index['head_w']),
                           preferred_element_type=f32) + V(index['head_b'])

    @jax.jit
    def forward(x, arrays):
        B = x.shape[0]
        ps = PATCH_SIZE
        # Conv2d(kernel=stride=patch) == per-patch flatten + matmul; the flatten is a
        # one-off tiny XLA rearrange of the input image.
        patches = (x.reshape(B, IN_CHANS, nh, ps, nw, ps)
                    .transpose(0, 2, 4, 1, 3, 5)
                    .reshape(B, nP, Cpp))
        out = pl.pallas_call(
            kernel,
            grid=(B,),
            out_shape=jax.ShapeDtypeStruct((B, 1, NUM_CLASSES), f32),
            in_specs=[pl.BlockSpec((1, nP, Cpp), lambda b: (b, 0, 0))]
            + [_param_spec(a) for a in arrays],
            out_specs=pl.BlockSpec((1, 1, NUM_CLASSES), lambda b: (b, 0, 0)),
            compiler_params=pltpu.CompilerParams(
                dimension_semantics=("parallel",)),
        )(patches, *arrays)
        return out[:, 0, :]

    return forward


# ----------------------- deterministic parameter init -----------------------
def _init_params(key):
    keys = iter(jax.random.split(key, 256))

    def tn(shape, std=0.02):
        return (std * jax.random.truncated_normal(next(keys), -2.0, 2.0, shape)).astype(jnp.float32)

    params = {}
    conv_w = tn((EMBED_DIM, IN_CHANS, PATCH_SIZE, PATCH_SIZE))  # Conv2d weight (O, C, kh, kw)
    params['patch_embed'] = dict(
        proj_w=conv_w.reshape(EMBED_DIM, -1).T,   # (C*p*p, embed_dim)
        proj_b=jnp.zeros((EMBED_DIM,), jnp.float32),
        norm_g=jnp.ones((EMBED_DIM,), jnp.float32),
        norm_b=jnp.zeros((EMBED_DIM,), jnp.float32),
    )

    layers = []
    num_layers = len(DEPTHS)
    for li, depth in enumerate(DEPTHS):
        dim = EMBED_DIM * (2 ** li)
        nH = NUM_HEADS[li]
        hidden = dim * MLP_RATIO
        blocks = []
        for _ in range(depth):
            blocks.append(dict(
                norm1_g=jnp.ones((dim,), jnp.float32), norm1_b=jnp.zeros((dim,), jnp.float32),
                norm2_g=jnp.ones((dim,), jnp.float32), norm2_b=jnp.zeros((dim,), jnp.float32),
                qkv_w=tn((dim, 3 * dim)),
                q_bias=jnp.zeros((dim,), jnp.float32),
                v_bias=jnp.zeros((dim,), jnp.float32),
                proj_w=tn((dim, dim)), proj_b=jnp.zeros((dim,), jnp.float32),
                logit_scale=jnp.full((nH, 1, 1), float(np.log(10.0)), jnp.float32),
                cpb_w1=tn((2, 512)), cpb_b1=jnp.zeros((512,), jnp.float32),
                cpb_w2=tn((512, nH)),
                fc1_w=tn((dim, hidden)), fc1_b=jnp.zeros((hidden,), jnp.float32),
                fc2_w=tn((hidden, dim)), fc2_b=jnp.zeros((dim,), jnp.float32),
            ))
        layer = dict(blocks=blocks)
        if li < num_layers - 1:
            layer['downsample'] = dict(
                red_w=tn((4 * dim, 2 * dim)),
                norm_g=jnp.ones((2 * dim,), jnp.float32),
                norm_b=jnp.zeros((2 * dim,), jnp.float32),
            )
        layers.append(layer)

    num_features = EMBED_DIM * (2 ** (num_layers - 1))
    params['layers'] = layers
    params['norm_g'] = jnp.ones((num_features,), jnp.float32)
    params['norm_b'] = jnp.zeros((num_features,), jnp.float32)
    params['head_w'] = tn((num_features, NUM_CLASSES))
    params['head_b'] = jnp.zeros((NUM_CLASSES,), jnp.float32)
    return params


if __name__ == "__main__":
    root = jax.random.PRNGKey(0)
    pkey, xkey = jax.random.split(root)
    params = _init_params(pkey)
    arrays, index = prepare_inference_params(params)   # one-time, outside the jitted forward
    fwd = make_satvision_forward(index)
    x = jax.random.normal(xkey, (2, IN_CHANS, IMG_SIZE, IMG_SIZE), jnp.float32)
    logits = fwd(x, arrays)
    jax.block_until_ready(logits)
    assert logits.shape == (2, NUM_CLASSES), logits.shape
    print("KERNEL_OK")
</pallas_src>

<mosaic_0001>
module attributes {stable_mosaic.version = 11 : i64} {
  func.func @kernel(%arg0: i32, %arg1: memref<1x16x64xf32, #tpu.memory_space<vmem>>, %arg2: memref<64x32xbf16, #tpu.memory_space<vmem>>, %arg3: memref<1x32xf32, #tpu.memory_space<vmem>>, %arg4: memref<1x32xf32, #tpu.memory_space<vmem>>, %arg5: memref<1x32xf32, #tpu.memory_space<vmem>>, %arg6: memref<2x32x96xbf16, #tpu.memory_space<vmem>>, %arg7: memref<2x1x96xf32, #tpu.memory_space<vmem>>, %arg8: memref<2x32x32xbf16, #tpu.memory_space<vmem>>, %arg9: memref<2x1x32xf32, #tpu.memory_space<vmem>>, %arg10: memref<2x2x16x1xf32, #tpu.memory_space<vmem>>, %arg11: memref<2x2x16x16xf32, #tpu.memory_space<vmem>>, %arg12: memref<2x1x32xf32, #tpu.memory_space<vmem>>, %arg13: memref<2x1x32xf32, #tpu.memory_space<vmem>>, %arg14: memref<2x32x128xbf16, #tpu.memory_space<vmem>>, %arg15: memref<2x1x128xf32, #tpu.memory_space<vmem>>, %arg16: memref<2x128x32xbf16, #tpu.memory_space<vmem>>, %arg17: memref<2x1x32xf32, #tpu.memory_space<vmem>>, %arg18: memref<2x1x32xf32, #tpu.memory_space<vmem>>, %arg19: memref<2x1x32xf32, #tpu.memory_space<vmem>>, %arg20: memref<4x4x16xbf16, #tpu.memory_space<vmem>>, %arg21: memref<128x64xbf16, #tpu.memory_space<vmem>>, %arg22: memref<1x64xf32, #tpu.memory_space<vmem>>, %arg23: memref<1x64xf32, #tpu.memory_space<vmem>>, %arg24: memref<2x64x192xbf16, #tpu.memory_space<vmem>>, %arg25: memref<2x1x192xf32, #tpu.memory_space<vmem>>, %arg26: memref<2x64x64xbf16, #tpu.memory_space<vmem>>, %arg27: memref<2x1x64xf32, #tpu.memory_space<vmem>>, %arg28: memref<2x4x4x1xf32, #tpu.memory_space<vmem>>, %arg29: memref<2x4x4x4xf32, #tpu.memory_space<vmem>>, %arg30: memref<2x1x64xf32, #tpu.memory_space<vmem>>, %arg31: memref<2x1x64xf32, #tpu.memory_space<vmem>>, %arg32: memref<2x64x256xbf16, #tpu.memory_space<vmem>>, %arg33: memref<2x1x256xf32, #tpu.memory_space<vmem>>, %arg34: memref<2x256x64xbf16, #tpu.memory_space<vmem>>, %arg35: memref<2x1x64xf32, #tpu.memory_space<vmem>>, %arg36: memref<2x1x64xf32, #tpu.memory_space<vmem>>, %arg37: memref<2x1x64xf32, #tpu.memory_space<vmem>>, %arg38: memref<1x64xf32, #tpu.memory_space<vmem>>, %arg39: memref<1x64xf32, #tpu.memory_space<vmem>>, %arg40: memref<64x10xbf16, #tpu.memory_space<vmem>>, %arg41: memref<1x10xf32, #tpu.memory_space<vmem>>, %arg42: memref<1x1x10xf32, #tpu.memory_space<vmem>>) attributes {dimension_semantics = [#tpu.dimension_semantics<parallel>], iteration_bounds = array<i64: 2>, scalar_prefetch = 0 : i64, scratch_operands = 0 : i64, tpu.core_type = #tpu.core_type<tc>, window_params = [{transform_indices = @transform_0, window_bounds = array<i64: 1, 16, 64>}, {pipeline_mode = #tpu.pipeline_mode<synchronous>, transform_indices = @transform_1, window_bounds = array<i64: 64, 32>}, {pipeline_mode = #tpu.pipeline_mode<synchronous>, transform_indices = @transform_2, window_bounds = array<i64: 1, 32>}, {pipeline_mode = #tpu.pipeline_mode<synchronous>, transform_indices = @transform_3, window_bounds = array<i64: 1, 32>}, {pipeline_mode = #tpu.pipeline_mode<synchronous>, transform_indices = @transform_4, window_bounds = array<i64: 1, 32>}, {pipeline_mode = #tpu.pipeline_mode<synchronous>, transform_indices = @transform_5, window_bounds = array<i64: 2, 32, 96>}, {pipeline_mode = #tpu.pipeline_mode<synchronous>, transform_indices = @transform_6, window_bounds = array<i64: 2, 1, 96>}, {pipeline_mode = #tpu.pipeline_mode<synchronous>, transform_indices = @transform_7, window_bounds = array<i64: 2, 32, 32>}, {pipeline_mode = #tpu.pipeline_mode<synchronous>, transform_indices = @transform_8, window_bounds = array<i64: 2, 1, 32>}, {pipeline_mode = #tpu.pipeline_mode<synchronous>, transform_indices = @transform_9, window_bounds = array<i64: 2, 2, 16, 1>}, {pipeline_mode = #tpu.pipeline_mode<synchronous>, transform_indices = @transform_10, window_bounds = array<i64: 2, 2, 16, 16>}, {pipeline_mode = #tpu.pipeline_mode<synchronous>, transform_indices = @transform_11, window_bounds = array<i64: 2, 1, 32>}, {pipeline_mode = #tpu.pipeline_mode<synchronous>, transform_indices = @transform_12, window_bounds = array<i64: 2, 1, 32>}, {pipeline_mode = #tpu.pipeline_mode<synchronous>, transform_indices = @transform_13, window_bounds = array<i64: 2, 32, 128>}, {pipeline_mode = #tpu.pipeline_mode<synchronous>, transform_indices = @transform_14, window_bounds = array<i64: 2, 1, 128>}, {pipeline_mode = #tpu.pipeline_mode<synchronous>, transform_indices = @transform_15, window_bounds = array<i64: 2, 128, 32>}, {pipeline_mode = #tpu.pipeline_mode<synchronous>, transform_indices = @transform_16, window_bounds = array<i64: 2, 1, 32>}, {pipeline_mode = #tpu.pipeline_mode<synchronous>, transform_indices = @transform_17, window_bounds = array<i64: 2, 1, 32>}, {pipeline_mode = #tpu.pipeline_mode<synchronous>, transform_indices = @transform_18, window_bounds = array<i64: 2, 1, 32>}, {pipeline_mode = #tpu.pipeline_mode<synchronous>, transform_indices = @transform_19, window_bounds = array<i64: 4, 4, 16>}, {pipeline_mode = #tpu.pipeline_mode<synchronous>, transform_indices = @transform_20, window_bounds = array<i64: 128, 64>}, {pipeline_mode = #tpu.pipeline_mode<synchronous>, transform_indices = @transform_21, window_bounds = array<i64: 1, 64>}, {pipeline_mode = #tpu.pipeline_mode<synchronous>, transform_indices = @transform_22, window_bounds = array<i64: 1, 64>}, {pipeline_mode = #tpu.pipeline_mode<synchronous>, transform_indices = @transform_23, window_bounds = array<i64: 2, 64, 192>}, {pipeline_mode = #tpu.pipeline_mode<synchronous>, transform_indices = @transform_24, window_bounds = array<i64: 2, 1, 192>}, {pipeline_mode = #tpu.pipeline_mode<synchronous>, transform_indices = @transform_25, window_bounds = array<i64: 2, 64, 64>}, {pipeline_mode = #tpu.pipeline_mode<synchronous>, transform_indices = @transform_26, window_bounds = array<i64: 2, 1, 64>}, {pipeline_mode = #tpu.pipeline_mode<synchronous>, transform_indices = @transform_27, window_bounds = array<i64: 2, 4, 4, 1>}, {pipeline_mode = #tpu.pipeline_mode<synchronous>, transform_indices = @transform_28, window_bounds = array<i64: 2, 4, 4, 4>}, {pipeline_mode = #tpu.pipeline_mode<synchronous>, transform_indices = @transform_29, window_bounds = array<i64: 2, 1, 64>}, {pipeline_mode = #tpu.pipeline_mode<synchronous>, transform_indices = @transform_30, window_bounds = array<i64: 2, 1, 64>}, {pipeline_mode = #tpu.pipeline_mode<synchronous>, transform_indices = @transform_31, window_bounds = array<i64: 2, 64, 256>}, {pipeline_mode = #tpu.pipeline_mode<synchronous>, transform_indices = @transform_32, window_bounds = array<i64: 2, 1, 256>}, {pipeline_mode = #tpu.pipeline_mode<synchronous>, transform_indices = @transform_33, window_bounds = array<i64: 2, 256, 64>}, {pipeline_mode = #tpu.pipeline_mode<synchronous>, transform_indices = @transform_34, window_bounds = array<i64: 2, 1, 64>}, {pipeline_mode = #tpu.pipeline_mode<synchronous>, transform_indices = @transform_35, window_bounds = array<i64: 2, 1, 64>}, {pipeline_mode = #tpu.pipeline_mode<synchronous>, transform_indices = @transform_36, window_bounds = array<i64: 2, 1, 64>}, {pipeline_mode = #tpu.pipeline_mode<synchronous>, transform_indices = @transform_37, window_bounds = array<i64: 1, 64>}, {pipeline_mode = #tpu.pipeline_mode<synchronous>, transform_indices = @transform_38, window_bounds = array<i64: 1, 64>}, {pipeline_mode = #tpu.pipeline_mode<synchronous>, transform_indices = @transform_39, window_bounds = array<i64: 64, 10>}, {pipeline_mode = #tpu.pipeline_mode<synchronous>, transform_indices = @transform_40, window_bounds = array<i64: 1, 10>}, {transform_indices = @transform_41, window_bounds = array<i64: 1, 1, 10>}]} {
    %c0 = arith.constant 0 : index
    %c0_0 = arith.constant 0 : index
    %c0_1 = arith.constant 0 : index
    %0 = vector.load %arg1[%c0, %c0_0, %c0_1] : memref<1x16x64xf32, #tpu.memory_space<vmem>>, vector<1x16x64xf32>
    %1 = vector.shape_cast %0 : vector<1x16x64xf32> to vector<16x64xf32>
    %2 = arith.truncf %1 : vector<16x64xf32> to vector<16x64xbf16>
    %c0_2 = arith.constant 0 : index
    %c0_3 = arith.constant 0 : index
    %3 = vector.load %arg2[%c0_2, %c0_3] : memref<64x32xbf16, #tpu.memory_space<vmem>>, vector<64x32xbf16>
    %cst = arith.constant dense<0.000000e+00> : vector<16x32xf32>
    %4 = tpu.matmul %2, %3, %cst {dimension_numbers = #tpu.dot_dimension_numbers<[1], [0], [0], [1], [0, 0, 1, 1], [], []>} : vector<16x64xbf16>, vector<64x32xbf16>, vector<16x32xf32> -> vector<16x32xf32>
    %c0_4 = arith.constant 0 : index
    %c0_5 = arith.constant 0 : index
    %5 = vector.load %arg3[%c0_4, %c0_5] : memref<1x32xf32, #tpu.memory_space<vmem>>, vector<1x32xf32>
    %6 = vector.broadcast %5 : vector<1x32xf32> to vector<16x32xf32>
    %7 = arith.addf %4, %6 : vector<16x32xf32>
    %c0_6 = arith.constant 0 : index
    %c0_7 = arith.constant 0 : index
    %8 = vector.load %arg4[%c0_6, %c0_7] : memref<1x32xf32, #tpu.memory_space<vmem>>, vector<1x32xf32>
    %c0_8 = arith.constant 0 : index
    %c0_9 = arith.constant 0 : index
    %9 = vector.load %arg5[%c0_8, %c0_9] : memref<1x32xf32, #tpu.memory_space<vmem>>, vector<1x32xf32>
    %cst_10 = arith.constant dense<0.000000e+00> : vector<16xf32>
    %10 = vector.multi_reduction <add>, %7, %cst_10 [1] : vector<16x32xf32> to vector<16xf32>
    %11 = vector.shape_cast %10 : vector<16xf32> to vector<16x1xf32>
    %cst_11 = arith.constant 3.200000e+01 : f32
    %12 = vector.broadcast %cst_11 : f32 to vector<16x1xf32>
    %13 = arith.divf %11, %12 : vector<16x1xf32>
    %14 = vector.broadcast %13 : vector<16x1xf32> to vector<16x32xf32>
    %15 = arith.subf %7, %14 : vector<16x32xf32>
    %16 = arith.mulf %15, %15 : vector<16x32xf32>
    %cst_12 = arith.constant dense<0.000000e+00> : vector<16xf32>
    %17 = vector.multi_reduction <add>, %16, %cst_12 [1] : vector<16x32xf32> to vector<16xf32>
    %18 = vector.shape_cast %17 : vector<16xf32> to vector<16x1xf32>
    %cst_13 = arith.constant 3.200000e+01 : f32
    %19 = vector.broadcast %cst_13 : f32 to vector<16x1xf32>
    %20 = arith.divf %18, %19 : vector<16x1xf32>
    %cst_14 = arith.constant 9.99999974E-6 : f32
    %21 = vector.broadcast %cst_14 : f32 to vector<16x1xf32>
    %22 = arith.addf %20, %21 : vector<16x1xf32>
    %23 = math.rsqrt %22 : vector<16x1xf32>
    %24 = vector.broadcast %23 : vector<16x1xf32> to vector<16x32xf32>
    %25 = arith.mulf %15, %24 : vector<16x32xf32>
    %26 = vector.broadcast %8 : vector<1x32xf32> to vector<16x32xf32>
    %27 = arith.mulf %25, %26 : vector<16x32xf32>
    %28 = vector.broadcast %9 : vector<1x32xf32> to vector<16x32xf32>
    %29 = arith.addf %27, %28 : vector<16x32xf32>
    %30 = arith.truncf %29 : vector<16x32xf32> to vector<16x32xbf16>
    %c0_15 = arith.constant 0 : index
    %c0_16 = arith.constant 0 : index
    %c0_17 = arith.constant 0 : index
    %31 = vector.load %arg6[%c0_15, %c0_16, %c0_17] : memref<2x32x96xbf16, #tpu.memory_space<vmem>>, vector<1x32x96xbf16>
    %32 = vector.shape_cast %31 : vector<1x32x96xbf16> to vector<32x96xbf16>
    %cst_18 = arith.constant dense<0.000000e+00> : vector<16x96xf32>
    %33 = tpu.matmul %30, %32, %cst_18 {dimension_numbers = #tpu.dot_dimension_numbers<[1], [0], [0], [1], [0, 0, 1, 1], [], []>} : vector<16x32xbf16>, vector<32x96xbf16>, vector<16x96xf32> -> vector<16x96xf32>
    %c0_19 = arith.constant 0 : index
    %c0_20 = arith.constant 0 : index
    %c0_21 = arith.constant 0 : index
    %34 = vector.load %arg7[%c0_19, %c0_20, %c0_21] : memref<2x1x96xf32, #tpu.memory_space<vmem>>, vector<1x1x96xf32>
    %35 = vector.shape_cast %34 : vector<1x1x96xf32> to vector<1x96xf32>
    %36 = vector.broadcast %35 : vector<1x96xf32> to vector<16x96xf32>
    %37 = arith.addf %33, %36 : vector<16x96xf32>
    %38 = vector.extract_strided_slice %37 {offsets = [0, 0], sizes = [16, 16], strides = [1, 1]} : vector<16x96xf32> to vector<16x16xf32>
    %39 = vector.shape_cast %38 : vector<16x16xf32> to vector<1x16x16xf32>
    %40 = vector.extract_strided_slice %37 {offsets = [0, 16], sizes = [16, 16], strides = [1, 1]} : vector<16x96xf32> to vector<16x16xf32>
    %41 = vector.shape_cast %40 : vector<16x16xf32> to vector<1x16x16xf32>
    %42 = tpu.concatenate %39, %41 in 0 : vector<1x16x16xf32>, vector<1x16x16xf32> -> vector<2x16x16xf32>
    %43 = vector.extract_strided_slice %37 {offsets = [0, 32], sizes = [16, 16], strides = [1, 1]} : vector<16x96xf32> to vector<16x16xf32>
    %44 = vector.shape_cast %43 : vector<16x16xf32> to vector<1x16x16xf32>
    %45 = vector.extract_strided_slice %37 {offsets = [0, 48], sizes = [16, 16], strides = [1, 1]} : vector<16x96xf32> to vector<16x16xf32>
    %46 = vector.shape_cast %45 : vector<16x16xf32> to vector<1x16x16xf32>
    %47 = tpu.concatenate %44, %46 in 0 : vector<1x16x16xf32>, vector<1x16x16xf32> -> vector<2x16x16xf32>
    %48 = vector.extract_strided_slice %37 {offsets = [0, 64], sizes = [16, 16], strides = [1, 1]} : vector<16x96xf32> to vector<16x16xf32>
    %49 = vector.shape_cast %48 : vector<16x16xf32> to vector<1x16x16xf32>
    %50 = vector.extract_strided_slice %37 {offsets = [0, 80], sizes = [16, 16], strides = [1, 1]} : vector<16x96xf32> to vector<16x16xf32>
    %51 = vector.shape_cast %50 : vector<16x16xf32> to vector<1x16x16xf32>
    %52 = tpu.concatenate %49, %51 in 0 : vector<1x16x16xf32>, vector<1x16x16xf32> -> vector<2x16x16xf32>
    %53 = arith.mulf %42, %42 : vector<2x16x16xf32>
    %cst_22 = arith.constant dense<0.000000e+00> : vector<2x16xf32>
    %54 = vector.multi_reduction <add>, %53, %cst_22 [2] : vector<2x16x16xf32> to vector<2x16xf32>
    %55 = vector.shape_cast %54 : vector<2x16xf32> to vector<2x16x1xf32>
    %cst_23 = arith.constant 1.000000e-24 : f32
    %56 = vector.broadcast %cst_23 : f32 to vector<2x16x1xf32>
    %57 = arith.maximumf %55, %56 : vector<2x16x1xf32>
    %58 = math.rsqrt %57 : vector<2x16x1xf32>
    %59 = vector.broadcast %58 : vector<2x16x1xf32> to vector<2x16x16xf32>
    %60 = arith.mulf %42, %59 : vector<2x16x16xf32>
    %61 = arith.mulf %47, %47 : vector<2x16x16xf32>
    %cst_24 = arith.constant dense<0.000000e+00> : vector<2x16xf32>
    %62 = vector.multi_reduction <add>, %61, %cst_24 [2] : vector<2x16x16xf32> to vector<2x16xf32>
    %63 = vector.shape_cast %62 : vector<2x16xf32> to vector<2x16x1xf32>
    %cst_25 = arith.constant 1.000000e-24 : f32
    %64 = vector.broadcast %cst_25 : f32 to vector<2x16x1xf32>
    %65 = arith.maximumf %63, %64 : vector<2x16x1xf32>
    %66 = math.rsqrt %65 : vector<2x16x1xf32>
    %67 = vector.broadcast %66 : vector<2x16x1xf32> to vector<2x16x16xf32>
    %68 = arith.mulf %47, %67 : vector<2x16x16xf32>
    %69 = arith.truncf %60 : vector<2x16x16xf32> to vector<2x16x16xbf16>
    %70 = arith.truncf %68 : vector<2x16x16xf32> to vector<2x16x16xbf16>
    %cst_26 = arith.constant dense<0.000000e+00> : vector<2x16x16xf32>
    %71 = tpu.matmul %69, %70, %cst_26 {dimension_numbers = #tpu.dot_dimension_numbers<[2], [2], [1], [1], [0, 0, 0, 1, 1, 1], [0], [0]>} : vector<2x16x16xbf16>, vector<2x16x16xbf16>, vector<2x16x16xf32> -> vector<2x16x16xf32>
    %c0_27 = arith.constant 0 : index
    %c0_28 = arith.constant 0 : index
    %c0_29 = arith.constant 0 : index
    %c0_30 = arith.constant 0 : index
    %72 = vector.load %arg10[%c0_27, %c0_28, %c0_29, %c0_30] : memref<2x2x16x1xf32, #tpu.memory_space<vmem>>, vector<1x2x16x1xf32>
    %73 = vector.shape_cast %72 : vector<1x2x16x1xf32> to vector<2x16x1xf32>
    %74 = vector.broadcast %73 : vector<2x16x1xf32> to vector<2x16x16xf32>
    %75 = arith.mulf %71, %74 : vector<2x16x16xf32>
    %c0_31 = arith.constant 0 : index
    %c0_32 = arith.constant 0 : index
    %c0_33 = arith.constant 0 : index
    %c0_34 = arith.constant 0 : index
    %76 = vector.load %arg11[%c0_31, %c0_32, %c0_33, %c0_34] : memref<2x2x16x16xf32, #tpu.memory_space<vmem>>, vector<1x2x16x16xf32>
    %77 = vector.shape_cast %76 : vector<1x2x16x16xf32> to vector<2x16x16xf32>
    %78 = arith.addf %75, %77 : vector<2x16x16xf32>
    %cst_35 = arith.constant dense<0xFF800000> : vector<2x16xf32>
    %79 = vector.multi_reduction <maximumf>, %78, %cst_35 [2] : vector<2x16x16xf32> to vector<2x16xf32>
    %80 = vector.shape_cast %79 : vector<2x16xf32> to vector<2x16x1xf32>
    %81 = vector.broadcast %80 : vector<2x16x1xf32> to vector<2x16x16xf32>
    %82 = arith.subf %78, %81 : vector<2x16x16xf32>
    %83 = math.exp %82 : vector<2x16x16xf32>
    %cst_36 = arith.constant dense<0.000000e+00> : vector<2x16xf32>
    %84 = vector.multi_reduction <add>, %83, %cst_36 [2] : vector<2x16x16xf32> to vector<2x16xf32>
    %85 = vector.shape_cast %84 : vector<2x16xf32> to vector<2x16x1xf32>
    %86 = tpu.reciprocal %85 {approx = true} : vector<2x16x1xf32> -> vector<2x16x1xf32>
    %87 = vector.broadcast %86 : vector<2x16x1xf32> to vector<2x16x16xf32>
    %88 = arith.mulf %83, %87 : vector<2x16x16xf32>
    %89 = arith.truncf %88 : vector<2x16x16xf32> to vector<2x16x16xbf16>
    %90 = arith.truncf %52 : vector<2x16x16xf32> to vector<2x16x16xbf16>
    %cst_37 = arith.constant dense<0.000000e+00> : vector<2x16x16xf32>
    %91 = tpu.matmul %89, %90, %cst_37 {dimension_numbers = #tpu.dot_dimension_numbers<[2], [1], [1], [2], [0, 0, 0, 1, 1, 2], [0], [0]>} : vector<2x16x16xbf16>, vector<2x16x16xbf16>, vector<2x16x16xf32> -> vector<2x16x16xf32>
    %92 = vector.extract_strided_slice %91 {offsets = [0, 0, 0], sizes = [1, 16, 16], strides = [1, 1, 1]} : vector<2x16x16xf32> to vector<1x16x16xf32>
    %93 = vector.shape_cast %92 : vector<1x16x16xf32> to vector<16x16xf32>
    %94 = vector.extract_strided_slice %91 {offsets = [1, 0, 0], sizes = [1, 16, 16], strides = [1, 1, 1]} : vector<2x16x16xf32> to vector<1x16x16xf32>
    %95 = vector.shape_cast %94 : vector<1x16x16xf32> to vector<16x16xf32>
    %96 = tpu.concatenate %93, %95 in 1 : vector<16x16xf32>, vector<16x16xf32> -> vector<16x32xf32>
    %97 = arith.truncf %96 : vector<16x32xf32> to vector<16x32xbf16>
    %c0_38 = arith.constant 0 : index
    %c0_39 = arith.constant 0 : index
    %c0_40 = arith.constant 0 : index
    %98 = vector.load %arg8[%c0_38, %c0_39, %c0_40] : memref<2x32x32xbf16, #tpu.memory_space<vmem>>, vector<1x32x32xbf16>
    %99 = vector.shape_cast %98 : vector<1x32x32xbf16> to vector<32x32xbf16>
    %cst_41 = arith.constant dense<0.000000e+00> : vector<16x32xf32>
    %100 = tpu.matmul %97, %99, %cst_41 {dimension_numbers = #tpu.dot_dimension_numbers<[1], [0], [0], [1], [0, 0, 1, 1], [], []>} : vector<16x32xbf16>, vector<32x32xbf16>, vector<16x32xf32> -> vector<16x32xf32>
    %c0_42 = arith.constant 0 : index
    %c0_43 = arith.constant 0 : index
    %c0_44 = arith.constant 0 : index
    %101 = vector.load %arg9[%c0_42, %c0_43, %c0_44] : memref<2x1x32xf32, #tpu.memory_space<vmem>>, vector<1x1x32xf32>
    %102 = vector.shape_cast %101 : vector<1x1x32xf32> to vector<1x32xf32>
    %103 = vector.broadcast %102 : vector<1x32xf32> to vector<16x32xf32>
    %104 = arith.addf %100, %103 : vector<16x32xf32>
    %c0_45 = arith.constant 0 : index
    %c0_46 = arith.constant 0 : index
    %c0_47 = arith.constant 0 : index
    %105 = vector.load %arg12[%c0_45, %c0_46, %c0_47] : memref<2x1x32xf32, #tpu.memory_space<vmem>>, vector<1x1x32xf32>
    %106 = vector.shape_cast %105 : vector<1x1x32xf32> to vector<1x32xf32>
    %c0_48 = arith.constant 0 : index
    %c0_49 = arith.constant 0 : index
    %c0_50 = arith.constant 0 : index
    %107 = vector.load %arg13[%c0_48, %c0_49, %c0_50] : memref<2x1x32xf32, #tpu.memory_space<vmem>>, vector<1x1x32xf32>
    %108 = vector.shape_cast %107 : vector<1x1x32xf32> to vector<1x32xf32>
    %cst_51 = arith.constant dense<0.000000e+00> : vector<16xf32>
    %109 = vector.multi_reduction <add>, %104, %cst_51 [1] : vector<16x32xf32> to vector<16xf32>
    %110 = vector.shape_cast %109 : vector<16xf32> to vector<16x1xf32>
    %cst_52 = arith.constant 3.200000e+01 : f32
    %111 = vector.broadcast %cst_52 : f32 to vector<16x1xf32>
    %112 = arith.divf %110, %111 : vector<16x1xf32>
    %113 = vector.broadcast %112 : vector<16x1xf32> to vector<16x32xf32>
    %114 = arith.subf %104, %113 : vector<16x32xf32>
    %115 = arith.mulf %114, %114 : vector<16x32xf32>
    %cst_53 = arith.constant dense<0.000000e+00> : vector<16xf32>
    %116 = vector.multi_reduction <add>, %115, %cst_53 [1] : vector<16x32xf32> to vector<16xf32>
    %117 = vector.shape_cast %116 : vector<16xf32> to vector<16x1xf32>
    %cst_54 = arith.constant 3.200000e+01 : f32
    %118 = vector.broadcast %cst_54 : f32 to vector<16x1xf32>
    %119 = arith.divf %117, %118 : vector<16x1xf32>
    %cst_55 = arith.constant 9.99999974E-6 : f32
    %120 = vector.broadcast %cst_55 : f32 to vector<16x1xf32>
    %121 = arith.addf %119, %120 : vector<16x1xf32>
    %122 = math.rsqrt %121 : vector<16x1xf32>
    %123 = vector.broadcast %122 : vector<16x1xf32> to vector<16x32xf32>
    %124 = arith.mulf %114, %123 : vector<16x32xf32>
    %125 = vector.broadcast %106 : vector<1x32xf32> to vector<16x32xf32>
    %126 = arith.mulf %124, %125 : vector<16x32xf32>
    %127 = vector.broadcast %108 : vector<1x32xf32> to vector<16x32xf32>
    %128 = arith.addf %126, %127 : vector<16x32xf32>
    %129 = arith.addf %29, %128 : vector<16x32xf32>
    %130 = arith.truncf %129 : vector<16x32xf32> to vector<16x32xbf16>
    %c0_56 = arith.constant 0 : index
    %c0_57 = arith.constant 0 : index
    %c0_58 = arith.constant 0 : index
    %131 = vector.load %arg14[%c0_56, %c0_57, %c0_58] : memref<2x32x128xbf16, #tpu.memory_space<vmem>>, vector<1x32x128xbf16>
    %132 = vector.shape_cast %131 : vector<1x32x128xbf16> to vector<32x128xbf16>
    %cst_59 = arith.constant dense<0.000000e+00> : vector<16x128xf32>
    %133 = tpu.matmul %130, %132, %cst_59 {dimension_numbers = #tpu.dot_dimension_numbers<[1], [0], [0], [1], [0, 0, 1, 1], [], []>} : vector<16x32xbf16>, vector<32x128xbf16>, vector<16x128xf32> -> vector<16x128xf32>
    %c0_60 = arith.constant 0 : index
    %c0_61 = arith.constant 0 : index
    %c0_62 = arith.constant 0 : index
    %134 = vector.load %arg15[%c0_60, %c0_61, %c0_62] : memref<2x1x128xf32, #tpu.memory_space<vmem>>, vector<1x1x128xf32>
    %135 = vector.shape_cast %134 : vector<1x1x128xf32> to vector<1x128xf32>
    %136 = vector.broadcast %135 : vector<1x128xf32> to vector<16x128xf32>
    %137 = arith.addf %133, %136 : vector<16x128xf32>
    %138 = arith.mulf %137, %137 : vector<16x128xf32>
    %139 = arith.mulf %137, %138 : vector<16x128xf32>
    %cst_63 = arith.constant 4.471500e-02 : f32
    %140 = vector.broadcast %cst_63 : f32 to vector<16x128xf32>
    %141 = arith.mulf %140, %139 : vector<16x128xf32>
    %142 = arith.addf %137, %141 : vector<16x128xf32>
    %cst_64 = arith.constant 0.797884583 : f32
    %143 = vector.broadcast %cst_64 : f32 to vector<16x128xf32>
    %144 = arith.mulf %143, %142 : vector<16x128xf32>
    %145 = math.tanh %144 : vector<16x128xf32>
    %cst_65 = arith.constant 1.000000e+00 : f32
    %146 = vector.broadcast %cst_65 : f32 to vector<16x128xf32>
    %147 = arith.addf %146, %145 : vector<16x128xf32>
    %cst_66 = arith.constant 5.000000e-01 : f32
    %148 = vector.broadcast %cst_66 : f32 to vector<16x128xf32>
    %149 = arith.mulf %148, %147 : vector<16x128xf32>
    %150 = arith.mulf %137, %149 : vector<16x128xf32>
    %151 = arith.truncf %150 : vector<16x128xf32> to vector<16x128xbf16>
    %c0_67 = arith.constant 0 : index
    %c0_68 = arith.constant 0 : index
    %c0_69 = arith.constant 0 : index
    %152 = vector.load %arg16[%c0_67, %c0_68, %c0_69] : memref<2x128x32xbf16, #tpu.memory_space<vmem>>, vector<1x128x32xbf16>
    %153 = vector.shape_cast %152 : vector<1x128x32xbf16> to vector<128x32xbf16>
    %cst_70 = arith.constant dense<0.000000e+00> : vector<16x32xf32>
    %154 = tpu.matmul %151, %153, %cst_70 {dimension_numbers = #tpu.dot_dimension_numbers<[1], [0], [0], [1], [0, 0, 1, 1], [], []>} : vector<16x128xbf16>, vector<128x32xbf16>, vector<16x32xf32> -> vector<16x32xf32>
    %c0_71 = arith.constant 0 : index
    %c0_72 = arith.constant 0 : index
    %c0_73 = arith.constant 0 : index
    %155 = vector.load %arg17[%c0_71, %c0_72, %c0_73] : memref<2x1x32xf32, #tpu.memory_space<vmem>>, vector<1x1x32xf32>
    %156 = vector.shape_cast %155 : vector<1x1x32xf32> to vector<1x32xf32>
    %157 = vector.broadcast %156 : vector<1x32xf32> to vector<16x32xf32>
    %158 = arith.addf %154, %157 : vector<16x32xf32>
    %c0_74 = arith.constant 0 : index
    %c0_75 = arith.constant 0 : index
    %c0_76 = arith.constant 0 : index
    %159 = vector.load %arg18[%c0_74, %c0_75, %c0_76] : memref<2x1x32xf32, #tpu.memory_space<vmem>>, vector<1x1x32xf32>
    %160 = vector.shape_cast %159 : vector<1x1x32xf32> to vector<1x32xf32>
    %c0_77 = arith.constant 0 : index
    %c0_78 = arith.constant 0 : index
    %c0_79 = arith.constant 0 : index
    %161 = vector.load %arg19[%c0_77, %c0_78, %c0_79] : memref<2x1x32xf32, #tpu.memory_space<vmem>>, vector<1x1x32xf32>
    %162 = vector.shape_cast %161 : vector<1x1x32xf32> to vector<1x32xf32>
    %cst_80 = arith.constant dense<0.000000e+00> : vector<16xf32>
    %163 = vector.multi_reduction <add>, %158, %cst_80 [1] : vector<16x32xf32> to vector<16xf32>
    %164 = vector.shape_cast %163 : vector<16xf32> to vector<16x1xf32>
    %cst_81 = arith.constant 3.200000e+01 : f32
    %165 = vector.broadcast %cst_81 : f32 to vector<16x1xf32>
    %166 = arith.divf %164, %165 : vector<16x1xf32>
    %167 = vector.broadcast %166 : vector<16x1xf32> to vector<16x32xf32>
    %168 = arith.subf %158, %167 : vector<16x32xf32>
    %169 = arith.mulf %168, %168 : vector<16x32xf32>
    %cst_82 = arith.constant dense<0.000000e+00> : vector<16xf32>
    %170 = vector.multi_reduction <add>, %169, %cst_82 [1] : vector<16x32xf32> to vector<16xf32>
    %171 = vector.shape_cast %170 : vector<16xf32> to vector<16x1xf32>
    %cst_83 = arith.constant 3.200000e+01 : f32
    %172 = vector.broadcast %cst_83 : f32 to vector<16x1xf32>
    %173 = arith.divf %171, %172 : vector<16x1xf32>
    %cst_84 = arith.constant 9.99999974E-6 : f32
    %174 = vector.broadcast %cst_84 : f32 to vector<16x1xf32>
    %175 = arith.addf %173, %174 : vector<16x1xf32>
    %176 = math.rsqrt %175 : vector<16x1xf32>
    %177 = vector.broadcast %176 : vector<16x1xf32> to vector<16x32xf32>
    %178 = arith.mulf %168, %177 : vector<16x32xf32>
    %179 = vector.broadcast %160 : vector<1x32xf32> to vector<16x32xf32>
    %180 = arith.mulf %178, %179 : vector<16x32xf32>
    %181 = vector.broadcast %162 : vector<1x32xf32> to vector<16x32xf32>
    %182 = arith.addf %180, %181 : vector<16x32xf32>
    %183 = arith.addf %129, %182 : vector<16x32xf32>
    %184 = arith.truncf %183 : vector<16x32xf32> to vector<16x32xbf16>
    %c1 = arith.constant 1 : index
    %c0_85 = arith.constant 0 : index
    %c0_86 = arith.constant 0 : index
    %185 = vector.load %arg6[%c1, %c0_85, %c0_86] : memref<2x32x96xbf16, #tpu.memory_space<vmem>>, vector<1x32x96xbf16>
    %186 = vector.shape_cast %185 : vector<1x32x96xbf16> to vector<32x96xbf16>
    %cst_87 = arith.constant dense<0.000000e+00> : vector<16x96xf32>
    %187 = tpu.matmul %184, %186, %cst_87 {dimension_numbers = #tpu.dot_dimension_numbers<[1], [0], [0], [1], [0, 0, 1, 1], [], []>} : vector<16x32xbf16>, vector<32x96xbf16>, vector<16x96xf32> -> vector<16x96xf32>
    %c1_88 = arith.constant 1 : index
    %c0_89 = arith.constant 0 : index
    %c0_90 = arith.constant 0 : index
    %188 = vector.load %arg7[%c1_88, %c0_89, %c0_90] : memref<2x1x96xf32, #tpu.memory_space<vmem>>, vector<1x1x96xf32>
    %189 = vector.shape_cast %188 : vector<1x1x96xf32> to vector<1x96xf32>
    %190 = vector.broadcast %189 : vector<1x96xf32> to vector<16x96xf32>
    %191 = arith.addf %187, %190 : vector<16x96xf32>
    %192 = vector.extract_strided_slice %191 {offsets = [0, 0], sizes = [16, 16], strides = [1, 1]} : vector<16x96xf32> to vector<16x16xf32>
    %193 = vector.shape_cast %192 : vector<16x16xf32> to vector<1x16x16xf32>
    %194 = vector.extract_strided_slice %191 {offsets = [0, 16], sizes = [16, 16], strides = [1, 1]} : vector<16x96xf32> to vector<16x16xf32>
    %195 = vector.shape_cast %194 : vector<16x16xf32> to vector<1x16x16xf32>
    %196 = tpu.concatenate %193, %195 in 0 : vector<1x16x16xf32>, vector<1x16x16xf32> -> vector<2x16x16xf32>
    %197 = vector.extract_strided_slice %191 {offsets = [0, 32], sizes = [16, 16], strides = [1, 1]} : vector<16x96xf32> to vector<16x16xf32>
    %198 = vector.shape_cast %197 : vector<16x16xf32> to vector<1x16x16xf32>
    %199 = vector.extract_strided_slice %191 {offsets = [0, 48], sizes = [16, 16], strides = [1, 1]} : vector<16x96xf32> to vector<16x16xf32>
    %200 = vector.shape_cast %199 : vector<16x16xf32> to vector<1x16x16xf32>
    %201 = tpu.concatenate %198, %200 in 0 : vector<1x16x16xf32>, vector<1x16x16xf32> -> vector<2x16x16xf32>
    %202 = vector.extract_strided_slice %191 {offsets = [0, 64], sizes = [16, 16], strides = [1, 1]} : vector<16x96xf32> to vector<16x16xf32>
    %203 = vector.shape_cast %202 : vector<16x16xf32> to vector<1x16x16xf32>
    %204 = vector.extract_strided_slice %191 {offsets = [0, 80], sizes = [16, 16], strides = [1, 1]} : vector<16x96xf32> to vector<16x16xf32>
    %205 = vector.shape_cast %204 : vector<16x16xf32> to vector<1x16x16xf32>
    %206 = tpu.concatenate %203, %205 in 0 : vector<1x16x16xf32>, vector<1x16x16xf32> -> vector<2x16x16xf32>
    %207 = arith.mulf %196, %196 : vector<2x16x16xf32>
    %cst_91 = arith.constant dense<0.000000e+00> : vector<2x16xf32>
    %208 = vector.multi_reduction <add>, %207, %cst_91 [2] : vector<2x16x16xf32> to vector<2x16xf32>
    %209 = vector.shape_cast %208 : vector<2x16xf32> to vector<2x16x1xf32>
    %cst_92 = arith.constant 1.000000e-24 : f32
    %210 = vector.broadcast %cst_92 : f32 to vector<2x16x1xf32>
    %211 = arith.maximumf %209, %210 : vector<2x16x1xf32>
    %212 = math.rsqrt %211 : vector<2x16x1xf32>
    %213 = vector.broadcast %212 : vector<2x16x1xf32> to vector<2x16x16xf32>
    %214 = arith.mulf %196, %213 : vector<2x16x16xf32>
    %215 = arith.mulf %201, %201 : vector<2x16x16xf32>
    %cst_93 = arith.constant dense<0.000000e+00> : vector<2x16xf32>
    %216 = vector.multi_reduction <add>, %215, %cst_93 [2] : vector<2x16x16xf32> to vector<2x16xf32>
    %217 = vector.shape_cast %216 : vector<2x16xf32> to vector<2x16x1xf32>
    %cst_94 = arith.constant 1.000000e-24 : f32
    %218 = vector.broadcast %cst_94 : f32 to vector<2x16x1xf32>
    %219 = arith.maximumf %217, %218 : vector<2x16x1xf32>
    %220 = math.rsqrt %219 : vector<2x16x1xf32>
    %221 = vector.broadcast %220 : vector<2x16x1xf32> to vector<2x16x16xf32>
    %222 = arith.mulf %201, %221 : vector<2x16x16xf32>
    %223 = arith.truncf %214 : vector<2x16x16xf32> to vector<2x16x16xbf16>
    %224 = arith.truncf %222 : vector<2x16x16xf32> to vector<2x16x16xbf16>
    %cst_95 = arith.constant dense<0.000000e+00> : vector<2x16x16xf32>
    %225 = tpu.matmul %223, %224, %cst_95 {dimension_numbers = #tpu.dot_dimension_numbers<[2], [2], [1], [1], [0, 0, 0, 1, 1, 1], [0], [0]>} : vector<2x16x16xbf16>, vector<2x16x16xbf16>, vector<2x16x16xf32> -> vector<2x16x16xf32>
    %c1_96 = arith.constant 1 : index
    %c0_97 = arith.constant 0 : index
    %c0_98 = arith.constant 0 : index
    %c0_99 = arith.constant 0 : index
    %226 = vector.load %arg10[%c1_96, %c0_97, %c0_98, %c0_99] : memref<2x2x16x1xf32, #tpu.memory_space<vmem>>, vector<1x2x16x1xf32>
    %227 = vector.shape_cast %226 : vector<1x2x16x1xf32> to vector<2x16x1xf32>
    %228 = vector.broadcast %227 : vector<2x16x1xf32> to vector<2x16x16xf32>
    %229 = arith.mulf %225, %228 : vector<2x16x16xf32>
    %c1_100 = arith.constant 1 : index
    %c0_101 = arith.constant 0 : index
    %c0_102 = arith.constant 0 : index
    %c0_103 = arith.constant 0 : index
    %230 = vector.load %arg11[%c1_100, %c0_101, %c0_102, %c0_103] : memref<2x2x16x16xf32, #tpu.memory_space<vmem>>, vector<1x2x16x16xf32>
    %231 = vector.shape_cast %230 : vector<1x2x16x16xf32> to vector<2x16x16xf32>
    %232 = arith.addf %229, %231 : vector<2x16x16xf32>
    %cst_104 = arith.constant dense<0xFF800000> : vector<2x16xf32>
    %233 = vector.multi_reduction <maximumf>, %232, %cst_104 [2] : vector<2x16x16xf32> to vector<2x16xf32>
    %234 = vector.shape_cast %233 : vector<2x16xf32> to vector<2x16x1xf32>
    %235 = vector.broadcast %234 : vector<2x16x1xf32> to vector<2x16x16xf32>
    %236 = arith.subf %232, %235 : vector<2x16x16xf32>
    %237 = math.exp %236 : vector<2x16x16xf32>
    %cst_105 = arith.constant dense<0.000000e+00> : vector<2x16xf32>
    %238 = vector.multi_reduction <add>, %237, %cst_105 [2] : vector<2x16x16xf32> to vector<2x16xf32>
    %239 = vector.shape_cast %238 : vector<2x16xf32> to vector<2x16x1xf32>
    %240 = tpu.reciprocal %239 {approx = true} : vector<2x16x1xf32> -> vector<2x16x1xf32>
    %241 = vector.broadcast %240 : vector<2x16x1xf32> to vector<2x16x16xf32>
    %242 = arith.mulf %237, %241 : vector<2x16x16xf32>
    %243 = arith.truncf %242 : vector<2x16x16xf32> to vector<2x16x16xbf16>
    %244 = arith.truncf %206 : vector<2x16x16xf32> to vector<2x16x16xbf16>
    %cst_106 = arith.constant dense<0.000000e+00> : vector<2x16x16xf32>
    %245 = tpu.matmul %243, %244, %cst_106 {dimension_numbers = #tpu.dot_dimension_numbers<[2], [1], [1], [2], [0, 0, 0, 1, 1, 2], [0], [0]>} : vector<2x16x16xbf16>, vector<2x16x16xbf16>, vector<2x16x16xf32> -> vector<2x16x16xf32>
    %246 = vector.extract_strided_slice %245 {offsets = [0, 0, 0], sizes = [1, 16, 16], strides = [1, 1, 1]} : vector<2x16x16xf32> to vector<1x16x16xf32>
    %247 = vector.shape_cast %246 : vector<1x16x16xf32> to vector<16x16xf32>
    %248 = vector.extract_strided_slice %245 {offsets = [1, 0, 0], sizes = [1, 16, 16], strides = [1, 1, 1]} : vector<2x16x16xf32> to vector<1x16x16xf32>
    %249 = vector.shape_cast %248 : vector<1x16x16xf32> to vector<16x16xf32>
    %250 = tpu.concatenate %247, %249 in 1 : vector<16x16xf32>, vector<16x16xf32> -> vector<16x32xf32>
    %251 = arith.truncf %250 : vector<16x32xf32> to vector<16x32xbf16>
    %c1_107 = arith.constant 1 : index
    %c0_108 = arith.constant 0 : index
    %c0_109 = arith.constant 0 : index
    %252 = vector.load %arg8[%c1_107, %c0_108, %c0_109] : memref<2x32x32xbf16, #tpu.memory_space<vmem>>, vector<1x32x32xbf16>
    %253 = vector.shape_cast %252 : vector<1x32x32xbf16> to vector<32x32xbf16>
    %cst_110 = arith.constant dense<0.000000e+00> : vector<16x32xf32>
    %254 = tpu.matmul %251, %253, %cst_110 {dimension_numbers = #tpu.dot_dimension_numbers<[1], [0], [0], [1], [0, 0, 1, 1], [], []>} : vector<16x32xbf16>, vector<32x32xbf16>, vector<16x32xf32> -> vector<16x32xf32>
    %c1_111 = arith.constant 1 : index
    %c0_112 = arith.constant 0 : index
    %c0_113 = arith.constant 0 : index
    %255 = vector.load %arg9[%c1_111, %c0_112, %c0_113] : memref<2x1x32xf32, #tpu.memory_space<vmem>>, vector<1x1x32xf32>
    %256 = vector.shape_cast %255 : vector<1x1x32xf32> to vector<1x32xf32>
    %257 = vector.broadcast %256 : vector<1x32xf32> to vector<16x32xf32>
    %258 = arith.addf %254, %257 : vector<16x32xf32>
    %c1_114 = arith.constant 1 : index
    %c0_115 = arith.constant 0 : index
    %c0_116 = arith.constant 0 : index
    %259 = vector.load %arg12[%c1_114, %c0_115, %c0_116] : memref<2x1x32xf32, #tpu.memory_space<vmem>>, vector<1x1x32xf32>
    %260 = vector.shape_cast %259 : vector<1x1x32xf32> to vector<1x32xf32>
    %c1_117 = arith.constant 1 : index
    %c0_118 = arith.constant 0 : index
    %c0_119 = arith.constant 0 : index
    %261 = vector.load %arg13[%c1_117, %c0_118, %c0_119] : memref<2x1x32xf32, #tpu.memory_space<vmem>>, vector<1x1x32xf32>
    %262 = vector.shape_cast %261 : vector<1x1x32xf32> to vector<1x32xf32>
    %cst_120 = arith.constant dense<0.000000e+00> : vector<16xf32>
    %263 = vector.multi_reduction <add>, %258, %cst_120 [1] : vector<16x32xf32> to vector<16xf32>
    %264 = vector.shape_cast %263 : vector<16xf32> to vector<16x1xf32>
    %cst_121 = arith.constant 3.200000e+01 : f32
    %265 = vector.broadcast %cst_121 : f32 to vector<16x1xf32>
    %266 = arith.divf %264, %265 : vector<16x1xf32>
    %267 = vector.broadcast %266 : vector<16x1xf32> to vector<16x32xf32>
    %268 = arith.subf %258, %267 : vector<16x32xf32>
    %269 = arith.mulf %268, %268 : vector<16x32xf32>
    %cst_122 = arith.constant dense<0.000000e+00> : vector<16xf32>
    %270 = vector.multi_reduction <add>, %269, %cst_122 [1] : vector<16x32xf32> to vector<16xf32>
    %271 = vector.shape_cast %270 : vector<16xf32> to vector<16x1xf32>
    %cst_123 = arith.constant 3.200000e+01 : f32
    %272 = vector.broadcast %cst_123 : f32 to vector<16x1xf32>
    %273 = arith.divf %271, %272 : vector<16x1xf32>
    %cst_124 = arith.constant 9.99999974E-6 : f32
    %274 = vector.broadcast %cst_124 : f32 to vector<16x1xf32>
    %275 = arith.addf %273, %274 : vector<16x1xf32>
    %276 = math.rsqrt %275 : vector<16x1xf32>
    %277 = vector.broadcast %276 : vector<16x1xf32> to vector<16x32xf32>
    %278 = arith.mulf %268, %277 : vector<16x32xf32>
    %279 = vector.broadcast %260 : vector<1x32xf32> to vector<16x32xf32>
    %280 = arith.mulf %278, %279 : vector<16x32xf32>
    %281 = vector.broadcast %262 : vector<1x32xf32> to vector<16x32xf32>
    %282 = arith.addf %280, %281 : vector<16x32xf32>
    %283 = arith.addf %183, %282 : vector<16x32xf32>
    %284 = arith.truncf %283 : vector<16x32xf32> to vector<16x32xbf16>
    %c1_125 = arith.constant 1 : index
    %c0_126 = arith.constant 0 : index
    %c0_127 = arith.constant 0 : index
    %285 = vector.load %arg14[%c1_125, %c0_126, %c0_127] : memref<2x32x128xbf16, #tpu.memory_space<vmem>>, vector<1x32x128xbf16>
    %286 = vector.shape_cast %285 : vector<1x32x128xbf16> to vector<32x128xbf16>
    %cst_128 = arith.constant dense<0.000000e+00> : vector<16x128xf32>
    %287 = tpu.matmul %284, %286, %cst_128 {dimension_numbers = #tpu.dot_dimension_numbers<[1], [0], [0], [1], [0, 0, 1, 1], [], []>} : vector<16x32xbf16>, vector<32x128xbf16>, vector<16x128xf32> -> vector<16x128xf32>
    %c1_129 = arith.constant 1 : index
    %c0_130 = arith.constant 0 : index
    %c0_131 = arith.constant 0 : index
    %288 = vector.load %arg15[%c1_129, %c0_130, %c0_131] : memref<2x1x128xf32, #tpu.memory_space<vmem>>, vector<1x1x128xf32>
    %289 = vector.shape_cast %288 : vector<1x1x128xf32> to vector<1x128xf32>
    %290 = vector.broadcast %289 : vector<1x128xf32> to vector<16x128xf32>
    %291 = arith.addf %287, %290 : vector<16x128xf32>
    %292 = arith.mulf %291, %291 : vector<16x128xf32>
    %293 = arith.mulf %291, %292 : vector<16x128xf32>
    %cst_132 = arith.constant 4.471500e-02 : f32
    %294 = vector.broadcast %cst_132 : f32 to vector<16x128xf32>
    %295 = arith.mulf %294, %293 : vector<16x128xf32>
    %296 = arith.addf %291, %295 : vector<16x128xf32>
    %cst_133 = arith.constant 0.797884583 : f32
    %297 = vector.broadcast %cst_133 : f32 to vector<16x128xf32>
    %298 = arith.mulf %297, %296 : vector<16x128xf32>
    %299 = math.tanh %298 : vector<16x128xf32>
    %cst_134 = arith.constant 1.000000e+00 : f32
    %300 = vector.broadcast %cst_134 : f32 to vector<16x128xf32>
    %301 = arith.addf %300, %299 : vector<16x128xf32>
    %cst_135 = arith.constant 5.000000e-01 : f32
    %302 = vector.broadcast %cst_135 : f32 to vector<16x128xf32>
    %303 = arith.mulf %302, %301 : vector<16x128xf32>
    %304 = arith.mulf %291, %303 : vector<16x128xf32>
    %305 = arith.truncf %304 : vector<16x128xf32> to vector<16x128xbf16>
    %c1_136 = arith.constant 1 : index
    %c0_137 = arith.constant 0 : index
    %c0_138 = arith.constant 0 : index
    %306 = vector.load %arg16[%c1_136, %c0_137, %c0_138] : memref<2x128x32xbf16, #tpu.memory_space<vmem>>, vector<1x128x32xbf16>
    %307 = vector.shape_cast %306 : vector<1x128x32xbf16> to vector<128x32xbf16>
    %cst_139 = arith.constant dense<0.000000e+00> : vector<16x32xf32>
    %308 = tpu.matmul %305, %307, %cst_139 {dimension_numbers = #tpu.dot_dimension_numbers<[1], [0], [0], [1], [0, 0, 1, 1], [], []>} : vector<16x128xbf16>, vector<128x32xbf16>, vector<16x32xf32> -> vector<16x32xf32>
    %c1_140 = arith.constant 1 : index
    %c0_141 = arith.constant 0 : index
    %c0_142 = arith.constant 0 : index
    %309 = vector.load %arg17[%c1_140, %c0_141, %c0_142] : memref<2x1x32xf32, #tpu.memory_space<vmem>>, vector<1x1x32xf32>
    %310 = vector.shape_cast %309 : vector<1x1x32xf32> to vector<1x32xf32>
    %311 = vector.broadcast %310 : vector<1x32xf32> to vector<16x32xf32>
    %312 = arith.addf %308, %311 : vector<16x32xf32>
    %c1_143 = arith.constant 1 : index
    %c0_144 = arith.constant 0 : index
    %c0_145 = arith.constant 0 : index
    %313 = vector.load %arg18[%c1_143, %c0_144, %c0_145] : memref<2x1x32xf32, #tpu.memory_space<vmem>>, vector<1x1x32xf32>
    %314 = vector.shape_cast %313 : vector<1x1x32xf32> to vector<1x32xf32>
    %c1_146 = arith.constant 1 : index
    %c0_147 = arith.constant 0 : index
    %c0_148 = arith.constant 0 : index
    %315 = vector.load %arg19[%c1_146, %c0_147, %c0_148] : memref<2x1x32xf32, #tpu.memory_space<vmem>>, vector<1x1x32xf32>
    %316 = vector.shape_cast %315 : vector<1x1x32xf32> to vector<1x32xf32>
    %cst_149 = arith.constant dense<0.000000e+00> : vector<16xf32>
    %317 = vector.multi_reduction <add>, %312, %cst_149 [1] : vector<16x32xf32> to vector<16xf32>
    %318 = vector.shape_cast %317 : vector<16xf32> to vector<16x1xf32>
    %cst_150 = arith.constant 3.200000e+01 : f32
    %319 = vector.broadcast %cst_150 : f32 to vector<16x1xf32>
    %320 = arith.divf %318, %319 : vector<16x1xf32>
    %321 = vector.broadcast %320 : vector<16x1xf32> to vector<16x32xf32>
    %322 = arith.subf %312, %321 : vector<16x32xf32>
    %323 = arith.mulf %322, %322 : vector<16x32xf32>
    %cst_151 = arith.constant dense<0.000000e+00> : vector<16xf32>
    %324 = vector.multi_reduction <add>, %323, %cst_151 [1] : vector<16x32xf32> to vector<16xf32>
    %325 = vector.shape_cast %324 : vector<16xf32> to vector<16x1xf32>
    %cst_152 = arith.constant 3.200000e+01 : f32
    %326 = vector.broadcast %cst_152 : f32 to vector<16x1xf32>
    %327 = arith.divf %325, %326 : vector<16x1xf32>
    %cst_153 = arith.constant 9.99999974E-6 : f32
    %328 = vector.broadcast %cst_153 : f32 to vector<16x1xf32>
    %329 = arith.addf %327, %328 : vector<16x1xf32>
    %330 = math.rsqrt %329 : vector<16x1xf32>
    %331 = vector.broadcast %330 : vector<16x1xf32> to vector<16x32xf32>
    %332 = arith.mulf %322, %331 : vector<16x32xf32>
    %333 = vector.broadcast %314 : vector<1x32xf32> to vector<16x32xf32>
    %334 = arith.mulf %332, %333 : vector<16x32xf32>
    %335 = vector.broadcast %316 : vector<1x32xf32> to vector<16x32xf32>
    %336 = arith.addf %334, %335 : vector<16x32xf32>
    %337 = arith.addf %283, %336 : vector<16x32xf32>
    %338 = arith.truncf %337 : vector<16x32xf32> to vector<16x32xbf16>
    %c0_154 = arith.constant 0 : index
    %c0_155 = arith.constant 0 : index
    %c0_156 = arith.constant 0 : index
    %339 = vector.load %arg20[%c0_154, %c0_155, %c0_156] : memref<4x4x16xbf16, #tpu.memory_space<vmem>>, vector<1x4x16xbf16>
    %340 = vector.shape_cast %339 : vector<1x4x16xbf16> to vector<4x16xbf16>
    %cst_157 = arith.constant dense<0.000000e+00> : vector<4x32xf32>
    %341 = tpu.matmul %340, %338, %cst_157 {dimension_numbers = #tpu.dot_dimension_numbers<[1], [0], [0], [1], [0, 0, 1, 1], [], []>} : vector<4x16xbf16>, vector<16x32xbf16>, vector<4x32xf32> -> vector<4x32xf32>
    %c1_158 = arith.constant 1 : index
    %c0_159 = arith.constant 0 : index
    %c0_160 = arith.constant 0 : index
    %342 = vector.load %arg20[%c1_158, %c0_159, %c0_160] : memref<4x4x16xbf16, #tpu.memory_space<vmem>>, vector<1x4x16xbf16>
    %343 = vector.shape_cast %342 : vector<1x4x16xbf16> to vector<4x16xbf16>
    %cst_161 = arith.constant dense<0.000000e+00> : vector<4x32xf32>
    %344 = tpu.matmul %343, %338, %cst_161 {dimension_numbers = #tpu.dot_dimension_numbers<[1], [0], [0], [1], [0, 0, 1, 1], [], []>} : vector<4x16xbf16>, vector<16x32xbf16>, vector<4x32xf32> -> vector<4x32xf32>
    %c2 = arith.constant 2 : index
    %c0_162 = arith.constant 0 : index
    %c0_163 = arith.constant 0 : index
    %345 = vector.load %arg20[%c2, %c0_162, %c0_163] : memref<4x4x16xbf16, #tpu.memory_space<vmem>>, vector<1x4x16xbf16>
    %346 = vector.shape_cast %345 : vector<1x4x16xbf16> to vector<4x16xbf16>
    %cst_164 = arith.constant dense<0.000000e+00> : vector<4x32xf32>
    %347 = tpu.matmul %346, %338, %cst_164 {dimension_numbers = #tpu.dot_dimension_numbers<[1], [0], [0], [1], [0, 0, 1, 1], [], []>} : vector<4x16xbf16>, vector<16x32xbf16>, vector<4x32xf32> -> vector<4x32xf32>
    %c3 = arith.constant 3 : index
    %c0_165 = arith.constant 0 : index
    %c0_166 = arith.constant 0 : index
    %348 = vector.load %arg20[%c3, %c0_165, %c0_166] : memref<4x4x16xbf16, #tpu.memory_space<vmem>>, vector<1x4x16xbf16>
    %349 = vector.shape_cast %348 : vector<1x4x16xbf16> to vector<4x16xbf16>
    %cst_167 = arith.constant dense<0.000000e+00> : vector<4x32xf32>
    %350 = tpu.matmul %349, %338, %cst_167 {dimension_numbers = #tpu.dot_dimension_numbers<[1], [0], [0], [1], [0, 0, 1, 1], [], []>} : vector<4x16xbf16>, vector<16x32xbf16>, vector<4x32xf32> -> vector<4x32xf32>
    %351 = tpu.concatenate %341, %344, %347, %350 in 1 : vector<4x32xf32>, vector<4x32xf32>, vector<4x32xf32>, vector<4x32xf32> -> vector<4x128xf32>
    %352 = arith.truncf %351 : vector<4x128xf32> to vector<4x128xbf16>
    %c0_168 = arith.constant 0 : index
    %c0_169 = arith.constant 0 : index
    %353 = vector.load %arg21[%c0_168, %c0_169] : memref<128x64xbf16, #tpu.memory_space<vmem>>, vector<128x64xbf16>
    %cst_170 = arith.constant dense<0.000000e+00> : vector<4x64xf32>
    %354 = tpu.matmul %352, %353, %cst_170 {dimension_numbers = #tpu.dot_dimension_numbers<[1], [0], [0], [1], [0, 0, 1, 1], [], []>} : vector<4x128xbf16>, vector<128x64xbf16>, vector<4x64xf32> -> vector<4x64xf32>
    %c0_171 = arith.constant 0 : index
    %c0_172 = arith.constant 0 : index
    %355 = vector.load %arg22[%c0_171, %c0_172] : memref<1x64xf32, #tpu.memory_space<vmem>>, vector<1x64xf32>
    %c0_173 = arith.constant 0 : index
    %c0_174 = arith.constant 0 : index
    %356 = vector.load %arg23[%c0_173, %c0_174] : memref<1x64xf32, #tpu.memory_space<vmem>>, vector<1x64xf32>
    %cst_175 = arith.constant dense<0.000000e+00> : vector<4xf32>
    %357 = vector.multi_reduction <add>, %354, %cst_175 [1] : vector<4x64xf32> to vector<4xf32>
    %358 = vector.shape_cast %357 : vector<4xf32> to vector<4x1xf32>
    %cst_176 = arith.constant 6.400000e+01 : f32
    %359 = vector.broadcast %cst_176 : f32 to vector<4x1xf32>
    %360 = arith.divf %358, %359 : vector<4x1xf32>
    %361 = vector.broadcast %360 : vector<4x1xf32> to vector<4x64xf32>
    %362 = arith.subf %354, %361 : vector<4x64xf32>
    %363 = arith.mulf %362, %362 : vector<4x64xf32>
    %cst_177 = arith.constant dense<0.000000e+00> : vector<4xf32>
    %364 = vector.multi_reduction <add>, %363, %cst_177 [1] : vector<4x64xf32> to vector<4xf32>
    %365 = vector.shape_cast %364 : vector<4xf32> to vector<4x1xf32>
    %cst_178 = arith.constant 6.400000e+01 : f32
    %366 = vector.broadcast %cst_178 : f32 to vector<4x1xf32>
    %367 = arith.divf %365, %366 : vector<4x1xf32>
    %cst_179 = arith.constant 9.99999974E-6 : f32
    %368 = vector.broadcast %cst_179 : f32 to vector<4x1xf32>
    %369 = arith.addf %367, %368 : vector<4x1xf32>
    %370 = math.rsqrt %369 : vector<4x1xf32>
    %371 = vector.broadcast %370 : vector<4x1xf32> to vector<4x64xf32>
    %372 = arith.mulf %362, %371 : vector<4x64xf32>
    %373 = vector.broadcast %355 : vector<1x64xf32> to vector<4x64xf32>
    %374 = arith.mulf %372, %373 : vector<4x64xf32>
    %375 = vector.broadcast %356 : vector<1x64xf32> to vector<4x64xf32>
    %376 = arith.addf %374, %375 : vector<4x64xf32>
    %377 = arith.truncf %376 : vector<4x64xf32> to vector<4x64xbf16>
    %c0_180 = arith.constant 0 : index
    %c0_181 = arith.constant 0 : index
    %c0_182 = arith.constant 0 : index
    %378 = vector.load %arg24[%c0_180, %c0_181, %c0_182] : memref<2x64x192xbf16, #tpu.memory_space<vmem>>, vector<1x64x192xbf16>
    %379 = vector.shape_cast %378 : vector<1x64x192xbf16> to vector<64x192xbf16>
    %cst_183 = arith.constant dense<0.000000e+00> : vector<4x192xf32>
    %380 = tpu.matmul %377, %379, %cst_183 {dimension_numbers = #tpu.dot_dimension_numbers<[1], [0], [0], [1], [0, 0, 1, 1], [], []>} : vector<4x64xbf16>, vector<64x192xbf16>, vector<4x192xf32> -> vector<4x192xf32>
    %c0_184 = arith.constant 0 : index
    %c0_185 = arith.constant 0 : index
    %c0_186 = arith.constant 0 : index
    %381 = vector.load %arg25[%c0_184, %c0_185, %c0_186] : memref<2x1x192xf32, #tpu.memory_space<vmem>>, vector<1x1x192xf32>
    %382 = vector.shape_cast %381 : vector<1x1x192xf32> to vector<1x192xf32>
    %383 = vector.broadcast %382 : vector<1x192xf32> to vector<4x192xf32>
    %384 = arith.addf %380, %383 : vector<4x192xf32>
    %385 = vector.extract_strided_slice %384 {offsets = [0, 0], sizes = [4, 16], strides = [1, 1]} : vector<4x192xf32> to vector<4x16xf32>
    %386 = vector.shape_cast %385 : vector<4x16xf32> to vector<1x4x16xf32>
    %387 = vector.extract_strided_slice %384 {offsets = [0, 16], sizes = [4, 16], strides = [1, 1]} : vector<4x192xf32> to vector<4x16xf32>
    %388 = vector.shape_cast %387 : vector<4x16xf32> to vector<1x4x16xf32>
    %389 = vector.extract_strided_slice %384 {offsets = [0, 32], sizes = [4, 16], strides = [1, 1]} : vector<4x192xf32> to vector<4x16xf32>
    %390 = vector.shape_cast %389 : vector<4x16xf32> to vector<1x4x16xf32>
    %391 = vector.extract_strided_slice %384 {offsets = [0, 48], sizes = [4, 16], strides = [1, 1]} : vector<4x192xf32> to vector<4x16xf32>
    %392 = vector.shape_cast %391 : vector<4x16xf32> to vector<1x4x16xf32>
    %393 = tpu.concatenate %386, %388, %390, %392 in 0 : vector<1x4x16xf32>, vector<1x4x16xf32>, vector<1x4x16xf32>, vector<1x4x16xf32> -> vector<4x4x16xf32>
    %394 = vector.extract_strided_slice %384 {offsets = [0, 64], sizes = [4, 16], strides = [1, 1]} : vector<4x192xf32> to vector<4x16xf32>
    %395 = vector.shape_cast %394 : vector<4x16xf32> to vector<1x4x16xf32>
    %396 = vector.extract_strided_slice %384 {offsets = [0, 80], sizes = [4, 16], strides = [1, 1]} : vector<4x192xf32> to vector<4x16xf32>
    %397 = vector.shape_cast %396 : vector<4x16xf32> to vector<1x4x16xf32>
    %398 = vector.extract_strided_slice %384 {offsets = [0, 96], sizes = [4, 16], strides = [1, 1]} : vector<4x192xf32> to vector<4x16xf32>
    %399 = vector.shape_cast %398 : vector<4x16xf32> to vector<1x4x16xf32>
    %400 = vector.extract_strided_slice %384 {offsets = [0, 112], sizes = [4, 16], strides = [1, 1]} : vector<4x192xf32> to vector<4x16xf32>
    %401 = vector.shape_cast %400 : vector<4x16xf32> to vector<1x4x16xf32>
    %402 = tpu.concatenate %395, %397, %399, %401 in 0 : vector<1x4x16xf32>, vector<1x4x16xf32>, vector<1x4x16xf32>, vector<1x4x16xf32> -> vector<4x4x16xf32>
    %403 = vector.extract_strided_slice %384 {offsets = [0, 128], sizes = [4, 16], strides = [1, 1]} : vector<4x192xf32> to vector<4x16xf32>
    %404 = vector.shape_cast %403 : vector<4x16xf32> to vector<1x4x16xf32>
    %405 = vector.extract_strided_slice %384 {offsets = [0, 144], sizes = [4, 16], strides = [1, 1]} : vector<4x192xf32> to vector<4x16xf32>
    %406 = vector.shape_cast %405 : vector<4x16xf32> to vector<1x4x16xf32>
    %407 = vector.extract_strided_slice %384 {offsets = [0, 160], sizes = [4, 16], strides = [1, 1]} : vector<4x192xf32> to vector<4x16xf32>
    %408 = vector.shape_cast %407 : vector<4x16xf32> to vector<1x4x16xf32>
    %409 = vector.extract_strided_slice %384 {offsets = [0, 176], sizes = [4, 16], strides = [1, 1]} : vector<4x192xf32> to vector<4x16xf32>
    %410 = vector.shape_cast %409 : vector<4x16xf32> to vector<1x4x16xf32>
    %411 = tpu.concatenate %404, %406, %408, %410 in 0 : vector<1x4x16xf32>, vector<1x4x16xf32>, vector<1x4x16xf32>, vector<1x4x16xf32> -> vector<4x4x16xf32>
    %412 = arith.mulf %393, %393 : vector<4x4x16xf32>
    %cst_187 = arith.constant dense<0.000000e+00> : vector<4x4xf32>
    %413 = vector.multi_reduction <add>, %412, %cst_187 [2] : vector<4x4x16xf32> to vector<4x4xf32>
    %414 = vector.shape_cast %413 : vector<4x4xf32> to vector<4x4x1xf32>
    %cst_188 = arith.constant 1.000000e-24 : f32
    %415 = vector.broadcast %cst_188 : f32 to vector<4x4x1xf32>
    %416 = arith.maximumf %414, %415 : vector<4x4x1xf32>
    %417 = math.rsqrt %416 : vector<4x4x1xf32>
    %418 = vector.broadcast %417 : vector<4x4x1xf32> to vector<4x4x16xf32>
    %419 = arith.mulf %393, %418 : vector<4x4x16xf32>
    %420 = arith.mulf %402, %402 : vector<4x4x16xf32>
    %cst_189 = arith.constant dense<0.000000e+00> : vector<4x4xf32>
    %421 = vector.multi_reduction <add>, %420, %cst_189 [2] : vector<4x4x16xf32> to vector<4x4xf32>
    %422 = vector.shape_cast %421 : vector<4x4xf32> to vector<4x4x1xf32>
    %cst_190 = arith.constant 1.000000e-24 : f32
    %423 = vector.broadcast %cst_190 : f32 to vector<4x4x1xf32>
    %424 = arith.maximumf %422, %423 : vector<4x4x1xf32>
    %425 = math.rsqrt %424 : vector<4x4x1xf32>
    %426 = vector.broadcast %425 : vector<4x4x1xf32> to vector<4x4x16xf32>
    %427 = arith.mulf %402, %426 : vector<4x4x16xf32>
    %428 = arith.truncf %419 : vector<4x4x16xf32> to vector<4x4x16xbf16>
    %429 = arith.truncf %427 : vector<4x4x16xf32> to vector<4x4x16xbf16>
    %cst_191 = arith.constant dense<0.000000e+00> : vector<4x4x4xf32>
    %430 = tpu.matmul %428, %429, %cst_191 {dimension_numbers = #tpu.dot_dimension_numbers<[2], [2], [1], [1], [0, 0, 0, 1, 1, 1], [0], [0]>} : vector<4x4x16xbf16>, vector<4x4x16xbf16>, vector<4x4x4xf32> -> vector<4x4x4xf32>
    %c0_192 = arith.constant 0 : index
    %c0_193 = arith.constant 0 : index
    %c0_194 = arith.constant 0 : index
    %c0_195 = arith.constant 0 : index
    %431 = vector.load %arg28[%c0_192, %c0_193, %c0_194, %c0_195] : memref<2x4x4x1xf32, #tpu.memory_space<vmem>>, vector<1x4x4x1xf32>
    %432 = vector.shape_cast %431 : vector<1x4x4x1xf32> to vector<4x4x1xf32>
    %433 = vector.broadcast %432 : vector<4x4x1xf32> to vector<4x4x4xf32>
    %434 = arith.mulf %430, %433 : vector<4x4x4xf32>
    %c0_196 = arith.constant 0 : index
    %c0_197 = arith.constant 0 : index
    %c0_198 = arith.constant 0 : index
    %c0_199 = arith.constant 0 : index
    %435 = vector.load %arg29[%c0_196, %c0_197, %c0_198, %c0_199] : memref<2x4x4x4xf32, #tpu.memory_space<vmem>>, vector<1x4x4x4xf32>
    %436 = vector.shape_cast %435 : vector<1x4x4x4xf32> to vector<4x4x4xf32>
    %437 = arith.addf %434, %436 : vector<4x4x4xf32>
    %cst_200 = arith.constant dense<0xFF800000> : vector<4x4xf32>
    %438 = vector.multi_reduction <maximumf>, %437, %cst_200 [2] : vector<4x4x4xf32> to vector<4x4xf32>
    %439 = vector.shape_cast %438 : vector<4x4xf32> to vector<4x4x1xf32>
    %440 = vector.broadcast %439 : vector<4x4x1xf32> to vector<4x4x4xf32>
    %441 = arith.subf %437, %440 : vector<4x4x4xf32>
    %442 = math.exp %441 : vector<4x4x4xf32>
    %cst_201 = arith.constant dense<0.000000e+00> : vector<4x4xf32>
    %443 = vector.multi_reduction <add>, %442, %cst_201 [2] : vector<4x4x4xf32> to vector<4x4xf32>
    %444 = vector.shape_cast %443 : vector<4x4xf32> to vector<4x4x1xf32>
    %445 = tpu.reciprocal %444 {approx = true} : vector<4x4x1xf32> -> vector<4x4x1xf32>
    %446 = vector.broadcast %445 : vector<4x4x1xf32> to vector<4x4x4xf32>
    %447 = arith.mulf %442, %446 : vector<4x4x4xf32>
    %448 = arith.truncf %447 : vector<4x4x4xf32> to vector<4x4x4xbf16>
    %449 = arith.truncf %411 : vector<4x4x16xf32> to vector<4x4x16xbf16>
    %cst_202 = arith.constant dense<0.000000e+00> : vector<4x4x16xf32>
    %450 = tpu.matmul %448, %449, %cst_202 {dimension_numbers = #tpu.dot_dimension_numbers<[2], [1], [1], [2], [0, 0, 0, 1, 1, 2], [0], [0]>} : vector<4x4x4xbf16>, vector<4x4x16xbf16>, vector<4x4x16xf32> -> vector<4x4x16xf32>
    %451 = vector.extract_strided_slice %450 {offsets = [0, 0, 0], sizes = [1, 4, 16], strides = [1, 1, 1]} : vector<4x4x16xf32> to vector<1x4x16xf32>
    %452 = vector.shape_cast %451 : vector<1x4x16xf32> to vector<4x16xf32>
    %453 = vector.extract_strided_slice %450 {offsets = [1, 0, 0], sizes = [1, 4, 16], strides = [1, 1, 1]} : vector<4x4x16xf32> to vector<1x4x16xf32>
    %454 = vector.shape_cast %453 : vector<1x4x16xf32> to vector<4x16xf32>
    %455 = vector.extract_strided_slice %450 {offsets = [2, 0, 0], sizes = [1, 4, 16], strides = [1, 1, 1]} : vector<4x4x16xf32> to vector<1x4x16xf32>
    %456 = vector.shape_cast %455 : vector<1x4x16xf32> to vector<4x16xf32>
    %457 = vector.extract_strided_slice %450 {offsets = [3, 0, 0], sizes = [1, 4, 16], strides = [1, 1, 1]} : vector<4x4x16xf32> to vector<1x4x16xf32>
    %458 = vector.shape_cast %457 : vector<1x4x16xf32> to vector<4x16xf32>
    %459 = tpu.concatenate %452, %454, %456, %458 in 1 : vector<4x16xf32>, vector<4x16xf32>, vector<4x16xf32>, vector<4x16xf32> -> vector<4x64xf32>
    %460 = arith.truncf %459 : vector<4x64xf32> to vector<4x64xbf16>
    %c0_203 = arith.constant 0 : index
    %c0_204 = arith.constant 0 : index
    %c0_205 = arith.constant 0 : index
    %461 = vector.load %arg26[%c0_203, %c0_204, %c0_205] : memref<2x64x64xbf16, #tpu.memory_space<vmem>>, vector<1x64x64xbf16>
    %462 = vector.shape_cast %461 : vector<1x64x64xbf16> to vector<64x64xbf16>
    %cst_206 = arith.constant dense<0.000000e+00> : vector<4x64xf32>
    %463 = tpu.matmul %460, %462, %cst_206 {dimension_numbers = #tpu.dot_dimension_numbers<[1], [0], [0], [1], [0, 0, 1, 1], [], []>} : vector<4x64xbf16>, vector<64x64xbf16>, vector<4x64xf32> -> vector<4x64xf32>
    %c0_207 = arith.constant 0 : index
    %c0_208 = arith.constant 0 : index
    %c0_209 = arith.constant 0 : index
    %464 = vector.load %arg27[%c0_207, %c0_208, %c0_209] : memref<2x1x64xf32, #tpu.memory_space<vmem>>, vector<1x1x64xf32>
    %465 = vector.shape_cast %464 : vector<1x1x64xf32> to vector<1x64xf32>
    %466 = vector.broadcast %465 : vector<1x64xf32> to vector<4x64xf32>
    %467 = arith.addf %463, %466 : vector<4x64xf32>
    %c0_210 = arith.constant 0 : index
    %c0_211 = arith.constant 0 : index
    %c0_212 = arith.constant 0 : index
    %468 = vector.load %arg30[%c0_210, %c0_211, %c0_212] : memref<2x1x64xf32, #tpu.memory_space<vmem>>, vector<1x1x64xf32>
    %469 = vector.shape_cast %468 : vector<1x1x64xf32> to vector<1x64xf32>
    %c0_213 = arith.constant 0 : index
    %c0_214 = arith.constant 0 : index
    %c0_215 = arith.constant 0 : index
    %470 = vector.load %arg31[%c0_213, %c0_214, %c0_215] : memref<2x1x64xf32, #tpu.memory_space<vmem>>, vector<1x1x64xf32>
    %471 = vector.shape_cast %470 : vector<1x1x64xf32> to vector<1x64xf32>
    %cst_216 = arith.constant dense<0.000000e+00> : vector<4xf32>
    %472 = vector.multi_reduction <add>, %467, %cst_216 [1] : vector<4x64xf32> to vector<4xf32>
    %473 = vector.shape_cast %472 : vector<4xf32> to vector<4x1xf32>
    %cst_217 = arith.constant 6.400000e+01 : f32
    %474 = vector.broadcast %cst_217 : f32 to vector<4x1xf32>
    %475 = arith.divf %473, %474 : vector<4x1xf32>
    %476 = vector.broadcast %475 : vector<4x1xf32> to vector<4x64xf32>
    %477 = arith.subf %467, %476 : vector<4x64xf32>
    %478 = arith.mulf %477, %477 : vector<4x64xf32>
    %cst_218 = arith.constant dense<0.000000e+00> : vector<4xf32>
    %479 = vector.multi_reduction <add>, %478, %cst_218 [1] : vector<4x64xf32> to vector<4xf32>
    %480 = vector.shape_cast %479 : vector<4xf32> to vector<4x1xf32>
    %cst_219 = arith.constant 6.400000e+01 : f32
    %481 = vector.broadcast %cst_219 : f32 to vector<4x1xf32>
    %482 = arith.divf %480, %481 : vector<4x1xf32>
    %cst_220 = arith.constant 9.99999974E-6 : f32
    %483 = vector.broadcast %cst_220 : f32 to vector<4x1xf32>
    %484 = arith.addf %482, %483 : vector<4x1xf32>
    %485 = math.rsqrt %484 : vector<4x1xf32>
    %486 = vector.broadcast %485 : vector<4x1xf32> to vector<4x64xf32>
    %487 = arith.mulf %477, %486 : vector<4x64xf32>
    %488 = vector.broadcast %469 : vector<1x64xf32> to vector<4x64xf32>
    %489 = arith.mulf %487, %488 : vector<4x64xf32>
    %490 = vector.broadcast %471 : vector<1x64xf32> to vector<4x64xf32>
    %491 = arith.addf %489, %490 : vector<4x64xf32>
    %492 = arith.addf %376, %491 : vector<4x64xf32>
    %493 = arith.truncf %492 : vector<4x64xf32> to vector<4x64xbf16>
    %c0_221 = arith.constant 0 : index
    %c0_222 = arith.constant 0 : index
    %c0_223 = arith.constant 0 : index
    %494 = vector.load %arg32[%c0_221, %c0_222, %c0_223] : memref<2x64x256xbf16, #tpu.memory_space<vmem>>, vector<1x64x256xbf16>
    %495 = vector.shape_cast %494 : vector<1x64x256xbf16> to vector<64x256xbf16>
    %cst_224 = arith.constant dense<0.000000e+00> : vector<4x256xf32>
    %496 = tpu.matmul %493, %495, %cst_224 {dimension_numbers = #tpu.dot_dimension_numbers<[1], [0], [0], [1], [0, 0, 1, 1], [], []>} : vector<4x64xbf16>, vector<64x256xbf16>, vector<4x256xf32> -> vector<4x256xf32>
    %c0_225 = arith.constant 0 : index
    %c0_226 = arith.constant 0 : index
    %c0_227 = arith.constant 0 : index
    %497 = vector.load %arg33[%c0_225, %c0_226, %c0_227] : memref<2x1x256xf32, #tpu.memory_space<vmem>>, vector<1x1x256xf32>
    %498 = vector.shape_cast %497 : vector<1x1x256xf32> to vector<1x256xf32>
    %499 = vector.broadcast %498 : vector<1x256xf32> to vector<4x256xf32>
    %500 = arith.addf %496, %499 : vector<4x256xf32>
    %501 = arith.mulf %500, %500 : vector<4x256xf32>
    %502 = arith.mulf %500, %501 : vector<4x256xf32>
    %cst_228 = arith.constant 4.471500e-02 : f32
    %503 = vector.broadcast %cst_228 : f32 to vector<4x256xf32>
    %504 = arith.mulf %503, %502 : vector<4x256xf32>
    %505 = arith.addf %500, %504 : vector<4x256xf32>
    %cst_229 = arith.constant 0.797884583 : f32
    %506 = vector.broadcast %cst_229 : f32 to vector<4x256xf32>
    %507 = arith.mulf %506, %505 : vector<4x256xf32>
    %508 = math.tanh %507 : vector<4x256xf32>
    %cst_230 = arith.constant 1.000000e+00 : f32
    %509 = vector.broadcast %cst_230 : f32 to vector<4x256xf32>
    %510 = arith.addf %509, %508 : vector<4x256xf32>
    %cst_231 = arith.constant 5.000000e-01 : f32
    %511 = vector.broadcast %cst_231 : f32 to vector<4x256xf32>
    %512 = arith.mulf %511, %510 : vector<4x256xf32>
    %513 = arith.mulf %500, %512 : vector<4x256xf32>
    %514 = arith.truncf %513 : vector<4x256xf32> to vector<4x256xbf16>
    %c0_232 = arith.constant 0 : index
    %c0_233 = arith.constant 0 : index
    %c0_234 = arith.constant 0 : index
    %515 = vector.load %arg34[%c0_232, %c0_233, %c0_234] : memref<2x256x64xbf16, #tpu.memory_space<vmem>>, vector<1x256x64xbf16>
    %516 = vector.shape_cast %515 : vector<1x256x64xbf16> to vector<256x64xbf16>
    %cst_235 = arith.constant dense<0.000000e+00> : vector<4x64xf32>
    %517 = tpu.matmul %514, %516, %cst_235 {dimension_numbers = #tpu.dot_dimension_numbers<[1], [0], [0], [1], [0, 0, 1, 1], [], []>} : vector<4x256xbf16>, vector<256x64xbf16>, vector<4x64xf32> -> vector<4x64xf32>
    %c0_236 = arith.constant 0 : index
    %c0_237 = arith.constant 0 : index
    %c0_238 = arith.constant 0 : index
    %518 = vector.load %arg35[%c0_236, %c0_237, %c0_238] : memref<2x1x64xf32, #tpu.memory_space<vmem>>, vector<1x1x64xf32>
    %519 = vector.shape_cast %518 : vector<1x1x64xf32> to vector<1x64xf32>
    %520 = vector.broadcast %519 : vector<1x64xf32> to vector<4x64xf32>
    %521 = arith.addf %517, %520 : vector<4x64xf32>
    %c0_239 = arith.constant 0 : index
    %c0_240 = arith.constant 0 : index
    %c0_241 = arith.constant 0 : index
    %522 = vector.load %arg36[%c0_239, %c0_240, %c0_241] : memref<2x1x64xf32, #tpu.memory_space<vmem>>, vector<1x1x64xf32>
    %523 = vector.shape_cast %522 : vector<1x1x64xf32> to vector<1x64xf32>
    %c0_242 = arith.constant 0 : index
    %c0_243 = arith.constant 0 : index
    %c0_244 = arith.constant 0 : index
    %524 = vector.load %arg37[%c0_242, %c0_243, %c0_244] : memref<2x1x64xf32, #tpu.memory_space<vmem>>, vector<1x1x64xf32>
    %525 = vector.shape_cast %524 : vector<1x1x64xf32> to vector<1x64xf32>
    %cst_245 = arith.constant dense<0.000000e+00> : vector<4xf32>
    %526 = vector.multi_reduction <add>, %521, %cst_245 [1] : vector<4x64xf32> to vector<4xf32>
    %527 = vector.shape_cast %526 : vector<4xf32> to vector<4x1xf32>
    %cst_246 = arith.constant 6.400000e+01 : f32
    %528 = vector.broadcast %cst_246 : f32 to vector<4x1xf32>
    %529 = arith.divf %527, %528 : vector<4x1xf32>
    %530 = vector.broadcast %529 : vector<4x1xf32> to vector<4x64xf32>
    %531 = arith.subf %521, %530 : vector<4x64xf32>
    %532 = arith.mulf %531, %531 : vector<4x64xf32>
    %cst_247 = arith.constant dense<0.000000e+00> : vector<4xf32>
    %533 = vector.multi_reduction <add>, %532, %cst_247 [1] : vector<4x64xf32> to vector<4xf32>
    %534 = vector.shape_cast %533 : vector<4xf32> to vector<4x1xf32>
    %cst_248 = arith.constant 6.400000e+01 : f32
    %535 = vector.broadcast %cst_248 : f32 to vector<4x1xf32>
    %536 = arith.divf %534, %535 : vector<4x1xf32>
    %cst_249 = arith.constant 9.99999974E-6 : f32
    %537 = vector.broadcast %cst_249 : f32 to vector<4x1xf32>
    %538 = arith.addf %536, %537 : vector<4x1xf32>
    %539 = math.rsqrt %538 : vector<4x1xf32>
    %540 = vector.broadcast %539 : vector<4x1xf32> to vector<4x64xf32>
    %541 = arith.mulf %531, %540 : vector<4x64xf32>
    %542 = vector.broadcast %523 : vector<1x64xf32> to vector<4x64xf32>
    %543 = arith.mulf %541, %542 : vector<4x64xf32>
    %544 = vector.broadcast %525 : vector<1x64xf32> to vector<4x64xf32>
    %545 = arith.addf %543, %544 : vector<4x64xf32>
    %546 = arith.addf %492, %545 : vector<4x64xf32>
    %547 = arith.truncf %546 : vector<4x64xf32> to vector<4x64xbf16>
    %c1_250 = arith.constant 1 : index
    %c0_251 = arith.constant 0 : index
    %c0_252 = arith.constant 0 : index
    %548 = vector.load %arg24[%c1_250, %c0_251, %c0_252] : memref<2x64x192xbf16, #tpu.memory_space<vmem>>, vector<1x64x192xbf16>
    %549 = vector.shape_cast %548 : vector<1x64x192xbf16> to vector<64x192xbf16>
    %cst_253 = arith.constant dense<0.000000e+00> : vector<4x192xf32>
    %550 = tpu.matmul %547, %549, %cst_253 {dimension_numbers = #tpu.dot_dimension_numbers<[1], [0], [0], [1], [0, 0, 1, 1], [], []>} : vector<4x64xbf16>, vector<64x192xbf16>, vector<4x192xf32> -> vector<4x192xf32>
    %c1_254 = arith.constant 1 : index
    %c0_255 = arith.constant 0 : index
    %c0_256 = arith.constant 0 : index
    %551 = vector.load %arg25[%c1_254, %c0_255, %c0_256] : memref<2x1x192xf32, #tpu.memory_space<vmem>>, vector<1x1x192xf32>
    %552 = vector.shape_cast %551 : vector<1x1x192xf32> to vector<1x192xf32>
    %553 = vector.broadcast %552 : vector<1x192xf32> to vector<4x192xf32>
    %554 = arith.addf %550, %553 : vector<4x192xf32>
    %555 = vector.extract_strided_slice %554 {offsets = [0, 0], sizes = [4, 16], strides = [1, 1]} : vector<4x192xf32> to vector<4x16xf32>
    %556 = vector.shape_cast %555 : vector<4x16xf32> to vector<1x4x16xf32>
    %557 = vector.extract_strided_slice %554 {offsets = [0, 16], sizes = [4, 16], strides = [1, 1]} : vector<4x192xf32> to vector<4x16xf32>
    %558 = vector.shape_cast %557 : vector<4x16xf32> to vector<1x4x16xf32>
    %559 = vector.extract_strided_slice %554 {offsets = [0, 32], sizes = [4, 16], strides = [1, 1]} : vector<4x192xf32> to vector<4x16xf32>
    %560 = vector.shape_cast %559 : vector<4x16xf32> to vector<1x4x16xf32>
    %561 = vector.extract_strided_slice %554 {offsets = [0, 48], sizes = [4, 16], strides = [1, 1]} : vector<4x192xf32> to vector<4x16xf32>
    %562 = vector.shape_cast %561 : vector<4x16xf32> to vector<1x4x16xf32>
    %563 = tpu.concatenate %556, %558, %560, %562 in 0 : vector<1x4x16xf32>, vector<1x4x16xf32>, vector<1x4x16xf32>, vector<1x4x16xf32> -> vector<4x4x16xf32>
    %564 = vector.extract_strided_slice %554 {offsets = [0, 64], sizes = [4, 16], strides = [1, 1]} : vector<4x192xf32> to vector<4x16xf32>
    %565 = vector.shape_cast %564 : vector<4x16xf32> to vector<1x4x16xf32>
    %566 = vector.extract_strided_slice %554 {offsets = [0, 80], sizes = [4, 16], strides = [1, 1]} : vector<4x192xf32> to vector<4x16xf32>
    %567 = vector.shape_cast %566 : vector<4x16xf32> to vector<1x4x16xf32>
    %568 = vector.extract_strided_slice %554 {offsets = [0, 96], sizes = [4, 16], strides = [1, 1]} : vector<4x192xf32> to vector<4x16xf32>
    %569 = vector.shape_cast %568 : vector<4x16xf32> to vector<1x4x16xf32>
    %570 = vector.extract_strided_slice %554 {offsets = [0, 112], sizes = [4, 16], strides = [1, 1]} : vector<4x192xf32> to vector<4x16xf32>
    %571 = vector.shape_cast %570 : vector<4x16xf32> to vector<1x4x16xf32>
    %572 = tpu.concatenate %565, %567, %569, %571 in 0 : vector<1x4x16xf32>, vector<1x4x16xf32>, vector<1x4x16xf32>, vector<1x4x16xf32> -> vector<4x4x16xf32>
    %573 = vector.extract_strided_slice %554 {offsets = [0, 128], sizes = [4, 16], strides = [1, 1]} : vector<4x192xf32> to vector<4x16xf32>
    %574 = vector.shape_cast %573 : vector<4x16xf32> to vector<1x4x16xf32>
    %575 = vector.extract_strided_slice %554 {offsets = [0, 144], sizes = [4, 16], strides = [1, 1]} : vector<4x192xf32> to vector<4x16xf32>
    %576 = vector.shape_cast %575 : vector<4x16xf32> to vector<1x4x16xf32>
    %577 = vector.extract_strided_slice %554 {offsets = [0, 160], sizes = [4, 16], strides = [1, 1]} : vector<4x192xf32> to vector<4x16xf32>
    %578 = vector.shape_cast %577 : vector<4x16xf32> to vector<1x4x16xf32>
    %579 = vector.extract_strided_slice %554 {offsets = [0, 176], sizes = [4, 16], strides = [1, 1]} : vector<4x192xf32> to vector<4x16xf32>
    %580 = vector.shape_cast %579 : vector<4x16xf32> to vector<1x4x16xf32>
    %581 = tpu.concatenate %574, %576, %578, %580 in 0 : vector<1x4x16xf32>, vector<1x4x16xf32>, vector<1x4x16xf32>, vector<1x4x16xf32> -> vector<4x4x16xf32>
    %582 = arith.mulf %563, %563 : vector<4x4x16xf32>
    %cst_257 = arith.constant dense<0.000000e+00> : vector<4x4xf32>
    %583 = vector.multi_reduction <add>, %582, %cst_257 [2] : vector<4x4x16xf32> to vector<4x4xf32>
    %584 = vector.shape_cast %583 : vector<4x4xf32> to vector<4x4x1xf32>
    %cst_258 = arith.constant 1.000000e-24 : f32
    %585 = vector.broadcast %cst_258 : f32 to vector<4x4x1xf32>
    %586 = arith.maximumf %584, %585 : vector<4x4x1xf32>
    %587 = math.rsqrt %586 : vector<4x4x1xf32>
    %588 = vector.broadcast %587 : vector<4x4x1xf32> to vector<4x4x16xf32>
    %589 = arith.mulf %563, %588 : vector<4x4x16xf32>
    %590 = arith.mulf %572, %572 : vector<4x4x16xf32>
    %cst_259 = arith.constant dense<0.000000e+00> : vector<4x4xf32>
    %591 = vector.multi_reduction <add>, %590, %cst_259 [2] : vector<4x4x16xf32> to vector<4x4xf32>
    %592 = vector.shape_cast %591 : vector<4x4xf32> to vector<4x4x1xf32>
    %cst_260 = arith.constant 1.000000e-24 : f32
    %593 = vector.broadcast %cst_260 : f32 to vector<4x4x1xf32>
    %594 = arith.maximumf %592, %593 : vector<4x4x1xf32>
    %595 = math.rsqrt %594 : vector<4x4x1xf32>
    %596 = vector.broadcast %595 : vector<4x4x1xf32> to vector<4x4x16xf32>
    %597 = arith.mulf %572, %596 : vector<4x4x16xf32>
    %598 = arith.truncf %589 : vector<4x4x16xf32> to vector<4x4x16xbf16>
    %599 = arith.truncf %597 : vector<4x4x16xf32> to vector<4x4x16xbf16>
    %cst_261 = arith.constant dense<0.000000e+00> : vector<4x4x4xf32>
    %600 = tpu.matmul %598, %599, %cst_261 {dimension_numbers = #tpu.dot_dimension_numbers<[2], [2], [1], [1], [0, 0, 0, 1, 1, 1], [0], [0]>} : vector<4x4x16xbf16>, vector<4x4x16xbf16>, vector<4x4x4xf32> -> vector<4x4x4xf32>
    %c1_262 = arith.constant 1 : index
    %c0_263 = arith.constant 0 : index
    %c0_264 = arith.constant 0 : index
    %c0_265 = arith.constant 0 : index
    %601 = vector.load %arg28[%c1_262, %c0_263, %c0_264, %c0_265] : memref<2x4x4x1xf32, #tpu.memory_space<vmem>>, vector<1x4x4x1xf32>
    %602 = vector.shape_cast %601 : vector<1x4x4x1xf32> to vector<4x4x1xf32>
    %603 = vector.broadcast %602 : vector<4x4x1xf32> to vector<4x4x4xf32>
    %604 = arith.mulf %600, %603 : vector<4x4x4xf32>
    %c1_266 = arith.constant 1 : index
    %c0_267 = arith.constant 0 : index
    %c0_268 = arith.constant 0 : index
    %c0_269 = arith.constant 0 : index
    %605 = vector.load %arg29[%c1_266, %c0_267, %c0_268, %c0_269] : memref<2x4x4x4xf32, #tpu.memory_space<vmem>>, vector<1x4x4x4xf32>
    %606 = vector.shape_cast %605 : vector<1x4x4x4xf32> to vector<4x4x4xf32>
    %607 = arith.addf %604, %606 : vector<4x4x4xf32>
    %cst_270 = arith.constant dense<0xFF800000> : vector<4x4xf32>
    %608 = vector.multi_reduction <maximumf>, %607, %cst_270 [2] : vector<4x4x4xf32> to vector<4x4xf32>
    %609 = vector.shape_cast %608 : vector<4x4xf32> to vector<4x4x1xf32>
    %610 = vector.broadcast %609 : vector<4x4x1xf32> to vector<4x4x4xf32>
    %611 = arith.subf %607, %610 : vector<4x4x4xf32>
    %612 = math.exp %611 : vector<4x4x4xf32>
    %cst_271 = arith.constant dense<0.000000e+00> : vector<4x4xf32>
    %613 = vector.multi_reduction <add>, %612, %cst_271 [2] : vector<4x4x4xf32> to vector<4x4xf32>
    %614 = vector.shape_cast %613 : vector<4x4xf32> to vector<4x4x1xf32>
    %615 = tpu.reciprocal %614 {approx = true} : vector<4x4x1xf32> -> vector<4x4x1xf32>
    %616 = vector.broadcast %615 : vector<4x4x1xf32> to vector<4x4x4xf32>
    %617 = arith.mulf %612, %616 : vector<4x4x4xf32>
    %618 = arith.truncf %617 : vector<4x4x4xf32> to vector<4x4x4xbf16>
    %619 = arith.truncf %581 : vector<4x4x16xf32> to vector<4x4x16xbf16>
    %cst_272 = arith.constant dense<0.000000e+00> : vector<4x4x16xf32>
    %620 = tpu.matmul %618, %619, %cst_272 {dimension_numbers = #tpu.dot_dimension_numbers<[2], [1], [1], [2], [0, 0, 0, 1, 1, 2], [0], [0]>} : vector<4x4x4xbf16>, vector<4x4x16xbf16>, vector<4x4x16xf32> -> vector<4x4x16xf32>
    %621 = vector.extract_strided_slice %620 {offsets = [0, 0, 0], sizes = [1, 4, 16], strides = [1, 1, 1]} : vector<4x4x16xf32> to vector<1x4x16xf32>
    %622 = vector.shape_cast %621 : vector<1x4x16xf32> to vector<4x16xf32>
    %623 = vector.extract_strided_slice %620 {offsets = [1, 0, 0], sizes = [1, 4, 16], strides = [1, 1, 1]} : vector<4x4x16xf32> to vector<1x4x16xf32>
    %624 = vector.shape_cast %623 : vector<1x4x16xf32> to vector<4x16xf32>
    %625 = vector.extract_strided_slice %620 {offsets = [2, 0, 0], sizes = [1, 4, 16], strides = [1, 1, 1]} : vector<4x4x16xf32> to vector<1x4x16xf32>
    %626 = vector.shape_cast %625 : vector<1x4x16xf32> to vector<4x16xf32>
    %627 = vector.extract_strided_slice %620 {offsets = [3, 0, 0], sizes = [1, 4, 16], strides = [1, 1, 1]} : vector<4x4x16xf32> to vector<1x4x16xf32>
    %628 = vector.shape_cast %627 : vector<1x4x16xf32> to vector<4x16xf32>
    %629 = tpu.concatenate %622, %624, %626, %628 in 1 : vector<4x16xf32>, vector<4x16xf32>, vector<4x16xf32>, vector<4x16xf32> -> vector<4x64xf32>
    %630 = arith.truncf %629 : vector<4x64xf32> to vector<4x64xbf16>
    %c1_273 = arith.constant 1 : index
    %c0_274 = arith.constant 0 : index
    %c0_275 = arith.constant 0 : index
    %631 = vector.load %arg26[%c1_273, %c0_274, %c0_275] : memref<2x64x64xbf16, #tpu.memory_space<vmem>>, vector<1x64x64xbf16>
    %632 = vector.shape_cast %631 : vector<1x64x64xbf16> to vector<64x64xbf16>
    %cst_276 = arith.constant dense<0.000000e+00> : vector<4x64xf32>
    %633 = tpu.matmul %630, %632, %cst_276 {dimension_numbers = #tpu.dot_dimension_numbers<[1], [0], [0], [1], [0, 0, 1, 1], [], []>} : vector<4x64xbf16>, vector<64x64xbf16>, vector<4x64xf32> -> vector<4x64xf32>
    %c1_277 = arith.constant 1 : index
    %c0_278 = arith.constant 0 : index
    %c0_279 = arith.constant 0 : index
    %634 = vector.load %arg27[%c1_277, %c0_278, %c0_279] : memref<2x1x64xf32, #tpu.memory_space<vmem>>, vector<1x1x64xf32>
    %635 = vector.shape_cast %634 : vector<1x1x64xf32> to vector<1x64xf32>
    %636 = vector.broadcast %635 : vector<1x64xf32> to vector<4x64xf32>
    %637 = arith.addf %633, %636 : vector<4x64xf32>
    %c1_280 = arith.constant 1 : index
    %c0_281 = arith.constant 0 : index
    %c0_282 = arith.constant 0 : index
    %638 = vector.load %arg30[%c1_280, %c0_281, %c0_282] : memref<2x1x64xf32, #tpu.memory_space<vmem>>, vector<1x1x64xf32>
    %639 = vector.shape_cast %638 : vector<1x1x64xf32> to vector<1x64xf32>
    %c1_283 = arith.constant 1 : index
    %c0_284 = arith.constant 0 : index
    %c0_285 = arith.constant 0 : index
    %640 = vector.load %arg31[%c1_283, %c0_284, %c0_285] : memref<2x1x64xf32, #tpu.memory_space<vmem>>, vector<1x1x64xf32>
    %641 = vector.shape_cast %640 : vector<1x1x64xf32> to vector<1x64xf32>
    %cst_286 = arith.constant dense<0.000000e+00> : vector<4xf32>
    %642 = vector.multi_reduction <add>, %637, %cst_286 [1] : vector<4x64xf32> to vector<4xf32>
    %643 = vector.shape_cast %642 : vector<4xf32> to vector<4x1xf32>
    %cst_287 = arith.constant 6.400000e+01 : f32
    %644 = vector.broadcast %cst_287 : f32 to vector<4x1xf32>
    %645 = arith.divf %643, %644 : vector<4x1xf32>
    %646 = vector.broadcast %645 : vector<4x1xf32> to vector<4x64xf32>
    %647 = arith.subf %637, %646 : vector<4x64xf32>
    %648 = arith.mulf %647, %647 : vector<4x64xf32>
    %cst_288 = arith.constant dense<0.000000e+00> : vector<4xf32>
    %649 = vector.multi_reduction <add>, %648, %cst_288 [1] : vector<4x64xf32> to vector<4xf32>
    %650 = vector.shape_cast %649 : vector<4xf32> to vector<4x1xf32>
    %cst_289 = arith.constant 6.400000e+01 : f32
    %651 = vector.broadcast %cst_289 : f32 to vector<4x1xf32>
    %652 = arith.divf %650, %651 : vector<4x1xf32>
    %cst_290 = arith.constant 9.99999974E-6 : f32
    %653 = vector.broadcast %cst_290 : f32 to vector<4x1xf32>
    %654 = arith.addf %652, %653 : vector<4x1xf32>
    %655 = math.rsqrt %654 : vector<4x1xf32>
    %656 = vector.broadcast %655 : vector<4x1xf32> to vector<4x64xf32>
    %657 = arith.mulf %647, %656 : vector<4x64xf32>
    %658 = vector.broadcast %639 : vector<1x64xf32> to vector<4x64xf32>
    %659 = arith.mulf %657, %658 : vector<4x64xf32>
    %660 = vector.broadcast %641 : vector<1x64xf32> to vector<4x64xf32>
    %661 = arith.addf %659, %660 : vector<4x64xf32>
    %662 = arith.addf %546, %661 : vector<4x64xf32>
    %663 = arith.truncf %662 : vector<4x64xf32> to vector<4x64xbf16>
    %c1_291 = arith.constant 1 : index
    %c0_292 = arith.constant 0 : index
    %c0_293 = arith.constant 0 : index
    %664 = vector.load %arg32[%c1_291, %c0_292, %c0_293] : memref<2x64x256xbf16, #tpu.memory_space<vmem>>, vector<1x64x256xbf16>
    %665 = vector.shape_cast %664 : vector<1x64x256xbf16> to vector<64x256xbf16>
    %cst_294 = arith.constant dense<0.000000e+00> : vector<4x256xf32>
    %666 = tpu.matmul %663, %665, %cst_294 {dimension_numbers = #tpu.dot_dimension_numbers<[1], [0], [0], [1], [0, 0, 1, 1], [], []>} : vector<4x64xbf16>, vector<64x256xbf16>, vector<4x256xf32> -> vector<4x256xf32>
    %c1_295 = arith.constant 1 : index
    %c0_296 = arith.constant 0 : index
    %c0_297 = arith.constant 0 : index
    %667 = vector.load %arg33[%c1_295, %c0_296, %c0_297] : memref<2x1x256xf32, #tpu.memory_space<vmem>>, vector<1x1x256xf32>
    %668 = vector.shape_cast %667 : vector<1x1x256xf32> to vector<1x256xf32>
    %669 = vector.broadcast %668 : vector<1x256xf32> to vector<4x256xf32>
    %670 = arith.addf %666, %669 : vector<4x256xf32>
    %671 = arith.mulf %670, %670 : vector<4x256xf32>
    %672 = arith.mulf %670, %671 : vector<4x256xf32>
    %cst_298 = arith.constant 4.471500e-02 : f32
    %673 = vector.broadcast %cst_298 : f32 to vector<4x256xf32>
    %674 = arith.mulf %673, %672 : vector<4x256xf32>
    %675 = arith.addf %670, %674 : vector<4x256xf32>
    %cst_299 = arith.constant 0.797884583 : f32
    %676 = vector.broadcast %cst_299 : f32 to vector<4x256xf32>
    %677 = arith.mulf %676, %675 : vector<4x256xf32>
    %678 = math.tanh %677 : vector<4x256xf32>
    %cst_300 = arith.constant 1.000000e+00 : f32
    %679 = vector.broadcast %cst_300 : f32 to vector<4x256xf32>
    %680 = arith.addf %679, %678 : vector<4x256xf32>
    %cst_301 = arith.constant 5.000000e-01 : f32
    %681 = vector.broadcast %cst_301 : f32 to vector<4x256xf32>
    %682 = arith.mulf %681, %680 : vector<4x256xf32>
    %683 = arith.mulf %670, %682 : vector<4x256xf32>
    %684 = arith.truncf %683 : vector<4x256xf32> to vector<4x256xbf16>
    %c1_302 = arith.constant 1 : index
    %c0_303 = arith.constant 0 : index
    %c0_304 = arith.constant 0 : index
    %685 = vector.load %arg34[%c1_302, %c0_303, %c0_304] : memref<2x256x64xbf16, #tpu.memory_space<vmem>>, vector<1x256x64xbf16>
    %686 = vector.shape_cast %685 : vector<1x256x64xbf16> to vector<256x64xbf16>
    %cst_305 = arith.constant dense<0.000000e+00> : vector<4x64xf32>
    %687 = tpu.matmul %684, %686, %cst_305 {dimension_numbers = #tpu.dot_dimension_numbers<[1], [0], [0], [1], [0, 0, 1, 1], [], []>} : vector<4x256xbf16>, vector<256x64xbf16>, vector<4x64xf32> -> vector<4x64xf32>
    %c1_306 = arith.constant 1 : index
    %c0_307 = arith.constant 0 : index
    %c0_308 = arith.constant 0 : index
    %688 = vector.load %arg35[%c1_306, %c0_307, %c0_308] : memref<2x1x64xf32, #tpu.memory_space<vmem>>, vector<1x1x64xf32>
    %689 = vector.shape_cast %688 : vector<1x1x64xf32> to vector<1x64xf32>
    %690 = vector.broadcast %689 : vector<1x64xf32> to vector<4x64xf32>
    %691 = arith.addf %687, %690 : vector<4x64xf32>
    %c1_309 = arith.constant 1 : index
    %c0_310 = arith.constant 0 : index
    %c0_311 = arith.constant 0 : index
    %692 = vector.load %arg36[%c1_309, %c0_310, %c0_311] : memref<2x1x64xf32, #tpu.memory_space<vmem>>, vector<1x1x64xf32>
    %693 = vector.shape_cast %692 : vector<1x1x64xf32> to vector<1x64xf32>
    %c1_312 = arith.constant 1 : index
    %c0_313 = arith.constant 0 : index
    %c0_314 = arith.constant 0 : index
    %694 = vector.load %arg37[%c1_312, %c0_313, %c0_314] : memref<2x1x64xf32, #tpu.memory_space<vmem>>, vector<1x1x64xf32>
    %695 = vector.shape_cast %694 : vector<1x1x64xf32> to vector<1x64xf32>
    %cst_315 = arith.constant dense<0.000000e+00> : vector<4xf32>
    %696 = vector.multi_reduction <add>, %691, %cst_315 [1] : vector<4x64xf32> to vector<4xf32>
    %697 = vector.shape_cast %696 : vector<4xf32> to vector<4x1xf32>
    %cst_316 = arith.constant 6.400000e+01 : f32
    %698 = vector.broadcast %cst_316 : f32 to vector<4x1xf32>
    %699 = arith.divf %697, %698 : vector<4x1xf32>
    %700 = vector.broadcast %699 : vector<4x1xf32> to vector<4x64xf32>
    %701 = arith.subf %691, %700 : vector<4x64xf32>
    %702 = arith.mulf %701, %701 : vector<4x64xf32>
    %cst_317 = arith.constant dense<0.000000e+00> : vector<4xf32>
    %703 = vector.multi_reduction <add>, %702, %cst_317 [1] : vector<4x64xf32> to vector<4xf32>
    %704 = vector.shape_cast %703 : vector<4xf32> to vector<4x1xf32>
    %cst_318 = arith.constant 6.400000e+01 : f32
    %705 = vector.broadcast %cst_318 : f32 to vector<4x1xf32>
    %706 = arith.divf %704, %705 : vector<4x1xf32>
    %cst_319 = arith.constant 9.99999974E-6 : f32
    %707 = vector.broadcast %cst_319 : f32 to vector<4x1xf32>
    %708 = arith.addf %706, %707 : vector<4x1xf32>
    %709 = math.rsqrt %708 : vector<4x1xf32>
    %710 = vector.broadcast %709 : vector<4x1xf32> to vector<4x64xf32>
    %711 = arith.mulf %701, %710 : vector<4x64xf32>
    %712 = vector.broadcast %693 : vector<1x64xf32> to vector<4x64xf32>
    %713 = arith.mulf %711, %712 : vector<4x64xf32>
    %714 = vector.broadcast %695 : vector<1x64xf32> to vector<4x64xf32>
    %715 = arith.addf %713, %714 : vector<4x64xf32>
    %716 = arith.addf %662, %715 : vector<4x64xf32>
    %c0_320 = arith.constant 0 : index
    %c0_321 = arith.constant 0 : index
    %717 = vector.load %arg38[%c0_320, %c0_321] : memref<1x64xf32, #tpu.memory_space<vmem>>, vector<1x64xf32>
    %c0_322 = arith.constant 0 : index
    %c0_323 = arith.constant 0 : index
    %718 = vector.load %arg39[%c0_322, %c0_323] : memref<1x64xf32, #tpu.memory_space<vmem>>, vector<1x64xf32>
    %cst_324 = arith.constant dense<0.000000e+00> : vector<4xf32>
    %719 = vector.multi_reduction <add>, %716, %cst_324 [1] : vector<4x64xf32> to vector<4xf32>
    %720 = vector.shape_cast %719 : vector<4xf32> to vector<4x1xf32>
    %cst_325 = arith.constant 6.400000e+01 : f32
    %721 = vector.broadcast %cst_325 : f32 to vector<4x1xf32>
    %722 = arith.divf %720, %721 : vector<4x1xf32>
    %723 = vector.broadcast %722 : vector<4x1xf32> to vector<4x64xf32>
    %724 = arith.subf %716, %723 : vector<4x64xf32>
    %725 = arith.mulf %724, %724 : vector<4x64xf32>
    %cst_326 = arith.constant dense<0.000000e+00> : vector<4xf32>
    %726 = vector.multi_reduction <add>, %725, %cst_326 [1] : vector<4x64xf32> to vector<4xf32>
    %727 = vector.shape_cast %726 : vector<4xf32> to vector<4x1xf32>
    %cst_327 = arith.constant 6.400000e+01 : f32
    %728 = vector.broadcast %cst_327 : f32 to vector<4x1xf32>
    %729 = arith.divf %727, %728 : vector<4x1xf32>
    %cst_328 = arith.constant 9.99999974E-6 : f32
    %730 = vector.broadcast %cst_328 : f32 to vector<4x1xf32>
    %731 = arith.addf %729, %730 : vector<4x1xf32>
    %732 = math.rsqrt %731 : vector<4x1xf32>
    %733 = vector.broadcast %732 : vector<4x1xf32> to vector<4x64xf32>
    %734 = arith.mulf %724, %733 : vector<4x64xf32>
    %735 = vector.broadcast %717 : vector<1x64xf32> to vector<4x64xf32>
    %736 = arith.mulf %734, %735 : vector<4x64xf32>
    %737 = vector.broadcast %718 : vector<1x64xf32> to vector<4x64xf32>
    %738 = arith.addf %736, %737 : vector<4x64xf32>
    %cst_329 = arith.constant dense<0.000000e+00> : vector<64xf32>
    %739 = vector.multi_reduction <add>, %738, %cst_329 [0] : vector<4x64xf32> to vector<64xf32>
    %740 = vector.shape_cast %739 : vector<64xf32> to vector<1x64xf32>
    %cst_330 = arith.constant 4.000000e+00 : f32
    %741 = vector.broadcast %cst_330 : f32 to vector<1x64xf32>
    %742 = arith.divf %740, %741 : vector<1x64xf32>
    %743 = arith.truncf %742 : vector<1x64xf32> to vector<1x64xbf16>
    %c0_331 = arith.constant 0 : index
    %c0_332 = arith.constant 0 : index
    %744 = vector.load %arg40[%c0_331, %c0_332] : memref<64x10xbf16, #tpu.memory_space<vmem>>, vector<64x10xbf16>
    %cst_333 = arith.constant dense<0.000000e+00> : vector<1x10xf32>
    %745 = tpu.matmul %743, %744, %cst_333 {dimension_numbers = #tpu.dot_dimension_numbers<[1], [0], [0], [1], [0, 0, 1, 1], [], []>} : vector<1x64xbf16>, vector<64x10xbf16>, vector<1x10xf32> -> vector<1x10xf32>
    %c0_334 = arith.constant 0 : index
    %c0_335 = arith.constant 0 : index
    %746 = vector.load %arg41[%c0_334, %c0_335] : memref<1x10xf32, #tpu.memory_space<vmem>>, vector<1x10xf32>
    %747 = arith.addf %745, %746 : vector<1x10xf32>
    %c0_336 = arith.constant 0 : index
    %c0_337 = arith.constant 0 : index
    %c0_338 = arith.constant 0 : index
    %748 = vector.load %arg42[%c0_336, %c0_337, %c0_338] : memref<1x1x10xf32, #tpu.memory_space<vmem>>, vector<1x1x10xf32>
    %749 = vector.shape_cast %748 : vector<1x1x10xf32> to vector<1x10xf32>
    %750 = vector.shape_cast %747 : vector<1x10xf32> to vector<1x1x10xf32>
    tpu.vector_store %arg42[%c0_336, %c0_337, %c0_338], %750 {strides = array<i32>} : memref<1x1x10xf32, #tpu.memory_space<vmem>>, vector<1x1x10xf32>,
    return
  }
  func.func @transform_0(%arg0: i32) -> (i32, i32, i32) {
    %c0_i32 = arith.constant 0 : i32
    %c0_i32_0 = arith.constant 0 : i32
    %c0_i32_1 = arith.constant 0 : i32
    return %arg0, %c0_i32, %c0_i32_0 : i32, i32, i32
  }
  func.func @transform_1(%arg0: i32) -> (i32, i32) {
    %c0_i32 = arith.constant 0 : i32
    %c0_i32_0 = arith.constant 0 : i32
    %c0_i32_1 = arith.constant 0 : i32
    return %c0_i32, %c0_i32_0 : i32, i32
  }
  func.func @transform_2(%arg0: i32) -> (i32, i32) {
    %c0_i32 = arith.constant 0 : i32
    %c0_i32_0 = arith.constant 0 : i32
    %c0_i32_1 = arith.constant 0 : i32
    return %c0_i32, %c0_i32_0 : i32, i32
  }
  func.func @transform_3(%arg0: i32) -> (i32, i32) {
    %c0_i32 = arith.constant 0 : i32
    %c0_i32_0 = arith.constant 0 : i32
    %c0_i32_1 = arith.constant 0 : i32
    return %c0_i32, %c0_i32_0 : i32, i32
  }
  func.func @transform_4(%arg0: i32) -> (i32, i32) {
    %c0_i32 = arith.constant 0 : i32
    %c0_i32_0 = arith.constant 0 : i32
    %c0_i32_1 = arith.constant 0 : i32
    return %c0_i32, %c0_i32_0 : i32, i32
  }
  func.func @transform_5(%arg0: i32) -> (i32, i32, i32) {
    %c0_i32 = arith.constant 0 : i32
    %c0_i32_0 = arith.constant 0 : i32
    %c0_i32_1 = arith.constant 0 : i32
    %c0_i32_2 = arith.constant 0 : i32
    return %c0_i32, %c0_i32_0, %c0_i32_1 : i32, i32, i32
  }
  func.func @transform_6(%arg0: i32) -> (i32, i32, i32) {
    %c0_i32 = arith.constant 0 : i32
    %c0_i32_0 = arith.constant 0 : i32
    %c0_i32_1 = arith.constant 0 : i32
    %c0_i32_2 = arith.constant 0 : i32
    return %c0_i32, %c0_i32_0, %c0_i32_1 : i32, i32, i32
  }
  func.func @transform_7(%arg0: i32) -> (i32, i32, i32) {
    %c0_i32 = arith.constant 0 : i32
    %c0_i32_0 = arith.constant 0 : i32
    %c0_i32_1 = arith.constant 0 : i32
    %c0_i32_2 = arith.constant 0 : i32
    return %c0_i32, %c0_i32_0, %c0_i32_1 : i32, i32, i32
  }
  func.func @transform_8(%arg0: i32) -> (i32, i32, i32) {
    %c0_i32 = arith.constant 0 : i32
    %c0_i32_0 = arith.constant 0 : i32
    %c0_i32_1 = arith.constant 0 : i32
    %c0_i32_2 = arith.constant 0 : i32
    return %c0_i32, %c0_i32_0, %c0_i32_1 : i32, i32, i32
  }
  func.func @transform_9(%arg0: i32) -> (i32, i32, i32, i32) {
    %c0_i32 = arith.constant 0 : i32
    %c0_i32_0 = arith.constant 0 : i32
    %c0_i32_1 = arith.constant 0 : i32
    %c0_i32_2 = arith.constant 0 : i32
    %c0_i32_3 = arith.constant 0 : i32
    return %c0_i32, %c0_i32_0, %c0_i32_1, %c0_i32_2 : i32, i32, i32, i32
  }
  func.func @transform_10(%arg0: i32) -> (i32, i32, i32, i32) {
    %c0_i32 = arith.constant 0 : i32
    %c0_i32_0 = arith.constant 0 : i32
    %c0_i32_1 = arith.constant 0 : i32
    %c0_i32_2 = arith.constant 0 : i32
    %c0_i32_3 = arith.constant 0 : i32
    return %c0_i32, %c0_i32_0, %c0_i32_1, %c0_i32_2 : i32, i32, i32, i32
  }
  func.func @transform_11(%arg0: i32) -> (i32, i32, i32) {
    %c0_i32 = arith.constant 0 : i32
    %c0_i32_0 = arith.constant 0 : i32
    %c0_i32_1 = arith.constant 0 : i32
    %c0_i32_2 = arith.constant 0 : i32
    return %c0_i32, %c0_i32_0, %c0_i32_1 : i32, i32, i32
  }
  func.func @transform_12(%arg0: i32) -> (i32, i32, i32) {
    %c0_i32 = arith.constant 0 : i32
    %c0_i32_0 = arith.constant 0 : i32
    %c0_i32_1 = arith.constant 0 : i32
    %c0_i32_2 = arith.constant 0 : i32
    return %c0_i32, %c0_i32_0, %c0_i32_1 : i32, i32, i32
  }
  func.func @transform_13(%arg0: i32) -> (i32, i32, i32) {
    %c0_i32 = arith.constant 0 : i32
    %c0_i32_0 = arith.constant 0 : i32
    %c0_i32_1 = arith.constant 0 : i32
    %c0_i32_2 = arith.constant 0 : i32
    return %c0_i32, %c0_i32_0, %c0_i32_1 : i32, i32, i32
  }
  func.func @transform_14(%arg0: i32) -> (i32, i32, i32) {
    %c0_i32 = arith.constant 0 : i32
    %c0_i32_0 = arith.constant 0 : i32
    %c0_i32_1 = arith.constant 0 : i32
    %c0_i32_2 = arith.constant 0 : i32
    return %c0_i32, %c0_i32_0, %c0_i32_1 : i32, i32, i32
  }
  func.func @transform_15(%arg0: i32) -> (i32, i32, i32) {
    %c0_i32 = arith.constant 0 : i32
    %c0_i32_0 = arith.constant 0 : i32
    %c0_i32_1 = arith.constant 0 : i32
    %c0_i32_2 = arith.constant 0 : i32
    return %c0_i32, %c0_i32_0, %c0_i32_1 : i32, i32, i32
  }
  func.func @transform_16(%arg0: i32) -> (i32, i32, i32) {
    %c0_i32 = arith.constant 0 : i32
    %c0_i32_0 = arith.constant 0 : i32
    %c0_i32_1 = arith.constant 0 : i32
    %c0_i32_2 = arith.constant 0 : i32
    return %c0_i32, %c0_i32_0, %c0_i32_1 : i32, i32, i32
  }
  func.func @transform_17(%arg0: i32) -> (i32, i32, i32) {
    %c0_i32 = arith.constant 0 : i32
    %c0_i32_0 = arith.constant 0 : i32
    %c0_i32_1 = arith.constant 0 : i32
    %c0_i32_2 = arith.constant 0 : i32
    return %c0_i32, %c0_i32_0, %c0_i32_1 : i32, i32, i32
  }
  func.func @transform_18(%arg0: i32) -> (i32, i32, i32) {
    %c0_i32 = arith.constant 0 : i32
    %c0_i32_0 = arith.constant 0 : i32
    %c0_i32_1 = arith.constant 0 : i32
    %c0_i32_2 = arith.constant 0 : i32
    return %c0_i32, %c0_i32_0, %c0_i32_1 : i32, i32, i32
  }
  func.func @transform_19(%arg0: i32) -> (i32, i32, i32) {
    %c0_i32 = arith.constant 0 : i32
    %c0_i32_0 = arith.constant 0 : i32
    %c0_i32_1 = arith.constant 0 : i32
    %c0_i32_2 = arith.constant 0 : i32
    return %c0_i32, %c0_i32_0, %c0_i32_1 : i32, i32, i32
  }
  func.func @transform_20(%arg0: i32) -> (i32, i32) {
    %c0_i32 = arith.constant 0 : i32
    %c0_i32_0 = arith.constant 0 : i32
    %c0_i32_1 = arith.constant 0 : i32
    return %c0_i32, %c0_i32_0 : i32, i32
  }
  func.func @transform_21(%arg0: i32) -> (i32, i32) {
    %c0_i32 = arith.constant 0 : i32
    %c0_i32_0 = arith.constant 0 : i32
    %c0_i32_1 = arith.constant 0 : i32
    return %c0_i32, %c0_i32_0 : i32, i32
  }
  func.func @transform_22(%arg0: i32) -> (i32, i32) {
    %c0_i32 = arith.constant 0 : i32
    %c0_i32_0 = arith.constant 0 : i32
    %c0_i32_1 = arith.constant 0 : i32
    return %c0_i32, %c0_i32_0 : i32, i32
  }
  func.func @transform_23(%arg0: i32) -> (i32, i32, i32) {
    %c0_i32 = arith.constant 0 : i32
    %c0_i32_0 = arith.constant 0 : i32
    %c0_i32_1 = arith.constant 0 : i32
    %c0_i32_2 = arith.constant 0 : i32
    return %c0_i32, %c0_i32_0, %c0_i32_1 : i32, i32, i32
  }
  func.func @transform_24(%arg0: i32) -> (i32, i32, i32) {
    %c0_i32 = arith.constant 0 : i32
    %c0_i32_0 = arith.constant 0 : i32
    %c0_i32_1 = arith.constant 0 : i32
    %c0_i32_2 = arith.constant 0 : i32
    return %c0_i32, %c0_i32_0, %c0_i32_1 : i32, i32, i32
  }
  func.func @transform_25(%arg0: i32) -> (i32, i32, i32) {
    %c0_i32 = arith.constant 0 : i32
    %c0_i32_0 = arith.constant 0 : i32
    %c0_i32_1 = arith.constant 0 : i32
    %c0_i32_2 = arith.constant 0 : i32
    return %c0_i32, %c0_i32_0, %c0_i32_1 : i32, i32, i32
  }
  func.func @transform_26(%arg0: i32) -> (i32, i32, i32) {
    %c0_i32 = arith.constant 0 : i32
    %c0_i32_0 = arith.constant 0 : i32
    %c0_i32_1 = arith.constant 0 : i32
    %c0_i32_2 = arith.constant 0 : i32
    return %c0_i32, %c0_i32_0, %c0_i32_1 : i32, i32, i32
  }
  func.func @transform_27(%arg0: i32) -> (i32, i32, i32, i32) {
    %c0_i32 = arith.constant 0 : i32
    %c0_i32_0 = arith.constant 0 : i32
    %c0_i32_1 = arith.constant 0 : i32
    %c0_i32_2 = arith.constant 0 : i32
    %c0_i32_3 = arith.constant 0 : i32
    return %c0_i32, %c0_i32_0, %c0_i32_1, %c0_i32_2 : i32, i32, i32, i32
  }
  func.func @transform_28(%arg0: i32) -> (i32, i32, i32, i32) {
    %c0_i32 = arith.constant 0 : i32
    %c0_i32_0 = arith.constant 0 : i32
    %c0_i32_1 = arith.constant 0 : i32
    %c0_i32_2 = arith.constant 0 : i32
    %c0_i32_3 = arith.constant 0 : i32
    return %c0_i32, %c0_i32_0, %c0_i32_1, %c0_i32_2 : i32, i32, i32, i32
  }
  func.func @transform_29(%arg0: i32) -> (i32, i32, i32) {
    %c0_i32 = arith.constant 0 : i32
    %c0_i32_0 = arith.constant 0 : i32
    %c0_i32_1 = arith.constant 0 : i32
    %c0_i32_2 = arith.constant 0 : i32
    return %c0_i32, %c0_i32_0, %c0_i32_1 : i32, i32, i32
  }
  func.func @transform_30(%arg0: i32) -> (i32, i32, i32) {
    %c0_i32 = arith.constant 0 : i32
    %c0_i32_0 = arith.constant 0 : i32
    %c0_i32_1 = arith.constant 0 : i32
    %c0_i32_2 = arith.constant 0 : i32
    return %c0_i32, %c0_i32_0, %c0_i32_1 : i32, i32, i32
  }
  func.func @transform_31(%arg0: i32) -> (i32, i32, i32) {
    %c0_i32 = arith.constant 0 : i32
    %c0_i32_0 = arith.constant 0 : i32
    %c0_i32_1 = arith.constant 0 : i32
    %c0_i32_2 = arith.constant 0 : i32
    return %c0_i32, %c0_i32_0, %c0_i32_1 : i32, i32, i32
  }
  func.func @transform_32(%arg0: i32) -> (i32, i32, i32) {
    %c0_i32 = arith.constant 0 : i32
    %c0_i32_0 = arith.constant 0 : i32
    %c0_i32_1 = arith.constant 0 : i32
    %c0_i32_2 = arith.constant 0 : i32
    return %c0_i32, %c0_i32_0, %c0_i32_1 : i32, i32, i32
  }
  func.func @transform_33(%arg0: i32) -> (i32, i32, i32) {
    %c0_i32 = arith.constant 0 : i32
    %c0_i32_0 = arith.constant 0 : i32
    %c0_i32_1 = arith.constant 0 : i32
    %c0_i32_2 = arith.constant 0 : i32
    return %c0_i32, %c0_i32_0, %c0_i32_1 : i32, i32, i32
  }
  func.func @transform_34(%arg0: i32) -> (i32, i32, i32) {
    %c0_i32 = arith.constant 0 : i32
    %c0_i32_0 = arith.constant 0 : i32
    %c0_i32_1 = arith.constant 0 : i32
    %c0_i32_2 = arith.constant 0 : i32
    return %c0_i32, %c0_i32_0, %c0_i32_1 : i32, i32, i32
  }
  func.func @transform_35(%arg0: i32) -> (i32, i32, i32) {
    %c0_i32 = arith.constant 0 : i32
    %c0_i32_0 = arith.constant 0 : i32
    %c0_i32_1 = arith.constant 0 : i32
    %c0_i32_2 = arith.constant 0 : i32
    return %c0_i32, %c0_i32_0, %c0_i32_1 : i32, i32, i32
  }
  func.func @transform_36(%arg0: i32) -> (i32, i32, i32) {
    %c0_i32 = arith.constant 0 : i32
    %c0_i32_0 = arith.constant 0 : i32
    %c0_i32_1 = arith.constant 0 : i32
    %c0_i32_2 = arith.constant 0 : i32
    return %c0_i32, %c0_i32_0, %c0_i32_1 : i32, i32, i32
  }
  func.func @transform_37(%arg0: i32) -> (i32, i32) {
    %c0_i32 = arith.constant 0 : i32
    %c0_i32_0 = arith.constant 0 : i32
    %c0_i32_1 = arith.constant 0 : i32
    return %c0_i32, %c0_i32_0 : i32, i32
  }
  func.func @transform_38(%arg0: i32) -> (i32, i32) {
    %c0_i32 = arith.constant 0 : i32
    %c0_i32_0 = arith.constant 0 : i32
    %c0_i32_1 = arith.constant 0 : i32
    return %c0_i32, %c0_i32_0 : i32, i32
  }
  func.func @transform_39(%arg0: i32) -> (i32, i32) {
    %c0_i32 = arith.constant 0 : i32
    %c0_i32_0 = arith.constant 0 : i32
    %c0_i32_1 = arith.constant 0 : i32
    return %c0_i32, %c0_i32_0 : i32, i32
  }
  func.func @transform_40(%arg0: i32) -> (i32, i32) {
    %c0_i32 = arith.constant 0 : i32
    %c0_i32_0 = arith.constant 0 : i32
    %c0_i32_1 = arith.constant 0 : i32
    return %c0_i32, %c0_i32_0 : i32, i32
  }
  func.func @transform_41(%arg0: i32) -> (i32, i32, i32) {
    %c0_i32 = arith.constant 0 : i32
    %c0_i32_0 = arith.constant 0 : i32
    %c0_i32_1 = arith.constant 0 : i32
    return %arg0, %c0_i32, %c0_i32_0 : i32, i32, i32
  }
}

</mosaic_0001>

<llo_original>
// kernel: forward.1
$region0: #{forward.1}
  #allocation0 [shape = 'u32[]', space=smem, size = 0x4, offset = 0x4, fixed_abs, tag = 'smem constant byte address 0x4 - core index']
  #allocation1 [shape = 'u32[144,128]{1,0:T(1,128)}', space=vmem, size = 0x12000, scoped, tag = 'internal scratch']
  %s0 = inlined_call_operand.smem [shape: u32[42], index: -1, kind: input, shape index: {}]
  %s1 = sld [smem:[%s0]]
  %s2 = scalar_lea.smem %s0, 1
  %s3 = sld [smem:[%s2]]
  %s4 = scalar_lea.smem %s0, 2
  %s5 = sld [smem:[%s4]]
  %s6 = scalar_lea.smem %s0, 3
  %s7 = sld [smem:[%s6]]
  %s8 = scalar_lea.smem %s0, 4
  %s9 = sld [smem:[%s8]]
  %s10 = scalar_lea.smem %s0, 5
  %s11 = sld [smem:[%s10]]
  %s12 = scalar_lea.smem %s0, 6
  %s13 = sld [smem:[%s12]]
  %s14 = scalar_lea.smem %s0, 7
  %s15 = sld [smem:[%s14]]
  %s16 = scalar_lea.smem %s0, 8
  %s17 = sld [smem:[%s16]]
  %s18 = scalar_lea.smem %s0, 9
  %s19 = sld [smem:[%s18]]
  %s20 = scalar_lea.smem %s0, 10
  %s21 = sld [smem:[%s20]]
  %s22 = scalar_lea.smem %s0, 11
  %s23 = sld [smem:[%s22]]
  %s24 = scalar_lea.smem %s0, 12
  %s25 = sld [smem:[%s24]]
  %s26 = scalar_lea.smem %s0, 13
  %s27 = sld [smem:[%s26]]
  %s28 = scalar_lea.smem %s0, 14
  %s29 = sld [smem:[%s28]]
  %s30 = scalar_lea.smem %s0, 15
  %s31 = sld [smem:[%s30]]
  %s32 = scalar_lea.smem %s0, 16
  %s33 = sld [smem:[%s32]]
  %s34 = scalar_lea.smem %s0, 17
  %s35 = sld [smem:[%s34]]
  %s36 = scalar_lea.smem %s0, 18
  %s37 = sld [smem:[%s36]]
  %s38 = scalar_lea.smem %s0, 19
  %s39 = sld [smem:[%s38]]
  %s40 = scalar_lea.smem %s0, 20
  %s41 = sld [smem:[%s40]]
  %s42 = scalar_lea.smem %s0, 21
  %s43 = sld [smem:[%s42]]
  %s44 = scalar_lea.smem %s0, 22
  %s45 = sld [smem:[%s44]]
  %s46 = scalar_lea.smem %s0, 23
  %s47 = sld [smem:[%s46]]
  %s48 = scalar_lea.smem %s0, 24
  %s49 = sld [smem:[%s48]]
  %s50 = scalar_lea.smem %s0, 25
  %s51 = sld [smem:[%s50]]
  %s52 = scalar_lea.smem %s0, 26
  %s53 = sld [smem:[%s52]]
  %s54 = scalar_lea.smem %s0, 27
  %s55 = sld [smem:[%s54]]
  %s56 = scalar_lea.smem %s0, 28
  %s57 = sld [smem:[%s56]]
  %s58 = scalar_lea.smem %s0, 29
  %s59 = sld [smem:[%s58]]
  %s60 = scalar_lea.smem %s0, 30
  %s61 = sld [smem:[%s60]]
  %s62 = scalar_lea.smem %s0, 31
  %s63 = sld [smem:[%s62]]
  %s64 = scalar_lea.smem %s0, 32
  %s65 = sld [smem:[%s64]]
  %s66 = scalar_lea.smem %s0, 33
  %s67 = sld [smem:[%s66]]
  %s68 = scalar_lea.smem %s0, 34
  %s69 = sld [smem:[%s68]]
  %s70 = scalar_lea.smem %s0, 35
  %s71 = sld [smem:[%s70]]
  %s72 = scalar_lea.smem %s0, 36
  %s73 = sld [smem:[%s72]]
  %s74 = scalar_lea.smem %s0, 37
  %s75 = sld [smem:[%s74]]
  %s76 = scalar_lea.smem %s0, 38
  %s77 = sld [smem:[%s76]]
  %s78 = scalar_lea.smem %s0, 39
  %s79 = sld [smem:[%s78]]
  %s80 = scalar_lea.smem %s0, 40
  %s81 = sld [smem:[%s80]]
  %s82 = scalar_lea.smem %s0, 41
  %s83 = sld [smem:[%s82]]
  %s84 = sld [smem:[#allocation0]]
  $region197: #{forward.1} parent=0
    _
  %s86 = ssub.s32 1, %s84
  %s87 = scalar_select 0, %s86, %s84
  $region1: #{forward.1} parent=0
    #allocation2 [shape = 'u8[1024]{0}', space=vmem, size = 0x400, scoped, tag = 'output window, operand 0']
    #allocation3 [shape = 's32[2]{0}', space=sflag, size = 0x8, scoped, tag = 'scoped memory for forward.1']
    %88 = vsyncpa [#allocation3], 0
    %s89 = scalar_lea.sflag [#allocation3], 1
    %90 = vsyncpa %s89, 0
    loop: start=0, step=1, limit=4
    $region2: #{forward.1} parent=1 // loop_pre_header
      _
    $region3: #{forward.1} parent=1 // loop_header
      %s92 = sphi 0, %s96
      %p93 = scmp.ge.s32.totalorder %s92, 4
      %s102 = sphi 0, %s104
      %s105 = sphi 0, %s102
      %s106 = sphi 0, %s105
      %s122 = sphi 0, %s106
      %s126 = sphi 0, %s126
      %s128 = sphi 0, %s126
      %s129 = sphi 0, %s128
      %s143 = sphi 0, %s129
      %s147 = sphi 0, %s147
      %s149 = sphi 0, %s147
      %s150 = sphi 0, %s149
      %s164 = sphi 0, %s150
      %s168 = sphi 0, %s168
      %s170 = sphi 0, %s168
      %s171 = sphi 0, %s170
      %s185 = sphi 0, %s171
      %s189 = sphi 0, %s189
      %s191 = sphi 0, %s189
      %s192 = sphi 0, %s191
      %s206 = sphi 0, %s192
      %s210 = sphi 0, %s210
      %s212 = sphi 0, %s210
      %s213 = sphi 0, %s212
      %s227 = sphi 0, %s213
      %s231 = sphi 0, %s231
      %s233 = sphi 0, %s231
      %s234 = sphi 0, %s233
      %s248 = sphi 0, %s234
      %s252 = sphi 0, %s252
      %s254 = sphi 0, %s252
      %s255 = sphi 0, %s254
      %s269 = sphi 0, %s255
      %s273 = sphi 0, %s273
      %s275 = sphi 0, %s273
      %s276 = sphi 0, %s275
      %s290 = sphi 0, %s276
      %s294 = sphi 0, %s294
      %s296 = sphi 0, %s294
      %s297 = sphi 0, %s296
      %s311 = sphi 0, %s297
      %s315 = sphi 0, %s315
      %s317 = sphi 0, %s315
      %s318 = sphi 0, %s317
      %s332 = sphi 0, %s318
      %s336 = sphi 0, %s336
      %s338 = sphi 0, %s336
      %s339 = sphi 0, %s338
      %s353 = sphi 0, %s339
      %s357 = sphi 0, %s357
      %s359 = sphi 0, %s357
      %s360 = sphi 0, %s359
      %s374 = sphi 0, %s360
      %s378 = sphi 0, %s378
      %s380 = sphi 0, %s378
      %s381 = sphi 0, %s380
      %s395 = sphi 0, %s381
      %s399 = sphi 0, %s399
      %s401 = sphi 0, %s399
      %s402 = sphi 0, %s401
      %s416 = sphi 0, %s402
      %s420 = sphi 0, %s420
      %s422 = sphi 0, %s420
      %s423 = sphi 0, %s422
      %s437 = sphi 0, %s423
      %s441 = sphi 0, %s441
      %s443 = sphi 0, %s441
      %s444 = sphi 0, %s443
      %s458 = sphi 0, %s444
      %s462 = sphi 0, %s462
      %s464 = sphi 0, %s462
      %s465 = sphi 0, %s464
      %s479 = sphi 0, %s465
      %s483 = sphi 0, %s483
      %s485 = sphi 0, %s483
      %s486 = sphi 0, %s485
      %s500 = sphi 0, %s486
      %s504 = sphi 0, %s504
      %s506 = sphi 0, %s504
      %s507 = sphi 0, %s506
      %s521 = sphi 0, %s507
      %s525 = sphi 0, %s525
      %s527 = sphi 0, %s525
      %s528 = sphi 0, %s527
      %s542 = sphi 0, %s528
      %s546 = sphi 0, %s546
      %s548 = sphi 0, %s546
      %s549 = sphi 0, %s548
      %s563 = sphi 0, %s549
      %s567 = sphi 0, %s567
      %s569 = sphi 0, %s567
      %s570 = sphi 0, %s569
      %s584 = sphi 0, %s570
      %s588 = sphi 0, %s588
      %s590 = sphi 0, %s588
      %s591 = sphi 0, %s590
      %s605 = sphi 0, %s591
      %s609 = sphi 0, %s609
      %s611 = sphi 0, %s609
      %s612 = sphi 0, %s611
      %s626 = sphi 0, %s612
      %s630 = sphi 0, %s630
      %s632 = sphi 0, %s630
      %s633 = sphi 0, %s632
      %s647 = sphi 0, %s633
      %s651 = sphi 0, %s651
      %s653 = sphi 0, %s651
      %s654 = sphi 0, %s653
      %s668 = sphi 0, %s654
      %s672 = sphi 0, %s672
      %s674 = sphi 0, %s672
      %s675 = sphi 0, %s674
      %s689 = sphi 0, %s675
      %s693 = sphi 0, %s693
      %s695 = sphi 0, %s693
      %s696 = sphi 0, %s695
      %s710 = sphi 0, %s696
      %s714 = sphi 0, %s714
      %s716 = sphi 0, %s714
      %s717 = sphi 0, %s716
      %s731 = sphi 0, %s717
      %s735 = sphi 0, %s735
      %s737 = sphi 0, %s735
      %s738 = sphi 0, %s737
      %s752 = sphi 0, %s738
      %s756 = sphi 0, %s756
      %s758 = sphi 0, %s756
      %s759 = sphi 0, %s758
      %s773 = sphi 0, %s759
      %s777 = sphi 0, %s777
      %s779 = sphi 0, %s777
      %s780 = sphi 0, %s779
      %s794 = sphi 0, %s780
      %s798 = sphi 0, %s798
      %s800 = sphi 0, %s798
      %s801 = sphi 0, %s800
      %s815 = sphi 0, %s801
      %s819 = sphi 0, %s819
      %s821 = sphi 0, %s819
      %s822 = sphi 0, %s821
      %s836 = sphi 0, %s822
      %s840 = sphi 0, %s840
      %s842 = sphi 0, %s840
      %s843 = sphi 0, %s842
      %s857 = sphi 0, %s843
      %s861 = sphi 0, %s861
      %s863 = sphi 0, %s861
      %s864 = sphi 0, %s863
      %s878 = sphi 0, %s864
      %s882 = sphi 0, %s882
      %s884 = sphi 0, %s882
      %s885 = sphi 0, %s884
      %s899 = sphi 0, %s885
      %s903 = sphi 0, %s903
      %s905 = sphi 0, %s903
      %s906 = sphi 0, %s905
      %s920 = sphi 0, %s906
      %s924 = sphi 0, %s924
      %s926 = sphi 0, %s924
      %s927 = sphi 0, %s926
      %s941 = sphi 0, %s927
      %s945 = sphi 0, %s945
      %s947 = sphi 0, %s945
      %s948 = sphi 0, %s947
      %s962 = sphi 0, %s948
      %s968 = sphi 0, %s970
      %s971 = sphi 0, %s968
      %s972 = sphi 0, %s971
      %s988 = sphi 0, %s972
    $region4: #{forward.1} parent=1 // loop_header_branch
      %95 = sbr.rel (%p93) target = $region8
    $region5: #{forward.1} parent=1 // loop_body
      %s97 = ssub.s32 %s92, 1
      %s98 = ssub.s32 %s92, 2
      %s99 = sadd.s32 %s92, 1
      %s100 = ssub.s32 %s92, %s99
      %p101 = scmp.eq.s32.totalorder %s100, 0
      %s103 = sadd.s32 %s102, 1
      %s104 = scalar_select %p101, %s102, %s103
      %p107 = pneg %p101
      %p108 = scmp.eq.s32.totalorder %s92, 1
      %p109 = por %p107, %p108
      %p110 = scmp.ne.s32.totalorder %s102, %s105
      %p111 = scmp.eq.s32.totalorder %s92, 0
      %p112 = por %p110, %p111
      %p113 = scmp.ne.s32.totalorder %s102, %s105
      %p114 = scmp.eq.s32.totalorder %s97, 1
      %p115 = por %p113, %p114
      %p116 = scmp.ne.s32.totalorder %s105, %s106
      %p117 = scmp.eq.s32.totalorder %s97, 0
      %p118 = por %p116, %p117
      %p119 = scmp.ne.s32.totalorder %s105, %s106
      %p120 = scmp.eq.s32.totalorder %s98, 1
      %p121 = por %p119, %p120
      %p123 = scmp.ne.s32.totalorder %s106, %s122
      %p124 = scmp.eq.s32.totalorder %s98, 0
      %p125 = por %p123, %p124
      %s127 = sadd.s32 %s126, 1
      %p130 = scmp.eq.s32.totalorder %s92, 1
      %p131 = scmp.ne.s32.totalorder %s126, %s128
      %p132 = scmp.eq.s32.totalorder %s92, 0
      %p133 = por %p131, %p132
      %p134 = scmp.ne.s32.totalorder %s126, %s128
      %p135 = scmp.eq.s32.totalorder %s97, 1
      %p136 = por %p134, %p135
      %p137 = scmp.ne.s32.totalorder %s128, %s129
      %p138 = scmp.eq.s32.totalorder %s97, 0
      %p139 = por %p137, %p138
      %p140 = scmp.ne.s32.totalorder %s128, %s129
      %p141 = scmp.eq.s32.totalorder %s98, 1
      %p142 = por %p140, %p141
      %p144 = scmp.ne.s32.totalorder %s129, %s143
      %p145 = scmp.eq.s32.totalorder %s98, 0
      %p146 = por %p144, %p145
      %s148 = sadd.s32 %s147, 1
      %p151 = scmp.eq.s32.totalorder %s92, 1
      %p152 = scmp.ne.s32.totalorder %s147, %s149
      %p153 = scmp.eq.s32.totalorder %s92, 0
      %p154 = por %p152, %p153
      %p155 = scmp.ne.s32.totalorder %s147, %s149
      %p156 = scmp.eq.s32.totalorder %s97, 1
      %p157 = por %p155, %p156
      %p158 = scmp.ne.s32.totalorder %s149, %s150
      %p159 = scmp.eq.s32.totalorder %s97, 0
      %p160 = por %p158, %p159
      %p161 = scmp.ne.s32.totalorder %s149, %s150
      %p162 = scmp.eq.s32.totalorder %s98, 1
      %p163 = por %p161, %p162
      %p165 = scmp.ne.s32.totalorder %s150, %s164
      %p166 = scmp.eq.s32.totalorder %s98, 0
      %p167 = por %p165, %p166
      %s169 = sadd.s32 %s168, 1
      %p172 = scmp.eq.s32.totalorder %s92, 1
      %p173 = scmp.ne.s32.totalorder %s168, %s170
      %p174 = scmp.eq.s32.totalorder %s92, 0
      %p175 = por %p173, %p174
      %p176 = scmp.ne.s32.totalorder %s168, %s170
      %p177 = scmp.eq.s32.totalorder %s97, 1
      %p178 = por %p176, %p177
      %p179 = scmp.ne.s32.totalorder %s170, %s171
      %p180 = scmp.eq.s32.totalorder %s97, 0
      %p181 = por %p179, %p180
      %p182 = scmp.ne.s32.totalorder %s170, %s171
      %p183 = scmp.eq.s32.totalorder %s98, 1
      %p184 = por %p182, %p183
      %p186 = scmp.ne.s32.totalorder %s171, %s185
      %p187 = scmp.eq.s32.totalorder %s98, 0
      %p188 = por %p186, %p187
      %s190 = sadd.s32 %s189, 1
      %p193 = scmp.eq.s32.totalorder %s92, 1
      %p194 = scmp.ne.s32.totalorder %s189, %s191
      %p195 = scmp.eq.s32.totalorder %s92, 0
      %p196 = por %p194, %p195
      %p197 = scmp.ne.s32.totalorder %s189, %s191
      %p198 = scmp.eq.s32.totalorder %s97, 1
      %p199 = por %p197, %p198
      %p200 = scmp.ne.s32.totalorder %s191, %s192
      %p201 = scmp.eq.s32.totalorder %s97, 0
      %p202 = por %p200, %p201
      %p203 = scmp.ne.s32.totalorder %s191, %s192
      %p204 = scmp.eq.s32.totalorder %s98, 1
      %p205 = por %p203, %p204
      %p207 = scmp.ne.s32.totalorder %s192, %s206
      %p208 = scmp.eq.s32.totalorder %s98, 0
      %p209 = por %p207, %p208
      %s211 = sadd.s32 %s210, 1
      %p214 = scmp.eq.s32.totalorder %s92, 1
      %p215 = scmp.ne.s32.totalorder %s210, %s212
      %p216 = scmp.eq.s32.totalorder %s92, 0
      %p217 = por %p215, %p216
      %p218 = scmp.ne.s32.totalorder %s210, %s212
      %p219 = scmp.eq.s32.totalorder %s97, 1
      %p220 = por %p218, %p219
      %p221 = scmp.ne.s32.totalorder %s212, %s213
      %p222 = scmp.eq.s32.totalorder %s97, 0
      %p223 = por %p221, %p222
      %p224 = scmp.ne.s32.totalorder %s212, %s213
      %p225 = scmp.eq.s32.totalorder %s98, 1
      %p226 = por %p224, %p225
      %p228 = scmp.ne.s32.totalorder %s213, %s227
      %p229 = scmp.eq.s32.totalorder %s98, 0
      %p230 = por %p228, %p229
      %s232 = sadd.s32 %s231, 1
      %p235 = scmp.eq.s32.totalorder %s92, 1
      %p236 = scmp.ne.s32.totalorder %s231, %s233
      %p237 = scmp.eq.s32.totalorder %s92, 0
      %p238 = por %p236, %p237
      %p239 = scmp.ne.s32.totalorder %s231, %s233
      %p240 = scmp.eq.s32.totalorder %s97, 1
      %p241 = por %p239, %p240
      %p242 = scmp.ne.s32.totalorder %s233, %s234
      %p243 = scmp.eq.s32.totalorder %s97, 0
      %p244 = por %p242, %p243
      %p245 = scmp.ne.s32.totalorder %s233, %s234
      %p246 = scmp.eq.s32.totalorder %s98, 1
      %p247 = por %p245, %p246
      %p249 = scmp.ne.s32.totalorder %s234, %s248
      %p250 = scmp.eq.s32.totalorder %s98, 0
      %p251 = por %p249, %p250
      %s253 = sadd.s32 %s252, 1
      %p256 = scmp.eq.s32.totalorder %s92, 1
      %p257 = scmp.ne.s32.totalorder %s252, %s254
      %p258 = scmp.eq.s32.totalorder %s92, 0
      %p259 = por %p257, %p258
      %p260 = scmp.ne.s32.totalorder %s252, %s254
      %p261 = scmp.eq.s32.totalorder %s97, 1
      %p262 = por %p260, %p261
      %p263 = scmp.ne.s32.totalorder %s254, %s255
      %p264 = scmp.eq.s32.totalorder %s97, 0
      %p265 = por %p263, %p264
      %p266 = scmp.ne.s32.totalorder %s254, %s255
      %p267 = scmp.eq.s32.totalorder %s98, 1
      %p268 = por %p266, %p267
      %p270 = scmp.ne.s32.totalorder %s255, %s269
      %p271 = scmp.eq.s32.totalorder %s98, 0
      %p272 = por %p270, %p271
      %s274 = sadd.s32 %s273, 1
      %p277 = scmp.eq.s32.totalorder %s92, 1
      %p278 = scmp.ne.s32.totalorder %s273, %s275
      %p279 = scmp.eq.s32.totalorder %s92, 0
      %p280 = por %p278, %p279
      %p281 = scmp.ne.s32.totalorder %s273, %s275
      %p282 = scmp.eq.s32.totalorder %s97, 1
      %p283 = por %p281, %p282
      %p284 = scmp.ne.s32.totalorder %s275, %s276
      %p285 = scmp.eq.s32.totalorder %s97, 0
      %p286 = por %p284, %p285
      %p287 = scmp.ne.s32.totalorder %s275, %s276
      %p288 = scmp.eq.s32.totalorder %s98, 1
      %p289 = por %p287, %p288
      %p291 = scmp.ne.s32.totalorder %s276, %s290
      %p292 = scmp.eq.s32.totalorder %s98, 0
      %p293 = por %p291, %p292
      %s295 = sadd.s32 %s294, 1
      %p298 = scmp.eq.s32.totalorder %s92, 1
      %p299 = scmp.ne.s32.totalorder %s294, %s296
      %p300 = scmp.eq.s32.totalorder %s92, 0
      %p301 = por %p299, %p300
      %p302 = scmp.ne.s32.totalorder %s294, %s296
      %p303 = scmp.eq.s32.totalorder %s97, 1
      %p304 = por %p302, %p303
      %p305 = scmp.ne.s32.totalorder %s296, %s297
      %p306 = scmp.eq.s32.totalorder %s97, 0
      %p307 = por %p305, %p306
      %p308 = scmp.ne.s32.totalorder %s296, %s297
      %p309 = scmp.eq.s32.totalorder %s98, 1
      %p310 = por %p308, %p309
      %p312 = scmp.ne.s32.totalorder %s297, %s311
      %p313 = scmp.eq.s32.totalorder %s98, 0
      %p314 = por %p312, %p313
      %s316 = sadd.s32 %s315, 1
      %p319 = scmp.eq.s32.totalorder %s92, 1
      %p320 = scmp.ne.s32.totalorder %s315, %s317
      %p321 = scmp.eq.s32.totalorder %s92, 0
      %p322 = por %p320, %p321
      %p323 = scmp.ne.s32.totalorder %s315, %s317
      %p324 = scmp.eq.s32.totalorder %s97, 1
      %p325 = por %p323, %p324
      %p326 = scmp.ne.s32.totalorder %s317, %s318
      %p327 = scmp.eq.s32.totalorder %s97, 0
      %p328 = por %p326, %p327
      %p329 = scmp.ne.s32.totalorder %s317, %s318
      %p330 = scmp.eq.s32.totalorder %s98, 1
      %p331 = por %p329, %p330
      %p333 = scmp.ne.s32.totalorder %s318, %s332
      %p334 = scmp.eq.s32.totalorder %s98, 0
      %p335 = por %p333, %p334
      %s337 = sadd.s32 %s336, 1
      %p340 = scmp.eq.s32.totalorder %s92, 1
      %p341 = scmp.ne.s32.totalorder %s336, %s338
      %p342 = scmp.eq.s32.totalorder %s92, 0
      %p343 = por %p341, %p342
      %p344 = scmp.ne.s32.totalorder %s336, %s338
      %p345 = scmp.eq.s32.totalorder %s97, 1
      %p346 = por %p344, %p345
      %p347 = scmp.ne.s32.totalorder %s338, %s339
      %p348 = scmp.eq.s32.totalorder %s97, 0
      %p349 = por %p347, %p348
      %p350 = scmp.ne.s32.totalorder %s338, %s339
      %p351 = scmp.eq.s32.totalorder %s98, 1
      %p352 = por %p350, %p351
      %p354 = scmp.ne.s32.totalorder %s339, %s353
      %p355 = scmp.eq.s32.totalorder %s98, 0
      %p356 = por %p354, %p355
      %s358 = sadd.s32 %s357, 1
      %p361 = scmp.eq.s32.totalorder %s92, 1
      %p362 = scmp.ne.s32.totalorder %s357, %s359
      %p363 = scmp.eq.s32.totalorder %s92, 0
      %p364 = por %p362, %p363
      %p365 = scmp.ne.s32.totalorder %s357, %s359
      %p366 = scmp.eq.s32.totalorder %s97, 1
      %p367 = por %p365, %p366
      %p368 = scmp.ne.s32.totalorder %s359, %s360
      %p369 = scmp.eq.s32.totalorder %s97, 0
      %p370 = por %p368, %p369
      %p371 = scmp.ne.s32.totalorder %s359, %s360
      %p372 = scmp.eq.s32.totalorder %s98, 1
      %p373 = por %p371, %p372
      %p375 = scmp.ne.s32.totalorder %s360, %s374
      %p376 = scmp.eq.s32.totalorder %s98, 0
      %p377 = por %p375, %p376
      %s379 = sadd.s32 %s378, 1
      %p382 = scmp.eq.s32.totalorder %s92, 1
      %p383 = scmp.ne.s32.totalorder %s378, %s380
      %p384 = scmp.eq.s32.totalorder %s92, 0
      %p385 = por %p383, %p384
      %p386 = scmp.ne.s32.totalorder %s378, %s380
      %p387 = scmp.eq.s32.totalorder %s97, 1
      %p388 = por %p386, %p387
      %p389 = scmp.ne.s32.totalorder %s380, %s381
      %p390 = scmp.eq.s32.totalorder %s97, 0
      %p391 = por %p389, %p390
      %p392 = scmp.ne.s32.totalorder %s380, %s381
      %p393 = scmp.eq.s32.totalorder %s98, 1
      %p394 = por %p392, %p393
      %p396 = scmp.ne.s32.totalorder %s381, %s395
      %p397 = scmp.eq.s32.totalorder %s98, 0
      %p398 = por %p396, %p397
      %s400 = sadd.s32 %s399, 1
      %p403 = scmp.eq.s32.totalorder %s92, 1
      %p404 = scmp.ne.s32.totalorder %s399, %s401
      %p405 = scmp.eq.s32.totalorder %s92, 0
      %p406 = por %p404, %p405
      %p407 = scmp.ne.s32.totalorder %s399, %s401
      %p408 = scmp.eq.s32.totalorder %s97, 1
      %p409 = por %p407, %p408
      %p410 = scmp.ne.s32.totalorder %s401, %s402
      %p411 = scmp.eq.s32.totalorder %s97, 0
      %p412 = por %p410, %p411
      %p413 = scmp.ne.s32.totalorder %s401, %s402
      %p414 = scmp.eq.s32.totalorder %s98, 1
      %p415 = por %p413, %p414
      %p417 = scmp.ne.s32.totalorder %s402, %s416
      %p418 = scmp.eq.s32.totalorder %s98, 0
      %p419 = por %p417, %p418
      %s421 = sadd.s32 %s420, 1
      %p424 = scmp.eq.s32.totalorder %s92, 1
      %p425 = scmp.ne.s32.totalorder %s420, %s422
      %p426 = scmp.eq.s32.totalorder %s92, 0
      %p427 = por %p425, %p426
      %p428 = scmp.ne.s32.totalorder %s420, %s422
      %p429 = scmp.eq.s32.totalorder %s97, 1
      %p430 = por %p428, %p429
      %p431 = scmp.ne.s32.totalorder %s422, %s423
      %p432 = scmp.eq.s32.totalorder %s97, 0
      %p433 = por %p431, %p432
      %p434 = scmp.ne.s32.totalorder %s422, %s423
      %p435 = scmp.eq.s32.totalorder %s98, 1
      %p436 = por %p434, %p435
      %p438 = scmp.ne.s32.totalorder %s423, %s437
      %p439 = scmp.eq.s32.totalorder %s98, 0
      %p440 = por %p438, %p439
      %s442 = sadd.s32 %s441, 1
      %p445 = scmp.eq.s32.totalorder %s92, 1
      %p446 = scmp.ne.s32.totalorder %s441, %s443
      %p447 = scmp.eq.s32.totalorder %s92, 0
      %p448 = por %p446, %p447
      %p449 = scmp.ne.s32.totalorder %s441, %s443
      %p450 = scmp.eq.s32.totalorder %s97, 1
      %p451 = por %p449, %p450
      %p452 = scmp.ne.s32.totalorder %s443, %s444
      %p453 = scmp.eq.s32.totalorder %s97, 0
      %p454 = por %p452, %p453
      %p455 = scmp.ne.s32.totalorder %s443, %s444
      %p456 = scmp.eq.s32.totalorder %s98, 1
      %p457 = por %p455, %p456
      %p459 = scmp.ne.s32.totalorder %s444, %s458
      %p460 = scmp.eq.s32.totalorder %s98, 0
      %p461 = por %p459, %p460
      %s463 = sadd.s32 %s462, 1
      %p466 = scmp.eq.s32.totalorder %s92, 1
      %p467 = scmp.ne.s32.totalorder %s462, %s464
      %p468 = scmp.eq.s32.totalorder %s92, 0
      %p469 = por %p467, %p468
      %p470 = scmp.ne.s32.totalorder %s462, %s464
      %p471 = scmp.eq.s32.totalorder %s97, 1
      %p472 = por %p470, %p471
      %p473 = scmp.ne.s32.totalorder %s464, %s465
      %p474 = scmp.eq.s32.totalorder %s97, 0
      %p475 = por %p473, %p474
      %p476 = scmp.ne.s32.totalorder %s464, %s465
      %p477 = scmp.eq.s32.totalorder %s98, 1
      %p478 = por %p476, %p477
      %p480 = scmp.ne.s32.totalorder %s465, %s479
      %p481 = scmp.eq.s32.totalorder %s98, 0
      %p482 = por %p480, %p481
      %s484 = sadd.s32 %s483, 1
      %p487 = scmp.eq.s32.totalorder %s92, 1
      %p488 = scmp.ne.s32.totalorder %s483, %s485
      %p489 = scmp.eq.s32.totalorder %s92, 0
      %p490 = por %p488, %p489
      %p491 = scmp.ne.s32.totalorder %s483, %s485
      %p492 = scmp.eq.s32.totalorder %s97, 1
      %p493 = por %p491, %p492
      %p494 = scmp.ne.s32.totalorder %s485, %s486
      %p495 = scmp.eq.s32.totalorder %s97, 0
      %p496 = por %p494, %p495
      %p497 = scmp.ne.s32.totalorder %s485, %s486
      %p498 = scmp.eq.s32.totalorder %s98, 1
      %p499 = por %p497, %p498
      %p501 = scmp.ne.s32.totalorder %s486, %s500
      %p502 = scmp.eq.s32.totalorder %s98, 0
      %p503 = por %p501, %p502
      %s505 = sadd.s32 %s504, 1
      %p508 = scmp.eq.s32.totalorder %s92, 1
      %p509 = scmp.ne.s32.totalorder %s504, %s506
      %p510 = scmp.eq.s32.totalorder %s92, 0
      %p511 = por %p509, %p510
      %p512 = scmp.ne.s32.totalorder %s504, %s506
      %p513 = scmp.eq.s32.totalorder %s97, 1
      %p514 = por %p512, %p513
      %p515 = scmp.ne.s32.totalorder %s506, %s507
      %p516 = scmp.eq.s32.totalorder %s97, 0
      %p517 = por %p515, %p516
      %p518 = scmp.ne.s32.totalorder %s506, %s507
      %p519 = scmp.eq.s32.totalorder %s98, 1
      %p520 = por %p518, %p519
      %p522 = scmp.ne.s32.totalorder %s507, %s521
      %p523 = scmp.eq.s32.totalorder %s98, 0
      %p524 = por %p522, %p523
      %s526 = sadd.s32 %s525, 1
      %p529 = scmp.eq.s32.totalorder %s92, 1
      %p530 = scmp.ne.s32.totalorder %s525, %s527
      %p531 = scmp.eq.s32.totalorder %s92, 0
      %p532 = por %p530, %p531
      %p533 = scmp.ne.s32.totalorder %s525, %s527
      %p534 = scmp.eq.s32.totalorder %s97, 1
      %p535 = por %p533, %p534
      %p536 = scmp.ne.s32.totalorder %s527, %s528
      %p537 = scmp.eq.s32.totalorder %s97, 0
      %p538 = por %p536, %p537
      %p539 = scmp.ne.s32.totalorder %s527, %s528
      %p540 = scmp.eq.s32.totalorder %s98, 1
      %p541 = por %p539, %p540
      %p543 = scmp.ne.s32.totalorder %s528, %s542
      %p544 = scmp.eq.s32.totalorder %s98, 0
      %p545 = por %p543, %p544
      %s547 = sadd.s32 %s546, 1
      %p550 = scmp.eq.s32.totalorder %s92, 1
      %p551 = scmp.ne.s32.totalorder %s546, %s548
      %p552 = scmp.eq.s32.totalorder %s92, 0
      %p553 = por %p551, %p552
      %p554 = scmp.ne.s32.totalorder %s546, %s548
      %p555 = scmp.eq.s32.totalorder %s97, 1
      %p556 = por %p554, %p555
      %p557 = scmp.ne.s32.totalorder %s548, %s549
      %p558 = scmp.eq.s32.totalorder %s97, 0
      %p559 = por %p557, %p558
      %p560 = scmp.ne.s32.totalorder %s548, %s549
      %p561 = scmp.eq.s32.totalorder %s98, 1
      %p562 = por %p560, %p561
      %p564 = scmp.ne.s32.totalorder %s549, %s563
      %p565 = scmp.eq.s32.totalorder %s98, 0
      %p566 = por %p564, %p565
      %s568 = sadd.s32 %s567, 1
      %p571 = scmp.eq.s32.totalorder %s92, 1
      %p572 = scmp.ne.s32.totalorder %s567, %s569
      %p573 = scmp.eq.s32.totalorder %s92, 0
      %p574 = por %p572, %p573
      %p575 = scmp.ne.s32.totalorder %s567, %s569
      %p576 = scmp.eq.s32.totalorder %s97, 1
      %p577 = por %p575, %p576
      %p578 = scmp.ne.s32.totalorder %s569, %s570
      %p579 = scmp.eq.s32.totalorder %s97, 0
      %p580 = por %p578, %p579
      %p581 = scmp.ne.s32.totalorder %s569, %s570
      %p582 = scmp.eq.s32.totalorder %s98, 1
      %p583 = por %p581, %p582
      %p585 = scmp.ne.s32.totalorder %s570, %s584
      %p586 = scmp.eq.s32.totalorder %s98, 0
      %p587 = por %p585, %p586
      %s589 = sadd.s32 %s588, 1
      %p592 = scmp.eq.s32.totalorder %s92, 1
      %p593 = scmp.ne.s32.totalorder %s588, %s590
      %p594 = scmp.eq.s32.totalorder %s92, 0
      %p595 = por %p593, %p594
      %p596 = scmp.ne.s32.totalorder %s588, %s590
      %p597 = scmp.eq.s32.totalorder %s97, 1
      %p598 = por %p596, %p597
      %p599 = scmp.ne.s32.totalorder %s590, %s591
      %p600 = scmp.eq.s32.totalorder %s97, 0
      %p601 = por %p599, %p600
      %p602 = scmp.ne.s32.totalorder %s590, %s591
      %p603 = scmp.eq.s32.totalorder %s98, 1
      %p604 = por %p602, %p603
      %p606 = scmp.ne.s32.totalorder %s591, %s605
      %p607 = scmp.eq.s32.totalorder %s98, 0
      %p608 = por %p606, %p607
      %s610 = sadd.s32 %s609, 1
      %p613 = scmp.eq.s32.totalorder %s92, 1
      %p614 = scmp.ne.s32.totalorder %s609, %s611
      %p615 = scmp.eq.s32.totalorder %s92, 0
      %p616 = por %p614, %p615
      %p617 = scmp.ne.s32.totalorder %s609, %s611
      %p618 = scmp.eq.s32.totalorder %s97, 1
      %p619 = por %p617, %p618
      %p620 = scmp.ne.s32.totalorder %s611, %s612
      %p621 = scmp.eq.s32.totalorder %s97, 0
      %p622 = por %p620, %p621
      %p623 = scmp.ne.s32.totalorder %s611, %s612
      %p624 = scmp.eq.s32.totalorder %s98, 1
      %p625 = por %p623, %p624
      %p627 = scmp.ne.s32.totalorder %s612, %s626
      %p628 = scmp.eq.s32.totalorder %s98, 0
      %p629 = por %p627, %p628
      %s631 = sadd.s32 %s630, 1
      %p634 = scmp.eq.s32.totalorder %s92, 1
      %p635 = scmp.ne.s32.totalorder %s630, %s632
      %p636 = scmp.eq.s32.totalorder %s92, 0
      %p637 = por %p635, %p636
      %p638 = scmp.ne.s32.totalorder %s630, %s632
      %p639 = scmp.eq.s32.totalorder %s97, 1
      %p640 = por %p638, %p639
      %p641 = scmp.ne.s32.totalorder %s632, %s633
      %p642 = scmp.eq.s32.totalorder %s97, 0
      %p643 = por %p641, %p642
      %p644 = scmp.ne.s32.totalorder %s632, %s633
      %p645 = scmp.eq.s32.totalorder %s98, 1
      %p646 = por %p644, %p645
      %p648 = scmp.ne.s32.totalorder %s633, %s647
      %p649 = scmp.eq.s32.totalorder %s98, 0
      %p650 = por %p648, %p649
      %s652 = sadd.s32 %s651, 1
      %p655 = scmp.eq.s32.totalorder %s92, 1
      %p656 = scmp.ne.s32.totalorder %s651, %s653
      %p657 = scmp.eq.s32.totalorder %s92, 0
      %p658 = por %p656, %p657
      %p659 = scmp.ne.s32.totalorder %s651, %s653
      %p660 = scmp.eq.s32.totalorder %s97, 1
      %p661 = por %p659, %p660
      %p662 = scmp.ne.s32.totalorder %s653, %s654
      %p663 = scmp.eq.s32.totalorder %s97, 0
      %p664 = por %p662, %p663
      %p665 = scmp.ne.s32.totalorder %s653, %s654
      %p666 = scmp.eq.s32.totalorder %s98, 1
      %p667 = por %p665, %p666
      %p669 = scmp.ne.s32.totalorder %s654, %s668
      %p670 = scmp.eq.s32.totalorder %s98, 0
      %p671 = por %p669, %p670
      %s673 = sadd.s32 %s672, 1
      %p676 = scmp.eq.s32.totalorder %s92, 1
      %p677 = scmp.ne.s32.totalorder %s672, %s674
      %p678 = scmp.eq.s32.totalorder %s92, 0
      %p679 = por %p677, %p678
      %p680 = scmp.ne.s32.totalorder %s672, %s674
      %p681 = scmp.eq.s32.totalorder %s97, 1
      %p682 = por %p680, %p681
      %p683 = scmp.ne.s32.totalorder %s674, %s675
      %p684 = scmp.eq.s32.totalorder %s97, 0
      %p685 = por %p683, %p684
      %p686 = scmp.ne.s32.totalorder %s674, %s675
      %p687 = scmp.eq.s32.totalorder %s98, 1
      %p688 = por %p686, %p687
      %p690 = scmp.ne.s32.totalorder %s675, %s689
      %p691 = scmp.eq.s32.totalorder %s98, 0
      %p692 = por %p690, %p691
      %s694 = sadd.s32 %s693, 1
      %p697 = scmp.eq.s32.totalorder %s92, 1
      %p698 = scmp.ne.s32.totalorder %s693, %s695
      %p699 = scmp.eq.s32.totalorder %s92, 0
      %p700 = por %p698, %p699
      %p701 = scmp.ne.s32.totalorder %s693, %s695
      %p702 = scmp.eq.s32.totalorder %s97, 1
      %p703 = por %p701, %p702
      %p704 = scmp.ne.s32.totalorder %s695, %s696
      %p705 = scmp.eq.s32.totalorder %s97, 0
      %p706 = por %p704, %p705
      %p707 = scmp.ne.s32.totalorder %s695, %s696
      %p708 = scmp.eq.s32.totalorder %s98, 1
      %p709 = por %p707, %p708
      %p711 = scmp.ne.s32.totalorder %s696, %s710
      %p712 = scmp.eq.s32.totalorder %s98, 0
      %p713 = por %p711, %p712
      %s715 = sadd.s32 %s714, 1
      %p718 = scmp.eq.s32.totalorder %s92, 1
      %p719 = scmp.ne.s32.totalorder %s714, %s716
      %p720 = scmp.eq.s32.totalorder %s92, 0
      %p721 = por %p719, %p720
      %p722 = scmp.ne.s32.totalorder %s714, %s716
      %p723 = scmp.eq.s32.totalorder %s97, 1
      %p724 = por %p722, %p723
      %p725 = scmp.ne.s32.totalorder %s716, %s717
      %p726 = scmp.eq.s32.totalorder %s97, 0
      %p727 = por %p725, %p726
      %p728 = scmp.ne.s32.totalorder %s716, %s717
      %p729 = scmp.eq.s32.totalorder %s98, 1
      %p730 = por %p728, %p729
      %p732 = scmp.ne.s32.totalorder %s717, %s731
      %p733 = scmp.eq.s32.totalorder %s98, 0
      %p734 = por %p732, %p733
      %s736 = sadd.s32 %s735, 1
      %p739 = scmp.eq.s32.totalorder %s92, 1
      %p740 = scmp.ne.s32.totalorder %s735, %s737
      %p741 = scmp.eq.s32.totalorder %s92, 0
      %p742 = por %p740, %p741
      %p743 = scmp.ne.s32.totalorder %s735, %s737
      %p744 = scmp.eq.s32.totalorder %s97, 1
      %p745 = por %p743, %p744
      %p746 = scmp.ne.s32.totalorder %s737, %s738
      %p747 = scmp.eq.s32.totalorder %s97, 0
      %p748 = por %p746, %p747
      %p749 = scmp.ne.s32.totalorder %s737, %s738
      %p750 = scmp.eq.s32.totalorder %s98, 1
      %p751 = por %p749, %p750
      %p753 = scmp.ne.s32.totalorder %s738, %s752
      %p754 = scmp.eq.s32.totalorder %s98, 0
      %p755 = por %p753, %p754
      %s757 = sadd.s32 %s756, 1
      %p760 = scmp.eq.s32.totalorder %s92, 1
      %p761 = scmp.ne.s32.totalorder %s756, %s758
      %p762 = scmp.eq.s32.totalorder %s92, 0
      %p763 = por %p761, %p762
      %p764 = scmp.ne.s32.totalorder %s756, %s758
      %p765 = scmp.eq.s32.totalorder %s97, 1
      %p766 = por %p764, %p765
      %p767 = scmp.ne.s32.totalorder %s758, %s759
      %p768 = scmp.eq.s32.totalorder %s97, 0
      %p769 = por %p767, %p768
      %p770 = scmp.ne.s32.totalorder %s758, %s759
      %p771 = scmp.eq.s32.totalorder %s98, 1
      %p772 = por %p770, %p771
      %p774 = scmp.ne.s32.totalorder %s759, %s773
      %p775 = scmp.eq.s32.totalorder %s98, 0
      %p776 = por %p774, %p775
      %s778 = sadd.s32 %s777, 1
      %p781 = scmp.eq.s32.totalorder %s92, 1
      %p782 = scmp.ne.s32.totalorder %s777, %s779
      %p783 = scmp.eq.s32.totalorder %s92, 0
      %p784 = por %p782, %p783
      %p785 = scmp.ne.s32.totalorder %s777, %s779
      %p786 = scmp.eq.s32.totalorder %s97, 1
      %p787 = por %p785, %p786
      %p788 = scmp.ne.s32.totalorder %s779, %s780
      %p789 = scmp.eq.s32.totalorder %s97, 0
      %p790 = por %p788, %p789
      %p791 = scmp.ne.s32.totalorder %s779, %s780
      %p792 = scmp.eq.s32.totalorder %s98, 1
      %p793 = por %p791, %p792
      %p795 = scmp.ne.s32.totalorder %s780, %s794
      %p796 = scmp.eq.s32.totalorder %s98, 0
      %p797 = por %p795, %p796
      %s799 = sadd.s32 %s798, 1
      %p802 = scmp.eq.s32.totalorder %s92, 1
      %p803 = scmp.ne.s32.totalorder %s798, %s800
      %p804 = scmp.eq.s32.totalorder %s92, 0
      %p805 = por %p803, %p804
      %p806 = scmp.ne.s32.totalorder %s798, %s800
      %p807 = scmp.eq.s32.totalorder %s97, 1
      %p808 = por %p806, %p807
      %p809 = scmp.ne.s32.totalorder %s800, %s801
      %p810 = scmp.eq.s32.totalorder %s97, 0
      %p811 = por %p809, %p810
      %p812 = scmp.ne.s32.totalorder %s800, %s801
      %p813 = scmp.eq.s32.totalorder %s98, 1
      %p814 = por %p812, %p813
      %p816 = scmp.ne.s32.totalorder %s801, %s815
      %p817 = scmp.eq.s32.totalorder %s98, 0
      %p818 = por %p816, %p817
      %s820 = sadd.s32 %s819, 1
      %p823 = scmp.eq.s32.totalorder %s92, 1
      %p824 = scmp.ne.s32.totalorder %s819, %s821
      %p825 = scmp.eq.s32.totalorder %s92, 0
      %p826 = por %p824, %p825
      %p827 = scmp.ne.s32.totalorder %s819, %s821
      %p828 = scmp.eq.s32.totalorder %s97, 1
      %p829 = por %p827, %p828
      %p830 = scmp.ne.s32.totalorder %s821, %s822
      %p831 = scmp.eq.s32.totalorder %s97, 0
      %p832 = por %p830, %p831
      %p833 = scmp.ne.s32.totalorder %s821, %s822
      %p834 = scmp.eq.s32.totalorder %s98, 1
      %p835 = por %p833, %p834
      %p837 = scmp.ne.s32.totalorder %s822, %s836
      %p838 = scmp.eq.s32.totalorder %s98, 0
      %p839 = por %p837, %p838
      %s841 = sadd.s32 %s840, 1
      %p844 = scmp.eq.s32.totalorder %s92, 1
      %p845 = scmp.ne.s32.totalorder %s840, %s842
      %p846 = scmp.eq.s32.totalorder %s92, 0
      %p847 = por %p845, %p846
      %p848 = scmp.ne.s32.totalorder %s840, %s842
      %p849 = scmp.eq.s32.totalorder %s97, 1
      %p850 = por %p848, %p849
      %p851 = scmp.ne.s32.totalorder %s842, %s843
      %p852 = scmp.eq.s32.totalorder %s97, 0
      %p853 = por %p851, %p852
      %p854 = scmp.ne.s32.totalorder %s842, %s843
      %p855 = scmp.eq.s32.totalorder %s98, 1
      %p856 = por %p854, %p855
      %p858 = scmp.ne.s32.totalorder %s843, %s857
      %p859 = scmp.eq.s32.totalorder %s98, 0
      %p860 = por %p858, %p859
      %s862 = sadd.s32 %s861, 1
      %p865 = scmp.eq.s32.totalorder %s92, 1
      %p866 = scmp.ne.s32.totalorder %s861, %s863
      %p867 = scmp.eq.s32.totalorder %s92, 0
      %p868 = por %p866, %p867
      %p869 = scmp.ne.s32.totalorder %s861, %s863
      %p870 = scmp.eq.s32.totalorder %s97, 1
      %p871 = por %p869, %p870
      %p872 = scmp.ne.s32.totalorder %s863, %s864
      %p873 = scmp.eq.s32.totalorder %s97, 0
      %p874 = por %p872, %p873
      %p875 = scmp.ne.s32.totalorder %s863, %s864
      %p876 = scmp.eq.s32.totalorder %s98, 1
      %p877 = por %p875, %p876
      %p879 = scmp.ne.s32.totalorder %s864, %s878
      %p880 = scmp.eq.s32.totalorder %s98, 0
      %p881 = por %p879, %p880
      %s883 = sadd.s32 %s882, 1
      %p886 = scmp.eq.s32.totalorder %s92, 1
      %p887 = scmp.ne.s32.totalorder %s882, %s884
      %p888 = scmp.eq.s32.totalorder %s92, 0
      %p889 = por %p887, %p888
      %p890 = scmp.ne.s32.totalorder %s882, %s884
      %p891 = scmp.eq.s32.totalorder %s97, 1
      %p892 = por %p890, %p891
      %p893 = scmp.ne.s32.totalorder %s884, %s885
      %p894 = scmp.eq.s32.totalorder %s97, 0
      %p895 = por %p893, %p894
      %p896 = scmp.ne.s32.totalorder %s884, %s885
      %p897 = scmp.eq.s32.totalorder %s98, 1
      %p898 = por %p896, %p897
      %p900 = scmp.ne.s32.totalorder %s885, %s899
      %p901 = scmp.eq.s32.totalorder %s98, 0
      %p902 = por %p900, %p901
      %s904 = sadd.s32 %s903, 1
      %p907 = scmp.eq.s32.totalorder %s92, 1
      %p908 = scmp.ne.s32.totalorder %s903, %s905
      %p909 = scmp.eq.s32.totalorder %s92, 0
      %p910 = por %p908, %p909
      %p911 = scmp.ne.s32.totalorder %s903, %s905
      %p912 = scmp.eq.s32.totalorder %s97, 1
      %p913 = por %p911, %p912
      %p914 = scmp.ne.s32.totalorder %s905, %s906
      %p915 = scmp.eq.s32.totalorder %s97, 0
      %p916 = por %p914, %p915
      %p917 = scmp.ne.s32.totalorder %s905, %s906
      %p918 = scmp.eq.s32.totalorder %s98, 1
      %p919 = por %p917, %p918
      %p921 = scmp.ne.s32.totalorder %s906, %s920
      %p922 = scmp.eq.s32.totalorder %s98, 0
      %p923 = por %p921, %p922
      %s925 = sadd.s32 %s924, 1
      %p928 = scmp.eq.s32.totalorder %s92, 1
      %p929 = scmp.ne.s32.totalorder %s924, %s926
      %p930 = scmp.eq.s32.totalorder %s92, 0
      %p931 = por %p929, %p930
      %p932 = scmp.ne.s32.totalorder %s924, %s926
      %p933 = scmp.eq.s32.totalorder %s97, 1
      %p934 = por %p932, %p933
      %p935 = scmp.ne.s32.totalorder %s926, %s927
      %p936 = scmp.eq.s32.totalorder %s97, 0
      %p937 = por %p935, %p936
      %p938 = scmp.ne.s32.totalorder %s926, %s927
      %p939 = scmp.eq.s32.totalorder %s98, 1
      %p940 = por %p938, %p939
      %p942 = scmp.ne.s32.totalorder %s927, %s941
      %p943 = scmp.eq.s32.totalorder %s98, 0
      %p944 = por %p942, %p943
      %s946 = sadd.s32 %s945, 1
      %p949 = scmp.eq.s32.totalorder %s92, 1
      %p950 = scmp.ne.s32.totalorder %s945, %s947
      %p951 = scmp.eq.s32.totalorder %s92, 0
      %p952 = por %p950, %p951
      %p953 = scmp.ne.s32.totalorder %s945, %s947
      %p954 = scmp.eq.s32.totalorder %s97, 1
      %p955 = por %p953, %p954
      %p956 = scmp.ne.s32.totalorder %s947, %s948
      %p957 = scmp.eq.s32.totalorder %s97, 0
      %p958 = por %p956, %p957
      %p959 = scmp.ne.s32.totalorder %s947, %s948
      %p960 = scmp.eq.s32.totalorder %s98, 1
      %p961 = por %p959, %p960
      %p963 = scmp.ne.s32.totalorder %s948, %s962
      %p964 = scmp.eq.s32.totalorder %s98, 0
      %p965 = por %p963, %p964
      %s966 = ssub.s32 %s92, %s99
      %p967 = scmp.eq.s32.totalorder %s966, 0
      %s969 = sadd.s32 %s968, 1
      %s970 = scalar_select %p967, %s968, %s969
      %p973 = pneg %p967
      %p974 = scmp.eq.s32.totalorder %s92, 1
      %p975 = por %p973, %p974
      %p976 = scmp.ne.s32.totalorder %s968, %s971
      %p977 = scmp.eq.s32.totalorder %s92, 0
      %p978 = por %p976, %p977
      %p979 = scmp.ne.s32.totalorder %s968, %s971
      %p980 = scmp.eq.s32.totalorder %s97, 1
      %p981 = por %p979, %p980
      %p982 = scmp.ne.s32.totalorder %s971, %s972
      %p983 = scmp.eq.s32.totalorder %s97, 0
      %p984 = por %p982, %p983
      %p985 = scmp.ne.s32.totalorder %s971, %s972
      %p986 = scmp.eq.s32.totalorder %s98, 1
      %p987 = por %p985, %p986
      %p989 = scmp.ne.s32.totalorder %s972, %s988
      %p990 = scmp.eq.s32.totalorder %s98, 0
      %p991 = por %p989, %p990
      %p992 = scmp.le.s32.totalorder 1, %s92
      %p993 = scmp.lt.s32.totalorder %s92, 3
      %p994 = pnand %p992, %p993
      %p995 = pneg %p994
      // Predicated region
      $region9: #{forward.1} parent=5 // pred_check
        _
      $region10: #{forward.1} parent=5 // pred_check_branch
        %997 = sbr.rel (%p994) target = $region12
      $region11: #{forward.1} parent=5 // pred_region
        %s998 = ssub.s32 %s92, 1
        // Predicated region
        $region13: #{forward.1} parent=11 // pred_check
          %p999 = pneg %p139
        $region14: #{forward.1} parent=11 // pred_check_branch
          %1001 = sbr.rel (%p999) target = $region16
        $region15: #{forward.1} parent=11 // pred_region
          _
        $region16: #{forward.1} parent=11 // pred_fallthru
          _
        // Predicated region
        $region17: #{forward.1} parent=11 // pred_check
          %p1002 = pneg %p160
        $region18: #{forward.1} parent=11 // pred_check_branch
          %1004 = sbr.rel (%p1002) target = $region20
        $region19: #{forward.1} parent=11 // pred_region
          _
        $region20: #{forward.1} parent=11 // pred_fallthru
          _
        // Predicated region
        $region21: #{forward.1} parent=11 // pred_check
          %p1005 = pneg %p181
        $region22: #{forward.1} parent=11 // pred_check_branch
          %1007 = sbr.rel (%p1005) target = $region24
        $region23: #{forward.1} parent=11 // pred_region
          _
        $region24: #{forward.1} parent=11 // pred_fallthru
          _
        // Predicated region
        $region25: #{forward.1} parent=11 // pred_check
          %p1008 = pneg %p202
        $region26: #{forward.1} parent=11 // pred_check_branch
          %1010 = sbr.rel (%p1008) target = $region28
        $region27: #{forward.1} parent=11 // pred_region
          _
        $region28: #{forward.1} parent=11 // pred_fallthru
          _
        // Predicated region
        $region29: #{forward.1} parent=11 // pred_check
          %p1011 = pneg %p223
        $region30: #{forward.1} parent=11 // pred_check_branch
          %1013 = sbr.rel (%p1011) target = $region32
        $region31: #{forward.1} parent=11 // pred_region
          _
        $region32: #{forward.1} parent=11 // pred_fallthru
          _
        // Predicated region
        $region33: #{forward.1} parent=11 // pred_check
          %p1014 = pneg %p244
        $region34: #{forward.1} parent=11 // pred_check_branch
          %1016 = sbr.rel (%p1014) target = $region36
        $region35: #{forward.1} parent=11 // pred_region
          _
        $region36: #{forward.1} parent=11 // pred_fallthru
          _
        // Predicated region
        $region37: #{forward.1} parent=11 // pred_check
          %p1017 = pneg %p265
        $region38: #{forward.1} parent=11 // pred_check_branch
          %1019 = sbr.rel (%p1017) target = $region40
        $region39: #{forward.1} parent=11 // pred_region
          _
        $region40: #{forward.1} parent=11 // pred_fallthru
          _
        // Predicated region
        $region41: #{forward.1} parent=11 // pred_check
          %p1020 = pneg %p286
        $region42: #{forward.1} parent=11 // pred_check_branch
          %1022 = sbr.rel (%p1020) target = $region44
        $region43: #{forward.1} parent=11 // pred_region
          _
        $region44: #{forward.1} parent=11 // pred_fallthru
          _
        // Predicated region
        $region45: #{forward.1} parent=11 // pred_check
          %p1023 = pneg %p307
        $region46: #{forward.1} parent=11 // pred_check_branch
          %1025 = sbr.rel (%p1023) target = $region48
        $region47: #{forward.1} parent=11 // pred_region
          _
        $region48: #{forward.1} parent=11 // pred_fallthru
          _
        // Predicated region
        $region49: #{forward.1} parent=11 // pred_check
          %p1026 = pneg %p328
        $region50: #{forward.1} parent=11 // pred_check_branch
          %1028 = sbr.rel (%p1026) target = $region52
        $region51: #{forward.1} parent=11 // pred_region
          _
        $region52: #{forward.1} parent=11 // pred_fallthru
          _
        // Predicated region
        $region53: #{forward.1} parent=11 // pred_check
          %p1029 = pneg %p349
        $region54: #{forward.1} parent=11 // pred_check_branch
          %1031 = sbr.rel (%p1029) target = $region56
        $region55: #{forward.1} parent=11 // pred_region
          _
        $region56: #{forward.1} parent=11 // pred_fallthru
          _
        // Predicated region
        $region57: #{forward.1} parent=11 // pred_check
          %p1032 = pneg %p370
        $region58: #{forward.1} parent=11 // pred_check_branch
          %1034 = sbr.rel (%p1032) target = $region60
        $region59: #{forward.1} parent=11 // pred_region
          _
        $region60: #{forward.1} parent=11 // pred_fallthru
          _
        // Predicated region
        $region61: #{forward.1} parent=11 // pred_check
          %p1035 = pneg %p391
        $region62: #{forward.1} parent=11 // pred_check_branch
          %1037 = sbr.rel (%p1035) target = $region64
        $region63: #{forward.1} parent=11 // pred_region
          _
        $region64: #{forward.1} parent=11 // pred_fallthru
          _
        // Predicated region
        $region65: #{forward.1} parent=11 // pred_check
          %p1038 = pneg %p412
        $region66: #{forward.1} parent=11 // pred_check_branch
          %1040 = sbr.rel (%p1038) target = $region68
        $region67: #{forward.1} parent=11 // pred_region
          _
        $region68: #{forward.1} parent=11 // pred_fallthru
          _
        // Predicated region
        $region69: #{forward.1} parent=11 // pred_check
          %p1041 = pneg %p433
        $region70: #{forward.1} parent=11 // pred_check_branch
          %1043 = sbr.rel (%p1041) target = $region72
        $region71: #{forward.1} parent=11 // pred_region
          _
        $region72: #{forward.1} parent=11 // pred_fallthru
          _
        // Predicated region
        $region73: #{forward.1} parent=11 // pred_check
          %p1044 = pneg %p454
        $region74: #{forward.1} parent=11 // pred_check_branch
          %1046 = sbr.rel (%p1044) target = $region76
        $region75: #{forward.1} parent=11 // pred_region
          _
        $region76: #{forward.1} parent=11 // pred_fallthru
          _
        // Predicated region
        $region77: #{forward.1} parent=11 // pred_check
          %p1047 = pneg %p475
        $region78: #{forward.1} parent=11 // pred_check_branch
          %1049 = sbr.rel (%p1047) target = $region80
        $region79: #{forward.1} parent=11 // pred_region
          _
        $region80: #{forward.1} parent=11 // pred_fallthru
          _
        // Predicated region
        $region81: #{forward.1} parent=11 // pred_check
          %p1050 = pneg %p496
        $region82: #{forward.1} parent=11 // pred_check_branch
          %1052 = sbr.rel (%p1050) target = $region84
        $region83: #{forward.1} parent=11 // pred_region
          _
        $region84: #{forward.1} parent=11 // pred_fallthru
          _
        // Predicated region
        $region85: #{forward.1} parent=11 // pred_check
          %p1053 = pneg %p517
        $region86: #{forward.1} parent=11 // pred_check_branch
          %1055 = sbr.rel (%p1053) target = $region88
        $region87: #{forward.1} parent=11 // pred_region
          _
        $region88: #{forward.1} parent=11 // pred_fallthru
          _
        // Predicated region
        $region89: #{forward.1} parent=11 // pred_check
          %p1056 = pneg %p538
        $region90: #{forward.1} parent=11 // pred_check_branch
          %1058 = sbr.rel (%p1056) target = $region92
        $region91: #{forward.1} parent=11 // pred_region
          _
        $region92: #{forward.1} parent=11 // pred_fallthru
          _
        // Predicated region
        $region93: #{forward.1} parent=11 // pred_check
          %p1059 = pneg %p559
        $region94: #{forward.1} parent=11 // pred_check_branch
          %1061 = sbr.rel (%p1059) target = $region96
        $region95: #{forward.1} parent=11 // pred_region
          _
        $region96: #{forward.1} parent=11 // pred_fallthru
          _
        // Predicated region
        $region97: #{forward.1} parent=11 // pred_check
          %p1062 = pneg %p580
        $region98: #{forward.1} parent=11 // pred_check_branch
          %1064 = sbr.rel (%p1062) target = $region100
        $region99: #{forward.1} parent=11 // pred_region
          _
        $region100: #{forward.1} parent=11 // pred_fallthru
          _
        // Predicated region
        $region101: #{forward.1} parent=11 // pred_check
          %p1065 = pneg %p601
        $region102: #{forward.1} parent=11 // pred_check_branch
          %1067 = sbr.rel (%p1065) target = $region104
        $region103: #{forward.1} parent=11 // pred_region
          _
        $region104: #{forward.1} parent=11 // pred_fallthru
          _
        // Predicated region
        $region105: #{forward.1} parent=11 // pred_check
          %p1068 = pneg %p622
        $region106: #{forward.1} parent=11 // pred_check_branch
          %1070 = sbr.rel (%p1068) target = $region108
        $region107: #{forward.1} parent=11 // pred_region
          _
        $region108: #{forward.1} parent=11 // pred_fallthru
          _
        // Predicated region
        $region109: #{forward.1} parent=11 // pred_check
          %p1071 = pneg %p643
        $region110: #{forward.1} parent=11 // pred_check_branch
          %1073 = sbr.rel (%p1071) target = $region112
        $region111: #{forward.1} parent=11 // pred_region
          _
        $region112: #{forward.1} parent=11 // pred_fallthru
          _
        // Predicated region
        $region113: #{forward.1} parent=11 // pred_check
          %p1074 = pneg %p664
        $region114: #{forward.1} parent=11 // pred_check_branch
          %1076 = sbr.rel (%p1074) target = $region116
        $region115: #{forward.1} parent=11 // pred_region
          _
        $region116: #{forward.1} parent=11 // pred_fallthru
          _
        // Predicated region
        $region117: #{forward.1} parent=11 // pred_check
          %p1077 = pneg %p685
        $region118: #{forward.1} parent=11 // pred_check_branch
          %1079 = sbr.rel (%p1077) target = $region120
        $region119: #{forward.1} parent=11 // pred_region
          _
        $region120: #{forward.1} parent=11 // pred_fallthru
          _
        // Predicated region
        $region121: #{forward.1} parent=11 // pred_check
          %p1080 = pneg %p706
        $region122: #{forward.1} parent=11 // pred_check_branch
          %1082 = sbr.rel (%p1080) target = $region124
        $region123: #{forward.1} parent=11 // pred_region
          _
        $region124: #{forward.1} parent=11 // pred_fallthru
          _
        // Predicated region
        $region125: #{forward.1} parent=11 // pred_check
          %p1083 = pneg %p727
        $region126: #{forward.1} parent=11 // pred_check_branch
          %1085 = sbr.rel (%p1083) target = $region128
        $region127: #{forward.1} parent=11 // pred_region
          _
        $region128: #{forward.1} parent=11 // pred_fallthru
          _
        // Predicated region
        $region129: #{forward.1} parent=11 // pred_check
          %p1086 = pneg %p748
        $region130: #{forward.1} parent=11 // pred_check_branch
          %1088 = sbr.rel (%p1086) target = $region132
        $region131: #{forward.1} parent=11 // pred_region
          _
        $region132: #{forward.1} parent=11 // pred_fallthru
          _
        // Predicated region
        $region133: #{forward.1} parent=11 // pred_check
          %p1089 = pneg %p769
        $region134: #{forward.1} parent=11 // pred_check_branch
          %1091 = sbr.rel (%p1089) target = $region136
        $region135: #{forward.1} parent=11 // pred_region
          _
        $region136: #{forward.1} parent=11 // pred_fallthru
          _
        // Predicated region
        $region137: #{forward.1} parent=11 // pred_check
          %p1092 = pneg %p790
        $region138: #{forward.1} parent=11 // pred_check_branch
          %1094 = sbr.rel (%p1092) target = $region140
        $region139: #{forward.1} parent=11 // pred_region
          _
        $region140: #{forward.1} parent=11 // pred_fallthru
          _
        // Predicated region
        $region141: #{forward.1} parent=11 // pred_check
          %p1095 = pneg %p811
        $region142: #{forward.1} parent=11 // pred_check_branch
          %1097 = sbr.rel (%p1095) target = $region144
        $region143: #{forward.1} parent=11 // pred_region
          _
        $region144: #{forward.1} parent=11 // pred_fallthru
          _
        // Predicated region
        $region145: #{forward.1} parent=11 // pred_check
          %p1098 = pneg %p832
        $region146: #{forward.1} parent=11 // pred_check_branch
          %1100 = sbr.rel (%p1098) target = $region148
        $region147: #{forward.1} parent=11 // pred_region
          _
        $region148: #{forward.1} parent=11 // pred_fallthru
          _
        // Predicated region
        $region149: #{forward.1} parent=11 // pred_check
          %p1101 = pneg %p853
        $region150: #{forward.1} parent=11 // pred_check_branch
          %1103 = sbr.rel (%p1101) target = $region152
        $region151: #{forward.1} parent=11 // pred_region
          _
        $region152: #{forward.1} parent=11 // pred_fallthru
          _
        // Predicated region
        $region153: #{forward.1} parent=11 // pred_check
          %p1104 = pneg %p874
        $region154: #{forward.1} parent=11 // pred_check_branch
          %1106 = sbr.rel (%p1104) target = $region156
        $region155: #{forward.1} parent=11 // pred_region
          _
        $region156: #{forward.1} parent=11 // pred_fallthru
          _
        // Predicated region
        $region157: #{forward.1} parent=11 // pred_check
          %p1107 = pneg %p895
        $region158: #{forward.1} parent=11 // pred_check_branch
          %1109 = sbr.rel (%p1107) target = $region160
        $region159: #{forward.1} parent=11 // pred_region
          _
        $region160: #{forward.1} parent=11 // pred_fallthru
          _
        // Predicated region
        $region161: #{forward.1} parent=11 // pred_check
          %p1110 = pneg %p916
        $region162: #{forward.1} parent=11 // pred_check_branch
          %1112 = sbr.rel (%p1110) target = $region164
        $region163: #{forward.1} parent=11 // pred_region
          _
        $region164: #{forward.1} parent=11 // pred_fallthru
          _
        // Predicated region
        $region165: #{forward.1} parent=11 // pred_check
          %p1113 = pneg %p937
        $region166: #{forward.1} parent=11 // pred_check_branch
          %1115 = sbr.rel (%p1113) target = $region168
        $region167: #{forward.1} parent=11 // pred_region
          _
        $region168: #{forward.1} parent=11 // pred_fallthru
          _
        // Predicated region
        $region169: #{forward.1} parent=11 // pred_check
          %p1116 = pneg %p958
        $region170: #{forward.1} parent=11 // pred_check_branch
          %1118 = sbr.rel (%p1116) target = $region172
        $region171: #{forward.1} parent=11 // pred_region
          _
        $region172: #{forward.1} parent=11 // pred_fallthru
          _
      $region12: #{forward.1} parent=5 // pred_fallthru
        _
      %p1119 = scmp.lt.s32.totalorder %s92, 2
      // Predicated region
      $region173: #{forward.1} parent=5 // pred_check
        %p1120 = pneg %p1119
      $region174: #{forward.1} parent=5 // pred_check_branch
        %1122 = sbr.rel (%p1120) target = $region176
      $region175: #{forward.1} parent=5 // pred_region
        // Predicated region
        $region177: #{forward.1} parent=175 // pred_check
          %p1123 = pneg %p112
        $region178: #{forward.1} parent=175 // pred_check_branch
          %1125 = sbr.rel (%p1123) target = $region180
        $region179: #{forward.1} parent=175 // pred_region
          %p1126 = scmp.lt.s32.totalorder %s92, 1
          %s1127 = scalar_select %p1126, %s92, 1
          %s1128 = smul.addr %s1127, 2
          %s1129 = smul.addr %s1128, 8
          %s1130 = scalar_lea.vmem %s1, %s1129
        $region180: #{forward.1} parent=175 // pred_fallthru
          _
      $region176: #{forward.1} parent=5 // pred_fallthru
        _
      %p1131 = scmp.le.s32.totalorder 1, %s92
      %p1132 = scmp.lt.s32.totalorder %s92, 3
      %p1133 = pnand %p1131, %p1132
      %p1134 = pneg %p1133
      // Predicated region
      $region181: #{forward.1} parent=5 // pred_check
        _
      $region182: #{forward.1} parent=5 // pred_check_branch
        %1136 = sbr.rel (%p1133) target = $region184
      $region183: #{forward.1} parent=5 // pred_region
        %s1137 = ssub.s32 %s92, 1
        %p1138 = scmp.lt.s32.totalorder %s97, 1
        %s1139 = scalar_select %p1138, %s97, 1
        %s1140 = smul.addr %s1139, 2
        %s1141 = smul.addr %s1140, 8
        %s1142 = scalar_lea.vmem %s1, %s1141
        %p1143 = pneg %p118
        %p1144 = pneg %p115
        %p1145 = pneg %p139
        %p1146 = pneg %p136
        %p1147 = pneg %p160
        %p1148 = pneg %p157
        %p1149 = pneg %p181
        %p1150 = pneg %p178
        %p1151 = pneg %p202
        %p1152 = pneg %p199
        %p1153 = pneg %p223
        %p1154 = pneg %p220
        %p1155 = pneg %p244
        %p1156 = pneg %p241
        %p1157 = pneg %p265
        %p1158 = pneg %p262
        %p1159 = pneg %p286
        %p1160 = pneg %p283
        %p1161 = pneg %p307
        %p1162 = pneg %p304
        %p1163 = pneg %p328
        %p1164 = pneg %p325
        %p1165 = pneg %p349
        %p1166 = pneg %p346
        %p1167 = pneg %p370
        %p1168 = pneg %p367
        %p1169 = pneg %p391
        %p1170 = pneg %p388
        %p1171 = pneg %p412
        %p1172 = pneg %p409
        %p1173 = pneg %p433
        %p1174 = pneg %p430
        %p1175 = pneg %p454
        %p1176 = pneg %p451
        %p1177 = pneg %p475
        %p1178 = pneg %p472
        %p1179 = pneg %p496
        %p1180 = pneg %p493
        %p1181 = pneg %p517
        %p1182 = pneg %p514
        %p1183 = pneg %p538
        %p1184 = pneg %p535
        %p1185 = pneg %p559
        %p1186 = pneg %p556
        %p1187 = pneg %p580
        %p1188 = pneg %p577
        %p1189 = pneg %p601
        %p1190 = pneg %p598
        %p1191 = pneg %p622
        %p1192 = pneg %p619
        %p1193 = pneg %p643
        %p1194 = pneg %p640
        %p1195 = pneg %p664
        %p1196 = pneg %p661
        %p1197 = pneg %p685
        %p1198 = pneg %p682
        %p1199 = pneg %p706
        %p1200 = pneg %p703
        %p1201 = pneg %p727
        %p1202 = pneg %p724
        %p1203 = pneg %p748
        %p1204 = pneg %p745
        %p1205 = pneg %p769
        %p1206 = pneg %p766
        %p1207 = pneg %p790
        %p1208 = pneg %p787
        %p1209 = pneg %p811
        %p1210 = pneg %p808
        %p1211 = pneg %p832
        %p1212 = pneg %p829
        %p1213 = pneg %p853
        %p1214 = pneg %p850
        %p1215 = pneg %p874
        %p1216 = pneg %p871
        %p1217 = pneg %p895
        %p1218 = pneg %p892
        %p1219 = pneg %p916
        %p1220 = pneg %p913
        %p1221 = pneg %p937
        %p1222 = pneg %p934
        %p1223 = pneg %p958
        %p1224 = pneg %p955
        %p1225 = pneg %p984
        %p1226 = pneg %p981
        %s1227 = sand.u32 %s971, 1
        %s1228 = scalar_lea.sflag [#allocation3], %s1227
        %s1229 = sand.u32 %s971, 1
        %s1230 = scalar_lea.vmem [#allocation2], %s1229
        %p1231 = scmp.lt.s32.totalorder %s97, 1
        %s1232 = scalar_select %p1231, %s97, 1
        %s1233 = smul.addr %s1232, 2
        %s1234 = smul.addr %s1233, 8
        %s1235 = scalar_lea.vmem %s1, %s1234
        %v1237 = vld [vmem:[%s1235] sm:$0xff]
        %v1238 = vld [vmem:[%s1235 + $0x8] sm:$0xff]
        %v1239 = vpack.c.bf16 %v1238, %v1237
        %v1240 = vld [vmem:[%s3] sm:$0xf]
        %v1241 = vld [vmem:[%s3 + $0x4] sm:$0xf]
        %v1242 = vld [vmem:[%s3 + $0x8] sm:$0xf]
        %v1243 = vld [vmem:[%s3 + $0xc] sm:$0xf]
        %v1244 = vld [vmem:[%s3 + $0x10] sm:$0xf]
        %v1245 = vld [vmem:[%s3 + $0x14] sm:$0xf]
        %v1246 = vld [vmem:[%s3 + $0x18] sm:$0xf]
        %v1247 = vld [vmem:[%s3 + $0x1c] sm:$0xf]
        %v1248 = vld [vmem:[%s5] sm:$0x1]
        %v1250 = vlaneseq
        %v1251 = vshrl.u32 %v1250, 7
        %v1252 = vsub.s32 0, %v1251
        %v1253 = vrot.slane %v1248, %v1252
        %v1263 = vunpack.c.l.b16 %v1240
        %v1264 = vunpack.c.l.b16 %v1241
        %v1265 = vunpack.c.l.b16 %v1242
        %v1266 = vunpack.c.l.b16 %v1243
        %v1267 = vunpack.c.l.b16 %v1244
        %v1268 = vunpack.c.l.b16 %v1245
        %v1269 = vunpack.c.l.b16 %v1246
        %v1270 = vunpack.c.l.b16 %v1247
        %v1271 = vpack.c.b16 %v1264, %v1263
        %v1272 = vpack.c.b16 %v1266, %v1265
        %v1273 = vpack.c.b16 %v1268, %v1267
        %v1274 = vpack.c.b16 %v1270, %v1269
        %vm1279 = vcmask 523264
        %v1281 = vsel %vm1279, %v1239, 0
        %1283 = vmatprep.subr.bf16.mxu0 0
        %1284 = vmatpush1.bf16.msra.mxu0 0
        %1285 = vmatprep.subr.bf16.mxu0 0
        %1286 = vmatpush1.bf16.msra.mxu0 0
        %1287 = vmatprep.subr.bf16.mxu0 0
        %1288 = vmatpush1.bf16.msra.mxu0 0
        %1289 = vmatprep.subr.bf16.mxu0 0
        %1290 = vmatpush1.bf16.msra.mxu0 0
        %1291 = vmatprep.subr.bf16.mxu0 0
        %1292 = vmatpush1.bf16.msra.mxu0 %v1274
        %1293 = vmatprep.subr.bf16.mxu0 0
        %1294 = vmatpush1.bf16.msra.mxu0 %v1273
        %1295 = vmatprep.subr.bf16.mxu0 0
        %1296 = vmatpush1.bf16.msra.mxu0 %v1272
        %1297 = vmatprep.subr.bf16.mxu0 0
        %1298 = vmatpush1.bf16.msra.mxu0 %v1271
        %1299 = vmatprep.subr.bf16.mxu0 0
        %1300 = vmatpush2.bf16.msra.mxu0 0
        %1301 = vmatprep.subr.bf16.mxu0 0
        %1302 = vmatpush2.bf16.msra.mxu0 0
        %1303 = vmatprep.subr.bf16.mxu0 0
        %1304 = vmatpush2.bf16.msra.mxu0 0
        %1305 = vmatprep.subr.bf16.mxu0 0
        %1306 = vmatpush2.bf16.msra.mxu0 0
        %1307 = vmatprep.subr.bf16.mxu0 0
        %1308 = vmatpush2.bf16.msra.mxu0 0
        %1309 = vmatprep.subr.bf16.mxu0 0
        %1310 = vmatpush2.bf16.msra.mxu0 0
        %1311 = vmatprep.subr.bf16.mxu0 0
        %1312 = vmatpush2.bf16.msra.mxu0 0
        %1313 = vmatprep.subr.bf16.mxu0 0
        %1314 = vmatpush2.bf16.msra.mxu0 0
        %1315 = vmatprep.mubr.bf16.mxu0 0
        %1316 = vmatmul.mubr.bf16.gmra.mxu0 %v1281
        %v1317 = vpop.f32.mrf.mxu0
        %v1318 = vadd.f32 %v1253, %v1317
        %v1319 = vpop.f32.mrf.mxu0
        %v1320 = vpop.f32.mrf.mxu0
        %v1321 = vadd.f32 %v1253, %v1320
        %v1322 = vpop.f32.mrf.mxu0
        %1323 = vdwg.mxu0
        %v1324 = vld [vmem:[%s7] sm:$0x1]
        %v1325 = vld [vmem:[%s9] sm:$0x1]
        %vm1326 = vcmask 261120
        %v1327 = vsel %vm1326, %v1318, 0.0
        %1328 = vadd.xlane.f32.xlu0 %v1327
        %v1329 = vpop.xlane.xlu0 %1328
        %v1330 = vsel %vm1326, %v1321, 0.0
        %1331 = vadd.xlane.f32.xlu0 %v1330
        %v1332 = vpop.xlane.xlu0 %1331
        %v1333 = vrcp.pop 32.0
        %v1334 = vmul.f32 %v1329, %v1333
        %v1335 = vmul.f32 %v1332, %v1333
        %v1336 = vsub.f32 %v1318, %v1334
        %v1337 = vsub.f32 %v1321, %v1335
        %v1338 = vmul.f32 %v1336, %v1336
        %v1339 = vmul.f32 %v1337, %v1337
        %v1340 = vsel %vm1326, %v1338, 0.0
        %1341 = vadd.xlane.f32.xlu0 %v1340
        %v1342 = vpop.xlane.xlu0 %1341
        %v1343 = vsel %vm1326, %v1339, 0.0
        %1344 = vadd.xlane.f32.xlu0 %v1343
        %v1345 = vpop.xlane.xlu0 %1344
        %v1346 = vmul.f32 %v1342, %v1333
        %v1347 = vmul.f32 %v1345, %v1333
        %v1348 = vadd.f32 %v1346, 1e-05
        %v1349 = vadd.f32 %v1347, 1e-05
        %v1350 = vrsqrt.pop %v1348
        %v1351 = vrsqrt.pop %v1349
        %v1352 = vmul.f32 %v1336, %v1350
        %v1353 = vmul.f32 %v1337, %v1351
        %v1355 = vlaneseq
        %v1356 = vshrl.u32 %v1355, 7
        %v1357 = vsub.s32 0, %v1356
        %v1358 = vrot.slane %v1324, %v1357
        %v1360 = vmul.f32 %v1352, %v1358
        %v1361 = vmul.f32 %v1353, %v1358
        %v1363 = vlaneseq
        %v1364 = vshrl.u32 %v1363, 7
        %v1365 = vsub.s32 0, %v1364
        %v1366 = vrot.slane %v1325, %v1365
        %v1368 = vadd.f32 %v1360, %v1366
        %v1369 = vadd.f32 %v1361, %v1366
        %v1370 = vpack.c.bf16 %v1369, %v1368
        %v1371 = vld [vmem:[%s11] sm:$0xf]
        %v1372 = vld [vmem:[%s11 + $0x4] sm:$0xf]
        %v1373 = vld [vmem:[%s11 + $0x8] sm:$0xf]
        %v1374 = vld [vmem:[%s11 + $0xc] sm:$0xf]
        %v1375 = vld [vmem:[%s13] sm:$0x1]
        %v1377 = vlaneseq
        %v1378 = vshrl.u32 %v1377, 7
        %v1379 = vsub.s32 0, %v1378
        %v1380 = vrot.slane %v1375, %v1379
        %v1386 = vunpack.c.l.b16 %v1371
        %v1387 = vunpack.c.l.b16 %v1372
        %v1388 = vunpack.c.l.b16 %v1373
        %v1389 = vunpack.c.l.b16 %v1374
        %v1390 = vpack.c.b16 %v1387, %v1386
        %v1391 = vpack.c.b16 %v1389, %v1388
        %v1395 = vsel %vm1326, %v1370, 0
        %1397 = vmatprep.subr.bf16.mxu0 0
        %1398 = vmatpush1.bf16.msra.mxu0 0
        %1399 = vmatprep.subr.bf16.mxu0 0
        %1400 = vmatpush1.bf16.msra.mxu0 0
        %1401 = vmatprep.subr.bf16.mxu0 0
        %1402 = vmatpush1.bf16.msra.mxu0 0
        %1403 = vmatprep.subr.bf16.mxu0 0
        %1404 = vmatpush1.bf16.msra.mxu0 0
        %1405 = vmatprep.subr.bf16.mxu0 0
        %1406 = vmatpush1.bf16.msra.mxu0 0
        %1407 = vmatprep.subr.bf16.mxu0 0
        %1408 = vmatpush1.bf16.msra.mxu0 0
        %1409 = vmatprep.subr.bf16.mxu0 0
        %1410 = vmatpush1.bf16.msra.mxu0 %v1391
        %1411 = vmatprep.subr.bf16.mxu0 0
        %1412 = vmatpush1.bf16.msra.mxu0 %v1390
        %1413 = vmatprep.subr.bf16.mxu0 0
        %1414 = vmatpush2.bf16.msra.mxu0 0
        %1415 = vmatprep.subr.bf16.mxu0 0
        %1416 = vmatpush2.bf16.msra.mxu0 0
        %1417 = vmatprep.subr.bf16.mxu0 0
        %1418 = vmatpush2.bf16.msra.mxu0 0
        %1419 = vmatprep.subr.bf16.mxu0 0
        %1420 = vmatpush2.bf16.msra.mxu0 0
        %1421 = vmatprep.subr.bf16.mxu0 0
        %1422 = vmatpush2.bf16.msra.mxu0 0
        %1423 = vmatprep.subr.bf16.mxu0 0
        %1424 = vmatpush2.bf16.msra.mxu0 0
        %1425 = vmatprep.subr.bf16.mxu0 0
        %1426 = vmatpush2.bf16.msra.mxu0 0
        %1427 = vmatprep.subr.bf16.mxu0 0
        %1428 = vmatpush2.bf16.msra.mxu0 0
        %1429 = vmatprep.mubr.bf16.mxu0 0
        %1430 = vmatmul.mubr.bf16.gmra.mxu0 %v1395
        %v1431 = vpop.f32.mrf.mxu0
        %v1432 = vadd.f32 %v1380, %v1431
        %v1433 = vpop.f32.mrf.mxu0
        %v1434 = vpop.f32.mrf.mxu0
        %v1435 = vadd.f32 %v1380, %v1434
        %v1436 = vpop.f32.mrf.mxu0
        %1437 = vdwg.mxu0
        %1440 = vrot.lane.b32.xlu0 %v1432, 112
        %v1441 = vpop.permute.xlu0 %1440
        %1442 = vrot.lane.b32.xlu0 %v1435, 112
        %v1443 = vpop.permute.xlu0 %1442
        %v1446 = vmul.f32 %v1432, %v1432
        %v1447 = vmul.f32 %v1435, %v1435
        %v1448 = vmul.f32 %v1441, %v1441
        %v1449 = vmul.f32 %v1443, %v1443
        %vm1450 = vcmask 130048
        %v1451 = vsel %vm1450, %v1446, 0.0
        %1452 = vadd.xlane.f32.xlu0 %v1451
        %v1453 = vpop.xlane.xlu0 %1452
        %v1454 = vsel %vm1450, %v1447, 0.0
        %1455 = vadd.xlane.f32.xlu0 %v1454
        %v1456 = vpop.xlane.xlu0 %1455
        %v1457 = vsel %vm1450, %v1448, 0.0
        %1458 = vadd.xlane.f32.xlu0 %v1457
        %v1459 = vpop.xlane.xlu0 %1458
        %v1460 = vsel %vm1450, %v1449, 0.0
        %1461 = vadd.xlane.f32.xlu0 %v1460
        %v1462 = vpop.xlane.xlu0 %1461
        %v1463 = vmax.f32 %v1453, 1e-24
        %v1464 = vmax.f32 %v1456, 1e-24
        %v1465 = vmax.f32 %v1459, 1e-24
        %v1466 = vmax.f32 %v1462, 1e-24
        %v1467 = vrsqrt.pop %v1463
        %v1468 = vrsqrt.pop %v1464
        %v1469 = vrsqrt.pop %v1465
        %v1470 = vrsqrt.pop %v1466
        %v1471 = vmul.f32 %v1432, %v1467
        %v1472 = vmul.f32 %v1435, %v1468
        %v1473 = vmul.f32 %v1441, %v1469
        %v1474 = vmul.f32 %v1443, %v1470
        %1479 = vrot.lane.b32.xlu0 %v1446, 96
        %v1480 = vpop.permute.xlu0 %1479
        %1481 = vrot.lane.b32.xlu0 %v1447, 96
        %v1482 = vpop.permute.xlu0 %1481
        %1483 = vrot.lane.b32.xlu0 %v1448, 96
        %v1484 = vpop.permute.xlu0 %1483
        %1485 = vrot.lane.b32.xlu0 %v1449, 96
        %v1486 = vpop.permute.xlu0 %1485
        %v1491 = vsel %vm1450, %v1480, 0.0
        %1492 = vadd.xlane.f32.xlu0 %v1491
        %v1493 = vpop.xlane.xlu0 %1492
        %v1494 = vsel %vm1450, %v1482, 0.0
        %1495 = vadd.xlane.f32.xlu0 %v1494
        %v1496 = vpop.xlane.xlu0 %1495
        %v1497 = vsel %vm1450, %v1484, 0.0
        %1498 = vadd.xlane.f32.xlu0 %v1497
        %v1499 = vpop.xlane.xlu0 %1498
        %v1500 = vsel %vm1450, %v1486, 0.0
        %1501 = vadd.xlane.f32.xlu0 %v1500
        %v1502 = vpop.xlane.xlu0 %1501
        %v1503 = vmax.f32 %v1493, 1e-24
        %v1504 = vmax.f32 %v1496, 1e-24
        %v1505 = vmax.f32 %v1499, 1e-24
        %v1506 = vmax.f32 %v1502, 1e-24
        %v1507 = vrsqrt.pop %v1503
        %v1508 = vrsqrt.pop %v1504
        %v1509 = vrsqrt.pop %v1505
        %v1510 = vrsqrt.pop %v1506
        %v1511 = vmul.f32 %v1432, %v1507
        %v1512 = vmul.f32 %v1435, %v1508
        %v1513 = vmul.f32 %v1441, %v1509
        %v1514 = vmul.f32 %v1443, %v1510
        %v1515 = vpack.c.bf16 %v1472, %v1471
        %v1516 = vpack.c.bf16 %v1474, %v1473
        %v1517 = vpack.c.bf16 %v1512, %v1511
        %v1518 = vpack.c.bf16 %v1514, %v1513
        %1520 = vrot.lane.b32.xlu0 %v1517, 96
        %v1521 = vpop.permute.xlu0 %1520
        %v1523 = vsel %vm1450, %v1515, 0
        %v1526 = vsel %vm1450, %v1521, 0
        %1528 = vmatprep.subr.bf16.mxu0 0
        %1529 = vmatpush1.bf16.xpose.msra.mxu0 0
        %1530 = vmatprep.subr.bf16.mxu0 0
        %1531 = vmatpush1.bf16.xpose.msra.mxu0 0
        %1532 = vmatprep.subr.bf16.mxu0 0
        %1533 = vmatpush1.bf16.xpose.msra.mxu0 0
        %1534 = vmatprep.subr.bf16.mxu0 0
        %1535 = vmatpush1.bf16.xpose.msra.mxu0 0
        %1536 = vmatprep.subr.bf16.mxu0 0
        %1537 = vmatpush1.bf16.xpose.msra.mxu0 0
        %1538 = vmatprep.subr.bf16.mxu0 0
        %1539 = vmatpush1.bf16.xpose.msra.mxu0 0
        %1540 = vmatprep.subr.bf16.mxu0 0
        %1541 = vmatpush1.bf16.xpose.msra.mxu0 0
        %1542 = vmatprep.subr.bf16.mxu0 0
        %1543 = vmatpush1.bf16.xpose.msra.mxu0 %v1526
        %1544 = vmatprep.subr.bf16.mxu0 0
        %1545 = vmatpush2.bf16.xpose.msra.mxu0 0
        %1546 = vmatprep.subr.bf16.mxu0 0
        %1547 = vmatpush2.bf16.xpose.msra.mxu0 0
        %1548 = vmatprep.subr.bf16.mxu0 0
        %1549 = vmatpush2.bf16.xpose.msra.mxu0 0
        %1550 = vmatprep.subr.bf16.mxu0 0
        %1551 = vmatpush2.bf16.xpose.msra.mxu0 0
        %1552 = vmatprep.subr.bf16.mxu0 0
        %1553 = vmatpush2.bf16.xpose.msra.mxu0 0
        %1554 = vmatprep.subr.bf16.mxu0 0
        %1555 = vmatpush2.bf16.xpose.msra.mxu0 0
        %1556 = vmatprep.subr.bf16.mxu0 0
        %1557 = vmatpush2.bf16.xpose.msra.mxu0 0
        %1558 = vmatprep.subr.bf16.mxu0 0
        %1559 = vmatpush2.bf16.xpose.msra.mxu0 0
        %1560 = vmatprep.mubr.bf16.mxu0 0
        %1561 = vmatmul.mubr.bf16.gmra.mxu0 %v1523
        %v1562 = vpop.f32.mrf.mxu0
        %v1563 = vadd.f32 0.0, %v1562
        %v1564 = vpop.f32.mrf.mxu0
        %v1565 = vpop.f32.mrf.mxu0
        %v1566 = vadd.f32 0.0, %v1565
        %v1567 = vpop.f32.mrf.mxu0
        %1568 = vdwg.mxu0
        %1570 = vrot.lane.b32.xlu0 %v1518, 96
        %v1571 = vpop.permute.xlu0 %1570
        %v1573 = vsel %vm1450, %v1516, 0
        %v1576 = vsel %vm1450, %v1571, 0
        %1578 = vmatprep.subr.bf16.mxu0 0
        %1579 = vmatpush1.bf16.xpose.msra.mxu0 0
        %1580 = vmatprep.subr.bf16.mxu0 0
        %1581 = vmatpush1.bf16.xpose.msra.mxu0 0
        %1582 = vmatprep.subr.bf16.mxu0 0
        %1583 = vmatpush1.bf16.xpose.msra.mxu0 0
        %1584 = vmatprep.subr.bf16.mxu0 0
        %1585 = vmatpush1.bf16.xpose.msra.mxu0 0
        %1586 = vmatprep.subr.bf16.mxu0 0
        %1587 = vmatpush1.bf16.xpose.msra.mxu0 0
        %1588 = vmatprep.subr.bf16.mxu0 0
        %1589 = vmatpush1.bf16.xpose.msra.mxu0 0
        %1590 = vmatprep.subr.bf16.mxu0 0
        %1591 = vmatpush1.bf16.xpose.msra.mxu0 0
        %1592 = vmatprep.subr.bf16.mxu0 0
        %1593 = vmatpush1.bf16.xpose.msra.mxu0 %v1576
        %1594 = vmatprep.subr.bf16.mxu0 0
        %1595 = vmatpush2.bf16.xpose.msra.mxu0 0
        %1596 = vmatprep.subr.bf16.mxu0 0
        %1597 = vmatpush2.bf16.xpose.msra.mxu0 0
        %1598 = vmatprep.subr.bf16.mxu0 0
        %1599 = vmatpush2.bf16.xpose.msra.mxu0 0
        %1600 = vmatprep.subr.bf16.mxu0 0
        %1601 = vmatpush2.bf16.xpose.msra.mxu0 0
        %1602 = vmatprep.subr.bf16.mxu0 0
        %1603 = vmatpush2.bf16.xpose.msra.mxu0 0
        %1604 = vmatprep.subr.bf16.mxu0 0
        %1605 = vmatpush2.bf16.xpose.msra.mxu0 0
        %1606 = vmatprep.subr.bf16.mxu0 0
        %1607 = vmatpush2.bf16.xpose.msra.mxu0 0
        %1608 = vmatprep.subr.bf16.mxu0 0
        %1609 = vmatpush2.bf16.xpose.msra.mxu0 0
        %1610 = vmatprep.mubr.bf16.mxu0 0
        %1611 = vmatmul.mubr.bf16.gmra.mxu0 %v1573
        %v1612 = vpop.f32.mrf.mxu0
        %v1613 = vadd.f32 0.0, %v1612
        %v1614 = vpop.f32.mrf.mxu0
        %v1615 = vpop.f32.mrf.mxu0
        %v1616 = vadd.f32 0.0, %v1615
        %v1617 = vpop.f32.mrf.mxu0
        %1618 = vdwg.mxu0
        %v1619 = vld [vmem:[%s19] sm:$0xff]
        %v1620 = vld [vmem:[%s19 + $0x8] sm:$0xff]
        %v1621 = vld [vmem:[%s19 + $0x10] sm:$0xff]
        %v1622 = vld [vmem:[%s19 + $0x18] sm:$0xff]
        %1624 = vset.pattern.permute.xlu0 0
        %1625 = vperm.xlu0 %1624, %v1619
        %v1626 = vpop.permute.xlu0 %1625
        %1629 = vset.pattern.permute.xlu0 0
        %1630 = vperm.xlu0 %1629, %v1620
        %v1631 = vpop.permute.xlu0 %1630
        %1634 = vset.pattern.permute.xlu0 0
        %1635 = vperm.xlu0 %1634, %v1621
        %v1636 = vpop.permute.xlu0 %1635
        %1639 = vset.pattern.permute.xlu0 0
        %1640 = vperm.xlu0 %1639, %v1622
        %v1641 = vpop.permute.xlu0 %1640
        %v1643 = vmul.f32 %v1563, %v1626
        %v1644 = vmul.f32 %v1566, %v1631
        %v1645 = vmul.f32 %v1613, %v1636
        %v1646 = vmul.f32 %v1616, %v1641
        %v1647 = vld [vmem:[%s21] sm:$0xff]
        %v1648 = vld [vmem:[%s21 + $0x8] sm:$0xff]
        %v1649 = vld [vmem:[%s21 + $0x10] sm:$0xff]
        %v1650 = vld [vmem:[%s21 + $0x18] sm:$0xff]
        %v1651 = vadd.f32 %v1643, %v1647
        %v1652 = vadd.f32 %v1644, %v1648
        %v1653 = vadd.f32 %v1645, %v1649
        %v1654 = vadd.f32 %v1646, %v1650
        %v1655 = vsel %vm1450, %v1651, -inf
        %1656 = vmax.xlane.f32.xlu0 %v1655
        %v1657 = vpop.xlane.xlu0 %1656
        %v1658 = vsel %vm1450, %v1652, -inf
        %1659 = vmax.xlane.f32.xlu0 %v1658
        %v1660 = vpop.xlane.xlu0 %1659
        %v1661 = vsel %vm1450, %v1653, -inf
        %1662 = vmax.xlane.f32.xlu0 %v1661
        %v1663 = vpop.xlane.xlu0 %1662
        %v1664 = vsel %vm1450, %v1654, -inf
        %1665 = vmax.xlane.f32.xlu0 %v1664
        %v1666 = vpop.xlane.xlu0 %1665
        %v1667 = vsub.f32 %v1651, %v1657
        %v1668 = vsub.f32 %v1652, %v1660
        %v1669 = vsub.f32 %v1653, %v1663
        %v1670 = vsub.f32 %v1654, %v1666
        %v1671 = vmul.f32 %v1667, 1.442695
        %v1672 = vpow.pop %v1671
        %v1673 = vmul.f32 %v1668, 1.442695
        %v1674 = vpow.pop %v1673
        %v1675 = vmul.f32 %v1669, 1.442695
        %v1676 = vpow.pop %v1675
        %v1677 = vmul.f32 %v1670, 1.442695
        %v1678 = vpow.pop %v1677
        %v1679 = vsel %vm1450, %v1672, 0.0
        %1680 = vadd.xlane.f32.xlu0 %v1679
        %v1681 = vpop.xlane.xlu0 %1680
        %v1682 = vsel %vm1450, %v1674, 0.0
        %1683 = vadd.xlane.f32.xlu0 %v1682
        %v1684 = vpop.xlane.xlu0 %1683
        %v1685 = vsel %vm1450, %v1676, 0.0
        %1686 = vadd.xlane.f32.xlu0 %v1685
        %v1687 = vpop.xlane.xlu0 %1686
        %v1688 = vsel %vm1450, %v1678, 0.0
        %1689 = vadd.xlane.f32.xlu0 %v1688
        %v1690 = vpop.xlane.xlu0 %1689
        %v1691 = vrcp.pop %v1681
        %v1692 = vrcp.pop %v1684
        %v1693 = vrcp.pop %v1687
        %v1694 = vrcp.pop %v1690
        %v1695 = vmul.f32 %v1672, %v1691
        %v1696 = vmul.f32 %v1674, %v1692
        %v1697 = vmul.f32 %v1676, %v1693
        %v1698 = vmul.f32 %v1678, %v1694
        %v1699 = vpack.c.bf16 %v1696, %v1695
        %v1700 = vpack.c.bf16 %v1698, %v1697
        %v1701 = vpack.c.bf16 %v1435, %v1432
        %v1702 = vpack.c.bf16 %v1443, %v1441
        %1704 = vrot.lane.b32.xlu0 %v1701, 64
        %v1705 = vpop.permute.xlu0 %1704
        %v1708 = vsel %vm1450, %v1699, 0
        %1710 = vmatprep.subr.bf16.mxu0 0
        %1711 = vmatpush1.bf16.msra.mxu0 0
        %1712 = vmatprep.subr.bf16.mxu0 0
        %1713 = vmatpush1.bf16.msra.mxu0 0
        %1714 = vmatprep.subr.bf16.mxu0 0
        %1715 = vmatpush1.bf16.msra.mxu0 0
        %1716 = vmatprep.subr.bf16.mxu0 0
        %1717 = vmatpush1.bf16.msra.mxu0 0
        %1718 = vmatprep.subr.bf16.mxu0 0
        %1719 = vmatpush1.bf16.msra.mxu0 0
        %1720 = vmatprep.subr.bf16.mxu0 0
        %1721 = vmatpush1.bf16.msra.mxu0 0
        %1722 = vmatprep.subr.bf16.mxu0 0
        %1723 = vmatpush1.bf16.msra.mxu0 0
        %1724 = vmatprep.subr.bf16.mxu0 0
        %1725 = vmatpush1.bf16.msra.mxu0 %v1705
        %1726 = vmatprep.subr.bf16.mxu0 0
        %1727 = vmatpush2.bf16.msra.mxu0 0
        %1728 = vmatprep.subr.bf16.mxu0 0
        %1729 = vmatpush2.bf16.msra.mxu0 0
        %1730 = vmatprep.subr.bf16.mxu0 0
        %1731 = vmatpush2.bf16.msra.mxu0 0
        %1732 = vmatprep.subr.bf16.mxu0 0
        %1733 = vmatpush2.bf16.msra.mxu0 0
        %1734 = vmatprep.subr.bf16.mxu0 0
        %1735 = vmatpush2.bf16.msra.mxu0 0
        %1736 = vmatprep.subr.bf16.mxu0 0
        %1737 = vmatpush2.bf16.msra.mxu0 0
        %1738 = vmatprep.subr.bf16.mxu0 0
        %1739 = vmatpush2.bf16.msra.mxu0 0
        %1740 = vmatprep.subr.bf16.mxu0 0
        %1741 = vmatpush2.bf16.msra.mxu0 0
        %1742 = vmatprep.mubr.bf16.mxu0 0
        %1743 = vmatmul.mubr.bf16.gmra.mxu0 %v1708
        %v1744 = vpop.f32.mrf.mxu0
        %v1745 = vadd.f32 0.0, %v1744
        %v1746 = vpop.f32.mrf.mxu0
        %v1747 = vpop.f32.mrf.mxu0
        %v1748 = vadd.f32 0.0, %v1747
        %v1749 = vpop.f32.mrf.mxu0
        %1750 = vdwg.mxu0
        %1752 = vrot.lane.b32.xlu0 %v1702, 64
        %v1753 = vpop.permute.xlu0 %1752
        %v1756 = vsel %vm1450, %v1700, 0
        %1758 = vmatprep.subr.bf16.mxu0 0
        %1759 = vmatpush1.bf16.msra.mxu0 0
        %1760 = vmatprep.subr.bf16.mxu0 0
        %1761 = vmatpush1.bf16.msra.mxu0 0
        %1762 = vmatprep.subr.bf16.mxu0 0
        %1763 = vmatpush1.bf16.msra.mxu0 0
        %1764 = vmatprep.subr.bf16.mxu0 0
        %1765 = vmatpush1.bf16.msra.mxu0 0
        %1766 = vmatprep.subr.bf16.mxu0 0
        %1767 = vmatpush1.bf16.msra.mxu0 0
        %1768 = vmatprep.subr.bf16.mxu0 0
        %1769 = vmatpush1.bf16.msra.mxu0 0
        %1770 = vmatprep.subr.bf16.mxu0 0
        %1771 = vmatpush1.bf16.msra.mxu0 0
        %1772 = vmatprep.subr.bf16.mxu0 0
        %1773 = vmatpush1.bf16.msra.mxu0 %v1753
        %1774 = vmatprep.subr.bf16.mxu0 0
        %1775 = vmatpush2.bf16.msra.mxu0 0
        %1776 = vmatprep.subr.bf16.mxu0 0
        %1777 = vmatpush2.bf16.msra.mxu0 0
        %1778 = vmatprep.subr.bf16.mxu0 0
        %1779 = vmatpush2.bf16.msra.mxu0 0
        %1780 = vmatprep.subr.bf16.mxu0 0
        %1781 = vmatpush2.bf16.msra.mxu0 0
        %1782 = vmatprep.subr.bf16.mxu0 0
        %1783 = vmatpush2.bf16.msra.mxu0 0
        %1784 = vmatprep.subr.bf16.mxu0 0
        %1785 = vmatpush2.bf16.msra.mxu0 0
        %1786 = vmatprep.subr.bf16.mxu0 0
        %1787 = vmatpush2.bf16.msra.mxu0 0
        %1788 = vmatprep.subr.bf16.mxu0 0
        %1789 = vmatpush2.bf16.msra.mxu0 0
        %1790 = vmatprep.mubr.bf16.mxu0 0
        %1791 = vmatmul.mubr.bf16.gmra.mxu0 %v1756
        %v1792 = vpop.f32.mrf.mxu0
        %v1793 = vadd.f32 0.0, %v1792
        %v1794 = vpop.f32.mrf.mxu0
        %v1795 = vpop.f32.mrf.mxu0
        %v1796 = vadd.f32 0.0, %v1795
        %v1797 = vpop.f32.mrf.mxu0
        %1798 = vdwg.mxu0
        %1801 = vrot.lane.b32.xlu0 %v1793, 16
        %v1802 = vpop.permute.xlu0 %1801
        %1803 = vrot.lane.b32.xlu0 %v1796, 16
        %v1804 = vpop.permute.xlu0 %1803
        %v1807 = vsel %vm1450, %v1745, %v1802
        %v1808 = vsel %vm1450, %v1748, %v1804
        %v1809 = vpack.c.bf16 %v1808, %v1807
        %v1810 = vld [vmem:[%s15] sm:$0xf]
        %v1811 = vld [vmem:[%s15 + $0x4] sm:$0xf]
        %v1812 = vld [vmem:[%s15 + $0x8] sm:$0xf]
        %v1813 = vld [vmem:[%s15 + $0xc] sm:$0xf]
        %v1814 = vld [vmem:[%s17] sm:$0x1]
        %v1816 = vlaneseq
        %v1817 = vshrl.u32 %v1816, 7
        %v1818 = vsub.s32 0, %v1817
        %v1819 = vrot.slane %v1814, %v1818
        %v1825 = vunpack.c.l.b16 %v1810
        %v1826 = vunpack.c.l.b16 %v1811
        %v1827 = vunpack.c.l.b16 %v1812
        %v1828 = vunpack.c.l.b16 %v1813
        %v1829 = vpack.c.b16 %v1826, %v1825
        %v1830 = vpack.c.b16 %v1828, %v1827
        %v1834 = vsel %vm1326, %v1809, 0
        %1836 = vmatprep.subr.bf16.mxu0 0
        %1837 = vmatpush1.bf16.msra.mxu0 0
        %1838 = vmatprep.subr.bf16.mxu0 0
        %1839 = vmatpush1.bf16.msra.mxu0 0
        %1840 = vmatprep.subr.bf16.mxu0 0
        %1841 = vmatpush1.bf16.msra.mxu0 0
        %1842 = vmatprep.subr.bf16.mxu0 0
        %1843 = vmatpush1.bf16.msra.mxu0 0
        %1844 = vmatprep.subr.bf16.mxu0 0
        %1845 = vmatpush1.bf16.msra.mxu0 0
        %1846 = vmatprep.subr.bf16.mxu0 0
        %1847 = vmatpush1.bf16.msra.mxu0 0
        %1848 = vmatprep.subr.bf16.mxu0 0
        %1849 = vmatpush1.bf16.msra.mxu0 %v1830
        %1850 = vmatprep.subr.bf16.mxu0 0
        %1851 = vmatpush1.bf16.msra.mxu0 %v1829
        %1852 = vmatprep.subr.bf16.mxu0 0
        %1853 = vmatpush2.bf16.msra.mxu0 0
        %1854 = vmatprep.subr.bf16.mxu0 0
        %1855 = vmatpush2.bf16.msra.mxu0 0
        %1856 = vmatprep.subr.bf16.mxu0 0
        %1857 = vmatpush2.bf16.msra.mxu0 0
        %1858 = vmatprep.subr.bf16.mxu0 0
        %1859 = vmatpush2.bf16.msra.mxu0 0
        %1860 = vmatprep.subr.bf16.mxu0 0
        %1861 = vmatpush2.bf16.msra.mxu0 0
        %1862 = vmatprep.subr.bf16.mxu0 0
        %1863 = vmatpush2.bf16.msra.mxu0 0
        %1864 = vmatprep.subr.bf16.mxu0 0
        %1865 = vmatpush2.bf16.msra.mxu0 0
        %1866 = vmatprep.subr.bf16.mxu0 0
        %1867 = vmatpush2.bf16.msra.mxu0 0
        %1868 = vmatprep.mubr.bf16.mxu0 0
        %1869 = vmatmul.mubr.bf16.gmra.mxu0 %v1834
        %v1870 = vpop.f32.mrf.mxu0
        %v1871 = vadd.f32 %v1819, %v1870
        %v1872 = vpop.f32.mrf.mxu0
        %v1873 = vpop.f32.mrf.mxu0
        %v1874 = vadd.f32 %v1819, %v1873
        %v1875 = vpop.f32.mrf.mxu0
        %1876 = vdwg.mxu0
        %v1877 = vld [vmem:[%s23] sm:$0x1]
        %v1878 = vld [vmem:[%s25] sm:$0x1]
        %v1879 = vsel %vm1326, %v1871, 0.0
        %1880 = vadd.xlane.f32.xlu0 %v1879
        %v1881 = vpop.xlane.xlu0 %1880
        %v1882 = vsel %vm1326, %v1874, 0.0
        %1883 = vadd.xlane.f32.xlu0 %v1882
        %v1884 = vpop.xlane.xlu0 %1883
        %v1885 = vmul.f32 %v1881, %v1333
        %v1886 = vmul.f32 %v1884, %v1333
        %v1887 = vsub.f32 %v1871, %v1885
        %v1888 = vsub.f32 %v1874, %v1886
        %v1889 = vmul.f32 %v1887, %v1887
        %v1890 = vmul.f32 %v1888, %v1888
        %v1891 = vsel %vm1326, %v1889, 0.0
        %1892 = vadd.xlane.f32.xlu0 %v1891
        %v1893 = vpop.xlane.xlu0 %1892
        %v1894 = vsel %vm1326, %v1890, 0.0
        %1895 = vadd.xlane.f32.xlu0 %v1894
        %v1896 = vpop.xlane.xlu0 %1895
        %v1897 = vmul.f32 %v1893, %v1333
        %v1898 = vmul.f32 %v1896, %v1333
        %v1899 = vadd.f32 %v1897, 1e-05
        %v1900 = vadd.f32 %v1898, 1e-05
        %v1901 = vrsqrt.pop %v1899
        %v1902 = vrsqrt.pop %v1900
        %v1903 = vmul.f32 %v1887, %v1901
        %v1904 = vmul.f32 %v1888, %v1902
        %v1906 = vlaneseq
        %v1907 = vshrl.u32 %v1906, 7
        %v1908 = vsub.s32 0, %v1907
        %v1909 = vrot.slane %v1877, %v1908
        %v1911 = vmul.f32 %v1903, %v1909
        %v1912 = vmul.f32 %v1904, %v1909
        %v1914 = vlaneseq
        %v1915 = vshrl.u32 %v1914, 7
        %v1916 = vsub.s32 0, %v1915
        %v1917 = vrot.slane %v1878, %v1916
        %v1919 = vadd.f32 %v1911, %v1917
        %v1920 = vadd.f32 %v1912, %v1917
        %v1921 = vadd.f32 %v1368, %v1919
        %v1922 = vadd.f32 %v1369, %v1920
        %v1923 = vpack.c.bf16 %v1922, %v1921
        %v1924 = vld [vmem:[%s27] sm:$0xf]
        %v1925 = vld [vmem:[%s27 + $0x4] sm:$0xf]
        %v1926 = vld [vmem:[%s27 + $0x8] sm:$0xf]
        %v1927 = vld [vmem:[%s27 + $0xc] sm:$0xf]
        %v1928 = vld [vmem:[%s29] sm:$0x1]
        %v1930 = vlaneseq
        %v1931 = vshrl.u32 %v1930, 7
        %v1932 = vsub.s32 0, %v1931
        %v1933 = vrot.slane %v1928, %v1932
        %v1939 = vunpack.c.l.b16 %v1924
        %v1940 = vunpack.c.l.b16 %v1925
        %v1941 = vunpack.c.l.b16 %v1926
        %v1942 = vunpack.c.l.b16 %v1927
        %v1943 = vpack.c.b16 %v1940, %v1939
        %v1944 = vpack.c.b16 %v1942, %v1941
        %v1948 = vsel %vm1326, %v1923, 0
        %1950 = vmatprep.subr.bf16.mxu0 0
        %1951 = vmatpush1.bf16.msra.mxu0 0
        %1952 = vmatprep.subr.bf16.mxu0 0
        %1953 = vmatpush1.bf16.msra.mxu0 0
        %1954 = vmatprep.subr.bf16.mxu0 0
        %1955 = vmatpush1.bf16.msra.mxu0 0
        %1956 = vmatprep.subr.bf16.mxu0 0
        %1957 = vmatpush1.bf16.msra.mxu0 0
        %1958 = vmatprep.subr.bf16.mxu0 0
        %1959 = vmatpush1.bf16.msra.mxu0 0
        %1960 = vmatprep.subr.bf16.mxu0 0
        %1961 = vmatpush1.bf16.msra.mxu0 0
        %1962 = vmatprep.subr.bf16.mxu0 0
        %1963 = vmatpush1.bf16.msra.mxu0 %v1944
        %1964 = vmatprep.subr.bf16.mxu0 0
        %1965 = vmatpush1.bf16.msra.mxu0 %v1943
        %1966 = vmatprep.subr.bf16.mxu0 0
        %1967 = vmatpush2.bf16.msra.mxu0 0
        %1968 = vmatprep.subr.bf16.mxu0 0
        %1969 = vmatpush2.bf16.msra.mxu0 0
        %1970 = vmatprep.subr.bf16.mxu0 0
        %1971 = vmatpush2.bf16.msra.mxu0 0
        %1972 = vmatprep.subr.bf16.mxu0 0
        %1973 = vmatpush2.bf16.msra.mxu0 0
        %1974 = vmatprep.subr.bf16.mxu0 0
        %1975 = vmatpush2.bf16.msra.mxu0 0
        %1976 = vmatprep.subr.bf16.mxu0 0
        %1977 = vmatpush2.bf16.msra.mxu0 0
        %1978 = vmatprep.subr.bf16.mxu0 0
        %1979 = vmatpush2.bf16.msra.mxu0 0
        %1980 = vmatprep.subr.bf16.mxu0 0
        %1981 = vmatpush2.bf16.msra.mxu0 0
        %1982 = vmatprep.mubr.bf16.mxu0 0
        %1983 = vmatmul.mubr.bf16.gmra.mxu0 %v1948
        %v1984 = vpop.f32.mrf.mxu0
        %v1985 = vadd.f32 %v1933, %v1984
        %v1986 = vpop.f32.mrf.mxu0
        %v1987 = vpop.f32.mrf.mxu0
        %v1988 = vadd.f32 %v1933, %v1987
        %v1989 = vpop.f32.mrf.mxu0
        %1990 = vdwg.mxu0
        %v1991 = vmul.f32 %v1985, %v1985
        %v1992 = vmul.f32 %v1988, %v1988
        %v1993 = vmul.f32 %v1985, %v1991
        %v1994 = vmul.f32 %v1988, %v1992
        %v1995 = vmul.f32 %v1993, 0.044715
        %v1996 = vmul.f32 %v1994, 0.044715
        %v1997 = vadd.f32 %v1985, %v1995
        %v1998 = vadd.f32 %v1988, %v1996
        %v1999 = vmul.f32 %v1997, 0.7978846
        %v2000 = vmul.f32 %v1998, 0.7978846
        %v2001 = vtanh.pop %v1999
        %v2002 = vtanh.pop %v2000
        %v2003 = vadd.f32 %v2001, 1.0
        %v2004 = vadd.f32 %v2002, 1.0
        %v2005 = vmul.f32 %v2003, 0.5
        %v2006 = vmul.f32 %v2004, 0.5
        %v2007 = vmul.f32 %v1985, %v2005
        %v2008 = vmul.f32 %v1988, %v2006
        %v2009 = vpack.c.bf16 %v2008, %v2007
        %v2010 = vld [vmem:[%s31] sm:$0xf]
        %v2011 = vld [vmem:[%s31 + $0x4] sm:$0xf]
        %v2012 = vld [vmem:[%s31 + $0x8] sm:$0xf]
        %v2013 = vld [vmem:[%s31 + $0xc] sm:$0xf]
        %v2014 = vld [vmem:[%s31 + $0x10] sm:$0xf]
        %v2015 = vld [vmem:[%s31 + $0x14] sm:$0xf]
        %v2016 = vld [vmem:[%s31 + $0x18] sm:$0xf]
        %v2017 = vld [vmem:[%s31 + $0x1c] sm:$0xf]
        %v2018 = vld [vmem:[%s31 + $0x20] sm:$0xf]
        %v2019 = vld [vmem:[%s31 + $0x24] sm:$0xf]
        %v2020 = vld [vmem:[%s31 + $0x28] sm:$0xf]
        %v2021 = vld [vmem:[%s31 + $0x2c] sm:$0xf]
        %v2022 = vld [vmem:[%s31 + $0x30] sm:$0xf]
        %v2023 = vld [vmem:[%s31 + $0x34] sm:$0xf]
        %v2024 = vld [vmem:[%s31 + $0x38] sm:$0xf]
        %v2025 = vld [vmem:[%s31 + $0x3c] sm:$0xf]
        %v2026 = vld [vmem:[%s33] sm:$0x1]
        %v2028 = vlaneseq
        %v2029 = vshrl.u32 %v2028, 7
        %v2030 = vsub.s32 0, %v2029
        %v2031 = vrot.slane %v2026, %v2030
        %v2049 = vunpack.c.l.b16 %v2010
        %v2050 = vunpack.c.l.b16 %v2011
        %v2051 = vunpack.c.l.b16 %v2012
        %v2052 = vunpack.c.l.b16 %v2013
        %v2053 = vunpack.c.l.b16 %v2014
        %v2054 = vunpack.c.l.b16 %v2015
        %v2055 = vunpack.c.l.b16 %v2016
        %v2056 = vunpack.c.l.b16 %v2017
        %v2057 = vunpack.c.l.b16 %v2018
        %v2058 = vunpack.c.l.b16 %v2019
        %v2059 = vunpack.c.l.b16 %v2020
        %v2060 = vunpack.c.l.b16 %v2021
        %v2061 = vunpack.c.l.b16 %v2022
        %v2062 = vunpack.c.l.b16 %v2023
        %v2063 = vunpack.c.l.b16 %v2024
        %v2064 = vunpack.c.l.b16 %v2025
        %v2065 = vpack.c.b16 %v2050, %v2049
        %v2066 = vpack.c.b16 %v2052, %v2051
        %v2067 = vpack.c.b16 %v2054, %v2053
        %v2068 = vpack.c.b16 %v2056, %v2055
        %v2069 = vpack.c.b16 %v2058, %v2057
        %v2070 = vpack.c.b16 %v2060, %v2059
        %v2071 = vpack.c.b16 %v2062, %v2061
        %v2072 = vpack.c.b16 %v2064, %v2063
        %2081 = vmatprep.subr.bf16.mxu0 0
        %2082 = vmatpush1.bf16.msra.mxu0 %v2072
        %2083 = vmatprep.subr.bf16.mxu0 0
        %2084 = vmatpush1.bf16.msra.mxu0 %v2071
        %2085 = vmatprep.subr.bf16.mxu0 0
        %2086 = vmatpush1.bf16.msra.mxu0 %v2070
        %2087 = vmatprep.subr.bf16.mxu0 0
        %2088 = vmatpush1.bf16.msra.mxu0 %v2069
        %2089 = vmatprep.subr.bf16.mxu0 0
        %2090 = vmatpush1.bf16.msra.mxu0 %v2068
        %2091 = vmatprep.subr.bf16.mxu0 0
        %2092 = vmatpush1.bf16.msra.mxu0 %v2067
        %2093 = vmatprep.subr.bf16.mxu0 0
        %2094 = vmatpush1.bf16.msra.mxu0 %v2066
        %2095 = vmatprep.subr.bf16.mxu0 0
        %2096 = vmatpush1.bf16.msra.mxu0 %v2065
        %2097 = vmatprep.subr.bf16.mxu0 0
        %2098 = vmatpush2.bf16.msra.mxu0 0
        %2099 = vmatprep.subr.bf16.mxu0 0
        %2100 = vmatpush2.bf16.msra.mxu0 0
        %2101 = vmatprep.subr.bf16.mxu0 0
        %2102 = vmatpush2.bf16.msra.mxu0 0
        %2103 = vmatprep.subr.bf16.mxu0 0
        %2104 = vmatpush2.bf16.msra.mxu0 0
        %2105 = vmatprep.subr.bf16.mxu0 0
        %2106 = vmatpush2.bf16.msra.mxu0 0
        %2107 = vmatprep.subr.bf16.mxu0 0
        %2108 = vmatpush2.bf16.msra.mxu0 0
        %2109 = vmatprep.subr.bf16.mxu0 0
        %2110 = vmatpush2.bf16.msra.mxu0 0
        %2111 = vmatprep.subr.bf16.mxu0 0
        %2112 = vmatpush2.bf16.msra.mxu0 0
        %2113 = vmatprep.mubr.bf16.mxu0 0
        %2114 = vmatmul.mubr.bf16.gmra.mxu0 %v2009
        %v2115 = vpop.f32.mrf.mxu0
        %v2116 = vadd.f32 %v2031, %v2115
        %v2117 = vpop.f32.mrf.mxu0
        %v2118 = vpop.f32.mrf.mxu0
        %v2119 = vadd.f32 %v2031, %v2118
        %v2120 = vpop.f32.mrf.mxu0
        %2121 = vdwg.mxu0
        %v2122 = vld [vmem:[%s35] sm:$0x1]
        %v2123 = vld [vmem:[%s37] sm:$0x1]
        %v2124 = vsel %vm1326, %v2116, 0.0
        %2125 = vadd.xlane.f32.xlu0 %v2124
        %v2126 = vpop.xlane.xlu0 %2125
        %v2127 = vsel %vm1326, %v2119, 0.0
        %2128 = vadd.xlane.f32.xlu0 %v2127
        %v2129 = vpop.xlane.xlu0 %2128
        %v2130 = vmul.f32 %v2126, %v1333
        %v2131 = vmul.f32 %v2129, %v1333
        %v2132 = vsub.f32 %v2116, %v2130
        %v2133 = vsub.f32 %v2119, %v2131
        %v2134 = vmul.f32 %v2132, %v2132
        %v2135 = vmul.f32 %v2133, %v2133
        %v2136 = vsel %vm1326, %v2134, 0.0
        %2137 = vadd.xlane.f32.xlu0 %v2136
        %v2138 = vpop.xlane.xlu0 %2137
        %v2139 = vsel %vm1326, %v2135, 0.0
        %2140 = vadd.xlane.f32.xlu0 %v2139
        %v2141 = vpop.xlane.xlu0 %2140
        %v2142 = vmul.f32 %v2138, %v1333
        %v2143 = vmul.f32 %v2141, %v1333
        %v2144 = vadd.f32 %v2142, 1e-05
        %v2145 = vadd.f32 %v2143, 1e-05
        %v2146 = vrsqrt.pop %v2144
        %v2147 = vrsqrt.pop %v2145
        %v2148 = vmul.f32 %v2132, %v2146
        %v2149 = vmul.f32 %v2133, %v2147
        %v2151 = vlaneseq
        %v2152 = vshrl.u32 %v2151, 7
        %v2153 = vsub.s32 0, %v2152
        %v2154 = vrot.slane %v2122, %v2153
        %v2156 = vmul.f32 %v2148, %v2154
        %v2157 = vmul.f32 %v2149, %v2154
        %v2159 = vlaneseq
        %v2160 = vshrl.u32 %v2159, 7
        %v2161 = vsub.s32 0, %v2160
        %v2162 = vrot.slane %v2123, %v2161
        %v2164 = vadd.f32 %v2156, %v2162
        %v2165 = vadd.f32 %v2157, %v2162
        %v2166 = vadd.f32 %v1921, %v2164
        %v2167 = vadd.f32 %v1922, %v2165
        %v2168 = vpack.c.bf16 %v2167, %v2166
        %s2169 = scalar_lea.vmem %s11, 16
        %v2170 = vld [vmem:[%s2169] sm:$0xf]
        %v2171 = vld [vmem:[%s2169 + $0x4] sm:$0xf]
        %v2172 = vld [vmem:[%s2169 + $0x8] sm:$0xf]
        %v2173 = vld [vmem:[%s2169 + $0xc] sm:$0xf]
        %s2174 = scalar_lea.vmem %s13, 1
        %v2175 = vld [vmem:[%s2174] sm:$0x1]
        %v2177 = vlaneseq
        %v2178 = vshrl.u32 %v2177, 7
        %v2179 = vsub.s32 0, %v2178
        %v2180 = vrot.slane %v2175, %v2179
        %v2186 = vunpack.c.l.b16 %v2170
        %v2187 = vunpack.c.l.b16 %v2171
        %v2188 = vunpack.c.l.b16 %v2172
        %v2189 = vunpack.c.l.b16 %v2173
        %v2190 = vpack.c.b16 %v2187, %v2186
        %v2191 = vpack.c.b16 %v2189, %v2188
        %v2195 = vsel %vm1326, %v2168, 0
        %2197 = vmatprep.subr.bf16.mxu0 0
        %2198 = vmatpush1.bf16.msra.mxu0 0
        %2199 = vmatprep.subr.bf16.mxu0 0
        %2200 = vmatpush1.bf16.msra.mxu0 0
        %2201 = vmatprep.subr.bf16.mxu0 0
        %2202 = vmatpush1.bf16.msra.mxu0 0
        %2203 = vmatprep.subr.bf16.mxu0 0
        %2204 = vmatpush1.bf16.msra.mxu0 0
        %2205 = vmatprep.subr.bf16.mxu0 0
        %2206 = vmatpush1.bf16.msra.mxu0 0
        %2207 = vmatprep.subr.bf16.mxu0 0
        %2208 = vmatpush1.bf16.msra.mxu0 0
        %2209 = vmatprep.subr.bf16.mxu0 0
        %2210 = vmatpush1.bf16.msra.mxu0 %v2191
        %2211 = vmatprep.subr.bf16.mxu0 0
        %2212 = vmatpush1.bf16.msra.mxu0 %v2190
        %2213 = vmatprep.subr.bf16.mxu0 0
        %2214 = vmatpush2.bf16.msra.mxu0 0
        %2215 = vmatprep.subr.bf16.mxu0 0
        %2216 = vmatpush2.bf16.msra.mxu0 0
        %2217 = vmatprep.subr.bf16.mxu0 0
        %2218 = vmatpush2.bf16.msra.mxu0 0
        %2219 = vmatprep.subr.bf16.mxu0 0
        %2220 = vmatpush2.bf16.msra.mxu0 0
        %2221 = vmatprep.subr.bf16.mxu0 0
        %2222 = vmatpush2.bf16.msra.mxu0 0
        %2223 = vmatprep.subr.bf16.mxu0 0
        %2224 = vmatpush2.bf16.msra.mxu0 0
        %2225 = vmatprep.subr.bf16.mxu0 0
        %2226 = vmatpush2.bf16.msra.mxu0 0
        %2227 = vmatprep.subr.bf16.mxu0 0
        %2228 = vmatpush2.bf16.msra.mxu0 0
        %2229 = vmatprep.mubr.bf16.mxu0 0
        %2230 = vmatmul.mubr.bf16.gmra.mxu0 %v2195
        %v2231 = vpop.f32.mrf.mxu0
        %v2232 = vadd.f32 %v2180, %v2231
        %v2233 = vpop.f32.mrf.mxu0
        %v2234 = vpop.f32.mrf.mxu0
        %v2235 = vadd.f32 %v2180, %v2234
        %v2236 = vpop.f32.mrf.mxu0
        %2237 = vdwg.mxu0
        %2240 = vrot.lane.b32.xlu0 %v2232, 112
        %v2241 = vpop.permute.xlu0 %2240
        %2242 = vrot.lane.b32.xlu0 %v2235, 112
        %v2243 = vpop.permute.xlu0 %2242
        %v2246 = vmul.f32 %v2232, %v2232
        %v2247 = vmul.f32 %v2235, %v2235
        %v2248 = vmul.f32 %v2241, %v2241
        %v2249 = vmul.f32 %v2243, %v2243
        %v2250 = vsel %vm1450, %v2246, 0.0
        %2251 = vadd.xlane.f32.xlu0 %v2250
        %v2252 = vpop.xlane.xlu0 %2251
        %v2253 = vsel %vm1450, %v2247, 0.0
        %2254 = vadd.xlane.f32.xlu0 %v2253
        %v2255 = vpop.xlane.xlu0 %2254
        %v2256 = vsel %vm1450, %v2248, 0.0
        %2257 = vadd.xlane.f32.xlu0 %v2256
        %v2258 = vpop.xlane.xlu0 %2257
        %v2259 = vsel %vm1450, %v2249, 0.0
        %2260 = vadd.xlane.f32.xlu0 %v2259
        %v2261 = vpop.xlane.xlu0 %2260
        %v2262 = vmax.f32 %v2252, 1e-24
        %v2263 = vmax.f32 %v2255, 1e-24
        %v2264 = vmax.f32 %v2258, 1e-24
        %v2265 = vmax.f32 %v2261, 1e-24
        %v2266 = vrsqrt.pop %v2262
        %v2267 = vrsqrt.pop %v2263
        %v2268 = vrsqrt.pop %v2264
        %v2269 = vrsqrt.pop %v2265
        %v2270 = vmul.f32 %v2232, %v2266
        %v2271 = vmul.f32 %v2235, %v2267
        %v2272 = vmul.f32 %v2241, %v2268
        %v2273 = vmul.f32 %v2243, %v2269
        %2278 = vrot.lane.b32.xlu0 %v2246, 96
        %v2279 = vpop.permute.xlu0 %2278
        %2280 = vrot.lane.b32.xlu0 %v2247, 96
        %v2281 = vpop.permute.xlu0 %2280
        %2282 = vrot.lane.b32.xlu0 %v2248, 96
        %v2283 = vpop.permute.xlu0 %2282
        %2284 = vrot.lane.b32.xlu0 %v2249, 96
        %v2285 = vpop.permute.xlu0 %2284
        %v2290 = vsel %vm1450, %v2279, 0.0
        %2291 = vadd.xlane.f32.xlu0 %v2290
        %v2292 = vpop.xlane.xlu0 %2291
        %v2293 = vsel %vm1450, %v2281, 0.0
        %2294 = vadd.xlane.f32.xlu0 %v2293
        %v2295 = vpop.xlane.xlu0 %2294
        %v2296 = vsel %vm1450, %v2283, 0.0
        %2297 = vadd.xlane.f32.xlu0 %v2296
        %v2298 = vpop.xlane.xlu0 %2297
        %v2299 = vsel %vm1450, %v2285, 0.0
        %2300 = vadd.xlane.f32.xlu0 %v2299
        %v2301 = vpop.xlane.xlu0 %2300
        %v2302 = vmax.f32 %v2292, 1e-24
        %v2303 = vmax.f32 %v2295, 1e-24
        %v2304 = vmax.f32 %v2298, 1e-24
        %v2305 = vmax.f32 %v2301, 1e-24
        %v2306 = vrsqrt.pop %v2302
        %v2307 = vrsqrt.pop %v2303
        %v2308 = vrsqrt.pop %v2304
        %v2309 = vrsqrt.pop %v2305
        %v2310 = vmul.f32 %v2232, %v2306
        %v2311 = vmul.f32 %v2235, %v2307
        %v2312 = vmul.f32 %v2241, %v2308
        %v2313 = vmul.f32 %v2243, %v2309
        %v2314 = vpack.c.bf16 %v2271, %v2270
        %v2315 = vpack.c.bf16 %v2273, %v2272
        %v2316 = vpack.c.bf16 %v2311, %v2310
        %v2317 = vpack.c.bf16 %v2313, %v2312
        %2319 = vrot.lane.b32.xlu0 %v2316, 96
        %v2320 = vpop.permute.xlu0 %2319
        %v2322 = vsel %vm1450, %v2314, 0
        %v2325 = vsel %vm1450, %v2320, 0
        %2327 = vmatprep.subr.bf16.mxu0 0
        %2328 = vmatpush1.bf16.xpose.msra.mxu0 0
        %2329 = vmatprep.subr.bf16.mxu0 0
        %2330 = vmatpush1.bf16.xpose.msra.mxu0 0
        %2331 = vmatprep.subr.bf16.mxu0 0
        %2332 = vmatpush1.bf16.xpose.msra.mxu0 0
        %2333 = vmatprep.subr.bf16.mxu0 0
        %2334 = vmatpush1.bf16.xpose.msra.mxu0 0
        %2335 = vmatprep.subr.bf16.mxu0 0
        %2336 = vmatpush1.bf16.xpose.msra.mxu0 0
        %2337 = vmatprep.subr.bf16.mxu0 0
        %2338 = vmatpush1.bf16.xpose.msra.mxu0 0
        %2339 = vmatprep.subr.bf16.mxu0 0
        %2340 = vmatpush1.bf16.xpose.msra.mxu0 0
        %2341 = vmatprep.subr.bf16.mxu0 0
        %2342 = vmatpush1.bf16.xpose.msra.mxu0 %v2325
        %2343 = vmatprep.subr.bf16.mxu0 0
        %2344 = vmatpush2.bf16.xpose.msra.mxu0 0
        %2345 = vmatprep.subr.bf16.mxu0 0
        %2346 = vmatpush2.bf16.xpose.msra.mxu0 0
        %2347 = vmatprep.subr.bf16.mxu0 0
        %2348 = vmatpush2.bf16.xpose.msra.mxu0 0
        %2349 = vmatprep.subr.bf16.mxu0 0
        %2350 = vmatpush2.bf16.xpose.msra.mxu0 0
        %2351 = vmatprep.subr.bf16.mxu0 0
        %2352 = vmatpush2.bf16.xpose.msra.mxu0 0
        %2353 = vmatprep.subr.bf16.mxu0 0
        %2354 = vmatpush2.bf16.xpose.msra.mxu0 0
        %2355 = vmatprep.subr.bf16.mxu0 0
        %2356 = vmatpush2.bf16.xpose.msra.mxu0 0
        %2357 = vmatprep.subr.bf16.mxu0 0
        %2358 = vmatpush2.bf16.xpose.msra.mxu0 0
        %2359 = vmatprep.mubr.bf16.mxu0 0
        %2360 = vmatmul.mubr.bf16.gmra.mxu0 %v2322
        %v2361 = vpop.f32.mrf.mxu0
        %v2362 = vadd.f32 0.0, %v2361
        %v2363 = vpop.f32.mrf.mxu0
        %v2364 = vpop.f32.mrf.mxu0
        %v2365 = vadd.f32 0.0, %v2364
        %v2366 = vpop.f32.mrf.mxu0
        %2367 = vdwg.mxu0
        %2369 = vrot.lane.b32.xlu0 %v2317, 96
        %v2370 = vpop.permute.xlu0 %2369
        %v2372 = vsel %vm1450, %v2315, 0
        %v2375 = vsel %vm1450, %v2370, 0
        %2377 = vmatprep.subr.bf16.mxu0 0
        %2378 = vmatpush1.bf16.xpose.msra.mxu0 0
        %2379 = vmatprep.subr.bf16.mxu0 0
        %2380 = vmatpush1.bf16.xpose.msra.mxu0 0
        %2381 = vmatprep.subr.bf16.mxu0 0
        %2382 = vmatpush1.bf16.xpose.msra.mxu0 0
        %2383 = vmatprep.subr.bf16.mxu0 0
        %2384 = vmatpush1.bf16.xpose.msra.mxu0 0
        %2385 = vmatprep.subr.bf16.mxu0 0
        %2386 = vmatpush1.bf16.xpose.msra.mxu0 0
        %2387 = vmatprep.subr.bf16.mxu0 0
        %2388 = vmatpush1.bf16.xpose.msra.mxu0 0
        %2389 = vmatprep.subr.bf16.mxu0 0
        %2390 = vmatpush1.bf16.xpose.msra.mxu0 0
        %2391 = vmatprep.subr.bf16.mxu0 0
        %2392 = vmatpush1.bf16.xpose.msra.mxu0 %v2375
        %2393 = vmatprep.subr.bf16.mxu0 0
        %2394 = vmatpush2.bf16.xpose.msra.mxu0 0
        %2395 = vmatprep.subr.bf16.mxu0 0
        %2396 = vmatpush2.bf16.xpose.msra.mxu0 0
        %2397 = vmatprep.subr.bf16.mxu0 0
        %2398 = vmatpush2.bf16.xpose.msra.mxu0 0
        %2399 = vmatprep.subr.bf16.mxu0 0
        %2400 = vmatpush2.bf16.xpose.msra.mxu0 0
        %2401 = vmatprep.subr.bf16.mxu0 0
        %2402 = vmatpush2.bf16.xpose.msra.mxu0 0
        %2403 = vmatprep.subr.bf16.mxu0 0
        %2404 = vmatpush2.bf16.xpose.msra.mxu0 0
        %2405 = vmatprep.subr.bf16.mxu0 0
        %2406 = vmatpush2.bf16.xpose.msra.mxu0 0
        %2407 = vmatprep.subr.bf16.mxu0 0
        %2408 = vmatpush2.bf16.xpose.msra.mxu0 0
        %2409 = vmatprep.mubr.bf16.mxu0 0
        %2410 = vmatmul.mubr.bf16.gmra.mxu0 %v2372
        %v2411 = vpop.f32.mrf.mxu0
        %v2412 = vadd.f32 0.0, %v2411
        %v2413 = vpop.f32.mrf.mxu0
        %v2414 = vpop.f32.mrf.mxu0
        %v2415 = vadd.f32 0.0, %v2414
        %v2416 = vpop.f32.mrf.mxu0
        %2417 = vdwg.mxu0
        %s2418 = scalar_lea.vmem %s19, 32
        %v2419 = vld [vmem:[%s2418] sm:$0xff]
        %v2420 = vld [vmem:[%s2418 + $0x8] sm:$0xff]
        %v2421 = vld [vmem:[%s2418 + $0x10] sm:$0xff]
        %v2422 = vld [vmem:[%s2418 + $0x18] sm:$0xff]
        %2424 = vset.pattern.permute.xlu0 0
        %2425 = vperm.xlu0 %2424, %v2419
        %v2426 = vpop.permute.xlu0 %2425
        %2429 = vset.pattern.permute.xlu0 0
        %2430 = vperm.xlu0 %2429, %v2420
        %v2431 = vpop.permute.xlu0 %2430
        %2434 = vset.pattern.permute.xlu0 0
        %2435 = vperm.xlu0 %2434, %v2421
        %v2436 = vpop.permute.xlu0 %2435
        %2439 = vset.pattern.permute.xlu0 0
        %2440 = vperm.xlu0 %2439, %v2422
        %v2441 = vpop.permute.xlu0 %2440
        %v2443 = vmul.f32 %v2362, %v2426
        %v2444 = vmul.f32 %v2365, %v2431
        %v2445 = vmul.f32 %v2412, %v2436
        %v2446 = vmul.f32 %v2415, %v2441
        %s2447 = scalar_lea.vmem %s21, 32
        %v2448 = vld [vmem:[%s2447] sm:$0xff]
        %v2449 = vld [vmem:[%s2447 + $0x8] sm:$0xff]
        %v2450 = vld [vmem:[%s2447 + $0x10] sm:$0xff]
        %v2451 = vld [vmem:[%s2447 + $0x18] sm:$0xff]
        %v2452 = vadd.f32 %v2443, %v2448
        %v2453 = vadd.f32 %v2444, %v2449
        %v2454 = vadd.f32 %v2445, %v2450
        %v2455 = vadd.f32 %v2446, %v2451
        %v2456 = vsel %vm1450, %v2452, -inf
        %2457 = vmax.xlane.f32.xlu0 %v2456
        %v2458 = vpop.xlane.xlu0 %2457
        %v2459 = vsel %vm1450, %v2453, -inf
        %2460 = vmax.xlane.f32.xlu0 %v2459
        %v2461 = vpop.xlane.xlu0 %2460
        %v2462 = vsel %vm1450, %v2454, -inf
        %2463 = vmax.xlane.f32.xlu0 %v2462
        %v2464 = vpop.xlane.xlu0 %2463
        %v2465 = vsel %vm1450, %v2455, -inf
        %2466 = vmax.xlane.f32.xlu0 %v2465
        %v2467 = vpop.xlane.xlu0 %2466
        %v2468 = vsub.f32 %v2452, %v2458
        %v2469 = vsub.f32 %v2453, %v2461
        %v2470 = vsub.f32 %v2454, %v2464
        %v2471 = vsub.f32 %v2455, %v2467
        %v2472 = vmul.f32 %v2468, 1.442695
        %v2473 = vpow.pop %v2472
        %v2474 = vmul.f32 %v2469, 1.442695
        %v2475 = vpow.pop %v2474
        %v2476 = vmul.f32 %v2470, 1.442695
        %v2477 = vpow.pop %v2476
        %v2478 = vmul.f32 %v2471, 1.442695
        %v2479 = vpow.pop %v2478
        %v2480 = vsel %vm1450, %v2473, 0.0
        %2481 = vadd.xlane.f32.xlu0 %v2480
        %v2482 = vpop.xlane.xlu0 %2481
        %v2483 = vsel %vm1450, %v2475, 0.0
        %2484 = vadd.xlane.f32.xlu0 %v2483
        %v2485 = vpop.xlane.xlu0 %2484
        %v2486 = vsel %vm1450, %v2477, 0.0
        %2487 = vadd.xlane.f32.xlu0 %v2486
        %v2488 = vpop.xlane.xlu0 %2487
        %v2489 = vsel %vm1450, %v2479, 0.0
        %2490 = vadd.xlane.f32.xlu0 %v2489
        %v2491 = vpop.xlane.xlu0 %2490
        %v2492 = vrcp.pop %v2482
        %v2493 = vrcp.pop %v2485
        %v2494 = vrcp.pop %v2488
        %v2495 = vrcp.pop %v2491
        %v2496 = vmul.f32 %v2473, %v2492
        %v2497 = vmul.f32 %v2475, %v2493
        %v2498 = vmul.f32 %v2477, %v2494
        %v2499 = vmul.f32 %v2479, %v2495
        %v2500 = vpack.c.bf16 %v2497, %v2496
        %v2501 = vpack.c.bf16 %v2499, %v2498
        %v2502 = vpack.c.bf16 %v2235, %v2232
        %v2503 = vpack.c.bf16 %v2243, %v2241
        %2505 = vrot.lane.b32.xlu0 %v2502, 64
        %v2506 = vpop.permute.xlu0 %2505
        %v2509 = vsel %vm1450, %v2500, 0
        %2511 = vmatprep.subr.bf16.mxu0 0
        %2512 = vmatpush1.bf16.msra.mxu0 0
        %2513 = vmatprep.subr.bf16.mxu0 0
        %2514 = vmatpush1.bf16.msra.mxu0 0
        %2515 = vmatprep.subr.bf16.mxu0 0
        %2516 = vmatpush1.bf16.msra.mxu0 0
        %2517 = vmatprep.subr.bf16.mxu0 0
        %2518 = vmatpush1.bf16.msra.mxu0 0
        %2519 = vmatprep.subr.bf16.mxu0 0
        %2520 = vmatpush1.bf16.msra.mxu0 0
        %2521 = vmatprep.subr.bf16.mxu0 0
        %2522 = vmatpush1.bf16.msra.mxu0 0
        %2523 = vmatprep.subr.bf16.mxu0 0
        %2524 = vmatpush1.bf16.msra.mxu0 0
        %2525 = vmatprep.subr.bf16.mxu0 0
        %2526 = vmatpush1.bf16.msra.mxu0 %v2506
        %2527 = vmatprep.subr.bf16.mxu0 0
        %2528 = vmatpush2.bf16.msra.mxu0 0
        %2529 = vmatprep.subr.bf16.mxu0 0
        %2530 = vmatpush2.bf16.msra.mxu0 0
        %2531 = vmatprep.subr.bf16.mxu0 0
        %2532 = vmatpush2.bf16.msra.mxu0 0
        %2533 = vmatprep.subr.bf16.mxu0 0
        %2534 = vmatpush2.bf16.msra.mxu0 0
        %2535 = vmatprep.subr.bf16.mxu0 0
        %2536 = vmatpush2.bf16.msra.mxu0 0
        %2537 = vmatprep.subr.bf16.mxu0 0
        %2538 = vmatpush2.bf16.msra.mxu0 0
        %2539 = vmatprep.subr.bf16.mxu0 0
        %2540 = vmatpush2.bf16.msra.mxu0 0
        %2541 = vmatprep.subr.bf16.mxu0 0
        %2542 = vmatpush2.bf16.msra.mxu0 0
        %2543 = vmatprep.mubr.bf16.mxu0 0
        %2544 = vmatmul.mubr.bf16.gmra.mxu0 %v2509
        %v2545 = vpop.f32.mrf.mxu0
        %v2546 = vadd.f32 0.0, %v2545
        %v2547 = vpop.f32.mrf.mxu0
        %v2548 = vpop.f32.mrf.mxu0
        %v2549 = vadd.f32 0.0, %v2548
        %v2550 = vpop.f32.mrf.mxu0
        %2551 = vdwg.mxu0
        %2553 = vrot.lane.b32.xlu0 %v2503, 64
        %v2554 = vpop.permute.xlu0 %2553
        %v2557 = vsel %vm1450, %v2501, 0
        %2559 = vmatprep.subr.bf16.mxu0 0
        %2560 = vmatpush1.bf16.msra.mxu0 0
        %2561 = vmatprep.subr.bf16.mxu0 0
        %2562 = vmatpush1.bf16.msra.mxu0 0
        %2563 = vmatprep.subr.bf16.mxu0 0
        %2564 = vmatpush1.bf16.msra.mxu0 0
        %2565 = vmatprep.subr.bf16.mxu0 0
        %2566 = vmatpush1.bf16.msra.mxu0 0
        %2567 = vmatprep.subr.bf16.mxu0 0
        %2568 = vmatpush1.bf16.msra.mxu0 0
        %2569 = vmatprep.subr.bf16.mxu0 0
        %2570 = vmatpush1.bf16.msra.mxu0 0
        %2571 = vmatprep.subr.bf16.mxu0 0
        %2572 = vmatpush1.bf16.msra.mxu0 0
        %2573 = vmatprep.subr.bf16.mxu0 0
        %2574 = vmatpush1.bf16.msra.mxu0 %v2554
        %2575 = vmatprep.subr.bf16.mxu0 0
        %2576 = vmatpush2.bf16.msra.mxu0 0
        %2577 = vmatprep.subr.bf16.mxu0 0
        %2578 = vmatpush2.bf16.msra.mxu0 0
        %2579 = vmatprep.subr.bf16.mxu0 0
        %2580 = vmatpush2.bf16.msra.mxu0 0
        %2581 = vmatprep.subr.bf16.mxu0 0
        %2582 = vmatpush2.bf16.msra.mxu0 0
        %2583 = vmatprep.subr.bf16.mxu0 0
        %2584 = vmatpush2.bf16.msra.mxu0 0
        %2585 = vmatprep.subr.bf16.mxu0 0
        %2586 = vmatpush2.bf16.msra.mxu0 0
        %2587 = vmatprep.subr.bf16.mxu0 0
        %2588 = vmatpush2.bf16.msra.mxu0 0
        %2589 = vmatprep.subr.bf16.mxu0 0
        %2590 = vmatpush2.bf16.msra.mxu0 0
        %2591 = vmatprep.mubr.bf16.mxu0 0
        %2592 = vmatmul.mubr.bf16.gmra.mxu0 %v2557
        %v2593 = vpop.f32.mrf.mxu0
        %v2594 = vadd.f32 0.0, %v2593
        %v2595 = vpop.f32.mrf.mxu0
        %v2596 = vpop.f32.mrf.mxu0
        %v2597 = vadd.f32 0.0, %v2596
        %v2598 = vpop.f32.mrf.mxu0
        %2599 = vdwg.mxu0
        %2602 = vrot.lane.b32.xlu0 %v2594, 16
        %v2603 = vpop.permute.xlu0 %2602
        %2604 = vrot.lane.b32.xlu0 %v2597, 16
        %v2605 = vpop.permute.xlu0 %2604
        %v2608 = vsel %vm1450, %v2546, %v2603
        %v2609 = vsel %vm1450, %v2549, %v2605
        %v2610 = vpack.c.bf16 %v2609, %v2608
        %s2611 = scalar_lea.vmem %s15, 16
        %v2612 = vld [vmem:[%s2611] sm:$0xf]
        %v2613 = vld [vmem:[%s2611 + $0x4] sm:$0xf]
        %v2614 = vld [vmem:[%s2611 + $0x8] sm:$0xf]
        %v2615 = vld [vmem:[%s2611 + $0xc] sm:$0xf]
        %s2616 = scalar_lea.vmem %s17, 1
        %v2617 = vld [vmem:[%s2616] sm:$0x1]
        %v2619 = vlaneseq
        %v2620 = vshrl.u32 %v2619, 7
        %v2621 = vsub.s32 0, %v2620
        %v2622 = vrot.slane %v2617, %v2621
        %v2628 = vunpack.c.l.b16 %v2612
        %v2629 = vunpack.c.l.b16 %v2613
        %v2630 = vunpack.c.l.b16 %v2614
        %v2631 = vunpack.c.l.b16 %v2615
        %v2632 = vpack.c.b16 %v2629, %v2628
        %v2633 = vpack.c.b16 %v2631, %v2630
        %v2637 = vsel %vm1326, %v2610, 0
        %2639 = vmatprep.subr.bf16.mxu0 0
        %2640 = vmatpush1.bf16.msra.mxu0 0
        %2641 = vmatprep.subr.bf16.mxu0 0
        %2642 = vmatpush1.bf16.msra.mxu0 0
        %2643 = vmatprep.subr.bf16.mxu0 0
        %2644 = vmatpush1.bf16.msra.mxu0 0
        %2645 = vmatprep.subr.bf16.mxu0 0
        %2646 = vmatpush1.bf16.msra.mxu0 0
        %2647 = vmatprep.subr.bf16.mxu0 0
        %2648 = vmatpush1.bf16.msra.mxu0 0
        %2649 = vmatprep.subr.bf16.mxu0 0
        %2650 = vmatpush1.bf16.msra.mxu0 0
        %2651 = vmatprep.subr.bf16.mxu0 0
        %2652 = vmatpush1.bf16.msra.mxu0 %v2633
        %2653 = vmatprep.subr.bf16.mxu0 0
        %2654 = vmatpush1.bf16.msra.mxu0 %v2632
        %2655 = vmatprep.subr.bf16.mxu0 0
        %2656 = vmatpush2.bf16.msra.mxu0 0
        %2657 = vmatprep.subr.bf16.mxu0 0
        %2658 = vmatpush2.bf16.msra.mxu0 0
        %2659 = vmatprep.subr.bf16.mxu0 0
        %2660 = vmatpush2.bf16.msra.mxu0 0
        %2661 = vmatprep.subr.bf16.mxu0 0
        %2662 = vmatpush2.bf16.msra.mxu0 0
        %2663 = vmatprep.subr.bf16.mxu0 0
        %2664 = vmatpush2.bf16.msra.mxu0 0
        %2665 = vmatprep.subr.bf16.mxu0 0
        %2666 = vmatpush2.bf16.msra.mxu0 0
        %2667 = vmatprep.subr.bf16.mxu0 0
        %2668 = vmatpush2.bf16.msra.mxu0 0
        %2669 = vmatprep.subr.bf16.mxu0 0
        %2670 = vmatpush2.bf16.msra.mxu0 0
        %2671 = vmatprep.mubr.bf16.mxu0 0
        %2672 = vmatmul.mubr.bf16.gmra.mxu0 %v2637
        %v2673 = vpop.f32.mrf.mxu0
        %v2674 = vadd.f32 %v2622, %v2673
        %v2675 = vpop.f32.mrf.mxu0
        %v2676 = vpop.f32.mrf.mxu0
        %v2677 = vadd.f32 %v2622, %v2676
        %v2678 = vpop.f32.mrf.mxu0
        %2679 = vdwg.mxu0
        %s2680 = scalar_lea.vmem %s23, 1
        %v2681 = vld [vmem:[%s2680] sm:$0x1]
        %s2682 = scalar_lea.vmem %s25, 1
        %v2683 = vld [vmem:[%s2682] sm:$0x1]
        %v2684 = vsel %vm1326, %v2674, 0.0
        %2685 = vadd.xlane.f32.xlu0 %v2684
        %v2686 = vpop.xlane.xlu0 %2685
        %v2687 = vsel %vm1326, %v2677, 0.0
        %2688 = vadd.xlane.f32.xlu0 %v2687
        %v2689 = vpop.xlane.xlu0 %2688
        %v2690 = vmul.f32 %v2686, %v1333
        %v2691 = vmul.f32 %v2689, %v1333
        %v2692 = vsub.f32 %v2674, %v2690
        %v2693 = vsub.f32 %v2677, %v2691
        %v2694 = vmul.f32 %v2692, %v2692
        %v2695 = vmul.f32 %v2693, %v2693
        %v2696 = vsel %vm1326, %v2694, 0.0
        %2697 = vadd.xlane.f32.xlu0 %v2696
        %v2698 = vpop.xlane.xlu0 %2697
        %v2699 = vsel %vm1326, %v2695, 0.0
        %2700 = vadd.xlane.f32.xlu0 %v2699
        %v2701 = vpop.xlane.xlu0 %2700
        %v2702 = vmul.f32 %v2698, %v1333
        %v2703 = vmul.f32 %v2701, %v1333
        %v2704 = vadd.f32 %v2702, 1e-05
        %v2705 = vadd.f32 %v2703, 1e-05
        %v2706 = vrsqrt.pop %v2704
        %v2707 = vrsqrt.pop %v2705
        %v2708 = vmul.f32 %v2692, %v2706
        %v2709 = vmul.f32 %v2693, %v2707
        %v2711 = vlaneseq
        %v2712 = vshrl.u32 %v2711, 7
        %v2713 = vsub.s32 0, %v2712
        %v2714 = vrot.slane %v2681, %v2713
        %v2716 = vmul.f32 %v2708, %v2714
        %v2717 = vmul.f32 %v2709, %v2714
        %v2719 = vlaneseq
        %v2720 = vshrl.u32 %v2719, 7
        %v2721 = vsub.s32 0, %v2720
        %v2722 = vrot.slane %v2683, %v2721
        %v2724 = vadd.f32 %v2716, %v2722
        %v2725 = vadd.f32 %v2717, %v2722
        %v2726 = vadd.f32 %v2166, %v2724
        %v2727 = vadd.f32 %v2167, %v2725
        %v2728 = vpack.c.bf16 %v2727, %v2726
        %s2729 = scalar_lea.vmem %s27, 16
        %v2730 = vld [vmem:[%s2729] sm:$0xf]
        %v2731 = vld [vmem:[%s2729 + $0x4] sm:$0xf]
        %v2732 = vld [vmem:[%s2729 + $0x8] sm:$0xf]
        %v2733 = vld [vmem:[%s2729 + $0xc] sm:$0xf]
        %s2734 = scalar_lea.vmem %s29, 1
        %v2735 = vld [vmem:[%s2734] sm:$0x1]
        %v2737 = vlaneseq
        %v2738 = vshrl.u32 %v2737, 7
        %v2739 = vsub.s32 0, %v2738
        %v2740 = vrot.slane %v2735, %v2739
        %v2746 = vunpack.c.l.b16 %v2730
        %v2747 = vunpack.c.l.b16 %v2731
        %v2748 = vunpack.c.l.b16 %v2732
        %v2749 = vunpack.c.l.b16 %v2733
        %v2750 = vpack.c.b16 %v2747, %v2746
        %v2751 = vpack.c.b16 %v2749, %v2748
        %v2755 = vsel %vm1326, %v2728, 0
        %2757 = vmatprep.subr.bf16.mxu0 0
        %2758 = vmatpush1.bf16.msra.mxu0 0
        %2759 = vmatprep.subr.bf16.mxu0 0
        %2760 = vmatpush1.bf16.msra.mxu0 0
        %2761 = vmatprep.subr.bf16.mxu0 0
        %2762 = vmatpush1.bf16.msra.mxu0 0
        %2763 = vmatprep.subr.bf16.mxu0 0
        %2764 = vmatpush1.bf16.msra.mxu0 0
        %2765 = vmatprep.subr.bf16.mxu0 0
        %2766 = vmatpush1.bf16.msra.mxu0 0
        %2767 = vmatprep.subr.bf16.mxu0 0
        %2768 = vmatpush1.bf16.msra.mxu0 0
        %2769 = vmatprep.subr.bf16.mxu0 0
        %2770 = vmatpush1.bf16.msra.mxu0 %v2751
        %2771 = vmatprep.subr.bf16.mxu0 0
        %2772 = vmatpush1.bf16.msra.mxu0 %v2750
        %2773 = vmatprep.subr.bf16.mxu0 0
        %2774 = vmatpush2.bf16.msra.mxu0 0
        %2775 = vmatprep.subr.bf16.mxu0 0
        %2776 = vmatpush2.bf16.msra.mxu0 0
        %2777 = vmatprep.subr.bf16.mxu0 0
        %2778 = vmatpush2.bf16.msra.mxu0 0
        %2779 = vmatprep.subr.bf16.mxu0 0
        %2780 = vmatpush2.bf16.msra.mxu0 0
        %2781 = vmatprep.subr.bf16.mxu0 0
        %2782 = vmatpush2.bf16.msra.mxu0 0
        %2783 = vmatprep.subr.bf16.mxu0 0
        %2784 = vmatpush2.bf16.msra.mxu0 0
        %2785 = vmatprep.subr.bf16.mxu0 0
        %2786 = vmatpush2.bf16.msra.mxu0 0
        %2787 = vmatprep.subr.bf16.mxu0 0
        %2788 = vmatpush2.bf16.msra.mxu0 0
        %2789 = vmatprep.mubr.bf16.mxu0 0
        %2790 = vmatmul.mubr.bf16.gmra.mxu0 %v2755
        %v2791 = vpop.f32.mrf.mxu0
        %v2792 = vadd.f32 %v2740, %v2791
        %v2793 = vpop.f32.mrf.mxu0
        %v2794 = vpop.f32.mrf.mxu0
        %v2795 = vadd.f32 %v2740, %v2794
        %v2796 = vpop.f32.mrf.mxu0
        %2797 = vdwg.mxu0
        %v2798 = vmul.f32 %v2792, %v2792
        %v2799 = vmul.f32 %v2795, %v2795
        %v2800 = vmul.f32 %v2792, %v2798
        %v2801 = vmul.f32 %v2795, %v2799
        %v2802 = vmul.f32 %v2800, 0.044715
        %v2803 = vmul.f32 %v2801, 0.044715
        %v2804 = vadd.f32 %v2792, %v2802
        %v2805 = vadd.f32 %v2795, %v2803
        %v2806 = vmul.f32 %v2804, 0.7978846
        %v2807 = vmul.f32 %v2805, 0.7978846
        %v2808 = vtanh.pop %v2806
        %v2809 = vtanh.pop %v2807
        %v2810 = vadd.f32 %v2808, 1.0
        %v2811 = vadd.f32 %v2809, 1.0
        %v2812 = vmul.f32 %v2810, 0.5
        %v2813 = vmul.f32 %v2811, 0.5
        %v2814 = vmul.f32 %v2792, %v2812
        %v2815 = vmul.f32 %v2795, %v2813
        %v2816 = vpack.c.bf16 %v2815, %v2814
        %s2817 = scalar_lea.vmem %s31, 64
        %v2818 = vld [vmem:[%s2817] sm:$0xf]
        %v2819 = vld [vmem:[%s2817 + $0x4] sm:$0xf]
        %v2820 = vld [vmem:[%s2817 + $0x8] sm:$0xf]
        %v2821 = vld [vmem:[%s2817 + $0xc] sm:$0xf]
        %v2822 = vld [vmem:[%s2817 + $0x10] sm:$0xf]
        %v2823 = vld [vmem:[%s2817 + $0x14] sm:$0xf]
        %v2824 = vld [vmem:[%s2817 + $0x18] sm:$0xf]
        %v2825 = vld [vmem:[%s2817 + $0x1c] sm:$0xf]
        %v2826 = vld [vmem:[%s2817 + $0x20] sm:$0xf]
        %v2827 = vld [vmem:[%s2817 + $0x24] sm:$0xf]
        %v2828 = vld [vmem:[%s2817 + $0x28] sm:$0xf]
        %v2829 = vld [vmem:[%s2817 + $0x2c] sm:$0xf]
        %v2830 = vld [vmem:[%s2817 + $0x30] sm:$0xf]
        %v2831 = vld [vmem:[%s2817 + $0x34] sm:$0xf]
        %v2832 = vld [vmem:[%s2817 + $0x38] sm:$0xf]
        %v2833 = vld [vmem:[%s2817 + $0x3c] sm:$0xf]
        %s2834 = scalar_lea.vmem %s33, 1
        %v2835 = vld [vmem:[%s2834] sm:$0x1]
        %v2837 = vlaneseq
        %v2838 = vshrl.u32 %v2837, 7
        %v2839 = vsub.s32 0, %v2838
        %v2840 = vrot.slane %v2835, %v2839
        %v2858 = vunpack.c.l.b16 %v2818
        %v2859 = vunpack.c.l.b16 %v2819
        %v2860 = vunpack.c.l.b16 %v2820
        %v2861 = vunpack.c.l.b16 %v2821
        %v2862 = vunpack.c.l.b16 %v2822
        %v2863 = vunpack.c.l.b16 %v2823
        %v2864 = vunpack.c.l.b16 %v2824
        %v2865 = vunpack.c.l.b16 %v2825
        %v2866 = vunpack.c.l.b16 %v2826
        %v2867 = vunpack.c.l.b16 %v2827
        %v2868 = vunpack.c.l.b16 %v2828
        %v2869 = vunpack.c.l.b16 %v2829
        %v2870 = vunpack.c.l.b16 %v2830
        %v2871 = vunpack.c.l.b16 %v2831
        %v2872 = vunpack.c.l.b16 %v2832
        %v2873 = vunpack.c.l.b16 %v2833
        %v2874 = vpack.c.b16 %v2859, %v2858
        %v2875 = vpack.c.b16 %v2861, %v2860
        %v2876 = vpack.c.b16 %v2863, %v2862
        %v2877 = vpack.c.b16 %v2865, %v2864
        %v2878 = vpack.c.b16 %v2867, %v2866
        %v2879 = vpack.c.b16 %v2869, %v2868
        %v2880 = vpack.c.b16 %v2871, %v2870
        %v2881 = vpack.c.b16 %v2873, %v2872
        %2890 = vmatprep.subr.bf16.mxu0 0
        %2891 = vmatpush1.bf16.msra.mxu0 %v2881
        %2892 = vmatprep.subr.bf16.mxu0 0
        %2893 = vmatpush1.bf16.msra.mxu0 %v2880
        %2894 = vmatprep.subr.bf16.mxu0 0
        %2895 = vmatpush1.bf16.msra.mxu0 %v2879
        %2896 = vmatprep.subr.bf16.mxu0 0
        %2897 = vmatpush1.bf16.msra.mxu0 %v2878
        %2898 = vmatprep.subr.bf16.mxu0 0
        %2899 = vmatpush1.bf16.msra.mxu0 %v2877
        %2900 = vmatprep.subr.bf16.mxu0 0
        %2901 = vmatpush1.bf16.msra.mxu0 %v2876
        %2902 = vmatprep.subr.bf16.mxu0 0
        %2903 = vmatpush1.bf16.msra.mxu0 %v2875
        %2904 = vmatprep.subr.bf16.mxu0 0
        %2905 = vmatpush1.bf16.msra.mxu0 %v2874
        %2906 = vmatprep.subr.bf16.mxu0 0
        %2907 = vmatpush2.bf16.msra.mxu0 0
        %2908 = vmatprep.subr.bf16.mxu0 0
        %2909 = vmatpush2.bf16.msra.mxu0 0
        %2910 = vmatprep.subr.bf16.mxu0 0
        %2911 = vmatpush2.bf16.msra.mxu0 0
        %2912 = vmatprep.subr.bf16.mxu0 0
        %2913 = vmatpush2.bf16.msra.mxu0 0
        %2914 = vmatprep.subr.bf16.mxu0 0
        %2915 = vmatpush2.bf16.msra.mxu0 0
        %2916 = vmatprep.subr.bf16.mxu0 0
        %2917 = vmatpush2.bf16.msra.mxu0 0
        %2918 = vmatprep.subr.bf16.mxu0 0
        %2919 = vmatpush2.bf16.msra.mxu0 0
        %2920 = vmatprep.subr.bf16.mxu0 0
        %2921 = vmatpush2.bf16.msra.mxu0 0
        %2922 = vmatprep.mubr.bf16.mxu0 0
        %2923 = vmatmul.mubr.bf16.gmra.mxu0 %v2816
        %v2924 = vpop.f32.mrf.mxu0
        %v2925 = vadd.f32 %v2840, %v2924
        %v2926 = vpop.f32.mrf.mxu0
        %v2927 = vpop.f32.mrf.mxu0
        %v2928 = vadd.f32 %v2840, %v2927
        %v2929 = vpop.f32.mrf.mxu0
        %2930 = vdwg.mxu0
        %s2931 = scalar_lea.vmem %s35, 1
        %v2932 = vld [vmem:[%s2931] sm:$0x1]
        %s2933 = scalar_lea.vmem %s37, 1
        %v2934 = vld [vmem:[%s2933] sm:$0x1]
        %v2935 = vsel %vm1326, %v2925, 0.0
        %2936 = vadd.xlane.f32.xlu0 %v2935
        %v2937 = vpop.xlane.xlu0 %2936
        %v2938 = vsel %vm1326, %v2928, 0.0
        %2939 = vadd.xlane.f32.xlu0 %v2938
        %v2940 = vpop.xlane.xlu0 %2939
        %v2941 = vmul.f32 %v2937, %v1333
        %v2942 = vmul.f32 %v2940, %v1333
        %v2943 = vsub.f32 %v2925, %v2941
        %v2944 = vsub.f32 %v2928, %v2942
        %v2945 = vmul.f32 %v2943, %v2943
        %v2946 = vmul.f32 %v2944, %v2944
        %v2947 = vsel %vm1326, %v2945, 0.0
        %2948 = vadd.xlane.f32.xlu0 %v2947
        %v2949 = vpop.xlane.xlu0 %2948
        %v2950 = vsel %vm1326, %v2946, 0.0
        %2951 = vadd.xlane.f32.xlu0 %v2950
        %v2952 = vpop.xlane.xlu0 %2951
        %v2953 = vmul.f32 %v2949, %v1333
        %v2954 = vmul.f32 %v2952, %v1333
        %v2955 = vadd.f32 %v2953, 1e-05
        %v2956 = vadd.f32 %v2954, 1e-05
        %v2957 = vrsqrt.pop %v2955
        %v2958 = vrsqrt.pop %v2956
        %v2959 = vmul.f32 %v2943, %v2957
        %v2960 = vmul.f32 %v2944, %v2958
        %v2962 = vlaneseq
        %v2963 = vshrl.u32 %v2962, 7
        %v2964 = vsub.s32 0, %v2963
        %v2965 = vrot.slane %v2932, %v2964
        %v2967 = vmul.f32 %v2959, %v2965
        %v2968 = vmul.f32 %v2960, %v2965
        %v2970 = vlaneseq
        %v2971 = vshrl.u32 %v2970, 7
        %v2972 = vsub.s32 0, %v2971
        %v2973 = vrot.slane %v2934, %v2972
        %v2975 = vadd.f32 %v2967, %v2973
        %v2976 = vadd.f32 %v2968, %v2973
        %v2977 = vadd.f32 %v2726, %v2975
        %v2978 = vadd.f32 %v2727, %v2976
        %v2979 = vpack.c.bf16 %v2978, %v2977
        %v2980 = vld [vmem:[%s39] sm:$0x3]
        %v2982 = vsel %vm1450, %v2980, 0
        %2984 = vmatprep.subr.bf16.mxu0 0
        %2985 = vmatpush1.bf16.msra.mxu0 0
        %2986 = vmatprep.subr.bf16.mxu0 0
        %2987 = vmatpush1.bf16.msra.mxu0 0
        %2988 = vmatprep.subr.bf16.mxu0 0
        %2989 = vmatpush1.bf16.msra.mxu0 0
        %2990 = vmatprep.subr.bf16.mxu0 0
        %2991 = vmatpush1.bf16.msra.mxu0 0
        %2992 = vmatprep.subr.bf16.mxu0 0
        %2993 = vmatpush1.bf16.msra.mxu0 0
        %2994 = vmatprep.subr.bf16.mxu0 0
        %2995 = vmatpush1.bf16.msra.mxu0 0
        %2996 = vmatprep.subr.bf16.mxu0 0
        %2997 = vmatpush1.bf16.msra.mxu0 0
        %2998 = vmatprep.subr.bf16.mxu0 0
        %2999 = vmatpush1.bf16.msra.mxu0 %v2979
        %3000 = vmatprep.subr.bf16.mxu0 0
        %3001 = vmatpush2.bf16.msra.mxu0 0
        %3002 = vmatprep.subr.bf16.mxu0 0
        %3003 = vmatpush2.bf16.msra.mxu0 0
        %3004 = vmatprep.subr.bf16.mxu0 0
        %3005 = vmatpush2.bf16.msra.mxu0 0
        %3006 = vmatprep.subr.bf16.mxu0 0
        %3007 = vmatpush2.bf16.msra.mxu0 0
        %3008 = vmatprep.subr.bf16.mxu0 0
        %3009 = vmatpush2.bf16.msra.mxu0 0
        %3010 = vmatprep.subr.bf16.mxu0 0
        %3011 = vmatpush2.bf16.msra.mxu0 0
        %3012 = vmatprep.subr.bf16.mxu0 0
        %3013 = vmatpush2.bf16.msra.mxu0 0
        %3014 = vmatprep.subr.bf16.mxu0 0
        %3015 = vmatpush2.bf16.msra.mxu0 0
        %3016 = vmatprep.mubr.bf16.mxu0 0
        %3017 = vmatmul.mubr.bf16.gmra.mxu0 %v2982
        %v3018 = vpop.f32.mrf.mxu0
        %v3019 = vadd.f32 0.0, %v3018
        %v3020 = vpop.f32.mrf.mxu0
        %v3021 = vpop.f32.mrf.mxu0
        %v3022 = vpop.f32.mrf.mxu0
        %3023 = vdwg.mxu0
        %s3024 = scalar_lea.vmem %s39, 2
        %v3025 = vld [vmem:[%s3024] sm:$0x3]
        %v3027 = vsel %vm1450, %v3025, 0
        %3029 = vmatprep.subr.bf16.mxu0 0
        %3030 = vmatpush1.bf16.msra.mxu0 0
        %3031 = vmatprep.subr.bf16.mxu0 0
        %3032 = vmatpush1.bf16.msra.mxu0 0
        %3033 = vmatprep.subr.bf16.mxu0 0
        %3034 = vmatpush1.bf16.msra.mxu0 0
        %3035 = vmatprep.subr.bf16.mxu0 0
        %3036 = vmatpush1.bf16.msra.mxu0 0
        %3037 = vmatprep.subr.bf16.mxu0 0
        %3038 = vmatpush1.bf16.msra.mxu0 0
        %3039 = vmatprep.subr.bf16.mxu0 0
        %3040 = vmatpush1.bf16.msra.mxu0 0
        %3041 = vmatprep.subr.bf16.mxu0 0
        %3042 = vmatpush1.bf16.msra.mxu0 0
        %3043 = vmatprep.subr.bf16.mxu0 0
        %3044 = vmatpush1.bf16.msra.mxu0 %v2979
        %3045 = vmatprep.subr.bf16.mxu0 0
        %3046 = vmatpush2.bf16.msra.mxu0 0
        %3047 = vmatprep.subr.bf16.mxu0 0
        %3048 = vmatpush2.bf16.msra.mxu0 0
        %3049 = vmatprep.subr.bf16.mxu0 0
        %3050 = vmatpush2.bf16.msra.mxu0 0
        %3051 = vmatprep.subr.bf16.mxu0 0
        %3052 = vmatpush2.bf16.msra.mxu0 0
        %3053 = vmatprep.subr.bf16.mxu0 0
        %3054 = vmatpush2.bf16.msra.mxu0 0
        %3055 = vmatprep.subr.bf16.mxu0 0
        %3056 = vmatpush2.bf16.msra.mxu0 0
        %3057 = vmatprep.subr.bf16.mxu0 0
        %3058 = vmatpush2.bf16.msra.mxu0 0
        %3059 = vmatprep.subr.bf16.mxu0 0
        %3060 = vmatpush2.bf16.msra.mxu0 0
        %3061 = vmatprep.mubr.bf16.mxu0 0
        %3062 = vmatmul.mubr.bf16.gmra.mxu0 %v3027
        %v3063 = vpop.f32.mrf.mxu0
        %v3064 = vadd.f32 0.0, %v3063
        %v3065 = vpop.f32.mrf.mxu0
        %v3066 = vpop.f32.mrf.mxu0
        %v3067 = vpop.f32.mrf.mxu0
        %3068 = vdwg.mxu0
        %s3069 = scalar_lea.vmem %s39, 4
        %v3070 = vld [vmem:[%s3069] sm:$0x3]
        %v3072 = vsel %vm1450, %v3070, 0
        %3074 = vmatprep.subr.bf16.mxu0 0
        %3075 = vmatpush1.bf16.msra.mxu0 0
        %3076 = vmatprep.subr.bf16.mxu0 0
        %3077 = vmatpush1.bf16.msra.mxu0 0
        %3078 = vmatprep.subr.bf16.mxu0 0
        %3079 = vmatpush1.bf16.msra.mxu0 0
        %3080 = vmatprep.subr.bf16.mxu0 0
        %3081 = vmatpush1.bf16.msra.mxu0 0
        %3082 = vmatprep.subr.bf16.mxu0 0
        %3083 = vmatpush1.bf16.msra.mxu0 0
        %3084 = vmatprep.subr.bf16.mxu0 0
        %3085 = vmatpush1.bf16.msra.mxu0 0
        %3086 = vmatprep.subr.bf16.mxu0 0
        %3087 = vmatpush1.bf16.msra.mxu0 0
        %3088 = vmatprep.subr.bf16.mxu0 0
        %3089 = vmatpush1.bf16.msra.mxu0 %v2979
        %3090 = vmatprep.subr.bf16.mxu0 0
        %3091 = vmatpush2.bf16.msra.mxu0 0
        %3092 = vmatprep.subr.bf16.mxu0 0
        %3093 = vmatpush2.bf16.msra.mxu0 0
        %3094 = vmatprep.subr.bf16.mxu0 0
        %3095 = vmatpush2.bf16.msra.mxu0 0
        %3096 = vmatprep.subr.bf16.mxu0 0
        %3097 = vmatpush2.bf16.msra.mxu0 0
        %3098 = vmatprep.subr.bf16.mxu0 0
        %3099 = vmatpush2.bf16.msra.mxu0 0
        %3100 = vmatprep.subr.bf16.mxu0 0
        %3101 = vmatpush2.bf16.msra.mxu0 0
        %3102 = vmatprep.subr.bf16.mxu0 0
        %3103 = vmatpush2.bf16.msra.mxu0 0
        %3104 = vmatprep.subr.bf16.mxu0 0
        %3105 = vmatpush2.bf16.msra.mxu0 0
        %3106 = vmatprep.mubr.bf16.mxu0 0
        %3107 = vmatmul.mubr.bf16.gmra.mxu0 %v3072
        %v3108 = vpop.f32.mrf.mxu0
        %v3109 = vadd.f32 0.0, %v3108
        %v3110 = vpop.f32.mrf.mxu0
        %v3111 = vpop.f32.mrf.mxu0
        %v3112 = vpop.f32.mrf.mxu0
        %3113 = vdwg.mxu0
        %s3114 = scalar_lea.vmem %s39, 6
        %v3115 = vld [vmem:[%s3114] sm:$0x3]
        %v3117 = vsel %vm1450, %v3115, 0
        %3119 = vmatprep.subr.bf16.mxu0 0
        %3120 = vmatpush1.bf16.msra.mxu0 0
        %3121 = vmatprep.subr.bf16.mxu0 0
        %3122 = vmatpush1.bf16.msra.mxu0 0
        %3123 = vmatprep.subr.bf16.mxu0 0
        %3124 = vmatpush1.bf16.msra.mxu0 0
        %3125 = vmatprep.subr.bf16.mxu0 0
        %3126 = vmatpush1.bf16.msra.mxu0 0
        %3127 = vmatprep.subr.bf16.mxu0 0
        %3128 = vmatpush1.bf16.msra.mxu0 0
        %3129 = vmatprep.subr.bf16.mxu0 0
        %3130 = vmatpush1.bf16.msra.mxu0 0
        %3131 = vmatprep.subr.bf16.mxu0 0
        %3132 = vmatpush1.bf16.msra.mxu0 0
        %3133 = vmatprep.subr.bf16.mxu0 0
        %3134 = vmatpush1.bf16.msra.mxu0 %v2979
        %3135 = vmatprep.subr.bf16.mxu0 0
        %3136 = vmatpush2.bf16.msra.mxu0 0
        %3137 = vmatprep.subr.bf16.mxu0 0
        %3138 = vmatpush2.bf16.msra.mxu0 0
        %3139 = vmatprep.subr.bf16.mxu0 0
        %3140 = vmatpush2.bf16.msra.mxu0 0
        %3141 = vmatprep.subr.bf16.mxu0 0
        %3142 = vmatpush2.bf16.msra.mxu0 0
        %3143 = vmatprep.subr.bf16.mxu0 0
        %3144 = vmatpush2.bf16.msra.mxu0 0
        %3145 = vmatprep.subr.bf16.mxu0 0
        %3146 = vmatpush2.bf16.msra.mxu0 0
        %3147 = vmatprep.subr.bf16.mxu0 0
        %3148 = vmatpush2.bf16.msra.mxu0 0
        %3149 = vmatprep.subr.bf16.mxu0 0
        %3150 = vmatpush2.bf16.msra.mxu0 0
        %3151 = vmatprep.mubr.bf16.mxu0 0
        %3152 = vmatmul.mubr.bf16.gmra.mxu0 %v3117
        %v3153 = vpop.f32.mrf.mxu0
        %v3154 = vadd.f32 0.0, %v3153
        %v3155 = vpop.f32.mrf.mxu0
        %v3156 = vpop.f32.mrf.mxu0
        %v3157 = vpop.f32.mrf.mxu0
        %3158 = vdwg.mxu0
        %3160 = vrot.lane.b32.xlu0 %v3064, 32
        %v3161 = vpop.permute.xlu0 %3160
        %3164 = vrot.lane.b32.xlu0 %v3109, 64
        %v3165 = vpop.permute.xlu0 %3164
        %3168 = vrot.lane.b32.xlu0 %v3154, 96
        %v3169 = vpop.permute.xlu0 %3168
        %v3171 = vsel %vm1326, %v3019, %v3161
        %v3172 = vsel %vm1279, %v3171, %v3165
        %vm3173 = vcmask 785408
        %v3174 = vsel %vm3173, %v3172, %v3169
        %v3175 = vpack.c.bf16 %v3174, %v3174
        %v3176 = vld [vmem:[%s41] sm:$0xf]
        %v3177 = vld [vmem:[%s41 + $0x4] sm:$0xf]
        %v3178 = vld [vmem:[%s41 + $0x8] sm:$0xf]
        %v3179 = vld [vmem:[%s41 + $0xc] sm:$0xf]
        %v3180 = vld [vmem:[%s41 + $0x10] sm:$0xf]
        %v3181 = vld [vmem:[%s41 + $0x14] sm:$0xf]
        %v3182 = vld [vmem:[%s41 + $0x18] sm:$0xf]
        %v3183 = vld [vmem:[%s41 + $0x1c] sm:$0xf]
        %v3184 = vld [vmem:[%s41 + $0x20] sm:$0xf]
        %v3185 = vld [vmem:[%s41 + $0x24] sm:$0xf]
        %v3186 = vld [vmem:[%s41 + $0x28] sm:$0xf]
        %v3187 = vld [vmem:[%s41 + $0x2c] sm:$0xf]
        %v3188 = vld [vmem:[%s41 + $0x30] sm:$0xf]
        %v3189 = vld [vmem:[%s41 + $0x34] sm:$0xf]
        %v3190 = vld [vmem:[%s41 + $0x38] sm:$0xf]
        %v3191 = vld [vmem:[%s41 + $0x3c] sm:$0xf]
        %v3208 = vunpack.c.l.b16 %v3176
        %v3209 = vunpack.c.l.b16 %v3177
        %v3210 = vunpack.c.l.b16 %v3178
        %v3211 = vunpack.c.l.b16 %v3179
        %v3212 = vunpack.c.l.b16 %v3180
        %v3213 = vunpack.c.l.b16 %v3181
        %v3214 = vunpack.c.l.b16 %v3182
        %v3215 = vunpack.c.l.b16 %v3183
        %v3216 = vunpack.c.l.b16 %v3184
        %v3217 = vunpack.c.l.b16 %v3185
        %v3218 = vunpack.c.l.b16 %v3186
        %v3219 = vunpack.c.l.b16 %v3187
        %v3220 = vunpack.c.l.b16 %v3188
        %v3221 = vunpack.c.l.b16 %v3189
        %v3222 = vunpack.c.l.b16 %v3190
        %v3223 = vunpack.c.l.b16 %v3191
        %v3224 = vpack.c.b16 %v3209, %v3208
        %v3225 = vpack.c.b16 %v3211, %v3210
        %v3226 = vpack.c.b16 %v3213, %v3212
        %v3227 = vpack.c.b16 %v3215, %v3214
        %v3228 = vpack.c.b16 %v3217, %v3216
        %v3229 = vpack.c.b16 %v3219, %v3218
        %v3230 = vpack.c.b16 %v3221, %v3220
        %v3231 = vpack.c.b16 %v3223, %v3222
        %3240 = vmatprep.subr.bf16.mxu0 0
        %3241 = vmatpush1.bf16.msra.mxu0 %v3231
        %3242 = vmatprep.subr.bf16.mxu0 0
        %3243 = vmatpush1.bf16.msra.mxu0 %v3230
        %3244 = vmatprep.subr.bf16.mxu0 0
        %3245 = vmatpush1.bf16.msra.mxu0 %v3229
        %3246 = vmatprep.subr.bf16.mxu0 0
        %3247 = vmatpush1.bf16.msra.mxu0 %v3228
        %3248 = vmatprep.subr.bf16.mxu0 0
        %3249 = vmatpush1.bf16.msra.mxu0 %v3227
        %3250 = vmatprep.subr.bf16.mxu0 0
        %3251 = vmatpush1.bf16.msra.mxu0 %v3226
        %3252 = vmatprep.subr.bf16.mxu0 0
        %3253 = vmatpush1.bf16.msra.mxu0 %v3225
        %3254 = vmatprep.subr.bf16.mxu0 0
        %3255 = vmatpush1.bf16.msra.mxu0 %v3224
        %3256 = vmatprep.subr.bf16.mxu0 0
        %3257 = vmatpush2.bf16.msra.mxu0 0
        %3258 = vmatprep.subr.bf16.mxu0 0
        %3259 = vmatpush2.bf16.msra.mxu0 0
        %3260 = vmatprep.subr.bf16.mxu0 0
        %3261 = vmatpush2.bf16.msra.mxu0 0
        %3262 = vmatprep.subr.bf16.mxu0 0
        %3263 = vmatpush2.bf16.msra.mxu0 0
        %3264 = vmatprep.subr.bf16.mxu0 0
        %3265 = vmatpush2.bf16.msra.mxu0 0
        %3266 = vmatprep.subr.bf16.mxu0 0
        %3267 = vmatpush2.bf16.msra.mxu0 0
        %3268 = vmatprep.subr.bf16.mxu0 0
        %3269 = vmatpush2.bf16.msra.mxu0 0
        %3270 = vmatprep.subr.bf16.mxu0 0
        %3271 = vmatpush2.bf16.msra.mxu0 0
        %3272 = vmatprep.mubr.bf16.mxu0 0
        %3273 = vmatmul.mubr.bf16.gmra.mxu0 %v3175
        %v3274 = vpop.f32.mrf.mxu0
        %v3275 = vadd.f32 0.0, %v3274
        %v3276 = vpop.f32.mrf.mxu0
        %v3277 = vpop.f32.mrf.mxu0
        %v3278 = vpop.f32.mrf.mxu0
        %3279 = vdwg.mxu0
        %v3280 = vld [vmem:[%s43] sm:$0x1]
        %v3281 = vld [vmem:[%s45] sm:$0x1]
        %vm3282 = vcmask 519168
        %v3283 = vsel %vm3282, %v3275, 0.0
        %3284 = vadd.xlane.f32.xlu0 %v3283
        %v3285 = vpop.xlane.xlu0 %3284
        %v3286 = vrcp.pop 64.0
        %v3287 = vmul.f32 %v3285, %v3286
        %v3288 = vsub.f32 %v3275, %v3287
        %v3289 = vmul.f32 %v3288, %v3288
        %v3290 = vsel %vm3282, %v3289, 0.0
        %3291 = vadd.xlane.f32.xlu0 %v3290
        %v3292 = vpop.xlane.xlu0 %3291
        %v3293 = vmul.f32 %v3292, %v3286
        %v3294 = vadd.f32 %v3293, 1e-05
        %v3295 = vrsqrt.pop %v3294
        %v3296 = vmul.f32 %v3288, %v3295
        %v3298 = vlaneseq
        %v3299 = vshrl.u32 %v3298, 7
        %v3300 = vsub.s32 0, %v3299
        %v3301 = vrot.slane %v3280, %v3300
        %v3303 = vmul.f32 %v3296, %v3301
        %v3305 = vlaneseq
        %v3306 = vshrl.u32 %v3305, 7
        %v3307 = vsub.s32 0, %v3306
        %v3308 = vrot.slane %v3281, %v3307
        %v3310 = vadd.f32 %v3303, %v3308
        %v3311 = vpack.c.bf16 %v3310, %v3310
        %v3312 = vld [vmem:[%s47] sm:$0xff]
        %v3313 = vld [vmem:[%s47 + $0x8] sm:$0xff]
        %v3314 = vld [vmem:[%s47 + $0x10] sm:$0xff]
        %v3315 = vld [vmem:[%s47 + $0x18] sm:$0xff]
        %v3316 = vld [vmem:[%s47 + $0x20] sm:$0xff]
        %v3317 = vld [vmem:[%s47 + $0x28] sm:$0xff]
        %v3318 = vld [vmem:[%s47 + $0x30] sm:$0xff]
        %v3319 = vld [vmem:[%s47 + $0x38] sm:$0xff]
        %v3320 = vld [vmem:[%s49] sm:$0x3]
        %v3322 = vlaneseq
        %v3323 = vshrl.u32 %v3322, 7
        %v3324 = vsub.s32 0, %v3323
        %v3325 = vrot.slane %v3320, %v3324
        %v3326 = vlaneseq
        %v3327 = vshrl.u32 %v3326, 7
        %v3328 = vsub.s32 1, %v3327
        %v3329 = vrot.slane %v3320, %v3328
        %v3340 = vunpack.c.l.b16 %v3312
        %v3341 = vunpack.c.h.b16 %v3312
        %v3342 = vunpack.c.l.b16 %v3313
        %v3343 = vunpack.c.h.b16 %v3313
        %v3344 = vunpack.c.l.b16 %v3314
        %v3345 = vunpack.c.h.b16 %v3314
        %v3346 = vunpack.c.l.b16 %v3315
        %v3347 = vunpack.c.h.b16 %v3315
        %v3348 = vunpack.c.l.b16 %v3316
        %v3349 = vunpack.c.h.b16 %v3316
        %v3350 = vunpack.c.l.b16 %v3317
        %v3351 = vunpack.c.h.b16 %v3317
        %v3352 = vunpack.c.l.b16 %v3318
        %v3353 = vunpack.c.h.b16 %v3318
        %v3354 = vunpack.c.l.b16 %v3319
        %v3355 = vunpack.c.h.b16 %v3319
        %v3356 = vpack.c.b16 %v3342, %v3340
        %v3357 = vpack.c.b16 %v3343, %v3341
        %v3358 = vpack.c.b16 %v3346, %v3344
        %v3359 = vpack.c.b16 %v3347, %v3345
        %v3360 = vpack.c.b16 %v3350, %v3348
        %v3361 = vpack.c.b16 %v3351, %v3349
        %v3362 = vpack.c.b16 %v3354, %v3352
        %v3363 = vpack.c.b16 %v3355, %v3353
        %v3373 = vsel %vm1279, %v3311, 0
        %3375 = vmatprep.subr.bf16.mxu0 0
        %3376 = vmatpush1.bf16.msra.mxu0 0
        %3377 = vmatprep.subr.bf16.mxu0 0
        %3378 = vmatpush1.bf16.msra.mxu0 0
        %3379 = vmatprep.subr.bf16.mxu0 0
        %3380 = vmatpush1.bf16.msra.mxu0 0
        %3381 = vmatprep.subr.bf16.mxu0 0
        %3382 = vmatpush1.bf16.msra.mxu0 0
        %3383 = vmatprep.subr.bf16.mxu0 %v3363
        %3384 = vmatpush1.bf16.msra.mxu0 %v3362
        %3385 = vmatprep.subr.bf16.mxu0 %v3361
        %3386 = vmatpush1.bf16.msra.mxu0 %v3360
        %3387 = vmatprep.subr.bf16.mxu0 %v3359
        %3388 = vmatpush1.bf16.msra.mxu0 %v3358
        %3389 = vmatprep.subr.bf16.mxu0 %v3357
        %3390 = vmatpush1.bf16.msra.mxu0 %v3356
        %3391 = vmatprep.subr.bf16.mxu0 0
        %3392 = vmatpush2.bf16.msra.mxu0 0
        %3393 = vmatprep.subr.bf16.mxu0 0
        %3394 = vmatpush2.bf16.msra.mxu0 0
        %3395 = vmatprep.subr.bf16.mxu0 0
        %3396 = vmatpush2.bf16.msra.mxu0 0
        %3397 = vmatprep.subr.bf16.mxu0 0
        %3398 = vmatpush2.bf16.msra.mxu0 0
        %3399 = vmatprep.subr.bf16.mxu0 0
        %3400 = vmatpush2.bf16.msra.mxu0 0
        %3401 = vmatprep.subr.bf16.mxu0 0
        %3402 = vmatpush2.bf16.msra.mxu0 0
        %3403 = vmatprep.subr.bf16.mxu0 0
        %3404 = vmatpush2.bf16.msra.mxu0 0
        %3405 = vmatprep.subr.bf16.mxu0 0
        %3406 = vmatpush2.bf16.msra.mxu0 0
        %3407 = vmatprep.mubr.bf16.mxu0 0
        %3408 = vmatmul.mubr.bf16.gmra.mxu0 %v3373
        %v3409 = vpop.f32.mrf.mxu0
        %v3410 = vadd.f32 %v3325, %v3409
        %v3411 = vpop.f32.mrf.mxu0
        %v3412 = vadd.f32 %v3329, %v3411
        %v3413 = vpop.f32.mrf.mxu0
        %v3414 = vpop.f32.mrf.mxu0
        %3415 = vdwg.mxu0
        %3417 = vrot.lane.b32.xlu0 %v3410, 112
        %v3418 = vpop.permute.xlu0 %3417
        %3420 = vrot.lane.b32.xlu0 %v3410, 96
        %v3421 = vpop.permute.xlu0 %3420
        %3423 = vrot.lane.b32.xlu0 %v3410, 80
        %v3424 = vpop.permute.xlu0 %3423
        %3427 = vrot.lane.b32.xlu0 %v3412, 112
        %v3428 = vpop.permute.xlu0 %3427
        %3430 = vrot.lane.b32.xlu0 %v3412, 96
        %v3431 = vpop.permute.xlu0 %3430
        %3433 = vrot.lane.b32.xlu0 %v3412, 80
        %v3434 = vpop.permute.xlu0 %3433
        %v3436 = vmul.f32 %v3410, %v3410
        %v3437 = vmul.f32 %v3418, %v3418
        %v3438 = vmul.f32 %v3421, %v3421
        %v3439 = vmul.f32 %v3424, %v3424
        %vm3440 = vcmask 125952
        %v3441 = vsel %vm3440, %v3436, 0.0
        %3442 = vadd.xlane.f32.xlu0 %v3441
        %v3443 = vpop.xlane.xlu0 %3442
        %v3444 = vsel %vm3440, %v3437, 0.0
        %3445 = vadd.xlane.f32.xlu0 %v3444
        %v3446 = vpop.xlane.xlu0 %3445
        %v3447 = vsel %vm3440, %v3438, 0.0
        %3448 = vadd.xlane.f32.xlu0 %v3447
        %v3449 = vpop.xlane.xlu0 %3448
        %v3450 = vsel %vm3440, %v3439, 0.0
        %3451 = vadd.xlane.f32.xlu0 %v3450
        %v3452 = vpop.xlane.xlu0 %3451
        %v3453 = vmax.f32 %v3443, 1e-24
        %v3454 = vmax.f32 %v3446, 1e-24
        %v3455 = vmax.f32 %v3449, 1e-24
        %v3456 = vmax.f32 %v3452, 1e-24
        %v3457 = vrsqrt.pop %v3453
        %v3458 = vrsqrt.pop %v3454
        %v3459 = vrsqrt.pop %v3455
        %v3460 = vrsqrt.pop %v3456
        %v3461 = vmul.f32 %v3410, %v3457
        %v3462 = vmul.f32 %v3418, %v3458
        %v3463 = vmul.f32 %v3421, %v3459
        %v3464 = vmul.f32 %v3424, %v3460
        %3469 = vrot.lane.b32.xlu0 %v3436, 64
        %v3470 = vpop.permute.xlu0 %3469
        %3471 = vrot.lane.b32.xlu0 %v3437, 64
        %v3472 = vpop.permute.xlu0 %3471
        %3473 = vrot.lane.b32.xlu0 %v3438, 64
        %v3474 = vpop.permute.xlu0 %3473
        %3475 = vrot.lane.b32.xlu0 %v3439, 64
        %v3476 = vpop.permute.xlu0 %3475
        %v3481 = vsel %vm3440, %v3470, 0.0
        %3482 = vadd.xlane.f32.xlu0 %v3481
        %v3483 = vpop.xlane.xlu0 %3482
        %v3484 = vsel %vm3440, %v3472, 0.0
        %3485 = vadd.xlane.f32.xlu0 %v3484
        %v3486 = vpop.xlane.xlu0 %3485
        %v3487 = vsel %vm3440, %v3474, 0.0
        %3488 = vadd.xlane.f32.xlu0 %v3487
        %v3489 = vpop.xlane.xlu0 %3488
        %v3490 = vsel %vm3440, %v3476, 0.0
        %3491 = vadd.xlane.f32.xlu0 %v3490
        %v3492 = vpop.xlane.xlu0 %3491
        %v3493 = vmax.f32 %v3483, 1e-24
        %v3494 = vmax.f32 %v3486, 1e-24
        %v3495 = vmax.f32 %v3489, 1e-24
        %v3496 = vmax.f32 %v3492, 1e-24
        %v3497 = vrsqrt.pop %v3493
        %v3498 = vrsqrt.pop %v3494
        %v3499 = vrsqrt.pop %v3495
        %v3500 = vrsqrt.pop %v3496
        %v3501 = vmul.f32 %v3410, %v3497
        %v3502 = vmul.f32 %v3418, %v3498
        %v3503 = vmul.f32 %v3421, %v3499
        %v3504 = vmul.f32 %v3424, %v3500
        %v3505 = vpack.c.bf16 %v3461, %v3461
        %v3506 = vpack.c.bf16 %v3462, %v3462
        %v3507 = vpack.c.bf16 %v3463, %v3463
        %v3508 = vpack.c.bf16 %v3464, %v3464
        %v3509 = vpack.c.bf16 %v3501, %v3501
        %v3510 = vpack.c.bf16 %v3502, %v3502
        %v3511 = vpack.c.bf16 %v3503, %v3503
        %v3512 = vpack.c.bf16 %v3504, %v3504
        %3514 = vrot.lane.b32.xlu0 %v3509, 64
        %v3515 = vpop.permute.xlu0 %3514
        %v3517 = vsel %vm1450, %v3505, 0
        %v3520 = vsel %vm1450, %v3515, 0
        %3522 = vmatprep.subr.bf16.mxu0 0
        %3523 = vmatpush1.bf16.xpose.msra.mxu0 0
        %3524 = vmatprep.subr.bf16.mxu0 0
        %3525 = vmatpush1.bf16.xpose.msra.mxu0 0
        %3526 = vmatprep.subr.bf16.mxu0 0
        %3527 = vmatpush1.bf16.xpose.msra.mxu0 0
        %3528 = vmatprep.subr.bf16.mxu0 0
        %3529 = vmatpush1.bf16.xpose.msra.mxu0 0
        %3530 = vmatprep.subr.bf16.mxu0 0
        %3531 = vmatpush1.bf16.xpose.msra.mxu0 0
        %3532 = vmatprep.subr.bf16.mxu0 0
        %3533 = vmatpush1.bf16.xpose.msra.mxu0 0
        %3534 = vmatprep.subr.bf16.mxu0 0
        %3535 = vmatpush1.bf16.xpose.msra.mxu0 0
        %3536 = vmatprep.subr.bf16.mxu0 0
        %3537 = vmatpush1.bf16.xpose.msra.mxu0 %v3520
        %3538 = vmatprep.subr.bf16.mxu0 0
        %3539 = vmatpush2.bf16.xpose.msra.mxu0 0
        %3540 = vmatprep.subr.bf16.mxu0 0
        %3541 = vmatpush2.bf16.xpose.msra.mxu0 0
        %3542 = vmatprep.subr.bf16.mxu0 0
        %3543 = vmatpush2.bf16.xpose.msra.mxu0 0
        %3544 = vmatprep.subr.bf16.mxu0 0
        %3545 = vmatpush2.bf16.xpose.msra.mxu0 0
        %3546 = vmatprep.subr.bf16.mxu0 0
        %3547 = vmatpush2.bf16.xpose.msra.mxu0 0
        %3548 = vmatprep.subr.bf16.mxu0 0
        %3549 = vmatpush2.bf16.xpose.msra.mxu0 0
        %3550 = vmatprep.subr.bf16.mxu0 0
        %3551 = vmatpush2.bf16.xpose.msra.mxu0 0
        %3552 = vmatprep.subr.bf16.mxu0 0
        %3553 = vmatpush2.bf16.xpose.msra.mxu0 0
        %3554 = vmatprep.mubr.bf16.mxu0 0
        %3555 = vmatmul.mubr.bf16.gmra.mxu0 %v3517
        %v3556 = vpop.f32.mrf.mxu0
        %v3557 = vadd.f32 0.0, %v3556
        %v3558 = vpop.f32.mrf.mxu0
        %v3559 = vpop.f32.mrf.mxu0
        %v3560 = vpop.f32.mrf.mxu0
        %3561 = vdwg.mxu0
        %3563 = vrot.lane.b32.xlu0 %v3510, 64
        %v3564 = vpop.permute.xlu0 %3563
        %v3566 = vsel %vm1450, %v3506, 0
        %v3569 = vsel %vm1450, %v3564, 0
        %3571 = vmatprep.subr.bf16.mxu0 0
        %3572 = vmatpush1.bf16.xpose.msra.mxu0 0
        %3573 = vmatprep.subr.bf16.mxu0 0
        %3574 = vmatpush1.bf16.xpose.msra.mxu0 0
        %3575 = vmatprep.subr.bf16.mxu0 0
        %3576 = vmatpush1.bf16.xpose.msra.mxu0 0
        %3577 = vmatprep.subr.bf16.mxu0 0
        %3578 = vmatpush1.bf16.xpose.msra.mxu0 0
        %3579 = vmatprep.subr.bf16.mxu0 0
        %3580 = vmatpush1.bf16.xpose.msra.mxu0 0
        %3581 = vmatprep.subr.bf16.mxu0 0
        %3582 = vmatpush1.bf16.xpose.msra.mxu0 0
        %3583 = vmatprep.subr.bf16.mxu0 0
        %3584 = vmatpush1.bf16.xpose.msra.mxu0 0
        %3585 = vmatprep.subr.bf16.mxu0 0
        %3586 = vmatpush1.bf16.xpose.msra.mxu0 %v3569
        %3587 = vmatprep.subr.bf16.mxu0 0
        %3588 = vmatpush2.bf16.xpose.msra.mxu0 0
        %3589 = vmatprep.subr.bf16.mxu0 0
        %3590 = vmatpush2.bf16.xpose.msra.mxu0 0
        %3591 = vmatprep.subr.bf16.mxu0 0
        %3592 = vmatpush2.bf16.xpose.msra.mxu0 0
        %3593 = vmatprep.subr.bf16.mxu0 0
        %3594 = vmatpush2.bf16.xpose.msra.mxu0 0
        %3595 = vmatprep.subr.bf16.mxu0 0
        %3596 = vmatpush2.bf16.xpose.msra.mxu0 0
        %3597 = vmatprep.subr.bf16.mxu0 0
        %3598 = vmatpush2.bf16.xpose.msra.mxu0 0
        %3599 = vmatprep.subr.bf16.mxu0 0
        %3600 = vmatpush2.bf16.xpose.msra.mxu0 0
        %3601 = vmatprep.subr.bf16.mxu0 0
        %3602 = vmatpush2.bf16.xpose.msra.mxu0 0
        %3603 = vmatprep.mubr.bf16.mxu0 0
        %3604 = vmatmul.mubr.bf16.gmra.mxu0 %v3566
        %v3605 = vpop.f32.mrf.mxu0
        %v3606 = vadd.f32 0.0, %v3605
        %v3607 = vpop.f32.mrf.mxu0
        %v3608 = vpop.f32.mrf.mxu0
        %v3609 = vpop.f32.mrf.mxu0
        %3610 = vdwg.mxu0
        %3612 = vrot.lane.b32.xlu0 %v3511, 64
        %v3613 = vpop.permute.xlu0 %3612
        %v3615 = vsel %vm1450, %v3507, 0
        %v3618 = vsel %vm1450, %v3613, 0
        %3620 = vmatprep.subr.bf16.mxu0 0
        %3621 = vmatpush1.bf16.xpose.msra.mxu0 0
        %3622 = vmatprep.subr.bf16.mxu0 0
        %3623 = vmatpush1.bf16.xpose.msra.mxu0 0
        %3624 = vmatprep.subr.bf16.mxu0 0
        %3625 = vmatpush1.bf16.xpose.msra.mxu0 0
        %3626 = vmatprep.subr.bf16.mxu0 0
        %3627 = vmatpush1.bf16.xpose.msra.mxu0 0
        %3628 = vmatprep.subr.bf16.mxu0 0
        %3629 = vmatpush1.bf16.xpose.msra.mxu0 0
        %3630 = vmatprep.subr.bf16.mxu0 0
        %3631 = vmatpush1.bf16.xpose.msra.mxu0 0
        %3632 = vmatprep.subr.bf16.mxu0 0
        %3633 = vmatpush1.bf16.xpose.msra.mxu0 0
        %3634 = vmatprep.subr.bf16.mxu0 0
        %3635 = vmatpush1.bf16.xpose.msra.mxu0 %v3618
        %3636 = vmatprep.subr.bf16.mxu0 0
        %3637 = vmatpush2.bf16.xpose.msra.mxu0 0
        %3638 = vmatprep.subr.bf16.mxu0 0
        %3639 = vmatpush2.bf16.xpose.msra.mxu0 0
        %3640 = vmatprep.subr.bf16.mxu0 0
        %3641 = vmatpush2.bf16.xpose.msra.mxu0 0
        %3642 = vmatprep.subr.bf16.mxu0 0
        %3643 = vmatpush2.bf16.xpose.msra.mxu0 0
        %3644 = vmatprep.subr.bf16.mxu0 0
        %3645 = vmatpush2.bf16.xpose.msra.mxu0 0
        %3646 = vmatprep.subr.bf16.mxu0 0
        %3647 = vmatpush2.bf16.xpose.msra.mxu0 0
        %3648 = vmatprep.subr.bf16.mxu0 0
        %3649 = vmatpush2.bf16.xpose.msra.mxu0 0
        %3650 = vmatprep.subr.bf16.mxu0 0
        %3651 = vmatpush2.bf16.xpose.msra.mxu0 0
        %3652 = vmatprep.mubr.bf16.mxu0 0
        %3653 = vmatmul.mubr.bf16.gmra.mxu0 %v3615
        %v3654 = vpop.f32.mrf.mxu0
        %v3655 = vadd.f32 0.0, %v3654
        %v3656 = vpop.f32.mrf.mxu0
        %v3657 = vpop.f32.mrf.mxu0
        %v3658 = vpop.f32.mrf.mxu0
        %3659 = vdwg.mxu0
        %3661 = vrot.lane.b32.xlu0 %v3512, 64
        %v3662 = vpop.permute.xlu0 %3661
        %v3664 = vsel %vm1450, %v3508, 0
        %v3667 = vsel %vm1450, %v3662, 0
        %3669 = vmatprep.subr.bf16.mxu0 0
        %3670 = vmatpush1.bf16.xpose.msra.mxu0 0
        %3671 = vmatprep.subr.bf16.mxu0 0
        %3672 = vmatpush1.bf16.xpose.msra.mxu0 0
        %3673 = vmatprep.subr.bf16.mxu0 0
        %3674 = vmatpush1.bf16.xpose.msra.mxu0 0
        %3675 = vmatprep.subr.bf16.mxu0 0
        %3676 = vmatpush1.bf16.xpose.msra.mxu0 0
        %3677 = vmatprep.subr.bf16.mxu0 0
        %3678 = vmatpush1.bf16.xpose.msra.mxu0 0
        %3679 = vmatprep.subr.bf16.mxu0 0
        %3680 = vmatpush1.bf16.xpose.msra.mxu0 0
        %3681 = vmatprep.subr.bf16.mxu0 0
        %3682 = vmatpush1.bf16.xpose.msra.mxu0 0
        %3683 = vmatprep.subr.bf16.mxu0 0
        %3684 = vmatpush1.bf16.xpose.msra.mxu0 %v3667
        %3685 = vmatprep.subr.bf16.mxu0 0
        %3686 = vmatpush2.bf16.xpose.msra.mxu0 0
        %3687 = vmatprep.subr.bf16.mxu0 0
        %3688 = vmatpush2.bf16.xpose.msra.mxu0 0
        %3689 = vmatprep.subr.bf16.mxu0 0
        %3690 = vmatpush2.bf16.xpose.msra.mxu0 0
        %3691 = vmatprep.subr.bf16.mxu0 0
        %3692 = vmatpush2.bf16.xpose.msra.mxu0 0
        %3693 = vmatprep.subr.bf16.mxu0 0
        %3694 = vmatpush2.bf16.xpose.msra.mxu0 0
        %3695 = vmatprep.subr.bf16.mxu0 0
        %3696 = vmatpush2.bf16.xpose.msra.mxu0 0
        %3697 = vmatprep.subr.bf16.mxu0 0
        %3698 = vmatpush2.bf16.xpose.msra.mxu0 0
        %3699 = vmatprep.subr.bf16.mxu0 0
        %3700 = vmatpush2.bf16.xpose.msra.mxu0 0
        %3701 = vmatprep.mubr.bf16.mxu0 0
        %3702 = vmatmul.mubr.bf16.gmra.mxu0 %v3664
        %v3703 = vpop.f32.mrf.mxu0
        %v3704 = vadd.f32 0.0, %v3703
        %v3705 = vpop.f32.mrf.mxu0
        %v3706 = vpop.f32.mrf.mxu0
        %v3707 = vpop.f32.mrf.mxu0
        %3708 = vdwg.mxu0
        %v3709 = vld [vmem:[%s55] sm:$0xf]
        %v3710 = vld [vmem:[%s55 + $0x4] sm:$0xf]
        %v3711 = vld [vmem:[%s55 + $0x8] sm:$0xf]
        %v3712 = vld [vmem:[%s55 + $0xc] sm:$0xf]
        %3714 = vset.pattern.permute.xlu0 0
        %3715 = vperm.xlu0 %3714, %v3709
        %v3716 = vpop.permute.xlu0 %3715
        %3719 = vset.pattern.permute.xlu0 0
        %3720 = vperm.xlu0 %3719, %v3710
        %v3721 = vpop.permute.xlu0 %3720
        %3724 = vset.pattern.permute.xlu0 0
        %3725 = vperm.xlu0 %3724, %v3711
        %v3726 = vpop.permute.xlu0 %3725
        %3729 = vset.pattern.permute.xlu0 0
        %3730 = vperm.xlu0 %3729, %v3712
        %v3731 = vpop.permute.xlu0 %3730
        %v3733 = vmul.f32 %v3557, %v3716
        %v3734 = vmul.f32 %v3606, %v3721
        %v3735 = vmul.f32 %v3655, %v3726
        %v3736 = vmul.f32 %v3704, %v3731
        %v3737 = vld [vmem:[%s57] sm:$0xf]
        %v3738 = vld [vmem:[%s57 + $0x4] sm:$0xf]
        %v3739 = vld [vmem:[%s57 + $0x8] sm:$0xf]
        %v3740 = vld [vmem:[%s57 + $0xc] sm:$0xf]
        %v3741 = vadd.f32 %v3733, %v3737
        %v3742 = vadd.f32 %v3734, %v3738
        %v3743 = vadd.f32 %v3735, %v3739
        %v3744 = vadd.f32 %v3736, %v3740
        %vm3745 = vcmask 27648
        %v3746 = vsel %vm3745, %v3741, -inf
        %3747 = vmax.xlane.f32.xlu0 %v3746
        %v3748 = vpop.xlane.xlu0 %3747
        %v3749 = vsel %vm3745, %v3742, -inf
        %3750 = vmax.xlane.f32.xlu0 %v3749
        %v3751 = vpop.xlane.xlu0 %3750
        %v3752 = vsel %vm3745, %v3743, -inf
        %3753 = vmax.xlane.f32.xlu0 %v3752
        %v3754 = vpop.xlane.xlu0 %3753
        %v3755 = vsel %vm3745, %v3744, -inf
        %3756 = vmax.xlane.f32.xlu0 %v3755
        %v3757 = vpop.xlane.xlu0 %3756
        %v3758 = vsub.f32 %v3741, %v3748
        %v3759 = vsub.f32 %v3742, %v3751
        %v3760 = vsub.f32 %v3743, %v3754
        %v3761 = vsub.f32 %v3744, %v3757
        %v3762 = vmul.f32 %v3758, 1.442695
        %v3763 = vpow.pop %v3762
        %v3764 = vmul.f32 %v3759, 1.442695
        %v3765 = vpow.pop %v3764
        %v3766 = vmul.f32 %v3760, 1.442695
        %v3767 = vpow.pop %v3766
        %v3768 = vmul.f32 %v3761, 1.442695
        %v3769 = vpow.pop %v3768
        %v3770 = vsel %vm3745, %v3763, 0.0
        %3771 = vadd.xlane.f32.xlu0 %v3770
        %v3772 = vpop.xlane.xlu0 %3771
        %v3773 = vsel %vm3745, %v3765, 0.0
        %3774 = vadd.xlane.f32.xlu0 %v3773
        %v3775 = vpop.xlane.xlu0 %3774
        %v3776 = vsel %vm3745, %v3767, 0.0
        %3777 = vadd.xlane.f32.xlu0 %v3776
        %v3778 = vpop.xlane.xlu0 %3777
        %v3779 = vsel %vm3745, %v3769, 0.0
        %3780 = vadd.xlane.f32.xlu0 %v3779
        %v3781 = vpop.xlane.xlu0 %3780
        %v3782 = vrcp.pop %v3772
        %v3783 = vrcp.pop %v3775
        %v3784 = vrcp.pop %v3778
        %v3785 = vrcp.pop %v3781
        %v3786 = vmul.f32 %v3763, %v3782
        %v3787 = vmul.f32 %v3765, %v3783
        %v3788 = vmul.f32 %v3767, %v3784
        %v3789 = vmul.f32 %v3769, %v3785
        %v3790 = vpack.c.bf16 %v3786, %v3786
        %v3791 = vpack.c.bf16 %v3787, %v3787
        %v3792 = vpack.c.bf16 %v3788, %v3788
        %v3793 = vpack.c.bf16 %v3789, %v3789
        %v3794 = vpack.c.bf16 %v3412, %v3412
        %v3795 = vpack.c.bf16 %v3428, %v3428
        %v3796 = vpack.c.bf16 %v3431, %v3431
        %v3797 = vpack.c.bf16 %v3434, %v3434
        %vm3798 = vcmask 31744
        %v3800 = vsel %vm3798, %v3790, 0
        %vm3802 = vcmask 1041408
        %v3804 = vsel %vm3802, %v3794, 0
        %3806 = vmatprep.subr.bf16.mxu0 0
        %3807 = vmatpush1.bf16.msra.mxu0 0
        %3808 = vmatprep.subr.bf16.mxu0 0
        %3809 = vmatpush1.bf16.msra.mxu0 0
        %3810 = vmatprep.subr.bf16.mxu0 0
        %3811 = vmatpush1.bf16.msra.mxu0 0
        %3812 = vmatprep.subr.bf16.mxu0 0
        %3813 = vmatpush1.bf16.msra.mxu0 0
        %3814 = vmatprep.subr.bf16.mxu0 0
        %3815 = vmatpush1.bf16.msra.mxu0 0
        %3816 = vmatprep.subr.bf16.mxu0 0
        %3817 = vmatpush1.bf16.msra.mxu0 0
        %3818 = vmatprep.subr.bf16.mxu0 0
        %3819 = vmatpush1.bf16.msra.mxu0 0
        %3820 = vmatprep.subr.bf16.mxu0 0
        %3821 = vmatpush1.bf16.msra.mxu0 %v3804
        %3822 = vmatprep.subr.bf16.mxu0 0
        %3823 = vmatpush2.bf16.msra.mxu0 0
        %3824 = vmatprep.subr.bf16.mxu0 0
        %3825 = vmatpush2.bf16.msra.mxu0 0
        %3826 = vmatprep.subr.bf16.mxu0 0
        %3827 = vmatpush2.bf16.msra.mxu0 0
        %3828 = vmatprep.subr.bf16.mxu0 0
        %3829 = vmatpush2.bf16.msra.mxu0 0
        %3830 = vmatprep.subr.bf16.mxu0 0
        %3831 = vmatpush2.bf16.msra.mxu0 0
        %3832 = vmatprep.subr.bf16.mxu0 0
        %3833 = vmatpush2.bf16.msra.mxu0 0
        %3834 = vmatprep.subr.bf16.mxu0 0
        %3835 = vmatpush2.bf16.msra.mxu0 0
        %3836 = vmatprep.subr.bf16.mxu0 0
        %3837 = vmatpush2.bf16.msra.mxu0 0
        %3838 = vmatprep.mubr.bf16.mxu0 0
        %3839 = vmatmul.mubr.bf16.gmra.mxu0 %v3800
        %v3840 = vpop.f32.mrf.mxu0
        %v3841 = vadd.f32 0.0, %v3840
        %v3842 = vpop.f32.mrf.mxu0
        %v3843 = vpop.f32.mrf.mxu0
        %v3844 = vpop.f32.mrf.mxu0
        %3845 = vdwg.mxu0
        %v3847 = vsel %vm3798, %v3791, 0
        %v3850 = vsel %vm3802, %v3795, 0
        %3852 = vmatprep.subr.bf16.mxu0 0
        %3853 = vmatpush1.bf16.msra.mxu0 0
        %3854 = vmatprep.subr.bf16.mxu0 0
        %3855 = vmatpush1.bf16.msra.mxu0 0
        %3856 = vmatprep.subr.bf16.mxu0 0
        %3857 = vmatpush1.bf16.msra.mxu0 0
        %3858 = vmatprep.subr.bf16.mxu0 0
        %3859 = vmatpush1.bf16.msra.mxu0 0
        %3860 = vmatprep.subr.bf16.mxu0 0
        %3861 = vmatpush1.bf16.msra.mxu0 0
        %3862 = vmatprep.subr.bf16.mxu0 0
        %3863 = vmatpush1.bf16.msra.mxu0 0
        %3864 = vmatprep.subr.bf16.mxu0 0
        %3865 = vmatpush1.bf16.msra.mxu0 0
        %3866 = vmatprep.subr.bf16.mxu0 0
        %3867 = vmatpush1.bf16.msra.mxu0 %v3850
        %3868 = vmatprep.subr.bf16.mxu0 0
        %3869 = vmatpush2.bf16.msra.mxu0 0
        %3870 = vmatprep.subr.bf16.mxu0 0
        %3871 = vmatpush2.bf16.msra.mxu0 0
        %3872 = vmatprep.subr.bf16.mxu0 0
        %3873 = vmatpush2.bf16.msra.mxu0 0
        %3874 = vmatprep.subr.bf16.mxu0 0
        %3875 = vmatpush2.bf16.msra.mxu0 0
        %3876 = vmatprep.subr.bf16.mxu0 0
        %3877 = vmatpush2.bf16.msra.mxu0 0
        %3878 = vmatprep.subr.bf16.mxu0 0
        %3879 = vmatpush2.bf16.msra.mxu0 0
        %3880 = vmatprep.subr.bf16.mxu0 0
        %3881 = vmatpush2.bf16.msra.mxu0 0
        %3882 = vmatprep.subr.bf16.mxu0 0
        %3883 = vmatpush2.bf16.msra.mxu0 0
        %3884 = vmatprep.mubr.bf16.mxu0 0
        %3885 = vmatmul.mubr.bf16.gmra.mxu0 %v3847
        %v3886 = vpop.f32.mrf.mxu0
        %v3887 = vadd.f32 0.0, %v3886
        %v3888 = vpop.f32.mrf.mxu0
        %v3889 = vpop.f32.mrf.mxu0
        %v3890 = vpop.f32.mrf.mxu0
        %3891 = vdwg.mxu0
        %v3893 = vsel %vm3798, %v3792, 0
        %v3896 = vsel %vm3802, %v3796, 0
        %3898 = vmatprep.subr.bf16.mxu0 0
        %3899 = vmatpush1.bf16.msra.mxu0 0
        %3900 = vmatprep.subr.bf16.mxu0 0
        %3901 = vmatpush1.bf16.msra.mxu0 0
        %3902 = vmatprep.subr.bf16.mxu0 0
        %3903 = vmatpush1.bf16.msra.mxu0 0
        %3904 = vmatprep.subr.bf16.mxu0 0
        %3905 = vmatpush1.bf16.msra.mxu0 0
        %3906 = vmatprep.subr.bf16.mxu0 0
        %3907 = vmatpush1.bf16.msra.mxu0 0
        %3908 = vmatprep.subr.bf16.mxu0 0
        %3909 = vmatpush1.bf16.msra.mxu0 0
        %3910 = vmatprep.subr.bf16.mxu0 0
        %3911 = vmatpush1.bf16.msra.mxu0 0
        %3912 = vmatprep.subr.bf16.mxu0 0
        %3913 = vmatpush1.bf16.msra.mxu0 %v3896
        %3914 = vmatprep.subr.bf16.mxu0 0
        %3915 = vmatpush2.bf16.msra.mxu0 0
        %3916 = vmatprep.subr.bf16.mxu0 0
        %3917 = vmatpush2.bf16.msra.mxu0 0
        %3918 = vmatprep.subr.bf16.mxu0 0
        %3919 = vmatpush2.bf16.msra.mxu0 0
        %3920 = vmatprep.subr.bf16.mxu0 0
        %3921 = vmatpush2.bf16.msra.mxu0 0
        %3922 = vmatprep.subr.bf16.mxu0 0
        %3923 = vmatpush2.bf16.msra.mxu0 0
        %3924 = vmatprep.subr.bf16.mxu0 0
        %3925 = vmatpush2.bf16.msra.mxu0 0
        %3926 = vmatprep.subr.bf16.mxu0 0
        %3927 = vmatpush2.bf16.msra.mxu0 0
        %3928 = vmatprep.subr.bf16.mxu0 0
        %3929 = vmatpush2.bf16.msra.mxu0 0
        %3930 = vmatprep.mubr.bf16.mxu0 0
        %3931 = vmatmul.mubr.bf16.gmra.mxu0 %v3893
        %v3932 = vpop.f32.mrf.mxu0
        %v3933 = vadd.f32 0.0, %v3932
        %v3934 = vpop.f32.mrf.mxu0
        %v3935 = vpop.f32.mrf.mxu0
        %v3936 = vpop.f32.mrf.mxu0
        %3937 = vdwg.mxu0
        %v3939 = vsel %vm3798, %v3793, 0
        %v3942 = vsel %vm3802, %v3797, 0
        %3944 = vmatprep.subr.bf16.mxu0 0
        %3945 = vmatpush1.bf16.msra.mxu0 0
        %3946 = vmatprep.subr.bf16.mxu0 0
        %3947 = vmatpush1.bf16.msra.mxu0 0
        %3948 = vmatprep.subr.bf16.mxu0 0
        %3949 = vmatpush1.bf16.msra.mxu0 0
        %3950 = vmatprep.subr.bf16.mxu0 0
        %3951 = vmatpush1.bf16.msra.mxu0 0
        %3952 = vmatprep.subr.bf16.mxu0 0
        %3953 = vmatpush1.bf16.msra.mxu0 0
        %3954 = vmatprep.subr.bf16.mxu0 0
        %3955 = vmatpush1.bf16.msra.mxu0 0
        %3956 = vmatprep.subr.bf16.mxu0 0
        %3957 = vmatpush1.bf16.msra.mxu0 0
        %3958 = vmatprep.subr.bf16.mxu0 0
        %3959 = vmatpush1.bf16.msra.mxu0 %v3942
        %3960 = vmatprep.subr.bf16.mxu0 0
        %3961 = vmatpush2.bf16.msra.mxu0 0
        %3962 = vmatprep.subr.bf16.mxu0 0
        %3963 = vmatpush2.bf16.msra.mxu0 0
        %3964 = vmatprep.subr.bf16.mxu0 0
        %3965 = vmatpush2.bf16.msra.mxu0 0
        %3966 = vmatprep.subr.bf16.mxu0 0
        %3967 = vmatpush2.bf16.msra.mxu0 0
        %3968 = vmatprep.subr.bf16.mxu0 0
        %3969 = vmatpush2.bf16.msra.mxu0 0
        %3970 = vmatprep.subr.bf16.mxu0 0
        %3971 = vmatpush2.bf16.msra.mxu0 0
        %3972 = vmatprep.subr.bf16.mxu0 0
        %3973 = vmatpush2.bf16.msra.mxu0 0
        %3974 = vmatprep.subr.bf16.mxu0 0
        %3975 = vmatpush2.bf16.msra.mxu0 0
        %3976 = vmatprep.mubr.bf16.mxu0 0
        %3977 = vmatmul.mubr.bf16.gmra.mxu0 %v3939
        %v3978 = vpop.f32.mrf.mxu0
        %v3979 = vadd.f32 0.0, %v3978
        %v3980 = vpop.f32.mrf.mxu0
        %v3981 = vpop.f32.mrf.mxu0
        %v3982 = vpop.f32.mrf.mxu0
        %3983 = vdwg.mxu0
        %3985 = vrot.lane.b32.xlu0 %v3887, 16
        %v3986 = vpop.permute.xlu0 %3985
        %3989 = vrot.lane.b32.xlu0 %v3933, 32
        %v3990 = vpop.permute.xlu0 %3989
        %3993 = vrot.lane.b32.xlu0 %v3979, 48
        %v3994 = vpop.permute.xlu0 %3993
        %v3996 = vsel %vm1450, %v3841, %v3986
        %v3997 = vsel %vm1326, %v3996, %v3990
        %vm3998 = vcmask 392192
        %v3999 = vsel %vm3998, %v3997, %v3994
        %v4000 = vpack.c.bf16 %v3999, %v3999
        %v4001 = vld [vmem:[%s51] sm:$0xf]
        %v4002 = vld [vmem:[%s51 + $0x4] sm:$0xf]
        %v4003 = vld [vmem:[%s51 + $0x8] sm:$0xf]
        %v4004 = vld [vmem:[%s51 + $0xc] sm:$0xf]
        %v4005 = vld [vmem:[%s51 + $0x10] sm:$0xf]
        %v4006 = vld [vmem:[%s51 + $0x14] sm:$0xf]
        %v4007 = vld [vmem:[%s51 + $0x18] sm:$0xf]
        %v4008 = vld [vmem:[%s51 + $0x1c] sm:$0xf]
        %v4009 = vld [vmem:[%s53] sm:$0x1]
        %v4011 = vlaneseq
        %v4012 = vshrl.u32 %v4011, 7
        %v4013 = vsub.s32 0, %v4012
        %v4014 = vrot.slane %v4009, %v4013
        %v4024 = vunpack.c.l.b16 %v4001
        %v4025 = vunpack.c.l.b16 %v4002
        %v4026 = vunpack.c.l.b16 %v4003
        %v4027 = vunpack.c.l.b16 %v4004
        %v4028 = vunpack.c.l.b16 %v4005
        %v4029 = vunpack.c.l.b16 %v4006
        %v4030 = vunpack.c.l.b16 %v4007
        %v4031 = vunpack.c.l.b16 %v4008
        %v4032 = vpack.c.b16 %v4025, %v4024
        %v4033 = vpack.c.b16 %v4027, %v4026
        %v4034 = vpack.c.b16 %v4029, %v4028
        %v4035 = vpack.c.b16 %v4031, %v4030
        %v4041 = vsel %vm1279, %v4000, 0
        %4043 = vmatprep.subr.bf16.mxu0 0
        %4044 = vmatpush1.bf16.msra.mxu0 0
        %4045 = vmatprep.subr.bf16.mxu0 0
        %4046 = vmatpush1.bf16.msra.mxu0 0
        %4047 = vmatprep.subr.bf16.mxu0 0
        %4048 = vmatpush1.bf16.msra.mxu0 0
        %4049 = vmatprep.subr.bf16.mxu0 0
        %4050 = vmatpush1.bf16.msra.mxu0 0
        %4051 = vmatprep.subr.bf16.mxu0 0
        %4052 = vmatpush1.bf16.msra.mxu0 %v4035
        %4053 = vmatprep.subr.bf16.mxu0 0
        %4054 = vmatpush1.bf16.msra.mxu0 %v4034
        %4055 = vmatprep.subr.bf16.mxu0 0
        %4056 = vmatpush1.bf16.msra.mxu0 %v4033
        %4057 = vmatprep.subr.bf16.mxu0 0
        %4058 = vmatpush1.bf16.msra.mxu0 %v4032
        %4059 = vmatprep.subr.bf16.mxu0 0
        %4060 = vmatpush2.bf16.msra.mxu0 0
        %4061 = vmatprep.subr.bf16.mxu0 0
        %4062 = vmatpush2.bf16.msra.mxu0 0
        %4063 = vmatprep.subr.bf16.mxu0 0
        %4064 = vmatpush2.bf16.msra.mxu0 0
        %4065 = vmatprep.subr.bf16.mxu0 0
        %4066 = vmatpush2.bf16.msra.mxu0 0
        %4067 = vmatprep.subr.bf16.mxu0 0
        %4068 = vmatpush2.bf16.msra.mxu0 0
        %4069 = vmatprep.subr.bf16.mxu0 0
        %4070 = vmatpush2.bf16.msra.mxu0 0
        %4071 = vmatprep.subr.bf16.mxu0 0
        %4072 = vmatpush2.bf16.msra.mxu0 0
        %4073 = vmatprep.subr.bf16.mxu0 0
        %4074 = vmatpush2.bf16.msra.mxu0 0
        %4075 = vmatprep.mubr.bf16.mxu0 0
        %4076 = vmatmul.mubr.bf16.gmra.mxu0 %v4041
        %v4077 = vpop.f32.mrf.mxu0
        %v4078 = vadd.f32 %v4014, %v4077
        %v4079 = vpop.f32.mrf.mxu0
        %v4080 = vpop.f32.mrf.mxu0
        %v4081 = vpop.f32.mrf.mxu0
        %4082 = vdwg.mxu0
        %v4083 = vld [vmem:[%s59] sm:$0x1]
        %v4084 = vld [vmem:[%s61] sm:$0x1]
        %v4085 = vsel %vm3282, %v4078, 0.0
        %4086 = vadd.xlane.f32.xlu0 %v4085
        %v4087 = vpop.xlane.xlu0 %4086
        %v4088 = vmul.f32 %v4087, %v3286
        %v4089 = vsub.f32 %v4078, %v4088
        %v4090 = vmul.f32 %v4089, %v4089
        %v4091 = vsel %vm3282, %v4090, 0.0
        %4092 = vadd.xlane.f32.xlu0 %v4091
        %v4093 = vpop.xlane.xlu0 %4092
        %v4094 = vmul.f32 %v4093, %v3286
        %v4095 = vadd.f32 %v4094, 1e-05
        %v4096 = vrsqrt.pop %v4095
        %v4097 = vmul.f32 %v4089, %v4096
        %v4099 = vlaneseq
        %v4100 = vshrl.u32 %v4099, 7
        %v4101 = vsub.s32 0, %v4100
        %v4102 = vrot.slane %v4083, %v4101
        %v4104 = vmul.f32 %v4097, %v4102
        %v4106 = vlaneseq
        %v4107 = vshrl.u32 %v4106, 7
        %v4108 = vsub.s32 0, %v4107
        %v4109 = vrot.slane %v4084, %v4108
        %v4111 = vadd.f32 %v4104, %v4109
        %v4112 = vadd.f32 %v3310, %v4111
        %v4113 = vpack.c.bf16 %v4112, %v4112
        %v4114 = vld [vmem:[%s63] sm:$0xff]
        %v4115 = vld [vmem:[%s63 + $0x8] sm:$0xff]
        %v4116 = vld [vmem:[%s63 + $0x10] sm:$0xff]
        %v4117 = vld [vmem:[%s63 + $0x18] sm:$0xff]
        %v4118 = vld [vmem:[%s63 + $0x20] sm:$0xff]
        %v4119 = vld [vmem:[%s63 + $0x28] sm:$0xff]
        %v4120 = vld [vmem:[%s63 + $0x30] sm:$0xff]
        %v4121 = vld [vmem:[%s63 + $0x38] sm:$0xff]
        %v4122 = vld [vmem:[%s65] sm:$0x3]
        %v4124 = vlaneseq
        %v4125 = vshrl.u32 %v4124, 7
        %v4126 = vsub.s32 0, %v4125
        %v4127 = vrot.slane %v4122, %v4126
        %v4128 = vlaneseq
        %v4129 = vshrl.u32 %v4128, 7
        %v4130 = vsub.s32 1, %v4129
        %v4131 = vrot.slane %v4122, %v4130
        %v4142 = vunpack.c.l.b16 %v4114
        %v4143 = vunpack.c.h.b16 %v4114
        %v4144 = vunpack.c.l.b16 %v4115
        %v4145 = vunpack.c.h.b16 %v4115
        %v4146 = vunpack.c.l.b16 %v4116
        %v4147 = vunpack.c.h.b16 %v4116
        %v4148 = vunpack.c.l.b16 %v4117
        %v4149 = vunpack.c.h.b16 %v4117
        %v4150 = vunpack.c.l.b16 %v4118
        %v4151 = vunpack.c.h.b16 %v4118
        %v4152 = vunpack.c.l.b16 %v4119
        %v4153 = vunpack.c.h.b16 %v4119
        %v4154 = vunpack.c.l.b16 %v4120
        %v4155 = vunpack.c.h.b16 %v4120
        %v4156 = vunpack.c.l.b16 %v4121
        %v4157 = vunpack.c.h.b16 %v4121
        %v4158 = vpack.c.b16 %v4144, %v4142
        %v4159 = vpack.c.b16 %v4145, %v4143
        %v4160 = vpack.c.b16 %v4148, %v4146
        %v4161 = vpack.c.b16 %v4149, %v4147
        %v4162 = vpack.c.b16 %v4152, %v4150
        %v4163 = vpack.c.b16 %v4153, %v4151
        %v4164 = vpack.c.b16 %v4156, %v4154
        %v4165 = vpack.c.b16 %v4157, %v4155
        %v4175 = vsel %vm1279, %v4113, 0
        %4177 = vmatprep.subr.bf16.mxu0 0
        %4178 = vmatpush1.bf16.msra.mxu0 0
        %4179 = vmatprep.subr.bf16.mxu0 0
        %4180 = vmatpush1.bf16.msra.mxu0 0
        %4181 = vmatprep.subr.bf16.mxu0 0
        %4182 = vmatpush1.bf16.msra.mxu0 0
        %4183 = vmatprep.subr.bf16.mxu0 0
        %4184 = vmatpush1.bf16.msra.mxu0 0
        %4185 = vmatprep.subr.bf16.mxu0 %v4165
        %4186 = vmatpush1.bf16.msra.mxu0 %v4164
        %4187 = vmatprep.subr.bf16.mxu0 %v4163
        %4188 = vmatpush1.bf16.msra.mxu0 %v4162
        %4189 = vmatprep.subr.bf16.mxu0 %v4161
        %4190 = vmatpush1.bf16.msra.mxu0 %v4160
        %4191 = vmatprep.subr.bf16.mxu0 %v4159
        %4192 = vmatpush1.bf16.msra.mxu0 %v4158
        %4193 = vmatprep.subr.bf16.mxu0 0
        %4194 = vmatpush2.bf16.msra.mxu0 0
        %4195 = vmatprep.subr.bf16.mxu0 0
        %4196 = vmatpush2.bf16.msra.mxu0 0
        %4197 = vmatprep.subr.bf16.mxu0 0
        %4198 = vmatpush2.bf16.msra.mxu0 0
        %4199 = vmatprep.subr.bf16.mxu0 0
        %4200 = vmatpush2.bf16.msra.mxu0 0
        %4201 = vmatprep.subr.bf16.mxu0 0
        %4202 = vmatpush2.bf16.msra.mxu0 0
        %4203 = vmatprep.subr.bf16.mxu0 0
        %4204 = vmatpush2.bf16.msra.mxu0 0
        %4205 = vmatprep.subr.bf16.mxu0 0
        %4206 = vmatpush2.bf16.msra.mxu0 0
        %4207 = vmatprep.subr.bf16.mxu0 0
        %4208 = vmatpush2.bf16.msra.mxu0 0
        %4209 = vmatprep.mubr.bf16.mxu0 0
        %4210 = vmatmul.mubr.bf16.gmra.mxu0 %v4175
        %v4211 = vpop.f32.mrf.mxu0
        %v4212 = vadd.f32 %v4127, %v4211
        %v4213 = vpop.f32.mrf.mxu0
        %v4214 = vadd.f32 %v4131, %v4213
        %v4215 = vpop.f32.mrf.mxu0
        %v4216 = vpop.f32.mrf.mxu0
        %4217 = vdwg.mxu0
        %v4218 = vmul.f32 %v4212, %v4212
        %v4219 = vmul.f32 %v4214, %v4214
        %v4220 = vmul.f32 %v4212, %v4218
        %v4221 = vmul.f32 %v4214, %v4219
        %v4222 = vmul.f32 %v4220, 0.044715
        %v4223 = vmul.f32 %v4221, 0.044715
        %v4224 = vadd.f32 %v4212, %v4222
        %v4225 = vadd.f32 %v4214, %v4223
        %v4226 = vmul.f32 %v4224, 0.7978846
        %v4227 = vmul.f32 %v4225, 0.7978846
        %v4228 = vtanh.pop %v4226
        %v4229 = vtanh.pop %v4227
        %v4230 = vadd.f32 %v4228, 1.0
        %v4231 = vadd.f32 %v4229, 1.0
        %v4232 = vmul.f32 %v4230, 0.5
        %v4233 = vmul.f32 %v4231, 0.5
        %v4234 = vmul.f32 %v4212, %v4232
        %v4235 = vmul.f32 %v4214, %v4233
        %v4236 = vpack.c.bf16 %v4234, %v4234
        %v4237 = vpack.c.bf16 %v4235, %v4235
        %v4238 = vld [vmem:[%s67] sm:$0xf]
        %v4239 = vld [vmem:[%s67 + $0x4] sm:$0xf]
        %v4240 = vld [vmem:[%s67 + $0x8] sm:$0xf]
        %v4241 = vld [vmem:[%s67 + $0xc] sm:$0xf]
        %v4242 = vld [vmem:[%s67 + $0x10] sm:$0xf]
        %v4243 = vld [vmem:[%s67 + $0x14] sm:$0xf]
        %v4244 = vld [vmem:[%s67 + $0x18] sm:$0xf]
        %v4245 = vld [vmem:[%s67 + $0x1c] sm:$0xf]
        %v4246 = vld [vmem:[%s67 + $0x20] sm:$0xf]
        %v4247 = vld [vmem:[%s67 + $0x24] sm:$0xf]
        %v4248 = vld [vmem:[%s67 + $0x28] sm:$0xf]
        %v4249 = vld [vmem:[%s67 + $0x2c] sm:$0xf]
        %v4250 = vld [vmem:[%s67 + $0x30] sm:$0xf]
        %v4251 = vld [vmem:[%s67 + $0x34] sm:$0xf]
        %v4252 = vld [vmem:[%s67 + $0x38] sm:$0xf]
        %v4253 = vld [vmem:[%s67 + $0x3c] sm:$0xf]
        %v4254 = vld [vmem:[%s67 + $0x40] sm:$0xf]
        %v4255 = vld [vmem:[%s67 + $0x44] sm:$0xf]
        %v4256 = vld [vmem:[%s67 + $0x48] sm:$0xf]
        %v4257 = vld [vmem:[%s67 + $0x4c] sm:$0xf]
        %v4258 = vld [vmem:[%s67 + $0x50] sm:$0xf]
        %v4259 = vld [vmem:[%s67 + $0x54] sm:$0xf]
        %v4260 = vld [vmem:[%s67 + $0x58] sm:$0xf]
        %v4261 = vld [vmem:[%s67 + $0x5c] sm:$0xf]
        %v4262 = vld [vmem:[%s67 + $0x60] sm:$0xf]
        %v4263 = vld [vmem:[%s67 + $0x64] sm:$0xf]
        %v4264 = vld [vmem:[%s67 + $0x68] sm:$0xf]
        %v4265 = vld [vmem:[%s67 + $0x6c] sm:$0xf]
        %v4266 = vld [vmem:[%s67 + $0x70] sm:$0xf]
        %v4267 = vld [vmem:[%s67 + $0x74] sm:$0xf]
        %v4268 = vld [vmem:[%s67 + $0x78] sm:$0xf]
        %v4269 = vld [vmem:[%s67 + $0x7c] sm:$0xf]
        %v4270 = vld [vmem:[%s69] sm:$0x1]
        %v4272 = vlaneseq
        %v4273 = vshrl.u32 %v4272, 7
        %v4274 = vsub.s32 0, %v4273
        %v4275 = vrot.slane %v4270, %v4274
        %v4309 = vunpack.c.l.b16 %v4238
        %v4310 = vunpack.c.l.b16 %v4239
        %v4311 = vunpack.c.l.b16 %v4240
        %v4312 = vunpack.c.l.b16 %v4241
        %v4313 = vunpack.c.l.b16 %v4242
        %v4314 = vunpack.c.l.b16 %v4243
        %v4315 = vunpack.c.l.b16 %v4244
        %v4316 = vunpack.c.l.b16 %v4245
        %v4317 = vunpack.c.l.b16 %v4246
        %v4318 = vunpack.c.l.b16 %v4247
        %v4319 = vunpack.c.l.b16 %v4248
        %v4320 = vunpack.c.l.b16 %v4249
        %v4321 = vunpack.c.l.b16 %v4250
        %v4322 = vunpack.c.l.b16 %v4251
        %v4323 = vunpack.c.l.b16 %v4252
        %v4324 = vunpack.c.l.b16 %v4253
        %v4325 = vunpack.c.l.b16 %v4254
        %v4326 = vunpack.c.l.b16 %v4255
        %v4327 = vunpack.c.l.b16 %v4256
        %v4328 = vunpack.c.l.b16 %v4257
        %v4329 = vunpack.c.l.b16 %v4258
        %v4330 = vunpack.c.l.b16 %v4259
        %v4331 = vunpack.c.l.b16 %v4260
        %v4332 = vunpack.c.l.b16 %v4261
        %v4333 = vunpack.c.l.b16 %v4262
        %v4334 = vunpack.c.l.b16 %v4263
        %v4335 = vunpack.c.l.b16 %v4264
        %v4336 = vunpack.c.l.b16 %v4265
        %v4337 = vunpack.c.l.b16 %v4266
        %v4338 = vunpack.c.l.b16 %v4267
        %v4339 = vunpack.c.l.b16 %v4268
        %v4340 = vunpack.c.l.b16 %v4269
        %v4341 = vpack.c.b16 %v4310, %v4309
        %v4342 = vpack.c.b16 %v4312, %v4311
        %v4343 = vpack.c.b16 %v4314, %v4313
        %v4344 = vpack.c.b16 %v4316, %v4315
        %v4345 = vpack.c.b16 %v4318, %v4317
        %v4346 = vpack.c.b16 %v4320, %v4319
        %v4347 = vpack.c.b16 %v4322, %v4321
        %v4348 = vpack.c.b16 %v4324, %v4323
        %v4349 = vpack.c.b16 %v4326, %v4325
        %v4350 = vpack.c.b16 %v4328, %v4327
        %v4351 = vpack.c.b16 %v4330, %v4329
        %v4352 = vpack.c.b16 %v4332, %v4331
        %v4353 = vpack.c.b16 %v4334, %v4333
        %v4354 = vpack.c.b16 %v4336, %v4335
        %v4355 = vpack.c.b16 %v4338, %v4337
        %v4356 = vpack.c.b16 %v4340, %v4339
        %4373 = vmatprep.subr.bf16.mxu0 0
        %4374 = vmatpush1.bf16.msra.mxu0 %v4348
        %4375 = vmatprep.subr.bf16.mxu0 0
        %4376 = vmatpush1.bf16.msra.mxu0 %v4347
        %4377 = vmatprep.subr.bf16.mxu0 0
        %4378 = vmatpush1.bf16.msra.mxu0 %v4346
        %4379 = vmatprep.subr.bf16.mxu0 0
        %4380 = vmatpush1.bf16.msra.mxu0 %v4345
        %4381 = vmatprep.subr.bf16.mxu0 0
        %4382 = vmatpush1.bf16.msra.mxu0 %v4344
        %4383 = vmatprep.subr.bf16.mxu0 0
        %4384 = vmatpush1.bf16.msra.mxu0 %v4343
        %4385 = vmatprep.subr.bf16.mxu0 0
        %4386 = vmatpush1.bf16.msra.mxu0 %v4342
        %4387 = vmatprep.subr.bf16.mxu0 0
        %4388 = vmatpush1.bf16.msra.mxu0 %v4341
        %4389 = vmatprep.subr.bf16.mxu0 0
        %4390 = vmatpush2.bf16.msra.mxu0 %v4356
        %4391 = vmatprep.subr.bf16.mxu0 0
        %4392 = vmatpush2.bf16.msra.mxu0 %v4355
        %4393 = vmatprep.subr.bf16.mxu0 0
        %4394 = vmatpush2.bf16.msra.mxu0 %v4354
        %4395 = vmatprep.subr.bf16.mxu0 0
        %4396 = vmatpush2.bf16.msra.mxu0 %v4353
        %4397 = vmatprep.subr.bf16.mxu0 0
        %4398 = vmatpush2.bf16.msra.mxu0 %v4352
        %4399 = vmatprep.subr.bf16.mxu0 0
        %4400 = vmatpush2.bf16.msra.mxu0 %v4351
        %4401 = vmatprep.subr.bf16.mxu0 0
        %4402 = vmatpush2.bf16.msra.mxu0 %v4350
        %4403 = vmatprep.subr.bf16.mxu0 0
        %4404 = vmatpush2.bf16.msra.mxu0 %v4349
        %4405 = vmatprep.mubr.bf16.mxu0 %v4237
        %4406 = vmatmul.mubr.bf16.gmra.mxu0 %v4236
        %v4407 = vpop.f32.mrf.mxu0
        %v4408 = vadd.f32 %v4275, %v4407
        %v4409 = vpop.f32.mrf.mxu0
        %v4410 = vpop.f32.mrf.mxu0
        %v4411 = vpop.f32.mrf.mxu0
        %4412 = vdwg.mxu0
        %v4413 = vld [vmem:[%s71] sm:$0x1]
        %v4414 = vld [vmem:[%s73] sm:$0x1]
        %v4415 = vsel %vm3282, %v4408, 0.0
        %4416 = vadd.xlane.f32.xlu0 %v4415
        %v4417 = vpop.xlane.xlu0 %4416
        %v4418 = vmul.f32 %v4417, %v3286
        %v4419 = vsub.f32 %v4408, %v4418
        %v4420 = vmul.f32 %v4419, %v4419
        %v4421 = vsel %vm3282, %v4420, 0.0
        %4422 = vadd.xlane.f32.xlu0 %v4421
        %v4423 = vpop.xlane.xlu0 %4422
        %v4424 = vmul.f32 %v4423, %v3286
        %v4425 = vadd.f32 %v4424, 1e-05
        %v4426 = vrsqrt.pop %v4425
        %v4427 = vmul.f32 %v4419, %v4426
        %v4429 = vlaneseq
        %v4430 = vshrl.u32 %v4429, 7
        %v4431 = vsub.s32 0, %v4430
        %v4432 = vrot.slane %v4413, %v4431
        %v4434 = vmul.f32 %v4427, %v4432
        %v4436 = vlaneseq
        %v4437 = vshrl.u32 %v4436, 7
        %v4438 = vsub.s32 0, %v4437
        %v4439 = vrot.slane %v4414, %v4438
        %v4441 = vadd.f32 %v4434, %v4439
        %v4442 = vadd.f32 %v4112, %v4441
        %v4443 = vpack.c.bf16 %v4442, %v4442
        %s4444 = scalar_lea.vmem %s47, 64
        %v4445 = vld [vmem:[%s4444] sm:$0xff]
        %v4446 = vld [vmem:[%s4444 + $0x8] sm:$0xff]
        %v4447 = vld [vmem:[%s4444 + $0x10] sm:$0xff]
        %v4448 = vld [vmem:[%s4444 + $0x18] sm:$0xff]
        %v4449 = vld [vmem:[%s4444 + $0x20] sm:$0xff]
        %v4450 = vld [vmem:[%s4444 + $0x28] sm:$0xff]
        %v4451 = vld [vmem:[%s4444 + $0x30] sm:$0xff]
        %v4452 = vld [vmem:[%s4444 + $0x38] sm:$0xff]
        %s4453 = scalar_lea.vmem %s49, 2
        %v4454 = vld [vmem:[%s4453] sm:$0x3]
        %v4456 = vlaneseq
        %v4457 = vshrl.u32 %v4456, 7
        %v4458 = vsub.s32 0, %v4457
        %v4459 = vrot.slane %v4454, %v4458
        %v4460 = vlaneseq
        %v4461 = vshrl.u32 %v4460, 7
        %v4462 = vsub.s32 1, %v4461
        %v4463 = vrot.slane %v4454, %v4462
        %v4474 = vunpack.c.l.b16 %v4445
        %v4475 = vunpack.c.h.b16 %v4445
        %v4476 = vunpack.c.l.b16 %v4446
        %v4477 = vunpack.c.h.b16 %v4446
        %v4478 = vunpack.c.l.b16 %v4447
        %v4479 = vunpack.c.h.b16 %v4447
        %v4480 = vunpack.c.l.b16 %v4448
        %v4481 = vunpack.c.h.b16 %v4448
        %v4482 = vunpack.c.l.b16 %v4449
        %v4483 = vunpack.c.h.b16 %v4449
        %v4484 = vunpack.c.l.b16 %v4450
        %v4485 = vunpack.c.h.b16 %v4450
        %v4486 = vunpack.c.l.b16 %v4451
        %v4487 = vunpack.c.h.b16 %v4451
        %v4488 = vunpack.c.l.b16 %v4452
        %v4489 = vunpack.c.h.b16 %v4452
        %v4490 = vpack.c.b16 %v4476, %v4474
        %v4491 = vpack.c.b16 %v4477, %v4475
        %v4492 = vpack.c.b16 %v4480, %v4478
        %v4493 = vpack.c.b16 %v4481, %v4479
        %v4494 = vpack.c.b16 %v4484, %v4482
        %v4495 = vpack.c.b16 %v4485, %v4483
        %v4496 = vpack.c.b16 %v4488, %v4486
        %v4497 = vpack.c.b16 %v4489, %v4487
        %v4507 = vsel %vm1279, %v4443, 0
        %4509 = vmatprep.subr.bf16.mxu0 0
        %4510 = vmatpush1.bf16.msra.mxu0 0
        %4511 = vmatprep.subr.bf16.mxu0 0
        %4512 = vmatpush1.bf16.msra.mxu0 0
        %4513 = vmatprep.subr.bf16.mxu0 0
        %4514 = vmatpush1.bf16.msra.mxu0 0
        %4515 = vmatprep.subr.bf16.mxu0 0
        %4516 = vmatpush1.bf16.msra.mxu0 0
        %4517 = vmatprep.subr.bf16.mxu0 %v4497
        %4518 = vmatpush1.bf16.msra.mxu0 %v4496
        %4519 = vmatprep.subr.bf16.mxu0 %v4495
        %4520 = vmatpush1.bf16.msra.mxu0 %v4494
        %4521 = vmatprep.subr.bf16.mxu0 %v4493
        %4522 = vmatpush1.bf16.msra.mxu0 %v4492
        %4523 = vmatprep.subr.bf16.mxu0 %v4491
        %4524 = vmatpush1.bf16.msra.mxu0 %v4490
        %4525 = vmatprep.subr.bf16.mxu0 0
        %4526 = vmatpush2.bf16.msra.mxu0 0
        %4527 = vmatprep.subr.bf16.mxu0 0
        %4528 = vmatpush2.bf16.msra.mxu0 0
        %4529 = vmatprep.subr.bf16.mxu0 0
        %4530 = vmatpush2.bf16.msra.mxu0 0
        %4531 = vmatprep.subr.bf16.mxu0 0
        %4532 = vmatpush2.bf16.msra.mxu0 0
        %4533 = vmatprep.subr.bf16.mxu0 0
        %4534 = vmatpush2.bf16.msra.mxu0 0
        %4535 = vmatprep.subr.bf16.mxu0 0
        %4536 = vmatpush2.bf16.msra.mxu0 0
        %4537 = vmatprep.subr.bf16.mxu0 0
        %4538 = vmatpush2.bf16.msra.mxu0 0
        %4539 = vmatprep.subr.bf16.mxu0 0
        %4540 = vmatpush2.bf16.msra.mxu0 0
        %4541 = vmatprep.mubr.bf16.mxu0 0
        %4542 = vmatmul.mubr.bf16.gmra.mxu0 %v4507
        %v4543 = vpop.f32.mrf.mxu0
        %v4544 = vadd.f32 %v4459, %v4543
        %v4545 = vpop.f32.mrf.mxu0
        %v4546 = vadd.f32 %v4463, %v4545
        %v4547 = vpop.f32.mrf.mxu0
        %v4548 = vpop.f32.mrf.mxu0
        %4549 = vdwg.mxu0
        %4551 = vrot.lane.b32.xlu0 %v4544, 112
        %v4552 = vpop.permute.xlu0 %4551
        %4554 = vrot.lane.b32.xlu0 %v4544, 96
        %v4555 = vpop.permute.xlu0 %4554
        %4557 = vrot.lane.b32.xlu0 %v4544, 80
        %v4558 = vpop.permute.xlu0 %4557
        %4561 = vrot.lane.b32.xlu0 %v4546, 112
        %v4562 = vpop.permute.xlu0 %4561
        %4564 = vrot.lane.b32.xlu0 %v4546, 96
        %v4565 = vpop.permute.xlu0 %4564
        %4567 = vrot.lane.b32.xlu0 %v4546, 80
        %v4568 = vpop.permute.xlu0 %4567
        %v4570 = vmul.f32 %v4544, %v4544
        %v4571 = vmul.f32 %v4552, %v4552
        %v4572 = vmul.f32 %v4555, %v4555
        %v4573 = vmul.f32 %v4558, %v4558
        %v4574 = vsel %vm3440, %v4570, 0.0
        %4575 = vadd.xlane.f32.xlu0 %v4574
        %v4576 = vpop.xlane.xlu0 %4575
        %v4577 = vsel %vm3440, %v4571, 0.0
        %4578 = vadd.xlane.f32.xlu0 %v4577
        %v4579 = vpop.xlane.xlu0 %4578
        %v4580 = vsel %vm3440, %v4572, 0.0
        %4581 = vadd.xlane.f32.xlu0 %v4580
        %v4582 = vpop.xlane.xlu0 %4581
        %v4583 = vsel %vm3440, %v4573, 0.0
        %4584 = vadd.xlane.f32.xlu0 %v4583
        %v4585 = vpop.xlane.xlu0 %4584
        %v4586 = vmax.f32 %v4576, 1e-24
        %v4587 = vmax.f32 %v4579, 1e-24
        %v4588 = vmax.f32 %v4582, 1e-24
        %v4589 = vmax.f32 %v4585, 1e-24
        %v4590 = vrsqrt.pop %v4586
        %v4591 = vrsqrt.pop %v4587
        %v4592 = vrsqrt.pop %v4588
        %v4593 = vrsqrt.pop %v4589
        %v4594 = vmul.f32 %v4544, %v4590
        %v4595 = vmul.f32 %v4552, %v4591
        %v4596 = vmul.f32 %v4555, %v4592
        %v4597 = vmul.f32 %v4558, %v4593
        %4602 = vrot.lane.b32.xlu0 %v4570, 64
        %v4603 = vpop.permute.xlu0 %4602
        %4604 = vrot.lane.b32.xlu0 %v4571, 64
        %v4605 = vpop.permute.xlu0 %4604
        %4606 = vrot.lane.b32.xlu0 %v4572, 64
        %v4607 = vpop.permute.xlu0 %4606
        %4608 = vrot.lane.b32.xlu0 %v4573, 64
        %v4609 = vpop.permute.xlu0 %4608
        %v4614 = vsel %vm3440, %v4603, 0.0
        %4615 = vadd.xlane.f32.xlu0 %v4614
        %v4616 = vpop.xlane.xlu0 %4615
        %v4617 = vsel %vm3440, %v4605, 0.0
        %4618 = vadd.xlane.f32.xlu0 %v4617
        %v4619 = vpop.xlane.xlu0 %4618
        %v4620 = vsel %vm3440, %v4607, 0.0
        %4621 = vadd.xlane.f32.xlu0 %v4620
        %v4622 = vpop.xlane.xlu0 %4621
        %v4623 = vsel %vm3440, %v4609, 0.0
        %4624 = vadd.xlane.f32.xlu0 %v4623
        %v4625 = vpop.xlane.xlu0 %4624
        %v4626 = vmax.f32 %v4616, 1e-24
        %v4627 = vmax.f32 %v4619, 1e-24
        %v4628 = vmax.f32 %v4622, 1e-24
        %v4629 = vmax.f32 %v4625, 1e-24
        %v4630 = vrsqrt.pop %v4626
        %v4631 = vrsqrt.pop %v4627
        %v4632 = vrsqrt.pop %v4628
        %v4633 = vrsqrt.pop %v4629
        %v4634 = vmul.f32 %v4544, %v4630
        %v4635 = vmul.f32 %v4552, %v4631
        %v4636 = vmul.f32 %v4555, %v4632
        %v4637 = vmul.f32 %v4558, %v4633
        %v4638 = vpack.c.bf16 %v4594, %v4594
        %v4639 = vpack.c.bf16 %v4595, %v4595
        %v4640 = vpack.c.bf16 %v4596, %v4596
        %v4641 = vpack.c.bf16 %v4597, %v4597
        %v4642 = vpack.c.bf16 %v4634, %v4634
        %v4643 = vpack.c.bf16 %v4635, %v4635
        %v4644 = vpack.c.bf16 %v4636, %v4636
        %v4645 = vpack.c.bf16 %v4637, %v4637
        %4647 = vrot.lane.b32.xlu0 %v4642, 64
        %v4648 = vpop.permute.xlu0 %4647
        %v4650 = vsel %vm1450, %v4638, 0
        %v4653 = vsel %vm1450, %v4648, 0
        %4655 = vmatprep.subr.bf16.mxu0 0
        %4656 = vmatpush1.bf16.xpose.msra.mxu0 0
        %4657 = vmatprep.subr.bf16.mxu0 0
        %4658 = vmatpush1.bf16.xpose.msra.mxu0 0
        %4659 = vmatprep.subr.bf16.mxu0 0
        %4660 = vmatpush1.bf16.xpose.msra.mxu0 0
        %4661 = vmatprep.subr.bf16.mxu0 0
        %4662 = vmatpush1.bf16.xpose.msra.mxu0 0
        %4663 = vmatprep.subr.bf16.mxu0 0
        %4664 = vmatpush1.bf16.xpose.msra.mxu0 0
        %4665 = vmatprep.subr.bf16.mxu0 0
        %4666 = vmatpush1.bf16.xpose.msra.mxu0 0
        %4667 = vmatprep.subr.bf16.mxu0 0
        %4668 = vmatpush1.bf16.xpose.msra.mxu0 0
        %4669 = vmatprep.subr.bf16.mxu0 0
        %4670 = vmatpush1.bf16.xpose.msra.mxu0 %v4653
        %4671 = vmatprep.subr.bf16.mxu0 0
        %4672 = vmatpush2.bf16.xpose.msra.mxu0 0
        %4673 = vmatprep.subr.bf16.mxu0 0
        %4674 = vmatpush2.bf16.xpose.msra.mxu0 0
        %4675 = vmatprep.subr.bf16.mxu0 0
        %4676 = vmatpush2.bf16.xpose.msra.mxu0 0
        %4677 = vmatprep.subr.bf16.mxu0 0
        %4678 = vmatpush2.bf16.xpose.msra.mxu0 0
        %4679 = vmatprep.subr.bf16.mxu0 0
        %4680 = vmatpush2.bf16.xpose.msra.mxu0 0
        %4681 = vmatprep.subr.bf16.mxu0 0
        %4682 = vmatpush2.bf16.xpose.msra.mxu0 0
        %4683 = vmatprep.subr.bf16.mxu0 0
        %4684 = vmatpush2.bf16.xpose.msra.mxu0 0
        %4685 = vmatprep.subr.bf16.mxu0 0
        %4686 = vmatpush2.bf16.xpose.msra.mxu0 0
        %4687 = vmatprep.mubr.bf16.mxu0 0
        %4688 = vmatmul.mubr.bf16.gmra.mxu0 %v4650
        %v4689 = vpop.f32.mrf.mxu0
        %v4690 = vadd.f32 0.0, %v4689
        %v4691 = vpop.f32.mrf.mxu0
        %v4692 = vpop.f32.mrf.mxu0
        %v4693 = vpop.f32.mrf.mxu0
        %4694 = vdwg.mxu0
        %4696 = vrot.lane.b32.xlu0 %v4643, 64
        %v4697 = vpop.permute.xlu0 %4696
        %v4699 = vsel %vm1450, %v4639, 0
        %v4702 = vsel %vm1450, %v4697, 0
        %4704 = vmatprep.subr.bf16.mxu0 0
        %4705 = vmatpush1.bf16.xpose.msra.mxu0 0
        %4706 = vmatprep.subr.bf16.mxu0 0
        %4707 = vmatpush1.bf16.xpose.msra.mxu0 0
        %4708 = vmatprep.subr.bf16.mxu0 0
        %4709 = vmatpush1.bf16.xpose.msra.mxu0 0
        %4710 = vmatprep.subr.bf16.mxu0 0
        %4711 = vmatpush1.bf16.xpose.msra.mxu0 0
        %4712 = vmatprep.subr.bf16.mxu0 0
        %4713 = vmatpush1.bf16.xpose.msra.mxu0 0
        %4714 = vmatprep.subr.bf16.mxu0 0
        %4715 = vmatpush1.bf16.xpose.msra.mxu0 0
        %4716 = vmatprep.subr.bf16.mxu0 0
        %4717 = vmatpush1.bf16.xpose.msra.mxu0 0
        %4718 = vmatprep.subr.bf16.mxu0 0
        %4719 = vmatpush1.bf16.xpose.msra.mxu0 %v4702
        %4720 = vmatprep.subr.bf16.mxu0 0
        %4721 = vmatpush2.bf16.xpose.msra.mxu0 0
        %4722 = vmatprep.subr.bf16.mxu0 0
        %4723 = vmatpush2.bf16.xpose.msra.mxu0 0
        %4724 = vmatprep.subr.bf16.mxu0 0
        %4725 = vmatpush2.bf16.xpose.msra.mxu0 0
        %4726 = vmatprep.subr.bf16.mxu0 0
        %4727 = vmatpush2.bf16.xpose.msra.mxu0 0
        %4728 = vmatprep.subr.bf16.mxu0 0
        %4729 = vmatpush2.bf16.xpose.msra.mxu0 0
        %4730 = vmatprep.subr.bf16.mxu0 0
        %4731 = vmatpush2.bf16.xpose.msra.mxu0 0
        %4732 = vmatprep.subr.bf16.mxu0 0
        %4733 = vmatpush2.bf16.xpose.msra.mxu0 0
        %4734 = vmatprep.subr.bf16.mxu0 0
        %4735 = vmatpush2.bf16.xpose.msra.mxu0 0
        %4736 = vmatprep.mubr.bf16.mxu0 0
        %4737 = vmatmul.mubr.bf16.gmra.mxu0 %v4699
        %v4738 = vpop.f32.mrf.mxu0
        %v4739 = vadd.f32 0.0, %v4738
        %v4740 = vpop.f32.mrf.mxu0
        %v4741 = vpop.f32.mrf.mxu0
        %v4742 = vpop.f32.mrf.mxu0
        %4743 = vdwg.mxu0
        %4745 = vrot.lane.b32.xlu0 %v4644, 64
        %v4746 = vpop.permute.xlu0 %4745
        %v4748 = vsel %vm1450, %v4640, 0
        %v4751 = vsel %vm1450, %v4746, 0
        %4753 = vmatprep.subr.bf16.mxu0 0
        %4754 = vmatpush1.bf16.xpose.msra.mxu0 0
        %4755 = vmatprep.subr.bf16.mxu0 0
        %4756 = vmatpush1.bf16.xpose.msra.mxu0 0
        %4757 = vmatprep.subr.bf16.mxu0 0
        %4758 = vmatpush1.bf16.xpose.msra.mxu0 0
        %4759 = vmatprep.subr.bf16.mxu0 0
        %4760 = vmatpush1.bf16.xpose.msra.mxu0 0
        %4761 = vmatprep.subr.bf16.mxu0 0
        %4762 = vmatpush1.bf16.xpose.msra.mxu0 0
        %4763 = vmatprep.subr.bf16.mxu0 0
        %4764 = vmatpush1.bf16.xpose.msra.mxu0 0
        %4765 = vmatprep.subr.bf16.mxu0 0
        %4766 = vmatpush1.bf16.xpose.msra.mxu0 0
        %4767 = vmatprep.subr.bf16.mxu0 0
        %4768 = vmatpush1.bf16.xpose.msra.mxu0 %v4751
        %4769 = vmatprep.subr.bf16.mxu0 0
        %4770 = vmatpush2.bf16.xpose.msra.mxu0 0
        %4771 = vmatprep.subr.bf16.mxu0 0
        %4772 = vmatpush2.bf16.xpose.msra.mxu0 0
        %4773 = vmatprep.subr.bf16.mxu0 0
        %4774 = vmatpush2.bf16.xpose.msra.mxu0 0
        %4775 = vmatprep.subr.bf16.mxu0 0
        %4776 = vmatpush2.bf16.xpose.msra.mxu0 0
        %4777 = vmatprep.subr.bf16.mxu0 0
        %4778 = vmatpush2.bf16.xpose.msra.mxu0 0
        %4779 = vmatprep.subr.bf16.mxu0 0
        %4780 = vmatpush2.bf16.xpose.msra.mxu0 0
        %4781 = vmatprep.subr.bf16.mxu0 0
        %4782 = vmatpush2.bf16.xpose.msra.mxu0 0
        %4783 = vmatprep.subr.bf16.mxu0 0
        %4784 = vmatpush2.bf16.xpose.msra.mxu0 0
        %4785 = vmatprep.mubr.bf16.mxu0 0
        %4786 = vmatmul.mubr.bf16.gmra.mxu0 %v4748
        %v4787 = vpop.f32.mrf.mxu0
        %v4788 = vadd.f32 0.0, %v4787
        %v4789 = vpop.f32.mrf.mxu0
        %v4790 = vpop.f32.mrf.mxu0
        %v4791 = vpop.f32.mrf.mxu0
        %4792 = vdwg.mxu0
        %4794 = vrot.lane.b32.xlu0 %v4645, 64
        %v4795 = vpop.permute.xlu0 %4794
        %v4797 = vsel %vm1450, %v4641, 0
        %v4800 = vsel %vm1450, %v4795, 0
        %4802 = vmatprep.subr.bf16.mxu0 0
        %4803 = vmatpush1.bf16.xpose.msra.mxu0 0
        %4804 = vmatprep.subr.bf16.mxu0 0
        %4805 = vmatpush1.bf16.xpose.msra.mxu0 0
        %4806 = vmatprep.subr.bf16.mxu0 0
        %4807 = vmatpush1.bf16.xpose.msra.mxu0 0
        %4808 = vmatprep.subr.bf16.mxu0 0
        %4809 = vmatpush1.bf16.xpose.msra.mxu0 0
        %4810 = vmatprep.subr.bf16.mxu0 0
        %4811 = vmatpush1.bf16.xpose.msra.mxu0 0
        %4812 = vmatprep.subr.bf16.mxu0 0
        %4813 = vmatpush1.bf16.xpose.msra.mxu0 0
        %4814 = vmatprep.subr.bf16.mxu0 0
        %4815 = vmatpush1.bf16.xpose.msra.mxu0 0
        %4816 = vmatprep.subr.bf16.mxu0 0
        %4817 = vmatpush1.bf16.xpose.msra.mxu0 %v4800
        %4818 = vmatprep.subr.bf16.mxu0 0
        %4819 = vmatpush2.bf16.xpose.msra.mxu0 0
        %4820 = vmatprep.subr.bf16.mxu0 0
        %4821 = vmatpush2.bf16.xpose.msra.mxu0 0
        %4822 = vmatprep.subr.bf16.mxu0 0
        %4823 = vmatpush2.bf16.xpose.msra.mxu0 0
        %4824 = vmatprep.subr.bf16.mxu0 0
        %4825 = vmatpush2.bf16.xpose.msra.mxu0 0
        %4826 = vmatprep.subr.bf16.mxu0 0
        %4827 = vmatpush2.bf16.xpose.msra.mxu0 0
        %4828 = vmatprep.subr.bf16.mxu0 0
        %4829 = vmatpush2.bf16.xpose.msra.mxu0 0
        %4830 = vmatprep.subr.bf16.mxu0 0
        %4831 = vmatpush2.bf16.xpose.msra.mxu0 0
        %4832 = vmatprep.subr.bf16.mxu0 0
        %4833 = vmatpush2.bf16.xpose.msra.mxu0 0
        %4834 = vmatprep.mubr.bf16.mxu0 0
        %4835 = vmatmul.mubr.bf16.gmra.mxu0 %v4797
        %v4836 = vpop.f32.mrf.mxu0
        %v4837 = vadd.f32 0.0, %v4836
        %v4838 = vpop.f32.mrf.mxu0
        %v4839 = vpop.f32.mrf.mxu0
        %v4840 = vpop.f32.mrf.mxu0
        %4841 = vdwg.mxu0
        %s4842 = scalar_lea.vmem %s55, 16
        %v4843 = vld [vmem:[%s4842] sm:$0xf]
        %v4844 = vld [vmem:[%s4842 + $0x4] sm:$0xf]
        %v4845 = vld [vmem:[%s4842 + $0x8] sm:$0xf]
        %v4846 = vld [vmem:[%s4842 + $0xc] sm:$0xf]
        %4848 = vset.pattern.permute.xlu0 0
        %4849 = vperm.xlu0 %4848, %v4843
        %v4850 = vpop.permute.xlu0 %4849
        %4853 = vset.pattern.permute.xlu0 0
        %4854 = vperm.xlu0 %4853, %v4844
        %v4855 = vpop.permute.xlu0 %4854
        %4858 = vset.pattern.permute.xlu0 0
        %4859 = vperm.xlu0 %4858, %v4845
        %v4860 = vpop.permute.xlu0 %4859
        %4863 = vset.pattern.permute.xlu0 0
        %4864 = vperm.xlu0 %4863, %v4846
        %v4865 = vpop.permute.xlu0 %4864
        %v4867 = vmul.f32 %v4690, %v4850
        %v4868 = vmul.f32 %v4739, %v4855
        %v4869 = vmul.f32 %v4788, %v4860
        %v4870 = vmul.f32 %v4837, %v4865
        %s4871 = scalar_lea.vmem %s57, 16
        %v4872 = vld [vmem:[%s4871] sm:$0xf]
        %v4873 = vld [vmem:[%s4871 + $0x4] sm:$0xf]
        %v4874 = vld [vmem:[%s4871 + $0x8] sm:$0xf]
        %v4875 = vld [vmem:[%s4871 + $0xc] sm:$0xf]
        %v4876 = vadd.f32 %v4867, %v4872
        %v4877 = vadd.f32 %v4868, %v4873
        %v4878 = vadd.f32 %v4869, %v4874
        %v4879 = vadd.f32 %v4870, %v4875
        %v4880 = vsel %vm3745, %v4876, -inf
        %4881 = vmax.xlane.f32.xlu0 %v4880
        %v4882 = vpop.xlane.xlu0 %4881
        %v4883 = vsel %vm3745, %v4877, -inf
        %4884 = vmax.xlane.f32.xlu0 %v4883
        %v4885 = vpop.xlane.xlu0 %4884
        %v4886 = vsel %vm3745, %v4878, -inf
        %4887 = vmax.xlane.f32.xlu0 %v4886
        %v4888 = vpop.xlane.xlu0 %4887
        %v4889 = vsel %vm3745, %v4879, -inf
        %4890 = vmax.xlane.f32.xlu0 %v4889
        %v4891 = vpop.xlane.xlu0 %4890
        %v4892 = vsub.f32 %v4876, %v4882
        %v4893 = vsub.f32 %v4877, %v4885
        %v4894 = vsub.f32 %v4878, %v4888
        %v4895 = vsub.f32 %v4879, %v4891
        %v4896 = vmul.f32 %v4892, 1.442695
        %v4897 = vpow.pop %v4896
        %v4898 = vmul.f32 %v4893, 1.442695
        %v4899 = vpow.pop %v4898
        %v4900 = vmul.f32 %v4894, 1.442695
        %v4901 = vpow.pop %v4900
        %v4902 = vmul.f32 %v4895, 1.442695
        %v4903 = vpow.pop %v4902
        %v4904 = vsel %vm3745, %v4897, 0.0
        %4905 = vadd.xlane.f32.xlu0 %v4904
        %v4906 = vpop.xlane.xlu0 %4905
        %v4907 = vsel %vm3745, %v4899, 0.0
        %4908 = vadd.xlane.f32.xlu0 %v4907
        %v4909 = vpop.xlane.xlu0 %4908
        %v4910 = vsel %vm3745, %v4901, 0.0
        %4911 = vadd.xlane.f32.xlu0 %v4910
        %v4912 = vpop.xlane.xlu0 %4911
        %v4913 = vsel %vm3745, %v4903, 0.0
        %4914 = vadd.xlane.f32.xlu0 %v4913
        %v4915 = vpop.xlane.xlu0 %4914
        %v4916 = vrcp.pop %v4906
        %v4917 = vrcp.pop %v4909
        %v4918 = vrcp.pop %v4912
        %v4919 = vrcp.pop %v4915
        %v4920 = vmul.f32 %v4897, %v4916
        %v4921 = vmul.f32 %v4899, %v4917
        %v4922 = vmul.f32 %v4901, %v4918
        %v4923 = vmul.f32 %v4903, %v4919
        %v4924 = vpack.c.bf16 %v4920, %v4920
        %v4925 = vpack.c.bf16 %v4921, %v4921
        %v4926 = vpack.c.bf16 %v4922, %v4922
        %v4927 = vpack.c.bf16 %v4923, %v4923
        %v4928 = vpack.c.bf16 %v4546, %v4546
        %v4929 = vpack.c.bf16 %v4562, %v4562
        %v4930 = vpack.c.bf16 %v4565, %v4565
        %v4931 = vpack.c.bf16 %v4568, %v4568
        %v4933 = vsel %vm3798, %v4924, 0
        %v4936 = vsel %vm3802, %v4928, 0
        %4938 = vmatprep.subr.bf16.mxu0 0
        %4939 = vmatpush1.bf16.msra.mxu0 0
        %4940 = vmatprep.subr.bf16.mxu0 0
        %4941 = vmatpush1.bf16.msra.mxu0 0
        %4942 = vmatprep.subr.bf16.mxu0 0
        %4943 = vmatpush1.bf16.msra.mxu0 0
        %4944 = vmatprep.subr.bf16.mxu0 0
        %4945 = vmatpush1.bf16.msra.mxu0 0
        %4946 = vmatprep.subr.bf16.mxu0 0
        %4947 = vmatpush1.bf16.msra.mxu0 0
        %4948 = vmatprep.subr.bf16.mxu0 0
        %4949 = vmatpush1.bf16.msra.mxu0 0
        %4950 = vmatprep.subr.bf16.mxu0 0
        %4951 = vmatpush1.bf16.msra.mxu0 0
        %4952 = vmatprep.subr.bf16.mxu0 0
        %4953 = vmatpush1.bf16.msra.mxu0 %v4936
        %4954 = vmatprep.subr.bf16.mxu0 0
        %4955 = vmatpush2.bf16.msra.mxu0 0
        %4956 = vmatprep.subr.bf16.mxu0 0
        %4957 = vmatpush2.bf16.msra.mxu0 0
        %4958 = vmatprep.subr.bf16.mxu0 0
        %4959 = vmatpush2.bf16.msra.mxu0 0
        %4960 = vmatprep.subr.bf16.mxu0 0
        %4961 = vmatpush2.bf16.msra.mxu0 0
        %4962 = vmatprep.subr.bf16.mxu0 0
        %4963 = vmatpush2.bf16.msra.mxu0 0
        %4964 = vmatprep.subr.bf16.mxu0 0
        %4965 = vmatpush2.bf16.msra.mxu0 0
        %4966 = vmatprep.subr.bf16.mxu0 0
        %4967 = vmatpush2.bf16.msra.mxu0 0
        %4968 = vmatprep.subr.bf16.mxu0 0
        %4969 = vmatpush2.bf16.msra.mxu0 0
        %4970 = vmatprep.mubr.bf16.mxu0 0
        %4971 = vmatmul.mubr.bf16.gmra.mxu0 %v4933
        %v4972 = vpop.f32.mrf.mxu0
        %v4973 = vadd.f32 0.0, %v4972
        %v4974 = vpop.f32.mrf.mxu0
        %v4975 = vpop.f32.mrf.mxu0
        %v4976 = vpop.f32.mrf.mxu0
        %4977 = vdwg.mxu0
        %v4979 = vsel %vm3798, %v4925, 0
        %v4982 = vsel %vm3802, %v4929, 0
        %4984 = vmatprep.subr.bf16.mxu0 0
        %4985 = vmatpush1.bf16.msra.mxu0 0
        %4986 = vmatprep.subr.bf16.mxu0 0
        %4987 = vmatpush1.bf16.msra.mxu0 0
        %4988 = vmatprep.subr.bf16.mxu0 0
        %4989 = vmatpush1.bf16.msra.mxu0 0
        %4990 = vmatprep.subr.bf16.mxu0 0
        %4991 = vmatpush1.bf16.msra.mxu0 0
        %4992 = vmatprep.subr.bf16.mxu0 0
        %4993 = vmatpush1.bf16.msra.mxu0 0
        %4994 = vmatprep.subr.bf16.mxu0 0
        %4995 = vmatpush1.bf16.msra.mxu0 0
        %4996 = vmatprep.subr.bf16.mxu0 0
        %4997 = vmatpush1.bf16.msra.mxu0 0
        %4998 = vmatprep.subr.bf16.mxu0 0
        %4999 = vmatpush1.bf16.msra.mxu0 %v4982
        %5000 = vmatprep.subr.bf16.mxu0 0
        %5001 = vmatpush2.bf16.msra.mxu0 0
        %5002 = vmatprep.subr.bf16.mxu0 0
        %5003 = vmatpush2.bf16.msra.mxu0 0
        %5004 = vmatprep.subr.bf16.mxu0 0
        %5005 = vmatpush2.bf16.msra.mxu0 0
        %5006 = vmatprep.subr.bf16.mxu0 0
        %5007 = vmatpush2.bf16.msra.mxu0 0
        %5008 = vmatprep.subr.bf16.mxu0 0
        %5009 = vmatpush2.bf16.msra.mxu0 0
        %5010 = vmatprep.subr.bf16.mxu0 0
        %5011 = vmatpush2.bf16.msra.mxu0 0
        %5012 = vmatprep.subr.bf16.mxu0 0
        %5013 = vmatpush2.bf16.msra.mxu0 0
        %5014 = vmatprep.subr.bf16.mxu0 0
        %5015 = vmatpush2.bf16.msra.mxu0 0
        %5016 = vmatprep.mubr.bf16.mxu0 0
        %5017 = vmatmul.mubr.bf16.gmra.mxu0 %v4979
        %v5018 = vpop.f32.mrf.mxu0
        %v5019 = vadd.f32 0.0, %v5018
        %v5020 = vpop.f32.mrf.mxu0
        %v5021 = vpop.f32.mrf.mxu0
        %v5022 = vpop.f32.mrf.mxu0
        %5023 = vdwg.mxu0
        %v5025 = vsel %vm3798, %v4926, 0
        %v5028 = vsel %vm3802, %v4930, 0
        %5030 = vmatprep.subr.bf16.mxu0 0
        %5031 = vmatpush1.bf16.msra.mxu0 0
        %5032 = vmatprep.subr.bf16.mxu0 0
        %5033 = vmatpush1.bf16.msra.mxu0 0
        %5034 = vmatprep.subr.bf16.mxu0 0
        %5035 = vmatpush1.bf16.msra.mxu0 0
        %5036 = vmatprep.subr.bf16.mxu0 0
        %5037 = vmatpush1.bf16.msra.mxu0 0
        %5038 = vmatprep.subr.bf16.mxu0 0
        %5039 = vmatpush1.bf16.msra.mxu0 0
        %5040 = vmatprep.subr.bf16.mxu0 0
        %5041 = vmatpush1.bf16.msra.mxu0 0
        %5042 = vmatprep.subr.bf16.mxu0 0
        %5043 = vmatpush1.bf16.msra.mxu0 0
        %5044 = vmatprep.subr.bf16.mxu0 0
        %5045 = vmatpush1.bf16.msra.mxu0 %v5028
        %5046 = vmatprep.subr.bf16.mxu0 0
        %5047 = vmatpush2.bf16.msra.mxu0 0
        %5048 = vmatprep.subr.bf16.mxu0 0
        %5049 = vmatpush2.bf16.msra.mxu0 0
        %5050 = vmatprep.subr.bf16.mxu0 0
        %5051 = vmatpush2.bf16.msra.mxu0 0
        %5052 = vmatprep.subr.bf16.mxu0 0
        %5053 = vmatpush2.bf16.msra.mxu0 0
        %5054 = vmatprep.subr.bf16.mxu0 0
        %5055 = vmatpush2.bf16.msra.mxu0 0
        %5056 = vmatprep.subr.bf16.mxu0 0
        %5057 = vmatpush2.bf16.msra.mxu0 0
        %5058 = vmatprep.subr.bf16.mxu0 0
        %5059 = vmatpush2.bf16.msra.mxu0 0
        %5060 = vmatprep.subr.bf16.mxu0 0
        %5061 = vmatpush2.bf16.msra.mxu0 0
        %5062 = vmatprep.mubr.bf16.mxu0 0
        %5063 = vmatmul.mubr.bf16.gmra.mxu0 %v5025
        %v5064 = vpop.f32.mrf.mxu0
        %v5065 = vadd.f32 0.0, %v5064
        %v5066 = vpop.f32.mrf.mxu0
        %v5067 = vpop.f32.mrf.mxu0
        %v5068 = vpop.f32.mrf.mxu0
        %5069 = vdwg.mxu0
        %v5071 = vsel %vm3798, %v4927, 0
        %v5074 = vsel %vm3802, %v4931, 0
        %5076 = vmatprep.subr.bf16.mxu0 0
        %5077 = vmatpush1.bf16.msra.mxu0 0
        %5078 = vmatprep.subr.bf16.mxu0 0
        %5079 = vmatpush1.bf16.msra.mxu0 0
        %5080 = vmatprep.subr.bf16.mxu0 0
        %5081 = vmatpush1.bf16.msra.mxu0 0
        %5082 = vmatprep.subr.bf16.mxu0 0
        %5083 = vmatpush1.bf16.msra.mxu0 0
        %5084 = vmatprep.subr.bf16.mxu0 0
        %5085 = vmatpush1.bf16.msra.mxu0 0
        %5086 = vmatprep.subr.bf16.mxu0 0
        %5087 = vmatpush1.bf16.msra.mxu0 0
        %5088 = vmatprep.subr.bf16.mxu0 0
        %5089 = vmatpush1.bf16.msra.mxu0 0
        %5090 = vmatprep.subr.bf16.mxu0 0
        %5091 = vmatpush1.bf16.msra.mxu0 %v5074
        %5092 = vmatprep.subr.bf16.mxu0 0
        %5093 = vmatpush2.bf16.msra.mxu0 0
        %5094 = vmatprep.subr.bf16.mxu0 0
        %5095 = vmatpush2.bf16.msra.mxu0 0
        %5096 = vmatprep.subr.bf16.mxu0 0
        %5097 = vmatpush2.bf16.msra.mxu0 0
        %5098 = vmatprep.subr.bf16.mxu0 0
        %5099 = vmatpush2.bf16.msra.mxu0 0
        %5100 = vmatprep.subr.bf16.mxu0 0
        %5101 = vmatpush2.bf16.msra.mxu0 0
        %5102 = vmatprep.subr.bf16.mxu0 0
        %5103 = vmatpush2.bf16.msra.mxu0 0
        %5104 = vmatprep.subr.bf16.mxu0 0
        %5105 = vmatpush2.bf16.msra.mxu0 0
        %5106 = vmatprep.subr.bf16.mxu0 0
        %5107 = vmatpush2.bf16.msra.mxu0 0
        %5108 = vmatprep.mubr.bf16.mxu0 0
        %5109 = vmatmul.mubr.bf16.gmra.mxu0 %v5071
        %v5110 = vpop.f32.mrf.mxu0
        %v5111 = vadd.f32 0.0, %v5110
        %v5112 = vpop.f32.mrf.mxu0
        %v5113 = vpop.f32.mrf.mxu0
        %v5114 = vpop.f32.mrf.mxu0
        %5115 = vdwg.mxu0
        %5117 = vrot.lane.b32.xlu0 %v5019, 16
        %v5118 = vpop.permute.xlu0 %5117
        %5121 = vrot.lane.b32.xlu0 %v5065, 32
        %v5122 = vpop.permute.xlu0 %5121
        %5125 = vrot.lane.b32.xlu0 %v5111, 48
        %v5126 = vpop.permute.xlu0 %5125
        %v5128 = vsel %vm1450, %v4973, %v5118
        %v5129 = vsel %vm1326, %v5128, %v5122
        %v5130 = vsel %vm3998, %v5129, %v5126
        %v5131 = vpack.c.bf16 %v5130, %v5130
        %s5132 = scalar_lea.vmem %s51, 32
        %v5133 = vld [vmem:[%s5132] sm:$0xf]
        %v5134 = vld [vmem:[%s5132 + $0x4] sm:$0xf]
        %v5135 = vld [vmem:[%s5132 + $0x8] sm:$0xf]
        %v5136 = vld [vmem:[%s5132 + $0xc] sm:$0xf]
        %v5137 = vld [vmem:[%s5132 + $0x10] sm:$0xf]
        %v5138 = vld [vmem:[%s5132 + $0x14] sm:$0xf]
        %v5139 = vld [vmem:[%s5132 + $0x18] sm:$0xf]
        %v5140 = vld [vmem:[%s5132 + $0x1c] sm:$0xf]
        %s5141 = scalar_lea.vmem %s53, 1
        %v5142 = vld [vmem:[%s5141] sm:$0x1]
        %v5144 = vlaneseq
        %v5145 = vshrl.u32 %v5144, 7
        %v5146 = vsub.s32 0, %v5145
        %v5147 = vrot.slane %v5142, %v5146
        %v5157 = vunpack.c.l.b16 %v5133
        %v5158 = vunpack.c.l.b16 %v5134
        %v5159 = vunpack.c.l.b16 %v5135
        %v5160 = vunpack.c.l.b16 %v5136
        %v5161 = vunpack.c.l.b16 %v5137
        %v5162 = vunpack.c.l.b16 %v5138
        %v5163 = vunpack.c.l.b16 %v5139
        %v5164 = vunpack.c.l.b16 %v5140
        %v5165 = vpack.c.b16 %v5158, %v5157
        %v5166 = vpack.c.b16 %v5160, %v5159
        %v5167 = vpack.c.b16 %v5162, %v5161
        %v5168 = vpack.c.b16 %v5164, %v5163
        %v5174 = vsel %vm1279, %v5131, 0
        %5176 = vmatprep.subr.bf16.mxu0 0
        %5177 = vmatpush1.bf16.msra.mxu0 0
        %5178 = vmatprep.subr.bf16.mxu0 0
        %5179 = vmatpush1.bf16.msra.mxu0 0
        %5180 = vmatprep.subr.bf16.mxu0 0
        %5181 = vmatpush1.bf16.msra.mxu0 0
        %5182 = vmatprep.subr.bf16.mxu0 0
        %5183 = vmatpush1.bf16.msra.mxu0 0
        %5184 = vmatprep.subr.bf16.mxu0 0
        %5185 = vmatpush1.bf16.msra.mxu0 %v5168
        %5186 = vmatprep.subr.bf16.mxu0 0
        %5187 = vmatpush1.bf16.msra.mxu0 %v5167
        %5188 = vmatprep.subr.bf16.mxu0 0
        %5189 = vmatpush1.bf16.msra.mxu0 %v5166
        %5190 = vmatprep.subr.bf16.mxu0 0
        %5191 = vmatpush1.bf16.msra.mxu0 %v5165
        %5192 = vmatprep.subr.bf16.mxu0 0
        %5193 = vmatpush2.bf16.msra.mxu0 0
        %5194 = vmatprep.subr.bf16.mxu0 0
        %5195 = vmatpush2.bf16.msra.mxu0 0
        %5196 = vmatprep.subr.bf16.mxu0 0
        %5197 = vmatpush2.bf16.msra.mxu0 0
        %5198 = vmatprep.subr.bf16.mxu0 0
        %5199 = vmatpush2.bf16.msra.mxu0 0
        %5200 = vmatprep.subr.bf16.mxu0 0
        %5201 = vmatpush2.bf16.msra.mxu0 0
        %5202 = vmatprep.subr.bf16.mxu0 0
        %5203 = vmatpush2.bf16.msra.mxu0 0
        %5204 = vmatprep.subr.bf16.mxu0 0
        %5205 = vmatpush2.bf16.msra.mxu0 0
        %5206 = vmatprep.subr.bf16.mxu0 0
        %5207 = vmatpush2.bf16.msra.mxu0 0
        %5208 = vmatprep.mubr.bf16.mxu0 0
        %5209 = vmatmul.mubr.bf16.gmra.mxu0 %v5174
        %v5210 = vpop.f32.mrf.mxu0
        %v5211 = vadd.f32 %v5147, %v5210
        %v5212 = vpop.f32.mrf.mxu0
        %v5213 = vpop.f32.mrf.mxu0
        %v5214 = vpop.f32.mrf.mxu0
        %5215 = vdwg.mxu0
        %s5216 = scalar_lea.vmem %s59, 1
        %v5217 = vld [vmem:[%s5216] sm:$0x1]
        %s5218 = scalar_lea.vmem %s61, 1
        %v5219 = vld [vmem:[%s5218] sm:$0x1]
        %v5220 = vsel %vm3282, %v5211, 0.0
        %5221 = vadd.xlane.f32.xlu0 %v5220
        %v5222 = vpop.xlane.xlu0 %5221
        %v5223 = vmul.f32 %v5222, %v3286
        %v5224 = vsub.f32 %v5211, %v5223
        %v5225 = vmul.f32 %v5224, %v5224
        %v5226 = vsel %vm3282, %v5225, 0.0
        %5227 = vadd.xlane.f32.xlu0 %v5226
        %v5228 = vpop.xlane.xlu0 %5227
        %v5229 = vmul.f32 %v5228, %v3286
        %v5230 = vadd.f32 %v5229, 1e-05
        %v5231 = vrsqrt.pop %v5230
        %v5232 = vmul.f32 %v5224, %v5231
        %v5234 = vlaneseq
        %v5235 = vshrl.u32 %v5234, 7
        %v5236 = vsub.s32 0, %v5235
        %v5237 = vrot.slane %v5217, %v5236
        %v5239 = vmul.f32 %v5232, %v5237
        %v5241 = vlaneseq
        %v5242 = vshrl.u32 %v5241, 7
        %v5243 = vsub.s32 0, %v5242
        %v5244 = vrot.slane %v5219, %v5243
        %v5246 = vadd.f32 %v5239, %v5244
        %v5247 = vadd.f32 %v4442, %v5246
        %v5248 = vpack.c.bf16 %v5247, %v5247
        %s5249 = scalar_lea.vmem %s63, 64
        %v5250 = vld [vmem:[%s5249] sm:$0xff]
        %v5251 = vld [vmem:[%s5249 + $0x8] sm:$0xff]
        %v5252 = vld [vmem:[%s5249 + $0x10] sm:$0xff]
        %v5253 = vld [vmem:[%s5249 + $0x18] sm:$0xff]
        %v5254 = vld [vmem:[%s5249 + $0x20] sm:$0xff]
        %v5255 = vld [vmem:[%s5249 + $0x28] sm:$0xff]
        %v5256 = vld [vmem:[%s5249 + $0x30] sm:$0xff]
        %v5257 = vld [vmem:[%s5249 + $0x38] sm:$0xff]
        %s5258 = scalar_lea.vmem %s65, 2
        %v5259 = vld [vmem:[%s5258] sm:$0x3]
        %v5261 = vlaneseq
        %v5262 = vshrl.u32 %v5261, 7
        %v5263 = vsub.s32 0, %v5262
        %v5264 = vrot.slane %v5259, %v5263
        %v5265 = vlaneseq
        %v5266 = vshrl.u32 %v5265, 7
        %v5267 = vsub.s32 1, %v5266
        %v5268 = vrot.slane %v5259, %v5267
        %v5279 = vunpack.c.l.b16 %v5250
        %v5280 = vunpack.c.h.b16 %v5250
        %v5281 = vunpack.c.l.b16 %v5251
        %v5282 = vunpack.c.h.b16 %v5251
        %v5283 = vunpack.c.l.b16 %v5252
        %v5284 = vunpack.c.h.b16 %v5252
        %v5285 = vunpack.c.l.b16 %v5253
        %v5286 = vunpack.c.h.b16 %v5253
        %v5287 = vunpack.c.l.b16 %v5254
        %v5288 = vunpack.c.h.b16 %v5254
        %v5289 = vunpack.c.l.b16 %v5255
        %v5290 = vunpack.c.h.b16 %v5255
        %v5291 = vunpack.c.l.b16 %v5256
        %v5292 = vunpack.c.h.b16 %v5256
        %v5293 = vunpack.c.l.b16 %v5257
        %v5294 = vunpack.c.h.b16 %v5257
        %v5295 = vpack.c.b16 %v5281, %v5279
        %v5296 = vpack.c.b16 %v5282, %v5280
        %v5297 = vpack.c.b16 %v5285, %v5283
        %v5298 = vpack.c.b16 %v5286, %v5284
        %v5299 = vpack.c.b16 %v5289, %v5287
        %v5300 = vpack.c.b16 %v5290, %v5288
        %v5301 = vpack.c.b16 %v5293, %v5291
        %v5302 = vpack.c.b16 %v5294, %v5292
        %v5312 = vsel %vm1279, %v5248, 0
        %5314 = vmatprep.subr.bf16.mxu0 0
        %5315 = vmatpush1.bf16.msra.mxu0 0
        %5316 = vmatprep.subr.bf16.mxu0 0
        %5317 = vmatpush1.bf16.msra.mxu0 0
        %5318 = vmatprep.subr.bf16.mxu0 0
        %5319 = vmatpush1.bf16.msra.mxu0 0
        %5320 = vmatprep.subr.bf16.mxu0 0
        %5321 = vmatpush1.bf16.msra.mxu0 0
        %5322 = vmatprep.subr.bf16.mxu0 %v5302
        %5323 = vmatpush1.bf16.msra.mxu0 %v5301
        %5324 = vmatprep.subr.bf16.mxu0 %v5300
        %5325 = vmatpush1.bf16.msra.mxu0 %v5299
        %5326 = vmatprep.subr.bf16.mxu0 %v5298
        %5327 = vmatpush1.bf16.msra.mxu0 %v5297
        %5328 = vmatprep.subr.bf16.mxu0 %v5296
        %5329 = vmatpush1.bf16.msra.mxu0 %v5295
        %5330 = vmatprep.subr.bf16.mxu0 0
        %5331 = vmatpush2.bf16.msra.mxu0 0
        %5332 = vmatprep.subr.bf16.mxu0 0
        %5333 = vmatpush2.bf16.msra.mxu0 0
        %5334 = vmatprep.subr.bf16.mxu0 0
        %5335 = vmatpush2.bf16.msra.mxu0 0
        %5336 = vmatprep.subr.bf16.mxu0 0
        %5337 = vmatpush2.bf16.msra.mxu0 0
        %5338 = vmatprep.subr.bf16.mxu0 0
        %5339 = vmatpush2.bf16.msra.mxu0 0
        %5340 = vmatprep.subr.bf16.mxu0 0
        %5341 = vmatpush2.bf16.msra.mxu0 0
        %5342 = vmatprep.subr.bf16.mxu0 0
        %5343 = vmatpush2.bf16.msra.mxu0 0
        %5344 = vmatprep.subr.bf16.mxu0 0
        %5345 = vmatpush2.bf16.msra.mxu0 0
        %5346 = vmatprep.mubr.bf16.mxu0 0
        %5347 = vmatmul.mubr.bf16.gmra.mxu0 %v5312
        %v5348 = vpop.f32.mrf.mxu0
        %v5349 = vadd.f32 %v5264, %v5348
        %v5350 = vpop.f32.mrf.mxu0
        %v5351 = vadd.f32 %v5268, %v5350
        %v5352 = vpop.f32.mrf.mxu0
        %v5353 = vpop.f32.mrf.mxu0
        %5354 = vdwg.mxu0
        %v5355 = vmul.f32 %v5349, %v5349
        %v5356 = vmul.f32 %v5351, %v5351
        %v5357 = vmul.f32 %v5349, %v5355
        %v5358 = vmul.f32 %v5351, %v5356
        %v5359 = vmul.f32 %v5357, 0.044715
        %v5360 = vmul.f32 %v5358, 0.044715
        %v5361 = vadd.f32 %v5349, %v5359
        %v5362 = vadd.f32 %v5351, %v5360
        %v5363 = vmul.f32 %v5361, 0.7978846
        %v5364 = vmul.f32 %v5362, 0.7978846
        %v5365 = vtanh.pop %v5363
        %v5366 = vtanh.pop %v5364
        %v5367 = vadd.f32 %v5365, 1.0
        %v5368 = vadd.f32 %v5366, 1.0
        %v5369 = vmul.f32 %v5367, 0.5
        %v5370 = vmul.f32 %v5368, 0.5
        %v5371 = vmul.f32 %v5349, %v5369
        %v5372 = vmul.f32 %v5351, %v5370
        %v5373 = vpack.c.bf16 %v5371, %v5371
        %v5374 = vpack.c.bf16 %v5372, %v5372
        %s5375 = scalar_lea.vmem %s67, 128
        %v5376 = vld [vmem:[%s5375] sm:$0xf]
        %v5377 = vld [vmem:[%s5375 + $0x4] sm:$0xf]
        %v5378 = vld [vmem:[%s5375 + $0x8] sm:$0xf]
        %v5379 = vld [vmem:[%s5375 + $0xc] sm:$0xf]
        %v5380 = vld [vmem:[%s5375 + $0x10] sm:$0xf]
        %v5381 = vld [vmem:[%s5375 + $0x14] sm:$0xf]
        %v5382 = vld [vmem:[%s5375 + $0x18] sm:$0xf]
        %v5383 = vld [vmem:[%s5375 + $0x1c] sm:$0xf]
        %v5384 = vld [vmem:[%s5375 + $0x20] sm:$0xf]
        %v5385 = vld [vmem:[%s5375 + $0x24] sm:$0xf]
        %v5386 = vld [vmem:[%s5375 + $0x28] sm:$0xf]
        %v5387 = vld [vmem:[%s5375 + $0x2c] sm:$0xf]
        %v5388 = vld [vmem:[%s5375 + $0x30] sm:$0xf]
        %v5389 = vld [vmem:[%s5375 + $0x34] sm:$0xf]
        %v5390 = vld [vmem:[%s5375 + $0x38] sm:$0xf]
        %v5391 = vld [vmem:[%s5375 + $0x3c] sm:$0xf]
        %v5392 = vld [vmem:[%s5375 + $0x40] sm:$0xf]
        %v5393 = vld [vmem:[%s5375 + $0x44] sm:$0xf]
        %v5394 = vld [vmem:[%s5375 + $0x48] sm:$0xf]
        %v5395 = vld [vmem:[%s5375 + $0x4c] sm:$0xf]
        %v5396 = vld [vmem:[%s5375 + $0x50] sm:$0xf]
        %v5397 = vld [vmem:[%s5375 + $0x54] sm:$0xf]
        %v5398 = vld [vmem:[%s5375 + $0x58] sm:$0xf]
        %v5399 = vld [vmem:[%s5375 + $0x5c] sm:$0xf]
        %v5400 = vld [vmem:[%s5375 + $0x60] sm:$0xf]
        %v5401 = vld [vmem:[%s5375 + $0x64] sm:$0xf]
        %v5402 = vld [vmem:[%s5375 + $0x68] sm:$0xf]
        %v5403 = vld [vmem:[%s5375 + $0x6c] sm:$0xf]
        %v5404 = vld [vmem:[%s5375 + $0x70] sm:$0xf]
        %v5405 = vld [vmem:[%s5375 + $0x74] sm:$0xf]
        %v5406 = vld [vmem:[%s5375 + $0x78] sm:$0xf]
        %v5407 = vld [vmem:[%s5375 + $0x7c] sm:$0xf]
        %s5408 = scalar_lea.vmem %s69, 1
        %v5409 = vld [vmem:[%s5408] sm:$0x1]
        %v5411 = vlaneseq
        %v5412 = vshrl.u32 %v5411, 7
        %v5413 = vsub.s32 0, %v5412
        %v5414 = vrot.slane %v5409, %v5413
        %v5448 = vunpack.c.l.b16 %v5376
        %v5449 = vunpack.c.l.b16 %v5377
        %v5450 = vunpack.c.l.b16 %v5378
        %v5451 = vunpack.c.l.b16 %v5379
        %v5452 = vunpack.c.l.b16 %v5380
        %v5453 = vunpack.c.l.b16 %v5381
        %v5454 = vunpack.c.l.b16 %v5382
        %v5455 = vunpack.c.l.b16 %v5383
        %v5456 = vunpack.c.l.b16 %v5384
        %v5457 = vunpack.c.l.b16 %v5385
        %v5458 = vunpack.c.l.b16 %v5386
        %v5459 = vunpack.c.l.b16 %v5387
        %v5460 = vunpack.c.l.b16 %v5388
        %v5461 = vunpack.c.l.b16 %v5389
        %v5462 = vunpack.c.l.b16 %v5390
        %v5463 = vunpack.c.l.b16 %v5391
        %v5464 = vunpack.c.l.b16 %v5392
        %v5465 = vunpack.c.l.b16 %v5393
        %v5466 = vunpack.c.l.b16 %v5394
        %v5467 = vunpack.c.l.b16 %v5395
        %v5468 = vunpack.c.l.b16 %v5396
        %v5469 = vunpack.c.l.b16 %v5397
        %v5470 = vunpack.c.l.b16 %v5398
        %v5471 = vunpack.c.l.b16 %v5399
        %v5472 = vunpack.c.l.b16 %v5400
        %v5473 = vunpack.c.l.b16 %v5401
        %v5474 = vunpack.c.l.b16 %v5402
        %v5475 = vunpack.c.l.b16 %v5403
        %v5476 = vunpack.c.l.b16 %v5404
        %v5477 = vunpack.c.l.b16 %v5405
        %v5478 = vunpack.c.l.b16 %v5406
        %v5479 = vunpack.c.l.b16 %v5407
        %v5480 = vpack.c.b16 %v5449, %v5448
        %v5481 = vpack.c.b16 %v5451, %v5450
        %v5482 = vpack.c.b16 %v5453, %v5452
        %v5483 = vpack.c.b16 %v5455, %v5454
        %v5484 = vpack.c.b16 %v5457, %v5456
        %v5485 = vpack.c.b16 %v5459, %v5458
        %v5486 = vpack.c.b16 %v5461, %v5460
        %v5487 = vpack.c.b16 %v5463, %v5462
        %v5488 = vpack.c.b16 %v5465, %v5464
        %v5489 = vpack.c.b16 %v5467, %v5466
        %v5490 = vpack.c.b16 %v5469, %v5468
        %v5491 = vpack.c.b16 %v5471, %v5470
        %v5492 = vpack.c.b16 %v5473, %v5472
        %v5493 = vpack.c.b16 %v5475, %v5474
        %v5494 = vpack.c.b16 %v5477, %v5476
        %v5495 = vpack.c.b16 %v5479, %v5478
        %5512 = vmatprep.subr.bf16.mxu0 0
        %5513 = vmatpush1.bf16.msra.mxu0 %v5487
        %5514 = vmatprep.subr.bf16.mxu0 0
        %5515 = vmatpush1.bf16.msra.mxu0 %v5486
        %5516 = vmatprep.subr.bf16.mxu0 0
        %5517 = vmatpush1.bf16.msra.mxu0 %v5485
        %5518 = vmatprep.subr.bf16.mxu0 0
        %5519 = vmatpush1.bf16.msra.mxu0 %v5484
        %5520 = vmatprep.subr.bf16.mxu0 0
        %5521 = vmatpush1.bf16.msra.mxu0 %v5483
        %5522 = vmatprep.subr.bf16.mxu0 0
        %5523 = vmatpush1.bf16.msra.mxu0 %v5482
        %5524 = vmatprep.subr.bf16.mxu0 0
        %5525 = vmatpush1.bf16.msra.mxu0 %v5481
        %5526 = vmatprep.subr.bf16.mxu0 0
        %5527 = vmatpush1.bf16.msra.mxu0 %v5480
        %5528 = vmatprep.subr.bf16.mxu0 0
        %5529 = vmatpush2.bf16.msra.mxu0 %v5495
        %5530 = vmatprep.subr.bf16.mxu0 0
        %5531 = vmatpush2.bf16.msra.mxu0 %v5494
        %5532 = vmatprep.subr.bf16.mxu0 0
        %5533 = vmatpush2.bf16.msra.mxu0 %v5493
        %5534 = vmatprep.subr.bf16.mxu0 0
        %5535 = vmatpush2.bf16.msra.mxu0 %v5492
        %5536 = vmatprep.subr.bf16.mxu0 0
        %5537 = vmatpush2.bf16.msra.mxu0 %v5491
        %5538 = vmatprep.subr.bf16.mxu0 0
        %5539 = vmatpush2.bf16.msra.mxu0 %v5490
        %5540 = vmatprep.subr.bf16.mxu0 0
        %5541 = vmatpush2.bf16.msra.mxu0 %v5489
        %5542 = vmatprep.subr.bf16.mxu0 0
        %5543 = vmatpush2.bf16.msra.mxu0 %v5488
        %5544 = vmatprep.mubr.bf16.mxu0 %v5374
        %5545 = vmatmul.mubr.bf16.gmra.mxu0 %v5373
        %v5546 = vpop.f32.mrf.mxu0
        %v5547 = vadd.f32 %v5414, %v5546
        %v5548 = vpop.f32.mrf.mxu0
        %v5549 = vpop.f32.mrf.mxu0
        %v5550 = vpop.f32.mrf.mxu0
        %5551 = vdwg.mxu0
        %s5552 = scalar_lea.vmem %s71, 1
        %v5553 = vld [vmem:[%s5552] sm:$0x1]
        %s5554 = scalar_lea.vmem %s73, 1
        %v5555 = vld [vmem:[%s5554] sm:$0x1]
        %v5556 = vsel %vm3282, %v5547, 0.0
        %5557 = vadd.xlane.f32.xlu0 %v5556
        %v5558 = vpop.xlane.xlu0 %5557
        %v5559 = vmul.f32 %v5558, %v3286
        %v5560 = vsub.f32 %v5547, %v5559
        %v5561 = vmul.f32 %v5560, %v5560
        %v5562 = vsel %vm3282, %v5561, 0.0
        %5563 = vadd.xlane.f32.xlu0 %v5562
        %v5564 = vpop.xlane.xlu0 %5563
        %v5565 = vmul.f32 %v5564, %v3286
        %v5566 = vadd.f32 %v5565, 1e-05
        %v5567 = vrsqrt.pop %v5566
        %v5568 = vmul.f32 %v5560, %v5567
        %v5570 = vlaneseq
        %v5571 = vshrl.u32 %v5570, 7
        %v5572 = vsub.s32 0, %v5571
        %v5573 = vrot.slane %v5553, %v5572
        %v5575 = vmul.f32 %v5568, %v5573
        %v5577 = vlaneseq
        %v5578 = vshrl.u32 %v5577, 7
        %v5579 = vsub.s32 0, %v5578
        %v5580 = vrot.slane %v5555, %v5579
        %v5582 = vadd.f32 %v5575, %v5580
        %v5583 = vadd.f32 %v5247, %v5582
        %v5584 = vld [vmem:[%s75] sm:$0x1]
        %v5585 = vld [vmem:[%s77] sm:$0x1]
        %v5586 = vsel %vm3282, %v5583, 0.0
        %5587 = vadd.xlane.f32.xlu0 %v5586
        %v5588 = vpop.xlane.xlu0 %5587
        %v5589 = vmul.f32 %v5588, %v3286
        %v5590 = vsub.f32 %v5583, %v5589
        %v5591 = vmul.f32 %v5590, %v5590
        %v5592 = vsel %vm3282, %v5591, 0.0
        %5593 = vadd.xlane.f32.xlu0 %v5592
        %v5594 = vpop.xlane.xlu0 %5593
        %v5595 = vmul.f32 %v5594, %v3286
        %v5596 = vadd.f32 %v5595, 1e-05
        %v5597 = vrsqrt.pop %v5596
        %v5598 = vmul.f32 %v5590, %v5597
        %v5600 = vlaneseq
        %v5601 = vshrl.u32 %v5600, 7
        %v5602 = vsub.s32 0, %v5601
        %v5603 = vrot.slane %v5584, %v5602
        %v5605 = vmul.f32 %v5598, %v5603
        %v5607 = vlaneseq
        %v5608 = vshrl.u32 %v5607, 7
        %v5609 = vsub.s32 0, %v5608
        %v5610 = vrot.slane %v5585, %v5609
        %v5612 = vadd.f32 %v5605, %v5610
        %v5613 = vsel %vm3282, %v5612, 0.0
        %v5614 = vrot.slane %v5613, 4
        %v5615 = vadd.f32 %v5613, %v5614
        %v5616 = vrot.slane %v5615, 2
        %v5617 = vadd.f32 %v5615, %v5616
        %v5618 = vrot.slane %v5617, 1
        %v5619 = vadd.f32 %v5617, %v5618
        %v5620 = vrcp.pop 4.0
        %v5621 = vmul.f32 %v5619, %v5620
        %v5622 = vpack.c.bf16 %v5621, %v5621
        %v5623 = vld [vmem:[%s79] sm:$0xf]
        %v5624 = vld [vmem:[%s79 + $0x4] sm:$0xf]
        %v5625 = vld [vmem:[%s79 + $0x8] sm:$0xf]
        %v5626 = vld [vmem:[%s79 + $0xc] sm:$0xf]
        %v5627 = vld [vmem:[%s79 + $0x10] sm:$0xf]
        %v5628 = vld [vmem:[%s79 + $0x14] sm:$0xf]
        %v5629 = vld [vmem:[%s79 + $0x18] sm:$0xf]
        %v5630 = vld [vmem:[%s79 + $0x1c] sm:$0xf]
        %v5631 = vld [vmem:[%s81] sm:$0x1]
        %v5640 = vunpack.c.l.b16 %v5623
        %v5641 = vunpack.c.l.b16 %v5624
        %v5642 = vunpack.c.l.b16 %v5625
        %v5643 = vunpack.c.l.b16 %v5626
        %v5644 = vunpack.c.l.b16 %v5627
        %v5645 = vunpack.c.l.b16 %v5628
        %v5646 = vunpack.c.l.b16 %v5629
        %v5647 = vunpack.c.l.b16 %v5630
        %v5648 = vpack.c.b16 %v5641, %v5640
        %v5649 = vpack.c.b16 %v5643, %v5642
        %v5650 = vpack.c.b16 %v5645, %v5644
        %v5651 = vpack.c.b16 %v5647, %v5646
        %v5657 = vsel %vm1279, %v5622, 0
        %5659 = vmatprep.subr.bf16.mxu0 0
        %5660 = vmatpush1.bf16.msra.mxu0 0
        %5661 = vmatprep.subr.bf16.mxu0 0
        %5662 = vmatpush1.bf16.msra.mxu0 0
        %5663 = vmatprep.subr.bf16.mxu0 0
        %5664 = vmatpush1.bf16.msra.mxu0 0
        %5665 = vmatprep.subr.bf16.mxu0 0
        %5666 = vmatpush1.bf16.msra.mxu0 0
        %5667 = vmatprep.subr.bf16.mxu0 0
        %5668 = vmatpush1.bf16.msra.mxu0 %v5651
        %5669 = vmatprep.subr.bf16.mxu0 0
        %5670 = vmatpush1.bf16.msra.mxu0 %v5650
        %5671 = vmatprep.subr.bf16.mxu0 0
        %5672 = vmatpush1.bf16.msra.mxu0 %v5649
        %5673 = vmatprep.subr.bf16.mxu0 0
        %5674 = vmatpush1.bf16.msra.mxu0 %v5648
        %5675 = vmatprep.subr.bf16.mxu0 0
        %5676 = vmatpush2.bf16.msra.mxu0 0
        %5677 = vmatprep.subr.bf16.mxu0 0
        %5678 = vmatpush2.bf16.msra.mxu0 0
        %5679 = vmatprep.subr.bf16.mxu0 0
        %5680 = vmatpush2.bf16.msra.mxu0 0
        %5681 = vmatprep.subr.bf16.mxu0 0
        %5682 = vmatpush2.bf16.msra.mxu0 0
        %5683 = vmatprep.subr.bf16.mxu0 0
        %5684 = vmatpush2.bf16.msra.mxu0 0
        %5685 = vmatprep.subr.bf16.mxu0 0
        %5686 = vmatpush2.bf16.msra.mxu0 0
        %5687 = vmatprep.subr.bf16.mxu0 0
        %5688 = vmatpush2.bf16.msra.mxu0 0
        %5689 = vmatprep.subr.bf16.mxu0 0
        %5690 = vmatpush2.bf16.msra.mxu0 0
        %5691 = vmatprep.mubr.bf16.mxu0 0
        %5692 = vmatmul.mubr.bf16.gmra.mxu0 %v5657
        %v5693 = vpop.f32.mrf.mxu0
        %v5694 = vadd.f32 %v5631, %v5693
        %v5695 = vpop.f32.mrf.mxu0
        %v5696 = vpop.f32.mrf.mxu0
        %v5697 = vpop.f32.mrf.mxu0
        %5698 = vdwg.mxu0
        %vm5699 = vcmask 73728
        %5700 = vst.msk [vmem:[%s1230] sm:$0x1] %vm5699, %v5694
        %s5701 = sand.u32 %s971, 1
        %s5702 = scalar_lea.sflag [#allocation3], %s5701
        %s5703 = sand.u32 %s971, 1
        %s5704 = scalar_lea.vmem [#allocation2], %s5703
        // Predicated region
        $region185: #{forward.1} parent=183 // pred_check
          %p5705 = pneg %p981
        $region186: #{forward.1} parent=183 // pred_check_branch
          %5707 = sbr.rel (%p5705) target = $region188
        $region187: #{forward.1} parent=183 // pred_region
          %s5709 = ssub.s32 16, 16
          %5710 = vsyncadd %s5702, %s5709
          %s5711 = smul.addr %s97, 16
          %s5712 = scalar_lea.hbm %s83, %s5711
          %s5714 = sshll.u32 %s5704, 4
          %s5715 = int_to_ptr.vmem [resolvable:$true] %s5714
          %5717 = dma.vmem_to_hbm [thread:$0]  %s5715, 16, %s5712, %s5702
        $region188: #{forward.1} parent=183 // pred_fallthru
          _
      $region184: #{forward.1} parent=5 // pred_fallthru
        _
      %p5718 = scmp.le.s32.totalorder 2, %s92
      // Predicated region
      $region189: #{forward.1} parent=5 // pred_check
        %p5719 = pneg %p5718
      $region190: #{forward.1} parent=5 // pred_check_branch
        %5721 = sbr.rel (%p5719) target = $region192
      $region191: #{forward.1} parent=5 // pred_region
        %s5722 = ssub.s32 %s92, 2
        // Predicated region
        $region193: #{forward.1} parent=191 // pred_check
          %p5723 = pneg %p987
        $region194: #{forward.1} parent=191 // pred_check_branch
          %5725 = sbr.rel (%p5723) target = $region196
        $region195: #{forward.1} parent=191 // pred_region
          %s5726 = sand.u32 %s972, 1
          %s5727 = scalar_lea.sflag [#allocation3], %s5726
          %s5728 = sand.u32 %s972, 1
          %s5729 = scalar_lea.vmem [#allocation2], %s5728
          %5730 = dma.done %s5727, 16
        $region196: #{forward.1} parent=191 // pred_fallthru
          _
      $region192: #{forward.1} parent=5 // pred_fallthru
        _
    $region6: #{forward.1} parent=1 // loop_footer
      %s96 = sadd.s32 1, %s92
    $region7: #{forward.1} parent=1 // loop_footer_branch
      %91 = sbr.rel target = $region3
    $region8: #{forward.1} parent=1 // loop_exit
      _
    %5731 = vsyncpa [#allocation3], 1
    %s5732 = scalar_lea.sflag [#allocation3], 1
    %5733 = vsyncpa %s5732, 1

</llo_original>
